<compile_context>
chip_gen: v7x
topology: tpu7x:2x2x1
jax: 0.10.0
libtpu: 0.0.40
codegen_flags: <defaults>
</compile_context>

<pallas_src>
import jax
import jax.numpy as jnp
import numpy as np
from jax.experimental import pallas as pl
from jax.experimental.pallas import tpu as pltpu

DIM_X = 100     # dim_x from the module
NE = 32         # ne from the module
HIDDEN = 1024   # hidden width of the alpha-MLP (hardcoded in the module)
PAD = 128       # dim_x padded to one full lane tile


def transition_kernel(x_ref, w1_ref, b1_ref, w2_ref, b2_ref, ws_ref, o_ref):
    x32 = x_ref[...]                                     # (B, 128) f32, cols >= 100 are 0
    xb = x32.astype(jnp.bfloat16)

    # ---- alpha-MLP (lane-dense logits: 128 cols, padded experts pinned to -1e9) ----
    h = jnp.dot(xb, w1_ref[...], preferred_element_type=jnp.float32) + b1_ref[...]
    h = jnp.maximum(h, 0.0)                              # (B, 1024) f32
    logits = jnp.dot(h.astype(jnp.bfloat16), w2_ref[...],
                     preferred_element_type=jnp.float32) + b2_ref[...]    # (B, 128) f32
    m = jnp.max(logits, axis=1, keepdims=True)
    p = jnp.exp(logits - m)                              # padded cols -> exp(-1e9) == 0
    inv = pl.reciprocal(jnp.sum(p, axis=1, keepdims=True), approx=True)
    alpha = p * inv                                      # (B, 128) f32, cols >= NE are 0

    # ---- pre-scale x by alpha per expert, then ONE MXU matmul over the stacked weights ----
    # x_scaled[b, e*128 + d] = alpha[b, e] * x[b, d]
    parts = [(x32 * alpha[:, e:e + 1]).astype(jnp.bfloat16) for e in range(NE)]
    x_scaled = jnp.concatenate(parts, axis=1)            # (B, NE*128) bf16
    contrib = jnp.dot(x_scaled, ws_ref[...],
                      preferred_element_type=jnp.float32)  # (B, 128) f32

    o_ref[...] = x32 + contrib                           # residual in f32, lane-dense output


def prepare_params(w1, b1, w2, b2, w_matrix):
    """Host-side glue: pad/cast weights and stack the expert matrix K-major.

    W_stack[e*128 + d, o] = w_matrix[o, d*NE + e]  (zeros in padded rows/cols), so that
      cat @ w_matrix.T == x_scaled @ W_stack   with x_scaled[b, e*128+d] = alpha[b,e]*x[b,d].
    """
    w1p = jnp.pad(w1, ((0, PAD - DIM_X), (0, 0))).astype(jnp.bfloat16)       # (128, 1024)
    # Lane-dense logits path: zero weight columns, -1e9 bias for the 96 padded experts.
    w2p = jnp.pad(w2, ((0, 0), (0, PAD - NE))).astype(jnp.bfloat16)          # (1024, 128)
    b2p = jnp.pad(b2, ((0, 0), (0, PAD - NE)), constant_values=-1e9)         # (1, 128) f32
    wt = jnp.transpose(w_matrix.reshape(DIM_X, DIM_X, NE), (2, 1, 0))        # (NE, d, o)
    wt = jnp.pad(wt, ((0, 0), (0, PAD - DIM_X), (0, PAD - DIM_X)))           # (NE, 128, 128)
    w_stack = wt.reshape(NE * PAD, PAD).astype(jnp.bfloat16)                 # (4096, 128)
    return w1p, b1, w2p, b2p, w_stack


@jax.jit
def transition_forward(x, w1p, b1, w2p, b2p, w_stack):
    B = x.shape[0]                                       # pack B (or B*T) >= 128 for MXU util
    x_pad = jnp.pad(x, ((0, 0), (0, PAD - DIM_X)))       # (B, 128) f32

    out_pad = pl.pallas_call(
        transition_kernel,
        out_shape=jax.ShapeDtypeStruct((B, PAD), jnp.float32),
        grid=(1,),                                       # single step: one DMA, no pipeline overhead
        in_specs=[
            pl.BlockSpec((B, PAD), lambda i: (0, 0)),            # x
            pl.BlockSpec((PAD, HIDDEN), lambda i: (0, 0)),       # w1 (bf16)
            pl.BlockSpec((1, HIDDEN), lambda i: (0, 0)),         # b1
            pl.BlockSpec((HIDDEN, PAD), lambda i: (0, 0)),       # w2 (bf16, lane-dense)
            pl.BlockSpec((1, PAD), lambda i: (0, 0)),            # b2 (padded to -1e9)
            pl.BlockSpec((NE * PAD, PAD), lambda i: (0, 0)),     # W_stack (bf16, 1 MiB)
        ],
        out_specs=pl.BlockSpec((B, PAD), lambda i: (0, 0)),
        compiler_params=pltpu.CompilerParams(
            dimension_semantics=("arbitrary",),
            vmem_limit_bytes=16 << 20,
        ),
    )(x_pad, w1p, b1, w2p, b2p, w_stack)

    return out_pad[:, :DIM_X]


def ref_forward(x, w1, b1, w2, b2, w_matrix):
    """Pure-JAX reference mirroring the PyTorch forward exactly (f32)."""
    h = jnp.maximum(x @ w1 + b1, 0.0)
    alpha = jax.nn.softmax(h @ w2 + b2, axis=1)          # (B, ne)
    x_ = x[:, :, None] @ alpha[:, None, :]               # (B, dim_x, ne)
    cat = x_.reshape(-1, NE * DIM_X)                     # (B, dim_x*ne)
    return x + cat @ w_matrix.T                          # matrix has no bias


if __name__ == "__main__":
    key = jax.random.PRNGKey(0)
    kx, k1, kb1, k2, kb2, k3 = jax.random.split(key, 6)

    B = 128  # pack rows (batch and/or timesteps) to >= 128 for MXU row utilization
    x = jax.random.normal(kx, (B, DIM_X), dtype=jnp.float32)

    # Deterministic synthetic parameters (shapes from the module __init__).
    w1 = jax.random.normal(k1, (DIM_X, HIDDEN), jnp.float32) / np.sqrt(DIM_X)
    b1 = jax.random.normal(kb1, (1, HIDDEN), jnp.float32) * 0.01
    w2 = jax.random.normal(k2, (HIDDEN, NE), jnp.float32) / np.sqrt(HIDDEN)
    b2 = jax.random.normal(kb2, (1, NE), jnp.float32) * 0.01
    # nn.Linear(dim_x*ne, dim_x, bias=False).weight -> (dim_x, dim_x*ne)
    w_matrix = jax.random.normal(k3, (DIM_X, DIM_X * NE), jnp.float32) / np.sqrt(DIM_X * NE)

    params = prepare_params(w1, b1, w2, b2, w_matrix)

    out = jax.block_until_ready(transition_forward(x, *params))
    ref = jax.block_until_ready(ref_forward(x, w1, b1, w2, b2, w_matrix))

    assert out.shape == (B, DIM_X) and out.dtype == jnp.float32
    np.testing.assert_allclose(np.asarray(out), np.asarray(ref), rtol=2e-2, atol=2e-2)

    print("KERNEL_OK")
</pallas_src>

<mosaic_0001>
module attributes {stable_mosaic.version = 11 : i64} {
  func.func @transition_kernel(%arg0: i32, %arg1: memref<128x128xf32, #tpu.memory_space<vmem>>, %arg2: memref<128x1024xbf16, #tpu.memory_space<vmem>>, %arg3: memref<1x1024xf32, #tpu.memory_space<vmem>>, %arg4: memref<1024x128xbf16, #tpu.memory_space<vmem>>, %arg5: memref<1x128xf32, #tpu.memory_space<vmem>>, %arg6: memref<4096x128xbf16, #tpu.memory_space<vmem>>, %arg7: memref<128x128xf32, #tpu.memory_space<vmem>>) attributes {dimension_semantics = [#tpu.dimension_semantics<arbitrary>], iteration_bounds = array<i64: 1>, scalar_prefetch = 0 : i64, scratch_operands = 0 : i64, tpu.core_type = #tpu.core_type<tc>, window_params = [{pipeline_mode = #tpu.pipeline_mode<synchronous>, transform_indices = @transform_0, window_bounds = array<i64: 128, 128>}, {pipeline_mode = #tpu.pipeline_mode<synchronous>, transform_indices = @transform_1, window_bounds = array<i64: 128, 1024>}, {pipeline_mode = #tpu.pipeline_mode<synchronous>, transform_indices = @transform_2, window_bounds = array<i64: 1, 1024>}, {pipeline_mode = #tpu.pipeline_mode<synchronous>, transform_indices = @transform_3, window_bounds = array<i64: 1024, 128>}, {pipeline_mode = #tpu.pipeline_mode<synchronous>, transform_indices = @transform_4, window_bounds = array<i64: 1, 128>}, {pipeline_mode = #tpu.pipeline_mode<synchronous>, transform_indices = @transform_5, window_bounds = array<i64: 4096, 128>}, {pipeline_mode = #tpu.pipeline_mode<synchronous>, transform_indices = @transform_6, window_bounds = array<i64: 128, 128>}]} {
    %c0 = arith.constant 0 : index
    %c0_0 = arith.constant 0 : index
    %0 = vector.load %arg1[%c0, %c0_0] : memref<128x128xf32, #tpu.memory_space<vmem>>, vector<128x128xf32>
    %1 = arith.truncf %0 : vector<128x128xf32> to vector<128x128xbf16>
    %c0_1 = arith.constant 0 : index
    %c0_2 = arith.constant 0 : index
    %2 = vector.load %arg2[%c0_1, %c0_2] : memref<128x1024xbf16, #tpu.memory_space<vmem>>, vector<128x1024xbf16>
    %cst = arith.constant dense<0.000000e+00> : vector<128x1024xf32>
    %3 = tpu.matmul %1, %2, %cst {dimension_numbers = #tpu.dot_dimension_numbers<[1], [0], [0], [1], [0, 0, 1, 1], [], []>} : vector<128x128xbf16>, vector<128x1024xbf16>, vector<128x1024xf32> -> vector<128x1024xf32>
    %c0_3 = arith.constant 0 : index
    %c0_4 = arith.constant 0 : index
    %4 = vector.load %arg3[%c0_3, %c0_4] : memref<1x1024xf32, #tpu.memory_space<vmem>>, vector<1x1024xf32>
    %5 = vector.broadcast %4 : vector<1x1024xf32> to vector<128x1024xf32>
    %6 = arith.addf %3, %5 : vector<128x1024xf32>
    %cst_5 = arith.constant 0.000000e+00 : f32
    %7 = vector.broadcast %cst_5 : f32 to vector<128x1024xf32>
    %8 = arith.maximumf %6, %7 : vector<128x1024xf32>
    %9 = arith.truncf %8 : vector<128x1024xf32> to vector<128x1024xbf16>
    %c0_6 = arith.constant 0 : index
    %c0_7 = arith.constant 0 : index
    %10 = vector.load %arg4[%c0_6, %c0_7] : memref<1024x128xbf16, #tpu.memory_space<vmem>>, vector<1024x128xbf16>
    %cst_8 = arith.constant dense<0.000000e+00> : vector<128x128xf32>
    %11 = tpu.matmul %9, %10, %cst_8 {dimension_numbers = #tpu.dot_dimension_numbers<[1], [0], [0], [1], [0, 0, 1, 1], [], []>} : vector<128x1024xbf16>, vector<1024x128xbf16>, vector<128x128xf32> -> vector<128x128xf32>
    %c0_9 = arith.constant 0 : index
    %c0_10 = arith.constant 0 : index
    %12 = vector.load %arg5[%c0_9, %c0_10] : memref<1x128xf32, #tpu.memory_space<vmem>>, vector<1x128xf32>
    %13 = vector.broadcast %12 : vector<1x128xf32> to vector<128x128xf32>
    %14 = arith.addf %11, %13 : vector<128x128xf32>
    %cst_11 = arith.constant dense<0xFF800000> : vector<128xf32>
    %15 = vector.multi_reduction <maximumf>, %14, %cst_11 [1] : vector<128x128xf32> to vector<128xf32>
    %16 = vector.shape_cast %15 : vector<128xf32> to vector<128x1xf32>
    %17 = vector.broadcast %16 : vector<128x1xf32> to vector<128x128xf32>
    %18 = arith.subf %14, %17 : vector<128x128xf32>
    %19 = math.exp %18 : vector<128x128xf32>
    %cst_12 = arith.constant dense<0.000000e+00> : vector<128xf32>
    %20 = vector.multi_reduction <add>, %19, %cst_12 [1] : vector<128x128xf32> to vector<128xf32>
    %21 = vector.shape_cast %20 : vector<128xf32> to vector<128x1xf32>
    %22 = tpu.reciprocal %21 {approx = true} : vector<128x1xf32> -> vector<128x1xf32>
    %23 = vector.broadcast %22 : vector<128x1xf32> to vector<128x128xf32>
    %24 = arith.mulf %19, %23 : vector<128x128xf32>
    %25 = vector.extract_strided_slice %24 {offsets = [0, 0], sizes = [128, 1], strides = [1, 1]} : vector<128x128xf32> to vector<128x1xf32>
    %26 = vector.broadcast %25 : vector<128x1xf32> to vector<128x128xf32>
    %27 = arith.mulf %0, %26 : vector<128x128xf32>
    %28 = arith.truncf %27 : vector<128x128xf32> to vector<128x128xbf16>
    %29 = vector.extract_strided_slice %24 {offsets = [0, 1], sizes = [128, 1], strides = [1, 1]} : vector<128x128xf32> to vector<128x1xf32>
    %30 = vector.broadcast %29 : vector<128x1xf32> to vector<128x128xf32>
    %31 = arith.mulf %0, %30 : vector<128x128xf32>
    %32 = arith.truncf %31 : vector<128x128xf32> to vector<128x128xbf16>
    %33 = vector.extract_strided_slice %24 {offsets = [0, 2], sizes = [128, 1], strides = [1, 1]} : vector<128x128xf32> to vector<128x1xf32>
    %34 = vector.broadcast %33 : vector<128x1xf32> to vector<128x128xf32>
    %35 = arith.mulf %0, %34 : vector<128x128xf32>
    %36 = arith.truncf %35 : vector<128x128xf32> to vector<128x128xbf16>
    %37 = vector.extract_strided_slice %24 {offsets = [0, 3], sizes = [128, 1], strides = [1, 1]} : vector<128x128xf32> to vector<128x1xf32>
    %38 = vector.broadcast %37 : vector<128x1xf32> to vector<128x128xf32>
    %39 = arith.mulf %0, %38 : vector<128x128xf32>
    %40 = arith.truncf %39 : vector<128x128xf32> to vector<128x128xbf16>
    %41 = vector.extract_strided_slice %24 {offsets = [0, 4], sizes = [128, 1], strides = [1, 1]} : vector<128x128xf32> to vector<128x1xf32>
    %42 = vector.broadcast %41 : vector<128x1xf32> to vector<128x128xf32>
    %43 = arith.mulf %0, %42 : vector<128x128xf32>
    %44 = arith.truncf %43 : vector<128x128xf32> to vector<128x128xbf16>
    %45 = vector.extract_strided_slice %24 {offsets = [0, 5], sizes = [128, 1], strides = [1, 1]} : vector<128x128xf32> to vector<128x1xf32>
    %46 = vector.broadcast %45 : vector<128x1xf32> to vector<128x128xf32>
    %47 = arith.mulf %0, %46 : vector<128x128xf32>
    %48 = arith.truncf %47 : vector<128x128xf32> to vector<128x128xbf16>
    %49 = vector.extract_strided_slice %24 {offsets = [0, 6], sizes = [128, 1], strides = [1, 1]} : vector<128x128xf32> to vector<128x1xf32>
    %50 = vector.broadcast %49 : vector<128x1xf32> to vector<128x128xf32>
    %51 = arith.mulf %0, %50 : vector<128x128xf32>
    %52 = arith.truncf %51 : vector<128x128xf32> to vector<128x128xbf16>
    %53 = vector.extract_strided_slice %24 {offsets = [0, 7], sizes = [128, 1], strides = [1, 1]} : vector<128x128xf32> to vector<128x1xf32>
    %54 = vector.broadcast %53 : vector<128x1xf32> to vector<128x128xf32>
    %55 = arith.mulf %0, %54 : vector<128x128xf32>
    %56 = arith.truncf %55 : vector<128x128xf32> to vector<128x128xbf16>
    %57 = vector.extract_strided_slice %24 {offsets = [0, 8], sizes = [128, 1], strides = [1, 1]} : vector<128x128xf32> to vector<128x1xf32>
    %58 = vector.broadcast %57 : vector<128x1xf32> to vector<128x128xf32>
    %59 = arith.mulf %0, %58 : vector<128x128xf32>
    %60 = arith.truncf %59 : vector<128x128xf32> to vector<128x128xbf16>
    %61 = vector.extract_strided_slice %24 {offsets = [0, 9], sizes = [128, 1], strides = [1, 1]} : vector<128x128xf32> to vector<128x1xf32>
    %62 = vector.broadcast %61 : vector<128x1xf32> to vector<128x128xf32>
    %63 = arith.mulf %0, %62 : vector<128x128xf32>
    %64 = arith.truncf %63 : vector<128x128xf32> to vector<128x128xbf16>
    %65 = vector.extract_strided_slice %24 {offsets = [0, 10], sizes = [128, 1], strides = [1, 1]} : vector<128x128xf32> to vector<128x1xf32>
    %66 = vector.broadcast %65 : vector<128x1xf32> to vector<128x128xf32>
    %67 = arith.mulf %0, %66 : vector<128x128xf32>
    %68 = arith.truncf %67 : vector<128x128xf32> to vector<128x128xbf16>
    %69 = vector.extract_strided_slice %24 {offsets = [0, 11], sizes = [128, 1], strides = [1, 1]} : vector<128x128xf32> to vector<128x1xf32>
    %70 = vector.broadcast %69 : vector<128x1xf32> to vector<128x128xf32>
    %71 = arith.mulf %0, %70 : vector<128x128xf32>
    %72 = arith.truncf %71 : vector<128x128xf32> to vector<128x128xbf16>
    %73 = vector.extract_strided_slice %24 {offsets = [0, 12], sizes = [128, 1], strides = [1, 1]} : vector<128x128xf32> to vector<128x1xf32>
    %74 = vector.broadcast %73 : vector<128x1xf32> to vector<128x128xf32>
    %75 = arith.mulf %0, %74 : vector<128x128xf32>
    %76 = arith.truncf %75 : vector<128x128xf32> to vector<128x128xbf16>
    %77 = vector.extract_strided_slice %24 {offsets = [0, 13], sizes = [128, 1], strides = [1, 1]} : vector<128x128xf32> to vector<128x1xf32>
    %78 = vector.broadcast %77 : vector<128x1xf32> to vector<128x128xf32>
    %79 = arith.mulf %0, %78 : vector<128x128xf32>
    %80 = arith.truncf %79 : vector<128x128xf32> to vector<128x128xbf16>
    %81 = vector.extract_strided_slice %24 {offsets = [0, 14], sizes = [128, 1], strides = [1, 1]} : vector<128x128xf32> to vector<128x1xf32>
    %82 = vector.broadcast %81 : vector<128x1xf32> to vector<128x128xf32>
    %83 = arith.mulf %0, %82 : vector<128x128xf32>
    %84 = arith.truncf %83 : vector<128x128xf32> to vector<128x128xbf16>
    %85 = vector.extract_strided_slice %24 {offsets = [0, 15], sizes = [128, 1], strides = [1, 1]} : vector<128x128xf32> to vector<128x1xf32>
    %86 = vector.broadcast %85 : vector<128x1xf32> to vector<128x128xf32>
    %87 = arith.mulf %0, %86 : vector<128x128xf32>
    %88 = arith.truncf %87 : vector<128x128xf32> to vector<128x128xbf16>
    %89 = vector.extract_strided_slice %24 {offsets = [0, 16], sizes = [128, 1], strides = [1, 1]} : vector<128x128xf32> to vector<128x1xf32>
    %90 = vector.broadcast %89 : vector<128x1xf32> to vector<128x128xf32>
    %91 = arith.mulf %0, %90 : vector<128x128xf32>
    %92 = arith.truncf %91 : vector<128x128xf32> to vector<128x128xbf16>
    %93 = vector.extract_strided_slice %24 {offsets = [0, 17], sizes = [128, 1], strides = [1, 1]} : vector<128x128xf32> to vector<128x1xf32>
    %94 = vector.broadcast %93 : vector<128x1xf32> to vector<128x128xf32>
    %95 = arith.mulf %0, %94 : vector<128x128xf32>
    %96 = arith.truncf %95 : vector<128x128xf32> to vector<128x128xbf16>
    %97 = vector.extract_strided_slice %24 {offsets = [0, 18], sizes = [128, 1], strides = [1, 1]} : vector<128x128xf32> to vector<128x1xf32>
    %98 = vector.broadcast %97 : vector<128x1xf32> to vector<128x128xf32>
    %99 = arith.mulf %0, %98 : vector<128x128xf32>
    %100 = arith.truncf %99 : vector<128x128xf32> to vector<128x128xbf16>
    %101 = vector.extract_strided_slice %24 {offsets = [0, 19], sizes = [128, 1], strides = [1, 1]} : vector<128x128xf32> to vector<128x1xf32>
    %102 = vector.broadcast %101 : vector<128x1xf32> to vector<128x128xf32>
    %103 = arith.mulf %0, %102 : vector<128x128xf32>
    %104 = arith.truncf %103 : vector<128x128xf32> to vector<128x128xbf16>
    %105 = vector.extract_strided_slice %24 {offsets = [0, 20], sizes = [128, 1], strides = [1, 1]} : vector<128x128xf32> to vector<128x1xf32>
    %106 = vector.broadcast %105 : vector<128x1xf32> to vector<128x128xf32>
    %107 = arith.mulf %0, %106 : vector<128x128xf32>
    %108 = arith.truncf %107 : vector<128x128xf32> to vector<128x128xbf16>
    %109 = vector.extract_strided_slice %24 {offsets = [0, 21], sizes = [128, 1], strides = [1, 1]} : vector<128x128xf32> to vector<128x1xf32>
    %110 = vector.broadcast %109 : vector<128x1xf32> to vector<128x128xf32>
    %111 = arith.mulf %0, %110 : vector<128x128xf32>
    %112 = arith.truncf %111 : vector<128x128xf32> to vector<128x128xbf16>
    %113 = vector.extract_strided_slice %24 {offsets = [0, 22], sizes = [128, 1], strides = [1, 1]} : vector<128x128xf32> to vector<128x1xf32>
    %114 = vector.broadcast %113 : vector<128x1xf32> to vector<128x128xf32>
    %115 = arith.mulf %0, %114 : vector<128x128xf32>
    %116 = arith.truncf %115 : vector<128x128xf32> to vector<128x128xbf16>
    %117 = vector.extract_strided_slice %24 {offsets = [0, 23], sizes = [128, 1], strides = [1, 1]} : vector<128x128xf32> to vector<128x1xf32>
    %118 = vector.broadcast %117 : vector<128x1xf32> to vector<128x128xf32>
    %119 = arith.mulf %0, %118 : vector<128x128xf32>
    %120 = arith.truncf %119 : vector<128x128xf32> to vector<128x128xbf16>
    %121 = vector.extract_strided_slice %24 {offsets = [0, 24], sizes = [128, 1], strides = [1, 1]} : vector<128x128xf32> to vector<128x1xf32>
    %122 = vector.broadcast %121 : vector<128x1xf32> to vector<128x128xf32>
    %123 = arith.mulf %0, %122 : vector<128x128xf32>
    %124 = arith.truncf %123 : vector<128x128xf32> to vector<128x128xbf16>
    %125 = vector.extract_strided_slice %24 {offsets = [0, 25], sizes = [128, 1], strides = [1, 1]} : vector<128x128xf32> to vector<128x1xf32>
    %126 = vector.broadcast %125 : vector<128x1xf32> to vector<128x128xf32>
    %127 = arith.mulf %0, %126 : vector<128x128xf32>
    %128 = arith.truncf %127 : vector<128x128xf32> to vector<128x128xbf16>
    %129 = vector.extract_strided_slice %24 {offsets = [0, 26], sizes = [128, 1], strides = [1, 1]} : vector<128x128xf32> to vector<128x1xf32>
    %130 = vector.broadcast %129 : vector<128x1xf32> to vector<128x128xf32>
    %131 = arith.mulf %0, %130 : vector<128x128xf32>
    %132 = arith.truncf %131 : vector<128x128xf32> to vector<128x128xbf16>
    %133 = vector.extract_strided_slice %24 {offsets = [0, 27], sizes = [128, 1], strides = [1, 1]} : vector<128x128xf32> to vector<128x1xf32>
    %134 = vector.broadcast %133 : vector<128x1xf32> to vector<128x128xf32>
    %135 = arith.mulf %0, %134 : vector<128x128xf32>
    %136 = arith.truncf %135 : vector<128x128xf32> to vector<128x128xbf16>
    %137 = vector.extract_strided_slice %24 {offsets = [0, 28], sizes = [128, 1], strides = [1, 1]} : vector<128x128xf32> to vector<128x1xf32>
    %138 = vector.broadcast %137 : vector<128x1xf32> to vector<128x128xf32>
    %139 = arith.mulf %0, %138 : vector<128x128xf32>
    %140 = arith.truncf %139 : vector<128x128xf32> to vector<128x128xbf16>
    %141 = vector.extract_strided_slice %24 {offsets = [0, 29], sizes = [128, 1], strides = [1, 1]} : vector<128x128xf32> to vector<128x1xf32>
    %142 = vector.broadcast %141 : vector<128x1xf32> to vector<128x128xf32>
    %143 = arith.mulf %0, %142 : vector<128x128xf32>
    %144 = arith.truncf %143 : vector<128x128xf32> to vector<128x128xbf16>
    %145 = vector.extract_strided_slice %24 {offsets = [0, 30], sizes = [128, 1], strides = [1, 1]} : vector<128x128xf32> to vector<128x1xf32>
    %146 = vector.broadcast %145 : vector<128x1xf32> to vector<128x128xf32>
    %147 = arith.mulf %0, %146 : vector<128x128xf32>
    %148 = arith.truncf %147 : vector<128x128xf32> to vector<128x128xbf16>
    %149 = vector.extract_strided_slice %24 {offsets = [0, 31], sizes = [128, 1], strides = [1, 1]} : vector<128x128xf32> to vector<128x1xf32>
    %150 = vector.broadcast %149 : vector<128x1xf32> to vector<128x128xf32>
    %151 = arith.mulf %0, %150 : vector<128x128xf32>
    %152 = arith.truncf %151 : vector<128x128xf32> to vector<128x128xbf16>
    %153 = tpu.concatenate %28, %32, %36, %40, %44, %48, %52, %56, %60, %64, %68, %72, %76, %80, %84, %88 in 1 : vector<128x128xbf16>, vector<128x128xbf16>, vector<128x128xbf16>, vector<128x128xbf16>, vector<128x128xbf16>, vector<128x128xbf16>, vector<128x128xbf16>, vector<128x128xbf16>, vector<128x128xbf16>, vector<128x128xbf16>, vector<128x128xbf16>, vector<128x128xbf16>, vector<128x128xbf16>, vector<128x128xbf16>, vector<128x128xbf16>, vector<128x128xbf16> -> vector<128x2048xbf16>
    %154 = tpu.concatenate %92, %96, %100, %104, %108, %112, %116, %120, %124, %128, %132, %136, %140, %144, %148, %152 in 1 : vector<128x128xbf16>, vector<128x128xbf16>, vector<128x128xbf16>, vector<128x128xbf16>, vector<128x128xbf16>, vector<128x128xbf16>, vector<128x128xbf16>, vector<128x128xbf16>, vector<128x128xbf16>, vector<128x128xbf16>, vector<128x128xbf16>, vector<128x128xbf16>, vector<128x128xbf16>, vector<128x128xbf16>, vector<128x128xbf16>, vector<128x128xbf16> -> vector<128x2048xbf16>
    %155 = tpu.concatenate %153, %154 in 1 : vector<128x2048xbf16>, vector<128x2048xbf16> -> vector<128x4096xbf16>
    %c0_13 = arith.constant 0 : index
    %c0_14 = arith.constant 0 : index
    %156 = vector.load %arg6[%c0_13, %c0_14] : memref<4096x128xbf16, #tpu.memory_space<vmem>>, vector<4096x128xbf16>
    %cst_15 = arith.constant dense<0.000000e+00> : vector<128x128xf32>
    %157 = tpu.matmul %155, %156, %cst_15 {dimension_numbers = #tpu.dot_dimension_numbers<[1], [0], [0], [1], [0, 0, 1, 1], [], []>} : vector<128x4096xbf16>, vector<4096x128xbf16>, vector<128x128xf32> -> vector<128x128xf32>
    %158 = arith.addf %0, %157 : vector<128x128xf32>
    %c0_16 = arith.constant 0 : index
    %c0_17 = arith.constant 0 : index
    %159 = vector.load %arg7[%c0_16, %c0_17] : memref<128x128xf32, #tpu.memory_space<vmem>>, vector<128x128xf32>
    tpu.vector_store %arg7[%c0_16, %c0_17], %158 {strides = array<i32>} : memref<128x128xf32, #tpu.memory_space<vmem>>, vector<128x128xf32>,
    return
  }
  func.func @transform_0(%arg0: i32) -> (i32, i32) {
    %c0_i32 = arith.constant 0 : i32
    %c0_i32_0 = arith.constant 0 : i32
    %c0_i32_1 = arith.constant 0 : i32
    return %c0_i32, %c0_i32_0 : i32, i32
  }
  func.func @transform_1(%arg0: i32) -> (i32, i32) {
    %c0_i32 = arith.constant 0 : i32
    %c0_i32_0 = arith.constant 0 : i32
    %c0_i32_1 = arith.constant 0 : i32
    return %c0_i32, %c0_i32_0 : i32, i32
  }
  func.func @transform_2(%arg0: i32) -> (i32, i32) {
    %c0_i32 = arith.constant 0 : i32
    %c0_i32_0 = arith.constant 0 : i32
    %c0_i32_1 = arith.constant 0 : i32
    return %c0_i32, %c0_i32_0 : i32, i32
  }
  func.func @transform_3(%arg0: i32) -> (i32, i32) {
    %c0_i32 = arith.constant 0 : i32
    %c0_i32_0 = arith.constant 0 : i32
    %c0_i32_1 = arith.constant 0 : i32
    return %c0_i32, %c0_i32_0 : i32, i32
  }
  func.func @transform_4(%arg0: i32) -> (i32, i32) {
    %c0_i32 = arith.constant 0 : i32
    %c0_i32_0 = arith.constant 0 : i32
    %c0_i32_1 = arith.constant 0 : i32
    return %c0_i32, %c0_i32_0 : i32, i32
  }
  func.func @transform_5(%arg0: i32) -> (i32, i32) {
    %c0_i32 = arith.constant 0 : i32
    %c0_i32_0 = arith.constant 0 : i32
    %c0_i32_1 = arith.constant 0 : i32
    return %c0_i32, %c0_i32_0 : i32, i32
  }
  func.func @transform_6(%arg0: i32) -> (i32, i32) {
    %c0_i32 = arith.constant 0 : i32
    %c0_i32_0 = arith.constant 0 : i32
    %c0_i32_1 = arith.constant 0 : i32
    return %c0_i32, %c0_i32_0 : i32, i32
  }
}

</mosaic_0001>

<llo_original>
// kernel: transition_forward.1
$region0: #{transition_forward.1}
  #allocation0 [shape = 'u32[]', space=smem, size = 0x4, offset = 0x4, fixed_abs, tag = 'smem constant byte address 0x4 - core index']
  #allocation1 [shape = 'u32[144,128]{1,0:T(1,128)}', space=vmem, size = 0x12000, scoped, tag = 'internal scratch']
  %s0 = inlined_call_operand.vmem [shape: f32[128,128], index: 0, kind: input, shape index: {}]
  %s1 = inlined_call_operand.hbm [shape: bf16[128,1024], index: 1, kind: input, shape index: {}]
  %s2 = inlined_call_operand.vmem [shape: f32[1,1024], index: 2, kind: input, shape index: {}]
  %s3 = inlined_call_operand.hbm [shape: bf16[1024,128], index: 3, kind: input, shape index: {}]
  %s4 = inlined_call_operand.vmem [shape: f32[1,128], index: 4, kind: input, shape index: {}]
  %s5 = inlined_call_operand.hbm [shape: bf16[4096,128], index: 5, kind: input, shape index: {}]
  %s6 = inlined_call_operand.vmem [shape: f32[128,128], index: 6, kind: output, shape index: {}]
  %s7 = sld [smem:[#allocation0]]
  $region46: #{transition_forward.1} parent=0
    _
  %s9 = ssub.s32 1, %s7
  %s10 = scalar_select 0, %s9, %s7
  $region1: #{transition_forward.1} parent=0
    #allocation2 [shape = 'u8[262144]{0}', space=vmem, size = 0x40000, scoped, tag = 'input window, operand 1, single buffered']
    #allocation3 [shape = 's32[1]{0}', space=sflag, size = 0x4, scoped, tag = 'scoped memory for transition_forward.1']
    #allocation4 [shape = 'u8[262144]{0}', space=vmem, size = 0x40000, scoped, tag = 'input window, operand 3, single buffered']
    #allocation5 [shape = 's32[1]{0}', space=sflag, size = 0x4, scoped, tag = 'scoped memory for transition_forward.1']
    #allocation6 [shape = 'u8[1048576]{0}', space=vmem, size = 0x100000, scoped, tag = 'input window, operand 5, single buffered']
    %11 = vsyncpa [#allocation3], 0
    %12 = vsyncpa [#allocation5], 0
    // Predicated region
    $region2: #{transition_forward.1} parent=1 // pred_check
      _
    $region3: #{transition_forward.1} parent=1 // pred_check_branch
      %14 = sbr.rel (0) target = $region5
    $region4: #{transition_forward.1} parent=1 // pred_region
      _
    $region5: #{transition_forward.1} parent=1 // pred_fallthru
      _
    // Predicated region
    $region6: #{transition_forward.1} parent=1 // pred_check
      _
    $region7: #{transition_forward.1} parent=1 // pred_check_branch
      %16 = sbr.rel (0) target = $region9
    $region8: #{transition_forward.1} parent=1 // pred_region
      %s18 = ssub.s32 8192, 8192
      %19 = vsyncadd [#allocation3], %s18
      %s20 = sshll.u32 [#allocation2], 4
      %s21 = int_to_ptr.vmem [resolvable:$true] %s20
      %26 = dma.hbm_to_vmem [thread:$0]  %s1, 8192, %s21, [#allocation3], 512, 512, 32
    $region9: #{transition_forward.1} parent=1 // pred_fallthru
      _
    // Predicated region
    $region10: #{transition_forward.1} parent=1 // pred_check
      _
    $region11: #{transition_forward.1} parent=1 // pred_check_branch
      %28 = sbr.rel (0) target = $region13
    $region12: #{transition_forward.1} parent=1 // pred_region
      _
    $region13: #{transition_forward.1} parent=1 // pred_fallthru
      _
    // Predicated region
    $region14: #{transition_forward.1} parent=1 // pred_check
      _
    $region15: #{transition_forward.1} parent=1 // pred_check_branch
      %30 = sbr.rel (0) target = $region17
    $region16: #{transition_forward.1} parent=1 // pred_region
      %s32 = ssub.s32 8192, 8192
      %33 = vsyncadd [#allocation5], %s32
      %s34 = sshll.u32 [#allocation4], 4
      %s35 = int_to_ptr.vmem [resolvable:$true] %s34
      %40 = dma.hbm_to_vmem [thread:$0]  %s3, 8192, %s35, [#allocation5], 64, 64, 4
    $region17: #{transition_forward.1} parent=1 // pred_fallthru
      _
    // Predicated region
    $region18: #{transition_forward.1} parent=1 // pred_check
      _
    $region19: #{transition_forward.1} parent=1 // pred_check_branch
      %42 = sbr.rel (0) target = $region21
    $region20: #{transition_forward.1} parent=1 // pred_region
      _
    $region21: #{transition_forward.1} parent=1 // pred_fallthru
      _
    // Predicated region
    $region22: #{transition_forward.1} parent=1 // pred_check
      _
    $region23: #{transition_forward.1} parent=1 // pred_check_branch
      %44 = sbr.rel (0) target = $region25
    $region24: #{transition_forward.1} parent=1 // pred_region
      %s46 = ssub.s32 32768, 32768
      %47 = vsyncadd [#allocation5], %s46
      %s48 = sshll.u32 [#allocation6], 4
      %s49 = int_to_ptr.vmem [resolvable:$true] %s48
      %54 = dma.hbm_to_vmem [thread:$0]  %s5, 32768, %s49, [#allocation5], 64, 64, 4
    $region25: #{transition_forward.1} parent=1 // pred_fallthru
      _
    // Predicated region
    $region26: #{transition_forward.1} parent=1 // pred_check
      _
    $region27: #{transition_forward.1} parent=1 // pred_check_branch
      %56 = sbr.rel (0) target = $region29
    $region28: #{transition_forward.1} parent=1 // pred_region
      %57 = dma.done [#allocation3], 8192
    $region29: #{transition_forward.1} parent=1 // pred_fallthru
      _
    // Predicated region
    $region30: #{transition_forward.1} parent=1 // pred_check
      _
    $region31: #{transition_forward.1} parent=1 // pred_check_branch
      %59 = sbr.rel (0) target = $region33
    $region32: #{transition_forward.1} parent=1 // pred_region
      %60 = dma.done [#allocation5], 8192
    $region33: #{transition_forward.1} parent=1 // pred_fallthru
      _
    // Predicated region
    $region34: #{transition_forward.1} parent=1 // pred_check
      _
    $region35: #{transition_forward.1} parent=1 // pred_check_branch
      %62 = sbr.rel (0) target = $region37
    $region36: #{transition_forward.1} parent=1 // pred_region
      %63 = dma.done [#allocation5], 32768
    $region37: #{transition_forward.1} parent=1 // pred_fallthru
      _
    %v65 = vld [vmem:[%s0] sm:$0xff]
    %v66 = vld [vmem:[%s0 + $0x8] sm:$0xff]
    %v67 = vld [vmem:[%s0 + $0x10] sm:$0xff]
    %v68 = vld [vmem:[%s0 + $0x18] sm:$0xff]
    %v69 = vld [vmem:[%s0 + $0x20] sm:$0xff]
    %v70 = vld [vmem:[%s0 + $0x28] sm:$0xff]
    %v71 = vld [vmem:[%s0 + $0x30] sm:$0xff]
    %v72 = vld [vmem:[%s0 + $0x38] sm:$0xff]
    %v73 = vld [vmem:[%s0 + $0x40] sm:$0xff]
    %v74 = vld [vmem:[%s0 + $0x48] sm:$0xff]
    %v75 = vld [vmem:[%s0 + $0x50] sm:$0xff]
    %v76 = vld [vmem:[%s0 + $0x58] sm:$0xff]
    %v77 = vld [vmem:[%s0 + $0x60] sm:$0xff]
    %v78 = vld [vmem:[%s0 + $0x68] sm:$0xff]
    %v79 = vld [vmem:[%s0 + $0x70] sm:$0xff]
    %v80 = vld [vmem:[%s0 + $0x78] sm:$0xff]
    %v81 = vpack.c.bf16 %v66, %v65
    %v82 = vpack.c.bf16 %v68, %v67
    %v83 = vpack.c.bf16 %v70, %v69
    %v84 = vpack.c.bf16 %v72, %v71
    %v85 = vpack.c.bf16 %v74, %v73
    %v86 = vpack.c.bf16 %v76, %v75
    %v87 = vpack.c.bf16 %v78, %v77
    %v88 = vpack.c.bf16 %v80, %v79
    %v89 = vld [vmem:[#allocation2] sm:$0xff]
    %v90 = vld [vmem:[#allocation2 + $0x8] sm:$0xff]
    %v91 = vld [vmem:[#allocation2 + $0x10] sm:$0xff]
    %v92 = vld [vmem:[#allocation2 + $0x18] sm:$0xff]
    %v93 = vld [vmem:[#allocation2 + $0x20] sm:$0xff]
    %v94 = vld [vmem:[#allocation2 + $0x28] sm:$0xff]
    %v95 = vld [vmem:[#allocation2 + $0x30] sm:$0xff]
    %v96 = vld [vmem:[#allocation2 + $0x38] sm:$0xff]
    %v97 = vld [vmem:[#allocation2 + $0x40] sm:$0xff]
    %v98 = vld [vmem:[#allocation2 + $0x48] sm:$0xff]
    %v99 = vld [vmem:[#allocation2 + $0x50] sm:$0xff]
    %v100 = vld [vmem:[#allocation2 + $0x58] sm:$0xff]
    %v101 = vld [vmem:[#allocation2 + $0x60] sm:$0xff]
    %v102 = vld [vmem:[#allocation2 + $0x68] sm:$0xff]
    %v103 = vld [vmem:[#allocation2 + $0x70] sm:$0xff]
    %v104 = vld [vmem:[#allocation2 + $0x78] sm:$0xff]
    %v105 = vld [vmem:[#allocation2 + $0x80] sm:$0xff]
    %v106 = vld [vmem:[#allocation2 + $0x88] sm:$0xff]
    %v107 = vld [vmem:[#allocation2 + $0x90] sm:$0xff]
    %v108 = vld [vmem:[#allocation2 + $0x98] sm:$0xff]
    %v109 = vld [vmem:[#allocation2 + $0xa0] sm:$0xff]
    %v110 = vld [vmem:[#allocation2 + $0xa8] sm:$0xff]
    %v111 = vld [vmem:[#allocation2 + $0xb0] sm:$0xff]
    %v112 = vld [vmem:[#allocation2 + $0xb8] sm:$0xff]
    %v113 = vld [vmem:[#allocation2 + $0xc0] sm:$0xff]
    %v114 = vld [vmem:[#allocation2 + $0xc8] sm:$0xff]
    %v115 = vld [vmem:[#allocation2 + $0xd0] sm:$0xff]
    %v116 = vld [vmem:[#allocation2 + $0xd8] sm:$0xff]
    %v117 = vld [vmem:[#allocation2 + $0xe0] sm:$0xff]
    %v118 = vld [vmem:[#allocation2 + $0xe8] sm:$0xff]
    %v119 = vld [vmem:[#allocation2 + $0xf0] sm:$0xff]
    %v120 = vld [vmem:[#allocation2 + $0xf8] sm:$0xff]
    %v121 = vld [vmem:[#allocation2 + $0x100] sm:$0xff]
    %v122 = vld [vmem:[#allocation2 + $0x108] sm:$0xff]
    %v123 = vld [vmem:[#allocation2 + $0x110] sm:$0xff]
    %v124 = vld [vmem:[#allocation2 + $0x118] sm:$0xff]
    %v125 = vld [vmem:[#allocation2 + $0x120] sm:$0xff]
    %v126 = vld [vmem:[#allocation2 + $0x128] sm:$0xff]
    %v127 = vld [vmem:[#allocation2 + $0x130] sm:$0xff]
    %v128 = vld [vmem:[#allocation2 + $0x138] sm:$0xff]
    %v129 = vld [vmem:[#allocation2 + $0x140] sm:$0xff]
    %v130 = vld [vmem:[#allocation2 + $0x148] sm:$0xff]
    %v131 = vld [vmem:[#allocation2 + $0x150] sm:$0xff]
    %v132 = vld [vmem:[#allocation2 + $0x158] sm:$0xff]
    %v133 = vld [vmem:[#allocation2 + $0x160] sm:$0xff]
    %v134 = vld [vmem:[#allocation2 + $0x168] sm:$0xff]
    %v135 = vld [vmem:[#allocation2 + $0x170] sm:$0xff]
    %v136 = vld [vmem:[#allocation2 + $0x178] sm:$0xff]
    %v137 = vld [vmem:[#allocation2 + $0x180] sm:$0xff]
    %v138 = vld [vmem:[#allocation2 + $0x188] sm:$0xff]
    %v139 = vld [vmem:[#allocation2 + $0x190] sm:$0xff]
    %v140 = vld [vmem:[#allocation2 + $0x198] sm:$0xff]
    %v141 = vld [vmem:[#allocation2 + $0x1a0] sm:$0xff]
    %v142 = vld [vmem:[#allocation2 + $0x1a8] sm:$0xff]
    %v143 = vld [vmem:[#allocation2 + $0x1b0] sm:$0xff]
    %v144 = vld [vmem:[#allocation2 + $0x1b8] sm:$0xff]
    %v145 = vld [vmem:[#allocation2 + $0x1c0] sm:$0xff]
    %v146 = vld [vmem:[#allocation2 + $0x1c8] sm:$0xff]
    %v147 = vld [vmem:[#allocation2 + $0x1d0] sm:$0xff]
    %v148 = vld [vmem:[#allocation2 + $0x1d8] sm:$0xff]
    %v149 = vld [vmem:[#allocation2 + $0x1e0] sm:$0xff]
    %v150 = vld [vmem:[#allocation2 + $0x1e8] sm:$0xff]
    %v151 = vld [vmem:[#allocation2 + $0x1f0] sm:$0xff]
    %v152 = vld [vmem:[#allocation2 + $0x1f8] sm:$0xff]
    %v153 = vld [vmem:[%s2] sm:$0xff]
    %v155 = vlaneseq
    %v156 = vshrl.u32 %v155, 7
    %v157 = vsub.s32 0, %v156
    %v158 = vrot.slane %v153, %v157
    %v159 = vlaneseq
    %v160 = vshrl.u32 %v159, 7
    %v161 = vsub.s32 1, %v160
    %v162 = vrot.slane %v153, %v161
    %v163 = vlaneseq
    %v164 = vshrl.u32 %v163, 7
    %v165 = vsub.s32 2, %v164
    %v166 = vrot.slane %v153, %v165
    %v167 = vlaneseq
    %v168 = vshrl.u32 %v167, 7
    %v169 = vsub.s32 3, %v168
    %v170 = vrot.slane %v153, %v169
    %v171 = vlaneseq
    %v172 = vshrl.u32 %v171, 7
    %v173 = vsub.s32 4, %v172
    %v174 = vrot.slane %v153, %v173
    %v175 = vlaneseq
    %v176 = vshrl.u32 %v175, 7
    %v177 = vsub.s32 5, %v176
    %v178 = vrot.slane %v153, %v177
    %v179 = vlaneseq
    %v180 = vshrl.u32 %v179, 7
    %v181 = vsub.s32 6, %v180
    %v182 = vrot.slane %v153, %v181
    %v183 = vlaneseq
    %v184 = vshrl.u32 %v183, 7
    %v185 = vsub.s32 7, %v184
    %v186 = vrot.slane %v153, %v185
    %v259 = vunpack.c.l.b16 %v89
    %v260 = vunpack.c.h.b16 %v89
    %v261 = vunpack.c.l.b16 %v90
    %v262 = vunpack.c.h.b16 %v90
    %v263 = vunpack.c.l.b16 %v91
    %v264 = vunpack.c.h.b16 %v91
    %v265 = vunpack.c.l.b16 %v92
    %v266 = vunpack.c.h.b16 %v92
    %v267 = vunpack.c.l.b16 %v93
    %v268 = vunpack.c.h.b16 %v93
    %v269 = vunpack.c.l.b16 %v94
    %v270 = vunpack.c.h.b16 %v94
    %v271 = vunpack.c.l.b16 %v95
    %v272 = vunpack.c.h.b16 %v95
    %v273 = vunpack.c.l.b16 %v96
    %v274 = vunpack.c.h.b16 %v96
    %v275 = vunpack.c.l.b16 %v97
    %v276 = vunpack.c.h.b16 %v97
    %v277 = vunpack.c.l.b16 %v98
    %v278 = vunpack.c.h.b16 %v98
    %v279 = vunpack.c.l.b16 %v99
    %v280 = vunpack.c.h.b16 %v99
    %v281 = vunpack.c.l.b16 %v100
    %v282 = vunpack.c.h.b16 %v100
    %v283 = vunpack.c.l.b16 %v101
    %v284 = vunpack.c.h.b16 %v101
    %v285 = vunpack.c.l.b16 %v102
    %v286 = vunpack.c.h.b16 %v102
    %v287 = vunpack.c.l.b16 %v103
    %v288 = vunpack.c.h.b16 %v103
    %v289 = vunpack.c.l.b16 %v104
    %v290 = vunpack.c.h.b16 %v104
    %v291 = vunpack.c.l.b16 %v105
    %v292 = vunpack.c.h.b16 %v105
    %v293 = vunpack.c.l.b16 %v106
    %v294 = vunpack.c.h.b16 %v106
    %v295 = vunpack.c.l.b16 %v107
    %v296 = vunpack.c.h.b16 %v107
    %v297 = vunpack.c.l.b16 %v108
    %v298 = vunpack.c.h.b16 %v108
    %v299 = vunpack.c.l.b16 %v109
    %v300 = vunpack.c.h.b16 %v109
    %v301 = vunpack.c.l.b16 %v110
    %v302 = vunpack.c.h.b16 %v110
    %v303 = vunpack.c.l.b16 %v111
    %v304 = vunpack.c.h.b16 %v111
    %v305 = vunpack.c.l.b16 %v112
    %v306 = vunpack.c.h.b16 %v112
    %v307 = vunpack.c.l.b16 %v113
    %v308 = vunpack.c.h.b16 %v113
    %v309 = vunpack.c.l.b16 %v114
    %v310 = vunpack.c.h.b16 %v114
    %v311 = vunpack.c.l.b16 %v115
    %v312 = vunpack.c.h.b16 %v115
    %v313 = vunpack.c.l.b16 %v116
    %v314 = vunpack.c.h.b16 %v116
    %v315 = vunpack.c.l.b16 %v117
    %v316 = vunpack.c.h.b16 %v117
    %v317 = vunpack.c.l.b16 %v118
    %v318 = vunpack.c.h.b16 %v118
    %v319 = vunpack.c.l.b16 %v119
    %v320 = vunpack.c.h.b16 %v119
    %v321 = vunpack.c.l.b16 %v120
    %v322 = vunpack.c.h.b16 %v120
    %v323 = vunpack.c.l.b16 %v121
    %v324 = vunpack.c.h.b16 %v121
    %v325 = vunpack.c.l.b16 %v122
    %v326 = vunpack.c.h.b16 %v122
    %v327 = vunpack.c.l.b16 %v123
    %v328 = vunpack.c.h.b16 %v123
    %v329 = vunpack.c.l.b16 %v124
    %v330 = vunpack.c.h.b16 %v124
    %v331 = vunpack.c.l.b16 %v125
    %v332 = vunpack.c.h.b16 %v125
    %v333 = vunpack.c.l.b16 %v126
    %v334 = vunpack.c.h.b16 %v126
    %v335 = vunpack.c.l.b16 %v127
    %v336 = vunpack.c.h.b16 %v127
    %v337 = vunpack.c.l.b16 %v128
    %v338 = vunpack.c.h.b16 %v128
    %v339 = vunpack.c.l.b16 %v129
    %v340 = vunpack.c.h.b16 %v129
    %v341 = vunpack.c.l.b16 %v130
    %v342 = vunpack.c.h.b16 %v130
    %v343 = vunpack.c.l.b16 %v131
    %v344 = vunpack.c.h.b16 %v131
    %v345 = vunpack.c.l.b16 %v132
    %v346 = vunpack.c.h.b16 %v132
    %v347 = vunpack.c.l.b16 %v133
    %v348 = vunpack.c.h.b16 %v133
    %v349 = vunpack.c.l.b16 %v134
    %v350 = vunpack.c.h.b16 %v134
    %v351 = vunpack.c.l.b16 %v135
    %v352 = vunpack.c.h.b16 %v135
    %v353 = vunpack.c.l.b16 %v136
    %v354 = vunpack.c.h.b16 %v136
    %v355 = vunpack.c.l.b16 %v137
    %v356 = vunpack.c.h.b16 %v137
    %v357 = vunpack.c.l.b16 %v138
    %v358 = vunpack.c.h.b16 %v138
    %v359 = vunpack.c.l.b16 %v139
    %v360 = vunpack.c.h.b16 %v139
    %v361 = vunpack.c.l.b16 %v140
    %v362 = vunpack.c.h.b16 %v140
    %v363 = vunpack.c.l.b16 %v141
    %v364 = vunpack.c.h.b16 %v141
    %v365 = vunpack.c.l.b16 %v142
    %v366 = vunpack.c.h.b16 %v142
    %v367 = vunpack.c.l.b16 %v143
    %v368 = vunpack.c.h.b16 %v143
    %v369 = vunpack.c.l.b16 %v144
    %v370 = vunpack.c.h.b16 %v144
    %v371 = vunpack.c.l.b16 %v145
    %v372 = vunpack.c.h.b16 %v145
    %v373 = vunpack.c.l.b16 %v146
    %v374 = vunpack.c.h.b16 %v146
    %v375 = vunpack.c.l.b16 %v147
    %v376 = vunpack.c.h.b16 %v147
    %v377 = vunpack.c.l.b16 %v148
    %v378 = vunpack.c.h.b16 %v148
    %v379 = vunpack.c.l.b16 %v149
    %v380 = vunpack.c.h.b16 %v149
    %v381 = vunpack.c.l.b16 %v150
    %v382 = vunpack.c.h.b16 %v150
    %v383 = vunpack.c.l.b16 %v151
    %v384 = vunpack.c.h.b16 %v151
    %v385 = vunpack.c.l.b16 %v152
    %v386 = vunpack.c.h.b16 %v152
    %v387 = vpack.c.b16 %v267, %v259
    %v388 = vpack.c.b16 %v268, %v260
    %v389 = vpack.c.b16 %v269, %v261
    %v390 = vpack.c.b16 %v270, %v262
    %v391 = vpack.c.b16 %v271, %v263
    %v392 = vpack.c.b16 %v272, %v264
    %v393 = vpack.c.b16 %v273, %v265
    %v394 = vpack.c.b16 %v274, %v266
    %v395 = vpack.c.b16 %v283, %v275
    %v396 = vpack.c.b16 %v284, %v276
    %v397 = vpack.c.b16 %v285, %v277
    %v398 = vpack.c.b16 %v286, %v278
    %v399 = vpack.c.b16 %v287, %v279
    %v400 = vpack.c.b16 %v288, %v280
    %v401 = vpack.c.b16 %v289, %v281
    %v402 = vpack.c.b16 %v290, %v282
    %v403 = vpack.c.b16 %v299, %v291
    %v404 = vpack.c.b16 %v300, %v292
    %v405 = vpack.c.b16 %v301, %v293
    %v406 = vpack.c.b16 %v302, %v294
    %v407 = vpack.c.b16 %v303, %v295
    %v408 = vpack.c.b16 %v304, %v296
    %v409 = vpack.c.b16 %v305, %v297
    %v410 = vpack.c.b16 %v306, %v298
    %v411 = vpack.c.b16 %v315, %v307
    %v412 = vpack.c.b16 %v316, %v308
    %v413 = vpack.c.b16 %v317, %v309
    %v414 = vpack.c.b16 %v318, %v310
    %v415 = vpack.c.b16 %v319, %v311
    %v416 = vpack.c.b16 %v320, %v312
    %v417 = vpack.c.b16 %v321, %v313
    %v418 = vpack.c.b16 %v322, %v314
    %v419 = vpack.c.b16 %v331, %v323
    %v420 = vpack.c.b16 %v332, %v324
    %v421 = vpack.c.b16 %v333, %v325
    %v422 = vpack.c.b16 %v334, %v326
    %v423 = vpack.c.b16 %v335, %v327
    %v424 = vpack.c.b16 %v336, %v328
    %v425 = vpack.c.b16 %v337, %v329
    %v426 = vpack.c.b16 %v338, %v330
    %v427 = vpack.c.b16 %v347, %v339
    %v428 = vpack.c.b16 %v348, %v340
    %v429 = vpack.c.b16 %v349, %v341
    %v430 = vpack.c.b16 %v350, %v342
    %v431 = vpack.c.b16 %v351, %v343
    %v432 = vpack.c.b16 %v352, %v344
    %v433 = vpack.c.b16 %v353, %v345
    %v434 = vpack.c.b16 %v354, %v346
    %v435 = vpack.c.b16 %v363, %v355
    %v436 = vpack.c.b16 %v364, %v356
    %v437 = vpack.c.b16 %v365, %v357
    %v438 = vpack.c.b16 %v366, %v358
    %v439 = vpack.c.b16 %v367, %v359
    %v440 = vpack.c.b16 %v368, %v360
    %v441 = vpack.c.b16 %v369, %v361
    %v442 = vpack.c.b16 %v370, %v362
    %v443 = vpack.c.b16 %v379, %v371
    %v444 = vpack.c.b16 %v380, %v372
    %v445 = vpack.c.b16 %v381, %v373
    %v446 = vpack.c.b16 %v382, %v374
    %v447 = vpack.c.b16 %v383, %v375
    %v448 = vpack.c.b16 %v384, %v376
    %v449 = vpack.c.b16 %v385, %v377
    %v450 = vpack.c.b16 %v386, %v378
    %515 = vmatprep.subr.bf16.mxu0 %v388
    %516 = vmatpush1.bf16.msra.mxu0 %v387
    %517 = vmatprep.subr.bf16.mxu0 %v396
    %518 = vmatpush1.bf16.msra.mxu0 %v395
    %519 = vmatprep.subr.bf16.mxu0 %v404
    %520 = vmatpush1.bf16.msra.mxu0 %v403
    %521 = vmatprep.subr.bf16.mxu0 %v412
    %522 = vmatpush1.bf16.msra.mxu0 %v411
    %523 = vmatprep.subr.bf16.mxu0 %v420
    %524 = vmatpush1.bf16.msra.mxu0 %v419
    %525 = vmatprep.subr.bf16.mxu0 %v428
    %526 = vmatpush1.bf16.msra.mxu0 %v427
    %527 = vmatprep.subr.bf16.mxu0 %v436
    %528 = vmatpush1.bf16.msra.mxu0 %v435
    %529 = vmatprep.subr.bf16.mxu0 %v444
    %530 = vmatpush1.bf16.msra.mxu0 %v443
    %531 = vmatprep.subr.bf16.mxu0 0
    %532 = vmatpush1.bf16.msra.mxu0 0
    %533 = vmatprep.subr.bf16.mxu0 0
    %534 = vmatpush1.bf16.msra.mxu0 0
    %535 = vmatprep.subr.bf16.mxu0 0
    %536 = vmatpush1.bf16.msra.mxu0 0
    %537 = vmatprep.subr.bf16.mxu0 0
    %538 = vmatpush1.bf16.msra.mxu0 0
    %539 = vmatprep.subr.bf16.mxu0 0
    %540 = vmatpush1.bf16.msra.mxu0 0
    %541 = vmatprep.subr.bf16.mxu0 0
    %542 = vmatpush1.bf16.msra.mxu0 0
    %543 = vmatprep.subr.bf16.mxu0 0
    %544 = vmatpush1.bf16.msra.mxu0 0
    %545 = vmatprep.subr.bf16.mxu0 0
    %546 = vmatpush1.bf16.msra.mxu0 0
    %547 = vmatprep.mubr.bf16.mxu0 0
    %548 = vmatmul.mubr.bf16.gmra.mrb[0].mxu0 %v81
    %v549 = vpop.f32.mrb[0].mxu0
    %v550 = vadd.f32 %v158, %v549
    %v551 = vpop.f32.mrb[0].mxu0
    %v552 = vadd.f32 %v162, %v551
    %v553 = vpop.f32.mrb[0].mxu0
    %v554 = vadd.f32 %v158, %v553
    %v555 = vpop.f32.mrb[0].mxu0
    %v556 = vadd.f32 %v162, %v555
    %557 = vmatprep.mubr.bf16.mxu0 0
    %558 = vmatmul.mubr.bf16.gmra.mrb[0].mxu0 %v82
    %v559 = vpop.f32.mrb[0].mxu0
    %v560 = vadd.f32 %v158, %v559
    %v561 = vpop.f32.mrb[0].mxu0
    %v562 = vadd.f32 %v162, %v561
    %v563 = vpop.f32.mrb[0].mxu0
    %v564 = vadd.f32 %v158, %v563
    %v565 = vpop.f32.mrb[0].mxu0
    %v566 = vadd.f32 %v162, %v565
    %567 = vmatprep.mubr.bf16.mxu0 0
    %568 = vmatmul.mubr.bf16.gmra.mrb[0].mxu0 %v83
    %v569 = vpop.f32.mrb[0].mxu0
    %v570 = vadd.f32 %v158, %v569
    %v571 = vpop.f32.mrb[0].mxu0
    %v572 = vadd.f32 %v162, %v571
    %v573 = vpop.f32.mrb[0].mxu0
    %v574 = vadd.f32 %v158, %v573
    %v575 = vpop.f32.mrb[0].mxu0
    %v576 = vadd.f32 %v162, %v575
    %577 = vmatprep.mubr.bf16.mxu0 0
    %578 = vmatmul.mubr.bf16.gmra.mrb[0].mxu0 %v84
    %v579 = vpop.f32.mrb[0].mxu0
    %v580 = vadd.f32 %v158, %v579
    %v581 = vpop.f32.mrb[0].mxu0
    %v582 = vadd.f32 %v162, %v581
    %v583 = vpop.f32.mrb[0].mxu0
    %v584 = vadd.f32 %v158, %v583
    %v585 = vpop.f32.mrb[0].mxu0
    %v586 = vadd.f32 %v162, %v585
    %587 = vmatprep.mubr.bf16.mxu0 0
    %588 = vmatmul.mubr.bf16.gmra.mrb[0].mxu0 %v85
    %v589 = vpop.f32.mrb[0].mxu0
    %v590 = vadd.f32 %v158, %v589
    %v591 = vpop.f32.mrb[0].mxu0
    %v592 = vadd.f32 %v162, %v591
    %v593 = vpop.f32.mrb[0].mxu0
    %v594 = vadd.f32 %v158, %v593
    %v595 = vpop.f32.mrb[0].mxu0
    %v596 = vadd.f32 %v162, %v595
    %597 = vmatprep.mubr.bf16.mxu0 0
    %598 = vmatmul.mubr.bf16.gmra.mrb[0].mxu0 %v86
    %v599 = vpop.f32.mrb[0].mxu0
    %v600 = vadd.f32 %v158, %v599
    %v601 = vpop.f32.mrb[0].mxu0
    %v602 = vadd.f32 %v162, %v601
    %v603 = vpop.f32.mrb[0].mxu0
    %v604 = vadd.f32 %v158, %v603
    %v605 = vpop.f32.mrb[0].mxu0
    %v606 = vadd.f32 %v162, %v605
    %607 = vmatprep.mubr.bf16.mxu0 0
    %608 = vmatmul.mubr.bf16.gmra.mrb[0].mxu0 %v87
    %v609 = vpop.f32.mrb[0].mxu0
    %v610 = vadd.f32 %v158, %v609
    %v611 = vpop.f32.mrb[0].mxu0
    %v612 = vadd.f32 %v162, %v611
    %v613 = vpop.f32.mrb[0].mxu0
    %v614 = vadd.f32 %v158, %v613
    %v615 = vpop.f32.mrb[0].mxu0
    %v616 = vadd.f32 %v162, %v615
    %617 = vmatprep.mubr.bf16.mxu0 0
    %618 = vmatmul.mubr.bf16.gmra.mrb[0].mxu0 %v88
    %v619 = vpop.f32.mrb[0].mxu0
    %v620 = vadd.f32 %v158, %v619
    %v621 = vpop.f32.mrb[0].mxu0
    %v622 = vadd.f32 %v162, %v621
    %v623 = vpop.f32.mrb[0].mxu0
    %v624 = vadd.f32 %v158, %v623
    %v625 = vpop.f32.mrb[0].mxu0
    %v626 = vadd.f32 %v162, %v625
    %627 = vdwg.mxu0
    %628 = vmatprep.subr.bf16.mxu0 %v390
    %629 = vmatpush1.bf16.msra.mxu0 %v389
    %630 = vmatprep.subr.bf16.mxu0 %v398
    %631 = vmatpush1.bf16.msra.mxu0 %v397
    %632 = vmatprep.subr.bf16.mxu0 %v406
    %633 = vmatpush1.bf16.msra.mxu0 %v405
    %634 = vmatprep.subr.bf16.mxu0 %v414
    %635 = vmatpush1.bf16.msra.mxu0 %v413
    %636 = vmatprep.subr.bf16.mxu0 %v422
    %637 = vmatpush1.bf16.msra.mxu0 %v421
    %638 = vmatprep.subr.bf16.mxu0 %v430
    %639 = vmatpush1.bf16.msra.mxu0 %v429
    %640 = vmatprep.subr.bf16.mxu0 %v438
    %641 = vmatpush1.bf16.msra.mxu0 %v437
    %642 = vmatprep.subr.bf16.mxu0 %v446
    %643 = vmatpush1.bf16.msra.mxu0 %v445
    %644 = vmatprep.subr.bf16.mxu0 0
    %645 = vmatpush1.bf16.msra.mxu0 0
    %646 = vmatprep.subr.bf16.mxu0 0
    %647 = vmatpush1.bf16.msra.mxu0 0
    %648 = vmatprep.subr.bf16.mxu0 0
    %649 = vmatpush1.bf16.msra.mxu0 0
    %650 = vmatprep.subr.bf16.mxu0 0
    %651 = vmatpush1.bf16.msra.mxu0 0
    %652 = vmatprep.subr.bf16.mxu0 0
    %653 = vmatpush1.bf16.msra.mxu0 0
    %654 = vmatprep.subr.bf16.mxu0 0
    %655 = vmatpush1.bf16.msra.mxu0 0
    %656 = vmatprep.subr.bf16.mxu0 0
    %657 = vmatpush1.bf16.msra.mxu0 0
    %658 = vmatprep.subr.bf16.mxu0 0
    %659 = vmatpush1.bf16.msra.mxu0 0
    %660 = vmatprep.mubr.bf16.mxu0 0
    %661 = vmatmul.mubr.bf16.gmra.mrb[0].mxu0 %v81
    %v662 = vpop.f32.mrb[0].mxu0
    %v663 = vadd.f32 %v166, %v662
    %v664 = vpop.f32.mrb[0].mxu0
    %v665 = vadd.f32 %v170, %v664
    %v666 = vpop.f32.mrb[0].mxu0
    %v667 = vadd.f32 %v166, %v666
    %v668 = vpop.f32.mrb[0].mxu0
    %v669 = vadd.f32 %v170, %v668
    %670 = vmatprep.mubr.bf16.mxu0 0
    %671 = vmatmul.mubr.bf16.gmra.mrb[0].mxu0 %v82
    %v672 = vpop.f32.mrb[0].mxu0
    %v673 = vadd.f32 %v166, %v672
    %v674 = vpop.f32.mrb[0].mxu0
    %v675 = vadd.f32 %v170, %v674
    %v676 = vpop.f32.mrb[0].mxu0
    %v677 = vadd.f32 %v166, %v676
    %v678 = vpop.f32.mrb[0].mxu0
    %v679 = vadd.f32 %v170, %v678
    %680 = vmatprep.mubr.bf16.mxu0 0
    %681 = vmatmul.mubr.bf16.gmra.mrb[0].mxu0 %v83
    %v682 = vpop.f32.mrb[0].mxu0
    %v683 = vadd.f32 %v166, %v682
    %v684 = vpop.f32.mrb[0].mxu0
    %v685 = vadd.f32 %v170, %v684
    %v686 = vpop.f32.mrb[0].mxu0
    %v687 = vadd.f32 %v166, %v686
    %v688 = vpop.f32.mrb[0].mxu0
    %v689 = vadd.f32 %v170, %v688
    %690 = vmatprep.mubr.bf16.mxu0 0
    %691 = vmatmul.mubr.bf16.gmra.mrb[0].mxu0 %v84
    %v692 = vpop.f32.mrb[0].mxu0
    %v693 = vadd.f32 %v166, %v692
    %v694 = vpop.f32.mrb[0].mxu0
    %v695 = vadd.f32 %v170, %v694
    %v696 = vpop.f32.mrb[0].mxu0
    %v697 = vadd.f32 %v166, %v696
    %v698 = vpop.f32.mrb[0].mxu0
    %v699 = vadd.f32 %v170, %v698
    %700 = vmatprep.mubr.bf16.mxu0 0
    %701 = vmatmul.mubr.bf16.gmra.mrb[0].mxu0 %v85
    %v702 = vpop.f32.mrb[0].mxu0
    %v703 = vadd.f32 %v166, %v702
    %v704 = vpop.f32.mrb[0].mxu0
    %v705 = vadd.f32 %v170, %v704
    %v706 = vpop.f32.mrb[0].mxu0
    %v707 = vadd.f32 %v166, %v706
    %v708 = vpop.f32.mrb[0].mxu0
    %v709 = vadd.f32 %v170, %v708
    %710 = vmatprep.mubr.bf16.mxu0 0
    %711 = vmatmul.mubr.bf16.gmra.mrb[0].mxu0 %v86
    %v712 = vpop.f32.mrb[0].mxu0
    %v713 = vadd.f32 %v166, %v712
    %v714 = vpop.f32.mrb[0].mxu0
    %v715 = vadd.f32 %v170, %v714
    %v716 = vpop.f32.mrb[0].mxu0
    %v717 = vadd.f32 %v166, %v716
    %v718 = vpop.f32.mrb[0].mxu0
    %v719 = vadd.f32 %v170, %v718
    %720 = vmatprep.mubr.bf16.mxu0 0
    %721 = vmatmul.mubr.bf16.gmra.mrb[0].mxu0 %v87
    %v722 = vpop.f32.mrb[0].mxu0
    %v723 = vadd.f32 %v166, %v722
    %v724 = vpop.f32.mrb[0].mxu0
    %v725 = vadd.f32 %v170, %v724
    %v726 = vpop.f32.mrb[0].mxu0
    %v727 = vadd.f32 %v166, %v726
    %v728 = vpop.f32.mrb[0].mxu0
    %v729 = vadd.f32 %v170, %v728
    %730 = vmatprep.mubr.bf16.mxu0 0
    %731 = vmatmul.mubr.bf16.gmra.mrb[0].mxu0 %v88
    %v732 = vpop.f32.mrb[0].mxu0
    %v733 = vadd.f32 %v166, %v732
    %v734 = vpop.f32.mrb[0].mxu0
    %v735 = vadd.f32 %v170, %v734
    %v736 = vpop.f32.mrb[0].mxu0
    %v737 = vadd.f32 %v166, %v736
    %v738 = vpop.f32.mrb[0].mxu0
    %v739 = vadd.f32 %v170, %v738
    %740 = vdwg.mxu0
    %741 = vmatprep.subr.bf16.mxu0 %v392
    %742 = vmatpush1.bf16.msra.mxu0 %v391
    %743 = vmatprep.subr.bf16.mxu0 %v400
    %744 = vmatpush1.bf16.msra.mxu0 %v399
    %745 = vmatprep.subr.bf16.mxu0 %v408
    %746 = vmatpush1.bf16.msra.mxu0 %v407
    %747 = vmatprep.subr.bf16.mxu0 %v416
    %748 = vmatpush1.bf16.msra.mxu0 %v415
    %749 = vmatprep.subr.bf16.mxu0 %v424
    %750 = vmatpush1.bf16.msra.mxu0 %v423
    %751 = vmatprep.subr.bf16.mxu0 %v432
    %752 = vmatpush1.bf16.msra.mxu0 %v431
    %753 = vmatprep.subr.bf16.mxu0 %v440
    %754 = vmatpush1.bf16.msra.mxu0 %v439
    %755 = vmatprep.subr.bf16.mxu0 %v448
    %756 = vmatpush1.bf16.msra.mxu0 %v447
    %757 = vmatprep.subr.bf16.mxu0 0
    %758 = vmatpush1.bf16.msra.mxu0 0
    %759 = vmatprep.subr.bf16.mxu0 0
    %760 = vmatpush1.bf16.msra.mxu0 0
    %761 = vmatprep.subr.bf16.mxu0 0
    %762 = vmatpush1.bf16.msra.mxu0 0
    %763 = vmatprep.subr.bf16.mxu0 0
    %764 = vmatpush1.bf16.msra.mxu0 0
    %765 = vmatprep.subr.bf16.mxu0 0
    %766 = vmatpush1.bf16.msra.mxu0 0
    %767 = vmatprep.subr.bf16.mxu0 0
    %768 = vmatpush1.bf16.msra.mxu0 0
    %769 = vmatprep.subr.bf16.mxu0 0
    %770 = vmatpush1.bf16.msra.mxu0 0
    %771 = vmatprep.subr.bf16.mxu0 0
    %772 = vmatpush1.bf16.msra.mxu0 0
    %773 = vmatprep.mubr.bf16.mxu0 0
    %774 = vmatmul.mubr.bf16.gmra.mrb[0].mxu0 %v81
    %v775 = vpop.f32.mrb[0].mxu0
    %v776 = vadd.f32 %v174, %v775
    %v777 = vpop.f32.mrb[0].mxu0
    %v778 = vadd.f32 %v178, %v777
    %v779 = vpop.f32.mrb[0].mxu0
    %v780 = vadd.f32 %v174, %v779
    %v781 = vpop.f32.mrb[0].mxu0
    %v782 = vadd.f32 %v178, %v781
    %783 = vmatprep.mubr.bf16.mxu0 0
    %784 = vmatmul.mubr.bf16.gmra.mrb[0].mxu0 %v82
    %v785 = vpop.f32.mrb[0].mxu0
    %v786 = vadd.f32 %v174, %v785
    %v787 = vpop.f32.mrb[0].mxu0
    %v788 = vadd.f32 %v178, %v787
    %v789 = vpop.f32.mrb[0].mxu0
    %v790 = vadd.f32 %v174, %v789
    %v791 = vpop.f32.mrb[0].mxu0
    %v792 = vadd.f32 %v178, %v791
    %793 = vmatprep.mubr.bf16.mxu0 0
    %794 = vmatmul.mubr.bf16.gmra.mrb[0].mxu0 %v83
    %v795 = vpop.f32.mrb[0].mxu0
    %v796 = vadd.f32 %v174, %v795
    %v797 = vpop.f32.mrb[0].mxu0
    %v798 = vadd.f32 %v178, %v797
    %v799 = vpop.f32.mrb[0].mxu0
    %v800 = vadd.f32 %v174, %v799
    %v801 = vpop.f32.mrb[0].mxu0
    %v802 = vadd.f32 %v178, %v801
    %803 = vmatprep.mubr.bf16.mxu0 0
    %804 = vmatmul.mubr.bf16.gmra.mrb[0].mxu0 %v84
    %v805 = vpop.f32.mrb[0].mxu0
    %v806 = vadd.f32 %v174, %v805
    %v807 = vpop.f32.mrb[0].mxu0
    %v808 = vadd.f32 %v178, %v807
    %v809 = vpop.f32.mrb[0].mxu0
    %v810 = vadd.f32 %v174, %v809
    %v811 = vpop.f32.mrb[0].mxu0
    %v812 = vadd.f32 %v178, %v811
    %813 = vmatprep.mubr.bf16.mxu0 0
    %814 = vmatmul.mubr.bf16.gmra.mrb[0].mxu0 %v85
    %v815 = vpop.f32.mrb[0].mxu0
    %v816 = vadd.f32 %v174, %v815
    %v817 = vpop.f32.mrb[0].mxu0
    %v818 = vadd.f32 %v178, %v817
    %v819 = vpop.f32.mrb[0].mxu0
    %v820 = vadd.f32 %v174, %v819
    %v821 = vpop.f32.mrb[0].mxu0
    %v822 = vadd.f32 %v178, %v821
    %823 = vmatprep.mubr.bf16.mxu0 0
    %824 = vmatmul.mubr.bf16.gmra.mrb[0].mxu0 %v86
    %v825 = vpop.f32.mrb[0].mxu0
    %v826 = vadd.f32 %v174, %v825
    %v827 = vpop.f32.mrb[0].mxu0
    %v828 = vadd.f32 %v178, %v827
    %v829 = vpop.f32.mrb[0].mxu0
    %v830 = vadd.f32 %v174, %v829
    %v831 = vpop.f32.mrb[0].mxu0
    %v832 = vadd.f32 %v178, %v831
    %833 = vmatprep.mubr.bf16.mxu0 0
    %834 = vmatmul.mubr.bf16.gmra.mrb[0].mxu0 %v87
    %v835 = vpop.f32.mrb[0].mxu0
    %v836 = vadd.f32 %v174, %v835
    %v837 = vpop.f32.mrb[0].mxu0
    %v838 = vadd.f32 %v178, %v837
    %v839 = vpop.f32.mrb[0].mxu0
    %v840 = vadd.f32 %v174, %v839
    %v841 = vpop.f32.mrb[0].mxu0
    %v842 = vadd.f32 %v178, %v841
    %843 = vmatprep.mubr.bf16.mxu0 0
    %844 = vmatmul.mubr.bf16.gmra.mrb[0].mxu0 %v88
    %v845 = vpop.f32.mrb[0].mxu0
    %v846 = vadd.f32 %v174, %v845
    %v847 = vpop.f32.mrb[0].mxu0
    %v848 = vadd.f32 %v178, %v847
    %v849 = vpop.f32.mrb[0].mxu0
    %v850 = vadd.f32 %v174, %v849
    %v851 = vpop.f32.mrb[0].mxu0
    %v852 = vadd.f32 %v178, %v851
    %853 = vdwg.mxu0
    %854 = vmatprep.subr.bf16.mxu0 %v394
    %855 = vmatpush1.bf16.msra.mxu0 %v393
    %856 = vmatprep.subr.bf16.mxu0 %v402
    %857 = vmatpush1.bf16.msra.mxu0 %v401
    %858 = vmatprep.subr.bf16.mxu0 %v410
    %859 = vmatpush1.bf16.msra.mxu0 %v409
    %860 = vmatprep.subr.bf16.mxu0 %v418
    %861 = vmatpush1.bf16.msra.mxu0 %v417
    %862 = vmatprep.subr.bf16.mxu0 %v426
    %863 = vmatpush1.bf16.msra.mxu0 %v425
    %864 = vmatprep.subr.bf16.mxu0 %v434
    %865 = vmatpush1.bf16.msra.mxu0 %v433
    %866 = vmatprep.subr.bf16.mxu0 %v442
    %867 = vmatpush1.bf16.msra.mxu0 %v441
    %868 = vmatprep.subr.bf16.mxu0 %v450
    %869 = vmatpush1.bf16.msra.mxu0 %v449
    %870 = vmatprep.subr.bf16.mxu0 0
    %871 = vmatpush1.bf16.msra.mxu0 0
    %872 = vmatprep.subr.bf16.mxu0 0
    %873 = vmatpush1.bf16.msra.mxu0 0
    %874 = vmatprep.subr.bf16.mxu0 0
    %875 = vmatpush1.bf16.msra.mxu0 0
    %876 = vmatprep.subr.bf16.mxu0 0
    %877 = vmatpush1.bf16.msra.mxu0 0
    %878 = vmatprep.subr.bf16.mxu0 0
    %879 = vmatpush1.bf16.msra.mxu0 0
    %880 = vmatprep.subr.bf16.mxu0 0
    %881 = vmatpush1.bf16.msra.mxu0 0
    %882 = vmatprep.subr.bf16.mxu0 0
    %883 = vmatpush1.bf16.msra.mxu0 0
    %884 = vmatprep.subr.bf16.mxu0 0
    %885 = vmatpush1.bf16.msra.mxu0 0
    %886 = vmatprep.mubr.bf16.mxu0 0
    %887 = vmatmul.mubr.bf16.gmra.mrb[0].mxu0 %v81
    %v888 = vpop.f32.mrb[0].mxu0
    %v889 = vadd.f32 %v182, %v888
    %v890 = vpop.f32.mrb[0].mxu0
    %v891 = vadd.f32 %v186, %v890
    %v892 = vpop.f32.mrb[0].mxu0
    %v893 = vadd.f32 %v182, %v892
    %v894 = vpop.f32.mrb[0].mxu0
    %v895 = vadd.f32 %v186, %v894
    %896 = vmatprep.mubr.bf16.mxu0 0
    %897 = vmatmul.mubr.bf16.gmra.mrb[0].mxu0 %v82
    %v898 = vpop.f32.mrb[0].mxu0
    %v899 = vadd.f32 %v182, %v898
    %v900 = vpop.f32.mrb[0].mxu0
    %v901 = vadd.f32 %v186, %v900
    %v902 = vpop.f32.mrb[0].mxu0
    %v903 = vadd.f32 %v182, %v902
    %v904 = vpop.f32.mrb[0].mxu0
    %v905 = vadd.f32 %v186, %v904
    %906 = vmatprep.mubr.bf16.mxu0 0
    %907 = vmatmul.mubr.bf16.gmra.mrb[0].mxu0 %v83
    %v908 = vpop.f32.mrb[0].mxu0
    %v909 = vadd.f32 %v182, %v908
    %v910 = vpop.f32.mrb[0].mxu0
    %v911 = vadd.f32 %v186, %v910
    %v912 = vpop.f32.mrb[0].mxu0
    %v913 = vadd.f32 %v182, %v912
    %v914 = vpop.f32.mrb[0].mxu0
    %v915 = vadd.f32 %v186, %v914
    %916 = vmatprep.mubr.bf16.mxu0 0
    %917 = vmatmul.mubr.bf16.gmra.mrb[0].mxu0 %v84
    %v918 = vpop.f32.mrb[0].mxu0
    %v919 = vadd.f32 %v182, %v918
    %v920 = vpop.f32.mrb[0].mxu0
    %v921 = vadd.f32 %v186, %v920
    %v922 = vpop.f32.mrb[0].mxu0
    %v923 = vadd.f32 %v182, %v922
    %v924 = vpop.f32.mrb[0].mxu0
    %v925 = vadd.f32 %v186, %v924
    %926 = vmatprep.mubr.bf16.mxu0 0
    %927 = vmatmul.mubr.bf16.gmra.mrb[0].mxu0 %v85
    %v928 = vpop.f32.mrb[0].mxu0
    %v929 = vadd.f32 %v182, %v928
    %v930 = vpop.f32.mrb[0].mxu0
    %v931 = vadd.f32 %v186, %v930
    %v932 = vpop.f32.mrb[0].mxu0
    %v933 = vadd.f32 %v182, %v932
    %v934 = vpop.f32.mrb[0].mxu0
    %v935 = vadd.f32 %v186, %v934
    %936 = vmatprep.mubr.bf16.mxu0 0
    %937 = vmatmul.mubr.bf16.gmra.mrb[0].mxu0 %v86
    %v938 = vpop.f32.mrb[0].mxu0
    %v939 = vadd.f32 %v182, %v938
    %v940 = vpop.f32.mrb[0].mxu0
    %v941 = vadd.f32 %v186, %v940
    %v942 = vpop.f32.mrb[0].mxu0
    %v943 = vadd.f32 %v182, %v942
    %v944 = vpop.f32.mrb[0].mxu0
    %v945 = vadd.f32 %v186, %v944
    %946 = vmatprep.mubr.bf16.mxu0 0
    %947 = vmatmul.mubr.bf16.gmra.mrb[0].mxu0 %v87
    %v948 = vpop.f32.mrb[0].mxu0
    %v949 = vadd.f32 %v182, %v948
    %v950 = vpop.f32.mrb[0].mxu0
    %v951 = vadd.f32 %v186, %v950
    %v952 = vpop.f32.mrb[0].mxu0
    %v953 = vadd.f32 %v182, %v952
    %v954 = vpop.f32.mrb[0].mxu0
    %v955 = vadd.f32 %v186, %v954
    %956 = vmatprep.mubr.bf16.mxu0 0
    %957 = vmatmul.mubr.bf16.gmra.mrb[0].mxu0 %v88
    %v958 = vpop.f32.mrb[0].mxu0
    %v959 = vadd.f32 %v182, %v958
    %v960 = vpop.f32.mrb[0].mxu0
    %v961 = vadd.f32 %v186, %v960
    %v962 = vpop.f32.mrb[0].mxu0
    %v963 = vadd.f32 %v182, %v962
    %v964 = vpop.f32.mrb[0].mxu0
    %v965 = vadd.f32 %v186, %v964
    %966 = vdwg.mxu0
    %v967 = vmax.f32 %v550, 0.0
    %v968 = vmax.f32 %v552, 0.0
    %v969 = vmax.f32 %v663, 0.0
    %v970 = vmax.f32 %v665, 0.0
    %v971 = vmax.f32 %v776, 0.0
    %v972 = vmax.f32 %v778, 0.0
    %v973 = vmax.f32 %v889, 0.0
    %v974 = vmax.f32 %v891, 0.0
    %v975 = vmax.f32 %v554, 0.0
    %v976 = vmax.f32 %v556, 0.0
    %v977 = vmax.f32 %v667, 0.0
    %v978 = vmax.f32 %v669, 0.0
    %v979 = vmax.f32 %v780, 0.0
    %v980 = vmax.f32 %v782, 0.0
    %v981 = vmax.f32 %v893, 0.0
    %v982 = vmax.f32 %v895, 0.0
    %v983 = vmax.f32 %v560, 0.0
    %v984 = vmax.f32 %v562, 0.0
    %v985 = vmax.f32 %v673, 0.0
    %v986 = vmax.f32 %v675, 0.0
    %v987 = vmax.f32 %v786, 0.0
    %v988 = vmax.f32 %v788, 0.0
    %v989 = vmax.f32 %v899, 0.0
    %v990 = vmax.f32 %v901, 0.0
    %v991 = vmax.f32 %v564, 0.0
    %v992 = vmax.f32 %v566, 0.0
    %v993 = vmax.f32 %v677, 0.0
    %v994 = vmax.f32 %v679, 0.0
    %v995 = vmax.f32 %v790, 0.0
    %v996 = vmax.f32 %v792, 0.0
    %v997 = vmax.f32 %v903, 0.0
    %v998 = vmax.f32 %v905, 0.0
    %v999 = vmax.f32 %v570, 0.0
    %v1000 = vmax.f32 %v572, 0.0
    %v1001 = vmax.f32 %v683, 0.0
    %v1002 = vmax.f32 %v685, 0.0
    %v1003 = vmax.f32 %v796, 0.0
    %v1004 = vmax.f32 %v798, 0.0
    %v1005 = vmax.f32 %v909, 0.0
    %v1006 = vmax.f32 %v911, 0.0
    %v1007 = vmax.f32 %v574, 0.0
    %v1008 = vmax.f32 %v576, 0.0
    %v1009 = vmax.f32 %v687, 0.0
    %v1010 = vmax.f32 %v689, 0.0
    %v1011 = vmax.f32 %v800, 0.0
    %v1012 = vmax.f32 %v802, 0.0
    %v1013 = vmax.f32 %v913, 0.0
    %v1014 = vmax.f32 %v915, 0.0
    %v1015 = vmax.f32 %v580, 0.0
    %v1016 = vmax.f32 %v582, 0.0
    %v1017 = vmax.f32 %v693, 0.0
    %v1018 = vmax.f32 %v695, 0.0
    %v1019 = vmax.f32 %v806, 0.0
    %v1020 = vmax.f32 %v808, 0.0
    %v1021 = vmax.f32 %v919, 0.0
    %v1022 = vmax.f32 %v921, 0.0
    %v1023 = vmax.f32 %v584, 0.0
    %v1024 = vmax.f32 %v586, 0.0
    %v1025 = vmax.f32 %v697, 0.0
    %v1026 = vmax.f32 %v699, 0.0
    %v1027 = vmax.f32 %v810, 0.0
    %v1028 = vmax.f32 %v812, 0.0
    %v1029 = vmax.f32 %v923, 0.0
    %v1030 = vmax.f32 %v925, 0.0
    %v1031 = vmax.f32 %v590, 0.0
    %v1032 = vmax.f32 %v592, 0.0
    %v1033 = vmax.f32 %v703, 0.0
    %v1034 = vmax.f32 %v705, 0.0
    %v1035 = vmax.f32 %v816, 0.0
    %v1036 = vmax.f32 %v818, 0.0
    %v1037 = vmax.f32 %v929, 0.0
    %v1038 = vmax.f32 %v931, 0.0
    %v1039 = vmax.f32 %v594, 0.0
    %v1040 = vmax.f32 %v596, 0.0
    %v1041 = vmax.f32 %v707, 0.0
    %v1042 = vmax.f32 %v709, 0.0
    %v1043 = vmax.f32 %v820, 0.0
    %v1044 = vmax.f32 %v822, 0.0
    %v1045 = vmax.f32 %v933, 0.0
    %v1046 = vmax.f32 %v935, 0.0
    %v1047 = vmax.f32 %v600, 0.0
    %v1048 = vmax.f32 %v602, 0.0
    %v1049 = vmax.f32 %v713, 0.0
    %v1050 = vmax.f32 %v715, 0.0
    %v1051 = vmax.f32 %v826, 0.0
    %v1052 = vmax.f32 %v828, 0.0
    %v1053 = vmax.f32 %v939, 0.0
    %v1054 = vmax.f32 %v941, 0.0
    %v1055 = vmax.f32 %v604, 0.0
    %v1056 = vmax.f32 %v606, 0.0
    %v1057 = vmax.f32 %v717, 0.0
    %v1058 = vmax.f32 %v719, 0.0
    %v1059 = vmax.f32 %v830, 0.0
    %v1060 = vmax.f32 %v832, 0.0
    %v1061 = vmax.f32 %v943, 0.0
    %v1062 = vmax.f32 %v945, 0.0
    %v1063 = vmax.f32 %v610, 0.0
    %v1064 = vmax.f32 %v612, 0.0
    %v1065 = vmax.f32 %v723, 0.0
    %v1066 = vmax.f32 %v725, 0.0
    %v1067 = vmax.f32 %v836, 0.0
    %v1068 = vmax.f32 %v838, 0.0
    %v1069 = vmax.f32 %v949, 0.0
    %v1070 = vmax.f32 %v951, 0.0
    %v1071 = vmax.f32 %v614, 0.0
    %v1072 = vmax.f32 %v616, 0.0
    %v1073 = vmax.f32 %v727, 0.0
    %v1074 = vmax.f32 %v729, 0.0
    %v1075 = vmax.f32 %v840, 0.0
    %v1076 = vmax.f32 %v842, 0.0
    %v1077 = vmax.f32 %v953, 0.0
    %v1078 = vmax.f32 %v955, 0.0
    %v1079 = vmax.f32 %v620, 0.0
    %v1080 = vmax.f32 %v622, 0.0
    %v1081 = vmax.f32 %v733, 0.0
    %v1082 = vmax.f32 %v735, 0.0
    %v1083 = vmax.f32 %v846, 0.0
    %v1084 = vmax.f32 %v848, 0.0
    %v1085 = vmax.f32 %v959, 0.0
    %v1086 = vmax.f32 %v961, 0.0
    %v1087 = vmax.f32 %v624, 0.0
    %v1088 = vmax.f32 %v626, 0.0
    %v1089 = vmax.f32 %v737, 0.0
    %v1090 = vmax.f32 %v739, 0.0
    %v1091 = vmax.f32 %v850, 0.0
    %v1092 = vmax.f32 %v852, 0.0
    %v1093 = vmax.f32 %v963, 0.0
    %v1094 = vmax.f32 %v965, 0.0
    %v1095 = vpack.c.bf16 %v975, %v967
    %v1096 = vpack.c.bf16 %v976, %v968
    %v1097 = vpack.c.bf16 %v977, %v969
    %v1098 = vpack.c.bf16 %v978, %v970
    %v1099 = vpack.c.bf16 %v979, %v971
    %v1100 = vpack.c.bf16 %v980, %v972
    %v1101 = vpack.c.bf16 %v981, %v973
    %v1102 = vpack.c.bf16 %v982, %v974
    %v1103 = vpack.c.bf16 %v991, %v983
    %v1104 = vpack.c.bf16 %v992, %v984
    %v1105 = vpack.c.bf16 %v993, %v985
    %v1106 = vpack.c.bf16 %v994, %v986
    %v1107 = vpack.c.bf16 %v995, %v987
    %v1108 = vpack.c.bf16 %v996, %v988
    %v1109 = vpack.c.bf16 %v997, %v989
    %v1110 = vpack.c.bf16 %v998, %v990
    %v1111 = vpack.c.bf16 %v1007, %v999
    %v1112 = vpack.c.bf16 %v1008, %v1000
    %v1113 = vpack.c.bf16 %v1009, %v1001
    %v1114 = vpack.c.bf16 %v1010, %v1002
    %v1115 = vpack.c.bf16 %v1011, %v1003
    %v1116 = vpack.c.bf16 %v1012, %v1004
    %v1117 = vpack.c.bf16 %v1013, %v1005
    %v1118 = vpack.c.bf16 %v1014, %v1006
    %v1119 = vpack.c.bf16 %v1023, %v1015
    %v1120 = vpack.c.bf16 %v1024, %v1016
    %v1121 = vpack.c.bf16 %v1025, %v1017
    %v1122 = vpack.c.bf16 %v1026, %v1018
    %v1123 = vpack.c.bf16 %v1027, %v1019
    %v1124 = vpack.c.bf16 %v1028, %v1020
    %v1125 = vpack.c.bf16 %v1029, %v1021
    %v1126 = vpack.c.bf16 %v1030, %v1022
    %v1127 = vpack.c.bf16 %v1039, %v1031
    %v1128 = vpack.c.bf16 %v1040, %v1032
    %v1129 = vpack.c.bf16 %v1041, %v1033
    %v1130 = vpack.c.bf16 %v1042, %v1034
    %v1131 = vpack.c.bf16 %v1043, %v1035
    %v1132 = vpack.c.bf16 %v1044, %v1036
    %v1133 = vpack.c.bf16 %v1045, %v1037
    %v1134 = vpack.c.bf16 %v1046, %v1038
    %v1135 = vpack.c.bf16 %v1055, %v1047
    %v1136 = vpack.c.bf16 %v1056, %v1048
    %v1137 = vpack.c.bf16 %v1057, %v1049
    %v1138 = vpack.c.bf16 %v1058, %v1050
    %v1139 = vpack.c.bf16 %v1059, %v1051
    %v1140 = vpack.c.bf16 %v1060, %v1052
    %v1141 = vpack.c.bf16 %v1061, %v1053
    %v1142 = vpack.c.bf16 %v1062, %v1054
    %v1143 = vpack.c.bf16 %v1071, %v1063
    %v1144 = vpack.c.bf16 %v1072, %v1064
    %v1145 = vpack.c.bf16 %v1073, %v1065
    %v1146 = vpack.c.bf16 %v1074, %v1066
    %v1147 = vpack.c.bf16 %v1075, %v1067
    %v1148 = vpack.c.bf16 %v1076, %v1068
    %v1149 = vpack.c.bf16 %v1077, %v1069
    %v1150 = vpack.c.bf16 %v1078, %v1070
    %v1151 = vpack.c.bf16 %v1087, %v1079
    %v1152 = vpack.c.bf16 %v1088, %v1080
    %v1153 = vpack.c.bf16 %v1089, %v1081
    %v1154 = vpack.c.bf16 %v1090, %v1082
    %v1155 = vpack.c.bf16 %v1091, %v1083
    %v1156 = vpack.c.bf16 %v1092, %v1084
    %v1157 = vpack.c.bf16 %v1093, %v1085
    %v1158 = vpack.c.bf16 %v1094, %v1086
    %v1159 = vld [vmem:[#allocation4] sm:$0xf]
    %v1160 = vld [vmem:[#allocation4 + $0x4] sm:$0xf]
    %v1161 = vld [vmem:[#allocation4 + $0x8] sm:$0xf]
    %v1162 = vld [vmem:[#allocation4 + $0xc] sm:$0xf]
    %v1163 = vld [vmem:[#allocation4 + $0x10] sm:$0xf]
    %v1164 = vld [vmem:[#allocation4 + $0x14] sm:$0xf]
    %v1165 = vld [vmem:[#allocation4 + $0x18] sm:$0xf]
    %v1166 = vld [vmem:[#allocation4 + $0x1c] sm:$0xf]
    %v1167 = vld [vmem:[#allocation4 + $0x20] sm:$0xf]
    %v1168 = vld [vmem:[#allocation4 + $0x24] sm:$0xf]
    %v1169 = vld [vmem:[#allocation4 + $0x28] sm:$0xf]
    %v1170 = vld [vmem:[#allocation4 + $0x2c] sm:$0xf]
    %v1171 = vld [vmem:[#allocation4 + $0x30] sm:$0xf]
    %v1172 = vld [vmem:[#allocation4 + $0x34] sm:$0xf]
    %v1173 = vld [vmem:[#allocation4 + $0x38] sm:$0xf]
    %v1174 = vld [vmem:[#allocation4 + $0x3c] sm:$0xf]
    %v1175 = vld [vmem:[#allocation4 + $0x40] sm:$0xf]
    %v1176 = vld [vmem:[#allocation4 + $0x44] sm:$0xf]
    %v1177 = vld [vmem:[#allocation4 + $0x48] sm:$0xf]
    %v1178 = vld [vmem:[#allocation4 + $0x4c] sm:$0xf]
    %v1179 = vld [vmem:[#allocation4 + $0x50] sm:$0xf]
    %v1180 = vld [vmem:[#allocation4 + $0x54] sm:$0xf]
    %v1181 = vld [vmem:[#allocation4 + $0x58] sm:$0xf]
    %v1182 = vld [vmem:[#allocation4 + $0x5c] sm:$0xf]
    %v1183 = vld [vmem:[#allocation4 + $0x60] sm:$0xf]
    %v1184 = vld [vmem:[#allocation4 + $0x64] sm:$0xf]
    %v1185 = vld [vmem:[#allocation4 + $0x68] sm:$0xf]
    %v1186 = vld [vmem:[#allocation4 + $0x6c] sm:$0xf]
    %v1187 = vld [vmem:[#allocation4 + $0x70] sm:$0xf]
    %v1188 = vld [vmem:[#allocation4 + $0x74] sm:$0xf]
    %v1189 = vld [vmem:[#allocation4 + $0x78] sm:$0xf]
    %v1190 = vld [vmem:[#allocation4 + $0x7c] sm:$0xf]
    %v1191 = vld [vmem:[#allocation4 + $0x80] sm:$0xf]
    %v1192 = vld [vmem:[#allocation4 + $0x84] sm:$0xf]
    %v1193 = vld [vmem:[#allocation4 + $0x88] sm:$0xf]
    %v1194 = vld [vmem:[#allocation4 + $0x8c] sm:$0xf]
    %v1195 = vld [vmem:[#allocation4 + $0x90] sm:$0xf]
    %v1196 = vld [vmem:[#allocation4 + $0x94] sm:$0xf]
    %v1197 = vld [vmem:[#allocation4 + $0x98] sm:$0xf]
    %v1198 = vld [vmem:[#allocation4 + $0x9c] sm:$0xf]
    %v1199 = vld [vmem:[#allocation4 + $0xa0] sm:$0xf]
    %v1200 = vld [vmem:[#allocation4 + $0xa4] sm:$0xf]
    %v1201 = vld [vmem:[#allocation4 + $0xa8] sm:$0xf]
    %v1202 = vld [vmem:[#allocation4 + $0xac] sm:$0xf]
    %v1203 = vld [vmem:[#allocation4 + $0xb0] sm:$0xf]
    %v1204 = vld [vmem:[#allocation4 + $0xb4] sm:$0xf]
    %v1205 = vld [vmem:[#allocation4 + $0xb8] sm:$0xf]
    %v1206 = vld [vmem:[#allocation4 + $0xbc] sm:$0xf]
    %v1207 = vld [vmem:[#allocation4 + $0xc0] sm:$0xf]
    %v1208 = vld [vmem:[#allocation4 + $0xc4] sm:$0xf]
    %v1209 = vld [vmem:[#allocation4 + $0xc8] sm:$0xf]
    %v1210 = vld [vmem:[#allocation4 + $0xcc] sm:$0xf]
    %v1211 = vld [vmem:[#allocation4 + $0xd0] sm:$0xf]
    %v1212 = vld [vmem:[#allocation4 + $0xd4] sm:$0xf]
    %v1213 = vld [vmem:[#allocation4 + $0xd8] sm:$0xf]
    %v1214 = vld [vmem:[#allocation4 + $0xdc] sm:$0xf]
    %v1215 = vld [vmem:[#allocation4 + $0xe0] sm:$0xf]
    %v1216 = vld [vmem:[#allocation4 + $0xe4] sm:$0xf]
    %v1217 = vld [vmem:[#allocation4 + $0xe8] sm:$0xf]
    %v1218 = vld [vmem:[#allocation4 + $0xec] sm:$0xf]
    %v1219 = vld [vmem:[#allocation4 + $0xf0] sm:$0xf]
    %v1220 = vld [vmem:[#allocation4 + $0xf4] sm:$0xf]
    %v1221 = vld [vmem:[#allocation4 + $0xf8] sm:$0xf]
    %v1222 = vld [vmem:[#allocation4 + $0xfc] sm:$0xf]
    %v1223 = vld [vmem:[#allocation4 + $0x100] sm:$0xf]
    %v1224 = vld [vmem:[#allocation4 + $0x104] sm:$0xf]
    %v1225 = vld [vmem:[#allocation4 + $0x108] sm:$0xf]
    %v1226 = vld [vmem:[#allocation4 + $0x10c] sm:$0xf]
    %v1227 = vld [vmem:[#allocation4 + $0x110] sm:$0xf]
    %v1228 = vld [vmem:[#allocation4 + $0x114] sm:$0xf]
    %v1229 = vld [vmem:[#allocation4 + $0x118] sm:$0xf]
    %v1230 = vld [vmem:[#allocation4 + $0x11c] sm:$0xf]
    %v1231 = vld [vmem:[#allocation4 + $0x120] sm:$0xf]
    %v1232 = vld [vmem:[#allocation4 + $0x124] sm:$0xf]
    %v1233 = vld [vmem:[#allocation4 + $0x128] sm:$0xf]
    %v1234 = vld [vmem:[#allocation4 + $0x12c] sm:$0xf]
    %v1235 = vld [vmem:[#allocation4 + $0x130] sm:$0xf]
    %v1236 = vld [vmem:[#allocation4 + $0x134] sm:$0xf]
    %v1237 = vld [vmem:[#allocation4 + $0x138] sm:$0xf]
    %v1238 = vld [vmem:[#allocation4 + $0x13c] sm:$0xf]
    %v1239 = vld [vmem:[#allocation4 + $0x140] sm:$0xf]
    %v1240 = vld [vmem:[#allocation4 + $0x144] sm:$0xf]
    %v1241 = vld [vmem:[#allocation4 + $0x148] sm:$0xf]
    %v1242 = vld [vmem:[#allocation4 + $0x14c] sm:$0xf]
    %v1243 = vld [vmem:[#allocation4 + $0x150] sm:$0xf]
    %v1244 = vld [vmem:[#allocation4 + $0x154] sm:$0xf]
    %v1245 = vld [vmem:[#allocation4 + $0x158] sm:$0xf]
    %v1246 = vld [vmem:[#allocation4 + $0x15c] sm:$0xf]
    %v1247 = vld [vmem:[#allocation4 + $0x160] sm:$0xf]
    %v1248 = vld [vmem:[#allocation4 + $0x164] sm:$0xf]
    %v1249 = vld [vmem:[#allocation4 + $0x168] sm:$0xf]
    %v1250 = vld [vmem:[#allocation4 + $0x16c] sm:$0xf]
    %v1251 = vld [vmem:[#allocation4 + $0x170] sm:$0xf]
    %v1252 = vld [vmem:[#allocation4 + $0x174] sm:$0xf]
    %v1253 = vld [vmem:[#allocation4 + $0x178] sm:$0xf]
    %v1254 = vld [vmem:[#allocation4 + $0x17c] sm:$0xf]
    %v1255 = vld [vmem:[#allocation4 + $0x180] sm:$0xf]
    %v1256 = vld [vmem:[#allocation4 + $0x184] sm:$0xf]
    %v1257 = vld [vmem:[#allocation4 + $0x188] sm:$0xf]
    %v1258 = vld [vmem:[#allocation4 + $0x18c] sm:$0xf]
    %v1259 = vld [vmem:[#allocation4 + $0x190] sm:$0xf]
    %v1260 = vld [vmem:[#allocation4 + $0x194] sm:$0xf]
    %v1261 = vld [vmem:[#allocation4 + $0x198] sm:$0xf]
    %v1262 = vld [vmem:[#allocation4 + $0x19c] sm:$0xf]
    %v1263 = vld [vmem:[#allocation4 + $0x1a0] sm:$0xf]
    %v1264 = vld [vmem:[#allocation4 + $0x1a4] sm:$0xf]
    %v1265 = vld [vmem:[#allocation4 + $0x1a8] sm:$0xf]
    %v1266 = vld [vmem:[#allocation4 + $0x1ac] sm:$0xf]
    %v1267 = vld [vmem:[#allocation4 + $0x1b0] sm:$0xf]
    %v1268 = vld [vmem:[#allocation4 + $0x1b4] sm:$0xf]
    %v1269 = vld [vmem:[#allocation4 + $0x1b8] sm:$0xf]
    %v1270 = vld [vmem:[#allocation4 + $0x1bc] sm:$0xf]
    %v1271 = vld [vmem:[#allocation4 + $0x1c0] sm:$0xf]
    %v1272 = vld [vmem:[#allocation4 + $0x1c4] sm:$0xf]
    %v1273 = vld [vmem:[#allocation4 + $0x1c8] sm:$0xf]
    %v1274 = vld [vmem:[#allocation4 + $0x1cc] sm:$0xf]
    %v1275 = vld [vmem:[#allocation4 + $0x1d0] sm:$0xf]
    %v1276 = vld [vmem:[#allocation4 + $0x1d4] sm:$0xf]
    %v1277 = vld [vmem:[#allocation4 + $0x1d8] sm:$0xf]
    %v1278 = vld [vmem:[#allocation4 + $0x1dc] sm:$0xf]
    %v1279 = vld [vmem:[#allocation4 + $0x1e0] sm:$0xf]
    %v1280 = vld [vmem:[#allocation4 + $0x1e4] sm:$0xf]
    %v1281 = vld [vmem:[#allocation4 + $0x1e8] sm:$0xf]
    %v1282 = vld [vmem:[#allocation4 + $0x1ec] sm:$0xf]
    %v1283 = vld [vmem:[#allocation4 + $0x1f0] sm:$0xf]
    %v1284 = vld [vmem:[#allocation4 + $0x1f4] sm:$0xf]
    %v1285 = vld [vmem:[#allocation4 + $0x1f8] sm:$0xf]
    %v1286 = vld [vmem:[#allocation4 + $0x1fc] sm:$0xf]
    %v1287 = vld [vmem:[%s4] sm:$0x1]
    %v1289 = vlaneseq
    %v1290 = vshrl.u32 %v1289, 7
    %v1291 = vsub.s32 0, %v1290
    %v1292 = vrot.slane %v1287, %v1291
    %v1422 = vunpack.c.l.b16 %v1159
    %v1423 = vunpack.c.l.b16 %v1160
    %v1424 = vunpack.c.l.b16 %v1161
    %v1425 = vunpack.c.l.b16 %v1162
    %v1426 = vunpack.c.l.b16 %v1163
    %v1427 = vunpack.c.l.b16 %v1164
    %v1428 = vunpack.c.l.b16 %v1165
    %v1429 = vunpack.c.l.b16 %v1166
    %v1430 = vunpack.c.l.b16 %v1167
    %v1431 = vunpack.c.l.b16 %v1168
    %v1432 = vunpack.c.l.b16 %v1169
    %v1433 = vunpack.c.l.b16 %v1170
    %v1434 = vunpack.c.l.b16 %v1171
    %v1435 = vunpack.c.l.b16 %v1172
    %v1436 = vunpack.c.l.b16 %v1173
    %v1437 = vunpack.c.l.b16 %v1174
    %v1438 = vunpack.c.l.b16 %v1175
    %v1439 = vunpack.c.l.b16 %v1176
    %v1440 = vunpack.c.l.b16 %v1177
    %v1441 = vunpack.c.l.b16 %v1178
    %v1442 = vunpack.c.l.b16 %v1179
    %v1443 = vunpack.c.l.b16 %v1180
    %v1444 = vunpack.c.l.b16 %v1181
    %v1445 = vunpack.c.l.b16 %v1182
    %v1446 = vunpack.c.l.b16 %v1183
    %v1447 = vunpack.c.l.b16 %v1184
    %v1448 = vunpack.c.l.b16 %v1185
    %v1449 = vunpack.c.l.b16 %v1186
    %v1450 = vunpack.c.l.b16 %v1187
    %v1451 = vunpack.c.l.b16 %v1188
    %v1452 = vunpack.c.l.b16 %v1189
    %v1453 = vunpack.c.l.b16 %v1190
    %v1454 = vunpack.c.l.b16 %v1191
    %v1455 = vunpack.c.l.b16 %v1192
    %v1456 = vunpack.c.l.b16 %v1193
    %v1457 = vunpack.c.l.b16 %v1194
    %v1458 = vunpack.c.l.b16 %v1195
    %v1459 = vunpack.c.l.b16 %v1196
    %v1460 = vunpack.c.l.b16 %v1197
    %v1461 = vunpack.c.l.b16 %v1198
    %v1462 = vunpack.c.l.b16 %v1199
    %v1463 = vunpack.c.l.b16 %v1200
    %v1464 = vunpack.c.l.b16 %v1201
    %v1465 = vunpack.c.l.b16 %v1202
    %v1466 = vunpack.c.l.b16 %v1203
    %v1467 = vunpack.c.l.b16 %v1204
    %v1468 = vunpack.c.l.b16 %v1205
    %v1469 = vunpack.c.l.b16 %v1206
    %v1470 = vunpack.c.l.b16 %v1207
    %v1471 = vunpack.c.l.b16 %v1208
    %v1472 = vunpack.c.l.b16 %v1209
    %v1473 = vunpack.c.l.b16 %v1210
    %v1474 = vunpack.c.l.b16 %v1211
    %v1475 = vunpack.c.l.b16 %v1212
    %v1476 = vunpack.c.l.b16 %v1213
    %v1477 = vunpack.c.l.b16 %v1214
    %v1478 = vunpack.c.l.b16 %v1215
    %v1479 = vunpack.c.l.b16 %v1216
    %v1480 = vunpack.c.l.b16 %v1217
    %v1481 = vunpack.c.l.b16 %v1218
    %v1482 = vunpack.c.l.b16 %v1219
    %v1483 = vunpack.c.l.b16 %v1220
    %v1484 = vunpack.c.l.b16 %v1221
    %v1485 = vunpack.c.l.b16 %v1222
    %v1486 = vunpack.c.l.b16 %v1223
    %v1487 = vunpack.c.l.b16 %v1224
    %v1488 = vunpack.c.l.b16 %v1225
    %v1489 = vunpack.c.l.b16 %v1226
    %v1490 = vunpack.c.l.b16 %v1227
    %v1491 = vunpack.c.l.b16 %v1228
    %v1492 = vunpack.c.l.b16 %v1229
    %v1493 = vunpack.c.l.b16 %v1230
    %v1494 = vunpack.c.l.b16 %v1231
    %v1495 = vunpack.c.l.b16 %v1232
    %v1496 = vunpack.c.l.b16 %v1233
    %v1497 = vunpack.c.l.b16 %v1234
    %v1498 = vunpack.c.l.b16 %v1235
    %v1499 = vunpack.c.l.b16 %v1236
    %v1500 = vunpack.c.l.b16 %v1237
    %v1501 = vunpack.c.l.b16 %v1238
    %v1502 = vunpack.c.l.b16 %v1239
    %v1503 = vunpack.c.l.b16 %v1240
    %v1504 = vunpack.c.l.b16 %v1241
    %v1505 = vunpack.c.l.b16 %v1242
    %v1506 = vunpack.c.l.b16 %v1243
    %v1507 = vunpack.c.l.b16 %v1244
    %v1508 = vunpack.c.l.b16 %v1245
    %v1509 = vunpack.c.l.b16 %v1246
    %v1510 = vunpack.c.l.b16 %v1247
    %v1511 = vunpack.c.l.b16 %v1248
    %v1512 = vunpack.c.l.b16 %v1249
    %v1513 = vunpack.c.l.b16 %v1250
    %v1514 = vunpack.c.l.b16 %v1251
    %v1515 = vunpack.c.l.b16 %v1252
    %v1516 = vunpack.c.l.b16 %v1253
    %v1517 = vunpack.c.l.b16 %v1254
    %v1518 = vunpack.c.l.b16 %v1255
    %v1519 = vunpack.c.l.b16 %v1256
    %v1520 = vunpack.c.l.b16 %v1257
    %v1521 = vunpack.c.l.b16 %v1258
    %v1522 = vunpack.c.l.b16 %v1259
    %v1523 = vunpack.c.l.b16 %v1260
    %v1524 = vunpack.c.l.b16 %v1261
    %v1525 = vunpack.c.l.b16 %v1262
    %v1526 = vunpack.c.l.b16 %v1263
    %v1527 = vunpack.c.l.b16 %v1264
    %v1528 = vunpack.c.l.b16 %v1265
    %v1529 = vunpack.c.l.b16 %v1266
    %v1530 = vunpack.c.l.b16 %v1267
    %v1531 = vunpack.c.l.b16 %v1268
    %v1532 = vunpack.c.l.b16 %v1269
    %v1533 = vunpack.c.l.b16 %v1270
    %v1534 = vunpack.c.l.b16 %v1271
    %v1535 = vunpack.c.l.b16 %v1272
    %v1536 = vunpack.c.l.b16 %v1273
    %v1537 = vunpack.c.l.b16 %v1274
    %v1538 = vunpack.c.l.b16 %v1275
    %v1539 = vunpack.c.l.b16 %v1276
    %v1540 = vunpack.c.l.b16 %v1277
    %v1541 = vunpack.c.l.b16 %v1278
    %v1542 = vunpack.c.l.b16 %v1279
    %v1543 = vunpack.c.l.b16 %v1280
    %v1544 = vunpack.c.l.b16 %v1281
    %v1545 = vunpack.c.l.b16 %v1282
    %v1546 = vunpack.c.l.b16 %v1283
    %v1547 = vunpack.c.l.b16 %v1284
    %v1548 = vunpack.c.l.b16 %v1285
    %v1549 = vunpack.c.l.b16 %v1286
    %v1550 = vpack.c.b16 %v1423, %v1422
    %v1551 = vpack.c.b16 %v1425, %v1424
    %v1552 = vpack.c.b16 %v1427, %v1426
    %v1553 = vpack.c.b16 %v1429, %v1428
    %v1554 = vpack.c.b16 %v1431, %v1430
    %v1555 = vpack.c.b16 %v1433, %v1432
    %v1556 = vpack.c.b16 %v1435, %v1434
    %v1557 = vpack.c.b16 %v1437, %v1436
    %v1558 = vpack.c.b16 %v1439, %v1438
    %v1559 = vpack.c.b16 %v1441, %v1440
    %v1560 = vpack.c.b16 %v1443, %v1442
    %v1561 = vpack.c.b16 %v1445, %v1444
    %v1562 = vpack.c.b16 %v1447, %v1446
    %v1563 = vpack.c.b16 %v1449, %v1448
    %v1564 = vpack.c.b16 %v1451, %v1450
    %v1565 = vpack.c.b16 %v1453, %v1452
    %v1566 = vpack.c.b16 %v1455, %v1454
    %v1567 = vpack.c.b16 %v1457, %v1456
    %v1568 = vpack.c.b16 %v1459, %v1458
    %v1569 = vpack.c.b16 %v1461, %v1460
    %v1570 = vpack.c.b16 %v1463, %v1462
    %v1571 = vpack.c.b16 %v1465, %v1464
    %v1572 = vpack.c.b16 %v1467, %v1466
    %v1573 = vpack.c.b16 %v1469, %v1468
    %v1574 = vpack.c.b16 %v1471, %v1470
    %v1575 = vpack.c.b16 %v1473, %v1472
    %v1576 = vpack.c.b16 %v1475, %v1474
    %v1577 = vpack.c.b16 %v1477, %v1476
    %v1578 = vpack.c.b16 %v1479, %v1478
    %v1579 = vpack.c.b16 %v1481, %v1480
    %v1580 = vpack.c.b16 %v1483, %v1482
    %v1581 = vpack.c.b16 %v1485, %v1484
    %v1582 = vpack.c.b16 %v1487, %v1486
    %v1583 = vpack.c.b16 %v1489, %v1488
    %v1584 = vpack.c.b16 %v1491, %v1490
    %v1585 = vpack.c.b16 %v1493, %v1492
    %v1586 = vpack.c.b16 %v1495, %v1494
    %v1587 = vpack.c.b16 %v1497, %v1496
    %v1588 = vpack.c.b16 %v1499, %v1498
    %v1589 = vpack.c.b16 %v1501, %v1500
    %v1590 = vpack.c.b16 %v1503, %v1502
    %v1591 = vpack.c.b16 %v1505, %v1504
    %v1592 = vpack.c.b16 %v1507, %v1506
    %v1593 = vpack.c.b16 %v1509, %v1508
    %v1594 = vpack.c.b16 %v1511, %v1510
    %v1595 = vpack.c.b16 %v1513, %v1512
    %v1596 = vpack.c.b16 %v1515, %v1514
    %v1597 = vpack.c.b16 %v1517, %v1516
    %v1598 = vpack.c.b16 %v1519, %v1518
    %v1599 = vpack.c.b16 %v1521, %v1520
    %v1600 = vpack.c.b16 %v1523, %v1522
    %v1601 = vpack.c.b16 %v1525, %v1524
    %v1602 = vpack.c.b16 %v1527, %v1526
    %v1603 = vpack.c.b16 %v1529, %v1528
    %v1604 = vpack.c.b16 %v1531, %v1530
    %v1605 = vpack.c.b16 %v1533, %v1532
    %v1606 = vpack.c.b16 %v1535, %v1534
    %v1607 = vpack.c.b16 %v1537, %v1536
    %v1608 = vpack.c.b16 %v1539, %v1538
    %v1609 = vpack.c.b16 %v1541, %v1540
    %v1610 = vpack.c.b16 %v1543, %v1542
    %v1611 = vpack.c.b16 %v1545, %v1544
    %v1612 = vpack.c.b16 %v1547, %v1546
    %v1613 = vpack.c.b16 %v1549, %v1548
    %1678 = vmatprep.subr.bf16.mxu0 0
    %1679 = vmatpush1.bf16.msra.mxu0 %v1550
    %1680 = vmatprep.subr.bf16.mxu0 0
    %1681 = vmatpush1.bf16.msra.mxu0 %v1551
    %1682 = vmatprep.subr.bf16.mxu0 0
    %1683 = vmatpush1.bf16.msra.mxu0 %v1552
    %1684 = vmatprep.subr.bf16.mxu0 0
    %1685 = vmatpush1.bf16.msra.mxu0 %v1553
    %1686 = vmatprep.subr.bf16.mxu0 0
    %1687 = vmatpush1.bf16.msra.mxu0 %v1554
    %1688 = vmatprep.subr.bf16.mxu0 0
    %1689 = vmatpush1.bf16.msra.mxu0 %v1555
    %1690 = vmatprep.subr.bf16.mxu0 0
    %1691 = vmatpush1.bf16.msra.mxu0 %v1556
    %1692 = vmatprep.subr.bf16.mxu0 0
    %1693 = vmatpush1.bf16.msra.mxu0 %v1557
    %1694 = vmatprep.subr.bf16.mxu0 0
    %1695 = vmatpush1.bf16.msra.mxu0 %v1558
    %1696 = vmatprep.subr.bf16.mxu0 0
    %1697 = vmatpush1.bf16.msra.mxu0 %v1559
    %1698 = vmatprep.subr.bf16.mxu0 0
    %1699 = vmatpush1.bf16.msra.mxu0 %v1560
    %1700 = vmatprep.subr.bf16.mxu0 0
    %1701 = vmatpush1.bf16.msra.mxu0 %v1561
    %1702 = vmatprep.subr.bf16.mxu0 0
    %1703 = vmatpush1.bf16.msra.mxu0 %v1562
    %1704 = vmatprep.subr.bf16.mxu0 0
    %1705 = vmatpush1.bf16.msra.mxu0 %v1563
    %1706 = vmatprep.subr.bf16.mxu0 0
    %1707 = vmatpush1.bf16.msra.mxu0 %v1564
    %1708 = vmatprep.subr.bf16.mxu0 0
    %1709 = vmatpush1.bf16.msra.mxu0 %v1565
    %1710 = vmatprep.mubr.bf16.mxu0 %v1096
    %1711 = vmatmul.mubr.bf16.gmra.mrb[0].mxu0 %v1095
    %v1712 = vpop.f32.mrb[0].mxu0
    %v1713 = vadd.f32 %v1292, %v1712
    %v1714 = vpop.f32.mrb[0].mxu0
    %v1715 = vpop.f32.mrb[0].mxu0
    %v1716 = vadd.f32 %v1292, %v1715
    %v1717 = vpop.f32.mrb[0].mxu0
    %1718 = vmatprep.mubr.bf16.mxu0 %v1104
    %1719 = vmatmul.mubr.bf16.gmra.mrb[0].mxu0 %v1103
    %v1720 = vpop.f32.mrb[0].mxu0
    %v1721 = vadd.f32 %v1292, %v1720
    %v1722 = vpop.f32.mrb[0].mxu0
    %v1723 = vpop.f32.mrb[0].mxu0
    %v1724 = vadd.f32 %v1292, %v1723
    %v1725 = vpop.f32.mrb[0].mxu0
    %1726 = vmatprep.mubr.bf16.mxu0 %v1112
    %1727 = vmatmul.mubr.bf16.gmra.mrb[0].mxu0 %v1111
    %v1728 = vpop.f32.mrb[0].mxu0
    %v1729 = vadd.f32 %v1292, %v1728
    %v1730 = vpop.f32.mrb[0].mxu0
    %v1731 = vpop.f32.mrb[0].mxu0
    %v1732 = vadd.f32 %v1292, %v1731
    %v1733 = vpop.f32.mrb[0].mxu0
    %1734 = vmatprep.mubr.bf16.mxu0 %v1120
    %1735 = vmatmul.mubr.bf16.gmra.mrb[0].mxu0 %v1119
    %v1736 = vpop.f32.mrb[0].mxu0
    %v1737 = vadd.f32 %v1292, %v1736
    %v1738 = vpop.f32.mrb[0].mxu0
    %v1739 = vpop.f32.mrb[0].mxu0
    %v1740 = vadd.f32 %v1292, %v1739
    %v1741 = vpop.f32.mrb[0].mxu0
    %1742 = vmatprep.mubr.bf16.mxu0 %v1128
    %1743 = vmatmul.mubr.bf16.gmra.mrb[0].mxu0 %v1127
    %v1744 = vpop.f32.mrb[0].mxu0
    %v1745 = vadd.f32 %v1292, %v1744
    %v1746 = vpop.f32.mrb[0].mxu0
    %v1747 = vpop.f32.mrb[0].mxu0
    %v1748 = vadd.f32 %v1292, %v1747
    %v1749 = vpop.f32.mrb[0].mxu0
    %1750 = vmatprep.mubr.bf16.mxu0 %v1136
    %1751 = vmatmul.mubr.bf16.gmra.mrb[0].mxu0 %v1135
    %v1752 = vpop.f32.mrb[0].mxu0
    %v1753 = vadd.f32 %v1292, %v1752
    %v1754 = vpop.f32.mrb[0].mxu0
    %v1755 = vpop.f32.mrb[0].mxu0
    %v1756 = vadd.f32 %v1292, %v1755
    %v1757 = vpop.f32.mrb[0].mxu0
    %1758 = vmatprep.mubr.bf16.mxu0 %v1144
    %1759 = vmatmul.mubr.bf16.gmra.mrb[0].mxu0 %v1143
    %v1760 = vpop.f32.mrb[0].mxu0
    %v1761 = vadd.f32 %v1292, %v1760
    %v1762 = vpop.f32.mrb[0].mxu0
    %v1763 = vpop.f32.mrb[0].mxu0
    %v1764 = vadd.f32 %v1292, %v1763
    %v1765 = vpop.f32.mrb[0].mxu0
    %1766 = vmatprep.mubr.bf16.mxu0 %v1152
    %1767 = vmatmul.mubr.bf16.gmra.mrb[0].mxu0 %v1151
    %v1768 = vpop.f32.mrb[0].mxu0
    %v1769 = vadd.f32 %v1292, %v1768
    %v1770 = vpop.f32.mrb[0].mxu0
    %v1771 = vpop.f32.mrb[0].mxu0
    %v1772 = vadd.f32 %v1292, %v1771
    %v1773 = vpop.f32.mrb[0].mxu0
    %1774 = vdwg.mxu0
    %1775 = vmatprep.subr.bf16.mxu0 0
    %1776 = vmatpush1.bf16.msra.mxu0 %v1566
    %1777 = vmatprep.subr.bf16.mxu0 0
    %1778 = vmatpush1.bf16.msra.mxu0 %v1567
    %1779 = vmatprep.subr.bf16.mxu0 0
    %1780 = vmatpush1.bf16.msra.mxu0 %v1568
    %1781 = vmatprep.subr.bf16.mxu0 0
    %1782 = vmatpush1.bf16.msra.mxu0 %v1569
    %1783 = vmatprep.subr.bf16.mxu0 0
    %1784 = vmatpush1.bf16.msra.mxu0 %v1570
    %1785 = vmatprep.subr.bf16.mxu0 0
    %1786 = vmatpush1.bf16.msra.mxu0 %v1571
    %1787 = vmatprep.subr.bf16.mxu0 0
    %1788 = vmatpush1.bf16.msra.mxu0 %v1572
    %1789 = vmatprep.subr.bf16.mxu0 0
    %1790 = vmatpush1.bf16.msra.mxu0 %v1573
    %1791 = vmatprep.subr.bf16.mxu0 0
    %1792 = vmatpush1.bf16.msra.mxu0 %v1574
    %1793 = vmatprep.subr.bf16.mxu0 0
    %1794 = vmatpush1.bf16.msra.mxu0 %v1575
    %1795 = vmatprep.subr.bf16.mxu0 0
    %1796 = vmatpush1.bf16.msra.mxu0 %v1576
    %1797 = vmatprep.subr.bf16.mxu0 0
    %1798 = vmatpush1.bf16.msra.mxu0 %v1577
    %1799 = vmatprep.subr.bf16.mxu0 0
    %1800 = vmatpush1.bf16.msra.mxu0 %v1578
    %1801 = vmatprep.subr.bf16.mxu0 0
    %1802 = vmatpush1.bf16.msra.mxu0 %v1579
    %1803 = vmatprep.subr.bf16.mxu0 0
    %1804 = vmatpush1.bf16.msra.mxu0 %v1580
    %1805 = vmatprep.subr.bf16.mxu0 0
    %1806 = vmatpush1.bf16.msra.mxu0 %v1581
    %1807 = vmatprep.mubr.bf16.mxu0 %v1098
    %1808 = vmatmul.mubr.bf16.gmra.mrb[0].mxu0 %v1097
    %v1809 = vpop.f32.mrb[0].mxu0
    %v1810 = vadd.f32 %v1713, %v1809
    %v1811 = vpop.f32.mrb[0].mxu0
    %v1812 = vpop.f32.mrb[0].mxu0
    %v1813 = vadd.f32 %v1716, %v1812
    %v1814 = vpop.f32.mrb[0].mxu0
    %1815 = vmatprep.mubr.bf16.mxu0 %v1106
    %1816 = vmatmul.mubr.bf16.gmra.mrb[0].mxu0 %v1105
    %v1817 = vpop.f32.mrb[0].mxu0
    %v1818 = vadd.f32 %v1721, %v1817
    %v1819 = vpop.f32.mrb[0].mxu0
    %v1820 = vpop.f32.mrb[0].mxu0
    %v1821 = vadd.f32 %v1724, %v1820
    %v1822 = vpop.f32.mrb[0].mxu0
    %1823 = vmatprep.mubr.bf16.mxu0 %v1114
    %1824 = vmatmul.mubr.bf16.gmra.mrb[0].mxu0 %v1113
    %v1825 = vpop.f32.mrb[0].mxu0
    %v1826 = vadd.f32 %v1729, %v1825
    %v1827 = vpop.f32.mrb[0].mxu0
    %v1828 = vpop.f32.mrb[0].mxu0
    %v1829 = vadd.f32 %v1732, %v1828
    %v1830 = vpop.f32.mrb[0].mxu0
    %1831 = vmatprep.mubr.bf16.mxu0 %v1122
    %1832 = vmatmul.mubr.bf16.gmra.mrb[0].mxu0 %v1121
    %v1833 = vpop.f32.mrb[0].mxu0
    %v1834 = vadd.f32 %v1737, %v1833
    %v1835 = vpop.f32.mrb[0].mxu0
    %v1836 = vpop.f32.mrb[0].mxu0
    %v1837 = vadd.f32 %v1740, %v1836
    %v1838 = vpop.f32.mrb[0].mxu0
    %1839 = vmatprep.mubr.bf16.mxu0 %v1130
    %1840 = vmatmul.mubr.bf16.gmra.mrb[0].mxu0 %v1129
    %v1841 = vpop.f32.mrb[0].mxu0
    %v1842 = vadd.f32 %v1745, %v1841
    %v1843 = vpop.f32.mrb[0].mxu0
    %v1844 = vpop.f32.mrb[0].mxu0
    %v1845 = vadd.f32 %v1748, %v1844
    %v1846 = vpop.f32.mrb[0].mxu0
    %1847 = vmatprep.mubr.bf16.mxu0 %v1138
    %1848 = vmatmul.mubr.bf16.gmra.mrb[0].mxu0 %v1137
    %v1849 = vpop.f32.mrb[0].mxu0
    %v1850 = vadd.f32 %v1753, %v1849
    %v1851 = vpop.f32.mrb[0].mxu0
    %v1852 = vpop.f32.mrb[0].mxu0
    %v1853 = vadd.f32 %v1756, %v1852
    %v1854 = vpop.f32.mrb[0].mxu0
    %1855 = vmatprep.mubr.bf16.mxu0 %v1146
    %1856 = vmatmul.mubr.bf16.gmra.mrb[0].mxu0 %v1145
    %v1857 = vpop.f32.mrb[0].mxu0
    %v1858 = vadd.f32 %v1761, %v1857
    %v1859 = vpop.f32.mrb[0].mxu0
    %v1860 = vpop.f32.mrb[0].mxu0
    %v1861 = vadd.f32 %v1764, %v1860
    %v1862 = vpop.f32.mrb[0].mxu0
    %1863 = vmatprep.mubr.bf16.mxu0 %v1154
    %1864 = vmatmul.mubr.bf16.gmra.mrb[0].mxu0 %v1153
    %v1865 = vpop.f32.mrb[0].mxu0
    %v1866 = vadd.f32 %v1769, %v1865
    %v1867 = vpop.f32.mrb[0].mxu0
    %v1868 = vpop.f32.mrb[0].mxu0
    %v1869 = vadd.f32 %v1772, %v1868
    %v1870 = vpop.f32.mrb[0].mxu0
    %1871 = vdwg.mxu0
    %1872 = vmatprep.subr.bf16.mxu0 0
    %1873 = vmatpush1.bf16.msra.mxu0 %v1582
    %1874 = vmatprep.subr.bf16.mxu0 0
    %1875 = vmatpush1.bf16.msra.mxu0 %v1583
    %1876 = vmatprep.subr.bf16.mxu0 0
    %1877 = vmatpush1.bf16.msra.mxu0 %v1584
    %1878 = vmatprep.subr.bf16.mxu0 0
    %1879 = vmatpush1.bf16.msra.mxu0 %v1585
    %1880 = vmatprep.subr.bf16.mxu0 0
    %1881 = vmatpush1.bf16.msra.mxu0 %v1586
    %1882 = vmatprep.subr.bf16.mxu0 0
    %1883 = vmatpush1.bf16.msra.mxu0 %v1587
    %1884 = vmatprep.subr.bf16.mxu0 0
    %1885 = vmatpush1.bf16.msra.mxu0 %v1588
    %1886 = vmatprep.subr.bf16.mxu0 0
    %1887 = vmatpush1.bf16.msra.mxu0 %v1589
    %1888 = vmatprep.subr.bf16.mxu0 0
    %1889 = vmatpush1.bf16.msra.mxu0 %v1590
    %1890 = vmatprep.subr.bf16.mxu0 0
    %1891 = vmatpush1.bf16.msra.mxu0 %v1591
    %1892 = vmatprep.subr.bf16.mxu0 0
    %1893 = vmatpush1.bf16.msra.mxu0 %v1592
    %1894 = vmatprep.subr.bf16.mxu0 0
    %1895 = vmatpush1.bf16.msra.mxu0 %v1593
    %1896 = vmatprep.subr.bf16.mxu0 0
    %1897 = vmatpush1.bf16.msra.mxu0 %v1594
    %1898 = vmatprep.subr.bf16.mxu0 0
    %1899 = vmatpush1.bf16.msra.mxu0 %v1595
    %1900 = vmatprep.subr.bf16.mxu0 0
    %1901 = vmatpush1.bf16.msra.mxu0 %v1596
    %1902 = vmatprep.subr.bf16.mxu0 0
    %1903 = vmatpush1.bf16.msra.mxu0 %v1597
    %1904 = vmatprep.mubr.bf16.mxu0 %v1100
    %1905 = vmatmul.mubr.bf16.gmra.mrb[0].mxu0 %v1099
    %v1906 = vpop.f32.mrb[0].mxu0
    %v1907 = vadd.f32 %v1810, %v1906
    %v1908 = vpop.f32.mrb[0].mxu0
    %v1909 = vpop.f32.mrb[0].mxu0
    %v1910 = vadd.f32 %v1813, %v1909
    %v1911 = vpop.f32.mrb[0].mxu0
    %1912 = vmatprep.mubr.bf16.mxu0 %v1108
    %1913 = vmatmul.mubr.bf16.gmra.mrb[0].mxu0 %v1107
    %v1914 = vpop.f32.mrb[0].mxu0
    %v1915 = vadd.f32 %v1818, %v1914
    %v1916 = vpop.f32.mrb[0].mxu0
    %v1917 = vpop.f32.mrb[0].mxu0
    %v1918 = vadd.f32 %v1821, %v1917
    %v1919 = vpop.f32.mrb[0].mxu0
    %1920 = vmatprep.mubr.bf16.mxu0 %v1116
    %1921 = vmatmul.mubr.bf16.gmra.mrb[0].mxu0 %v1115
    %v1922 = vpop.f32.mrb[0].mxu0
    %v1923 = vadd.f32 %v1826, %v1922
    %v1924 = vpop.f32.mrb[0].mxu0
    %v1925 = vpop.f32.mrb[0].mxu0
    %v1926 = vadd.f32 %v1829, %v1925
    %v1927 = vpop.f32.mrb[0].mxu0
    %1928 = vmatprep.mubr.bf16.mxu0 %v1124
    %1929 = vmatmul.mubr.bf16.gmra.mrb[0].mxu0 %v1123
    %v1930 = vpop.f32.mrb[0].mxu0
    %v1931 = vadd.f32 %v1834, %v1930
    %v1932 = vpop.f32.mrb[0].mxu0
    %v1933 = vpop.f32.mrb[0].mxu0
    %v1934 = vadd.f32 %v1837, %v1933
    %v1935 = vpop.f32.mrb[0].mxu0
    %1936 = vmatprep.mubr.bf16.mxu0 %v1132
    %1937 = vmatmul.mubr.bf16.gmra.mrb[0].mxu0 %v1131
    %v1938 = vpop.f32.mrb[0].mxu0
    %v1939 = vadd.f32 %v1842, %v1938
    %v1940 = vpop.f32.mrb[0].mxu0
    %v1941 = vpop.f32.mrb[0].mxu0
    %v1942 = vadd.f32 %v1845, %v1941
    %v1943 = vpop.f32.mrb[0].mxu0
    %1944 = vmatprep.mubr.bf16.mxu0 %v1140
    %1945 = vmatmul.mubr.bf16.gmra.mrb[0].mxu0 %v1139
    %v1946 = vpop.f32.mrb[0].mxu0
    %v1947 = vadd.f32 %v1850, %v1946
    %v1948 = vpop.f32.mrb[0].mxu0
    %v1949 = vpop.f32.mrb[0].mxu0
    %v1950 = vadd.f32 %v1853, %v1949
    %v1951 = vpop.f32.mrb[0].mxu0
    %1952 = vmatprep.mubr.bf16.mxu0 %v1148
    %1953 = vmatmul.mubr.bf16.gmra.mrb[0].mxu0 %v1147
    %v1954 = vpop.f32.mrb[0].mxu0
    %v1955 = vadd.f32 %v1858, %v1954
    %v1956 = vpop.f32.mrb[0].mxu0
    %v1957 = vpop.f32.mrb[0].mxu0
    %v1958 = vadd.f32 %v1861, %v1957
    %v1959 = vpop.f32.mrb[0].mxu0
    %1960 = vmatprep.mubr.bf16.mxu0 %v1156
    %1961 = vmatmul.mubr.bf16.gmra.mrb[0].mxu0 %v1155
    %v1962 = vpop.f32.mrb[0].mxu0
    %v1963 = vadd.f32 %v1866, %v1962
    %v1964 = vpop.f32.mrb[0].mxu0
    %v1965 = vpop.f32.mrb[0].mxu0
    %v1966 = vadd.f32 %v1869, %v1965
    %v1967 = vpop.f32.mrb[0].mxu0
    %1968 = vdwg.mxu0
    %1969 = vmatprep.subr.bf16.mxu0 0
    %1970 = vmatpush1.bf16.msra.mxu0 %v1598
    %1971 = vmatprep.subr.bf16.mxu0 0
    %1972 = vmatpush1.bf16.msra.mxu0 %v1599
    %1973 = vmatprep.subr.bf16.mxu0 0
    %1974 = vmatpush1.bf16.msra.mxu0 %v1600
    %1975 = vmatprep.subr.bf16.mxu0 0
    %1976 = vmatpush1.bf16.msra.mxu0 %v1601
    %1977 = vmatprep.subr.bf16.mxu0 0
    %1978 = vmatpush1.bf16.msra.mxu0 %v1602
    %1979 = vmatprep.subr.bf16.mxu0 0
    %1980 = vmatpush1.bf16.msra.mxu0 %v1603
    %1981 = vmatprep.subr.bf16.mxu0 0
    %1982 = vmatpush1.bf16.msra.mxu0 %v1604
    %1983 = vmatprep.subr.bf16.mxu0 0
    %1984 = vmatpush1.bf16.msra.mxu0 %v1605
    %1985 = vmatprep.subr.bf16.mxu0 0
    %1986 = vmatpush1.bf16.msra.mxu0 %v1606
    %1987 = vmatprep.subr.bf16.mxu0 0
    %1988 = vmatpush1.bf16.msra.mxu0 %v1607
    %1989 = vmatprep.subr.bf16.mxu0 0
    %1990 = vmatpush1.bf16.msra.mxu0 %v1608
    %1991 = vmatprep.subr.bf16.mxu0 0
    %1992 = vmatpush1.bf16.msra.mxu0 %v1609
    %1993 = vmatprep.subr.bf16.mxu0 0
    %1994 = vmatpush1.bf16.msra.mxu0 %v1610
    %1995 = vmatprep.subr.bf16.mxu0 0
    %1996 = vmatpush1.bf16.msra.mxu0 %v1611
    %1997 = vmatprep.subr.bf16.mxu0 0
    %1998 = vmatpush1.bf16.msra.mxu0 %v1612
    %1999 = vmatprep.subr.bf16.mxu0 0
    %2000 = vmatpush1.bf16.msra.mxu0 %v1613
    %2001 = vmatprep.mubr.bf16.mxu0 %v1102
    %2002 = vmatmul.mubr.bf16.gmra.mrb[0].mxu0 %v1101
    %v2003 = vpop.f32.mrb[0].mxu0
    %v2004 = vadd.f32 %v1907, %v2003
    %v2005 = vpop.f32.mrb[0].mxu0
    %v2006 = vpop.f32.mrb[0].mxu0
    %v2007 = vadd.f32 %v1910, %v2006
    %v2008 = vpop.f32.mrb[0].mxu0
    %2009 = vmatprep.mubr.bf16.mxu0 %v1110
    %2010 = vmatmul.mubr.bf16.gmra.mrb[0].mxu0 %v1109
    %v2011 = vpop.f32.mrb[0].mxu0
    %v2012 = vadd.f32 %v1915, %v2011
    %v2013 = vpop.f32.mrb[0].mxu0
    %v2014 = vpop.f32.mrb[0].mxu0
    %v2015 = vadd.f32 %v1918, %v2014
    %v2016 = vpop.f32.mrb[0].mxu0
    %2017 = vmatprep.mubr.bf16.mxu0 %v1118
    %2018 = vmatmul.mubr.bf16.gmra.mrb[0].mxu0 %v1117
    %v2019 = vpop.f32.mrb[0].mxu0
    %v2020 = vadd.f32 %v1923, %v2019
    %v2021 = vpop.f32.mrb[0].mxu0
    %v2022 = vpop.f32.mrb[0].mxu0
    %v2023 = vadd.f32 %v1926, %v2022
    %v2024 = vpop.f32.mrb[0].mxu0
    %2025 = vmatprep.mubr.bf16.mxu0 %v1126
    %2026 = vmatmul.mubr.bf16.gmra.mrb[0].mxu0 %v1125
    %v2027 = vpop.f32.mrb[0].mxu0
    %v2028 = vadd.f32 %v1931, %v2027
    %v2029 = vpop.f32.mrb[0].mxu0
    %v2030 = vpop.f32.mrb[0].mxu0
    %v2031 = vadd.f32 %v1934, %v2030
    %v2032 = vpop.f32.mrb[0].mxu0
    %2033 = vmatprep.mubr.bf16.mxu0 %v1134
    %2034 = vmatmul.mubr.bf16.gmra.mrb[0].mxu0 %v1133
    %v2035 = vpop.f32.mrb[0].mxu0
    %v2036 = vadd.f32 %v1939, %v2035
    %v2037 = vpop.f32.mrb[0].mxu0
    %v2038 = vpop.f32.mrb[0].mxu0
    %v2039 = vadd.f32 %v1942, %v2038
    %v2040 = vpop.f32.mrb[0].mxu0
    %2041 = vmatprep.mubr.bf16.mxu0 %v1142
    %2042 = vmatmul.mubr.bf16.gmra.mrb[0].mxu0 %v1141
    %v2043 = vpop.f32.mrb[0].mxu0
    %v2044 = vadd.f32 %v1947, %v2043
    %v2045 = vpop.f32.mrb[0].mxu0
    %v2046 = vpop.f32.mrb[0].mxu0
    %v2047 = vadd.f32 %v1950, %v2046
    %v2048 = vpop.f32.mrb[0].mxu0
    %2049 = vmatprep.mubr.bf16.mxu0 %v1150
    %2050 = vmatmul.mubr.bf16.gmra.mrb[0].mxu0 %v1149
    %v2051 = vpop.f32.mrb[0].mxu0
    %v2052 = vadd.f32 %v1955, %v2051
    %v2053 = vpop.f32.mrb[0].mxu0
    %v2054 = vpop.f32.mrb[0].mxu0
    %v2055 = vadd.f32 %v1958, %v2054
    %v2056 = vpop.f32.mrb[0].mxu0
    %2057 = vmatprep.mubr.bf16.mxu0 %v1158
    %2058 = vmatmul.mubr.bf16.gmra.mrb[0].mxu0 %v1157
    %v2059 = vpop.f32.mrb[0].mxu0
    %v2060 = vadd.f32 %v1963, %v2059
    %v2061 = vpop.f32.mrb[0].mxu0
    %v2062 = vpop.f32.mrb[0].mxu0
    %v2063 = vadd.f32 %v1966, %v2062
    %v2064 = vpop.f32.mrb[0].mxu0
    %2065 = vdwg.mxu0
    %2066 = vmax.xlane.f32.xlu0 %v2004
    %v2067 = vpop.xlane.xlu0 %2066
    %2068 = vmax.xlane.f32.xlu0 %v2007
    %v2069 = vpop.xlane.xlu0 %2068
    %2070 = vmax.xlane.f32.xlu0 %v2012
    %v2071 = vpop.xlane.xlu0 %2070
    %2072 = vmax.xlane.f32.xlu0 %v2015
    %v2073 = vpop.xlane.xlu0 %2072
    %2074 = vmax.xlane.f32.xlu0 %v2020
    %v2075 = vpop.xlane.xlu0 %2074
    %2076 = vmax.xlane.f32.xlu0 %v2023
    %v2077 = vpop.xlane.xlu0 %2076
    %2078 = vmax.xlane.f32.xlu0 %v2028
    %v2079 = vpop.xlane.xlu0 %2078
    %2080 = vmax.xlane.f32.xlu0 %v2031
    %v2081 = vpop.xlane.xlu0 %2080
    %2082 = vmax.xlane.f32.xlu0 %v2036
    %v2083 = vpop.xlane.xlu0 %2082
    %2084 = vmax.xlane.f32.xlu0 %v2039
    %v2085 = vpop.xlane.xlu0 %2084
    %2086 = vmax.xlane.f32.xlu0 %v2044
    %v2087 = vpop.xlane.xlu0 %2086
    %2088 = vmax.xlane.f32.xlu0 %v2047
    %v2089 = vpop.xlane.xlu0 %2088
    %2090 = vmax.xlane.f32.xlu0 %v2052
    %v2091 = vpop.xlane.xlu0 %2090
    %2092 = vmax.xlane.f32.xlu0 %v2055
    %v2093 = vpop.xlane.xlu0 %2092
    %2094 = vmax.xlane.f32.xlu0 %v2060
    %v2095 = vpop.xlane.xlu0 %2094
    %2096 = vmax.xlane.f32.xlu0 %v2063
    %v2097 = vpop.xlane.xlu0 %2096
    %v2098 = vsub.f32 %v2004, %v2067
    %v2099 = vsub.f32 %v2007, %v2069
    %v2100 = vsub.f32 %v2012, %v2071
    %v2101 = vsub.f32 %v2015, %v2073
    %v2102 = vsub.f32 %v2020, %v2075
    %v2103 = vsub.f32 %v2023, %v2077
    %v2104 = vsub.f32 %v2028, %v2079
    %v2105 = vsub.f32 %v2031, %v2081
    %v2106 = vsub.f32 %v2036, %v2083
    %v2107 = vsub.f32 %v2039, %v2085
    %v2108 = vsub.f32 %v2044, %v2087
    %v2109 = vsub.f32 %v2047, %v2089
    %v2110 = vsub.f32 %v2052, %v2091
    %v2111 = vsub.f32 %v2055, %v2093
    %v2112 = vsub.f32 %v2060, %v2095
    %v2113 = vsub.f32 %v2063, %v2097
    %v2114 = vmul.f32 %v2098, 1.442695
    %v2115 = vpow.pop %v2114
    %v2116 = vmul.f32 %v2099, 1.442695
    %v2117 = vpow.pop %v2116
    %v2118 = vmul.f32 %v2100, 1.442695
    %v2119 = vpow.pop %v2118
    %v2120 = vmul.f32 %v2101, 1.442695
    %v2121 = vpow.pop %v2120
    %v2122 = vmul.f32 %v2102, 1.442695
    %v2123 = vpow.pop %v2122
    %v2124 = vmul.f32 %v2103, 1.442695
    %v2125 = vpow.pop %v2124
    %v2126 = vmul.f32 %v2104, 1.442695
    %v2127 = vpow.pop %v2126
    %v2128 = vmul.f32 %v2105, 1.442695
    %v2129 = vpow.pop %v2128
    %v2130 = vmul.f32 %v2106, 1.442695
    %v2131 = vpow.pop %v2130
    %v2132 = vmul.f32 %v2107, 1.442695
    %v2133 = vpow.pop %v2132
    %v2134 = vmul.f32 %v2108, 1.442695
    %v2135 = vpow.pop %v2134
    %v2136 = vmul.f32 %v2109, 1.442695
    %v2137 = vpow.pop %v2136
    %v2138 = vmul.f32 %v2110, 1.442695
    %v2139 = vpow.pop %v2138
    %v2140 = vmul.f32 %v2111, 1.442695
    %v2141 = vpow.pop %v2140
    %v2142 = vmul.f32 %v2112, 1.442695
    %v2143 = vpow.pop %v2142
    %v2144 = vmul.f32 %v2113, 1.442695
    %v2145 = vpow.pop %v2144
    %2146 = vadd.xlane.f32.xlu0 %v2115
    %v2147 = vpop.xlane.xlu0 %2146
    %2148 = vadd.xlane.f32.xlu0 %v2117
    %v2149 = vpop.xlane.xlu0 %2148
    %2150 = vadd.xlane.f32.xlu0 %v2119
    %v2151 = vpop.xlane.xlu0 %2150
    %2152 = vadd.xlane.f32.xlu0 %v2121
    %v2153 = vpop.xlane.xlu0 %2152
    %2154 = vadd.xlane.f32.xlu0 %v2123
    %v2155 = vpop.xlane.xlu0 %2154
    %2156 = vadd.xlane.f32.xlu0 %v2125
    %v2157 = vpop.xlane.xlu0 %2156
    %2158 = vadd.xlane.f32.xlu0 %v2127
    %v2159 = vpop.xlane.xlu0 %2158
    %2160 = vadd.xlane.f32.xlu0 %v2129
    %v2161 = vpop.xlane.xlu0 %2160
    %2162 = vadd.xlane.f32.xlu0 %v2131
    %v2163 = vpop.xlane.xlu0 %2162
    %2164 = vadd.xlane.f32.xlu0 %v2133
    %v2165 = vpop.xlane.xlu0 %2164
    %2166 = vadd.xlane.f32.xlu0 %v2135
    %v2167 = vpop.xlane.xlu0 %2166
    %2168 = vadd.xlane.f32.xlu0 %v2137
    %v2169 = vpop.xlane.xlu0 %2168
    %2170 = vadd.xlane.f32.xlu0 %v2139
    %v2171 = vpop.xlane.xlu0 %2170
    %2172 = vadd.xlane.f32.xlu0 %v2141
    %v2173 = vpop.xlane.xlu0 %2172
    %2174 = vadd.xlane.f32.xlu0 %v2143
    %v2175 = vpop.xlane.xlu0 %2174
    %2176 = vadd.xlane.f32.xlu0 %v2145
    %v2177 = vpop.xlane.xlu0 %2176
    %v2178 = vrcp.pop %v2147
    %v2179 = vrcp.pop %v2149
    %v2180 = vrcp.pop %v2151
    %v2181 = vrcp.pop %v2153
    %v2182 = vrcp.pop %v2155
    %v2183 = vrcp.pop %v2157
    %v2184 = vrcp.pop %v2159
    %v2185 = vrcp.pop %v2161
    %v2186 = vrcp.pop %v2163
    %v2187 = vrcp.pop %v2165
    %v2188 = vrcp.pop %v2167
    %v2189 = vrcp.pop %v2169
    %v2190 = vrcp.pop %v2171
    %v2191 = vrcp.pop %v2173
    %v2192 = vrcp.pop %v2175
    %v2193 = vrcp.pop %v2177
    %v2194 = vmul.f32 %v2115, %v2178
    %v2195 = vmul.f32 %v2117, %v2179
    %v2196 = vmul.f32 %v2119, %v2180
    %v2197 = vmul.f32 %v2121, %v2181
    %v2198 = vmul.f32 %v2123, %v2182
    %v2199 = vmul.f32 %v2125, %v2183
    %v2200 = vmul.f32 %v2127, %v2184
    %v2201 = vmul.f32 %v2129, %v2185
    %v2202 = vmul.f32 %v2131, %v2186
    %v2203 = vmul.f32 %v2133, %v2187
    %v2204 = vmul.f32 %v2135, %v2188
    %v2205 = vmul.f32 %v2137, %v2189
    %v2206 = vmul.f32 %v2139, %v2190
    %v2207 = vmul.f32 %v2141, %v2191
    %v2208 = vmul.f32 %v2143, %v2192
    %v2209 = vmul.f32 %v2145, %v2193
    %2211 = vset.pattern.permute.xlu0 0
    %2212 = vperm.xlu0 %2211, %v2194
    %v2213 = vpop.permute.xlu0 %2212
    %2216 = vset.pattern.permute.xlu0 0
    %2217 = vperm.xlu0 %2216, %v2195
    %v2218 = vpop.permute.xlu0 %2217
    %2221 = vset.pattern.permute.xlu0 0
    %2222 = vperm.xlu0 %2221, %v2196
    %v2223 = vpop.permute.xlu0 %2222
    %2226 = vset.pattern.permute.xlu0 0
    %2227 = vperm.xlu0 %2226, %v2197
    %v2228 = vpop.permute.xlu0 %2227
    %2231 = vset.pattern.permute.xlu0 0
    %2232 = vperm.xlu0 %2231, %v2198
    %v2233 = vpop.permute.xlu0 %2232
    %2236 = vset.pattern.permute.xlu0 0
    %2237 = vperm.xlu0 %2236, %v2199
    %v2238 = vpop.permute.xlu0 %2237
    %2241 = vset.pattern.permute.xlu0 0
    %2242 = vperm.xlu0 %2241, %v2200
    %v2243 = vpop.permute.xlu0 %2242
    %2246 = vset.pattern.permute.xlu0 0
    %2247 = vperm.xlu0 %2246, %v2201
    %v2248 = vpop.permute.xlu0 %2247
    %2251 = vset.pattern.permute.xlu0 0
    %2252 = vperm.xlu0 %2251, %v2202
    %v2253 = vpop.permute.xlu0 %2252
    %2256 = vset.pattern.permute.xlu0 0
    %2257 = vperm.xlu0 %2256, %v2203
    %v2258 = vpop.permute.xlu0 %2257
    %2261 = vset.pattern.permute.xlu0 0
    %2262 = vperm.xlu0 %2261, %v2204
    %v2263 = vpop.permute.xlu0 %2262
    %2266 = vset.pattern.permute.xlu0 0
    %2267 = vperm.xlu0 %2266, %v2205
    %v2268 = vpop.permute.xlu0 %2267
    %2271 = vset.pattern.permute.xlu0 0
    %2272 = vperm.xlu0 %2271, %v2206
    %v2273 = vpop.permute.xlu0 %2272
    %2276 = vset.pattern.permute.xlu0 0
    %2277 = vperm.xlu0 %2276, %v2207
    %v2278 = vpop.permute.xlu0 %2277
    %2281 = vset.pattern.permute.xlu0 0
    %2282 = vperm.xlu0 %2281, %v2208
    %v2283 = vpop.permute.xlu0 %2282
    %2286 = vset.pattern.permute.xlu0 0
    %2287 = vperm.xlu0 %2286, %v2209
    %v2288 = vpop.permute.xlu0 %2287
    %v2290 = vmul.f32 %v65, %v2213
    %v2291 = vmul.f32 %v66, %v2218
    %v2292 = vmul.f32 %v67, %v2223
    %v2293 = vmul.f32 %v68, %v2228
    %v2294 = vmul.f32 %v69, %v2233
    %v2295 = vmul.f32 %v70, %v2238
    %v2296 = vmul.f32 %v71, %v2243
    %v2297 = vmul.f32 %v72, %v2248
    %v2298 = vmul.f32 %v73, %v2253
    %v2299 = vmul.f32 %v74, %v2258
    %v2300 = vmul.f32 %v75, %v2263
    %v2301 = vmul.f32 %v76, %v2268
    %v2302 = vmul.f32 %v77, %v2273
    %v2303 = vmul.f32 %v78, %v2278
    %v2304 = vmul.f32 %v79, %v2283
    %v2305 = vmul.f32 %v80, %v2288
    %v2306 = vpack.c.bf16 %v2291, %v2290
    %v2307 = vpack.c.bf16 %v2293, %v2292
    %v2308 = vpack.c.bf16 %v2295, %v2294
    %v2309 = vpack.c.bf16 %v2297, %v2296
    %v2310 = vpack.c.bf16 %v2299, %v2298
    %v2311 = vpack.c.bf16 %v2301, %v2300
    %v2312 = vpack.c.bf16 %v2303, %v2302
    %v2313 = vpack.c.bf16 %v2305, %v2304
    %2314 = vset.pattern.permute.xlu0 1
    %2315 = vperm.xlu0 %2314, %v2194
    %v2316 = vpop.permute.xlu0 %2315
    %2318 = vset.pattern.permute.xlu0 1
    %2319 = vperm.xlu0 %2318, %v2195
    %v2320 = vpop.permute.xlu0 %2319
    %2322 = vset.pattern.permute.xlu0 1
    %2323 = vperm.xlu0 %2322, %v2196
    %v2324 = vpop.permute.xlu0 %2323
    %2326 = vset.pattern.permute.xlu0 1
    %2327 = vperm.xlu0 %2326, %v2197
    %v2328 = vpop.permute.xlu0 %2327
    %2330 = vset.pattern.permute.xlu0 1
    %2331 = vperm.xlu0 %2330, %v2198
    %v2332 = vpop.permute.xlu0 %2331
    %2334 = vset.pattern.permute.xlu0 1
    %2335 = vperm.xlu0 %2334, %v2199
    %v2336 = vpop.permute.xlu0 %2335
    %2338 = vset.pattern.permute.xlu0 1
    %2339 = vperm.xlu0 %2338, %v2200
    %v2340 = vpop.permute.xlu0 %2339
    %2342 = vset.pattern.permute.xlu0 1
    %2343 = vperm.xlu0 %2342, %v2201
    %v2344 = vpop.permute.xlu0 %2343
    %2346 = vset.pattern.permute.xlu0 1
    %2347 = vperm.xlu0 %2346, %v2202
    %v2348 = vpop.permute.xlu0 %2347
    %2350 = vset.pattern.permute.xlu0 1
    %2351 = vperm.xlu0 %2350, %v2203
    %v2352 = vpop.permute.xlu0 %2351
    %2354 = vset.pattern.permute.xlu0 1
    %2355 = vperm.xlu0 %2354, %v2204
    %v2356 = vpop.permute.xlu0 %2355
    %2358 = vset.pattern.permute.xlu0 1
    %2359 = vperm.xlu0 %2358, %v2205
    %v2360 = vpop.permute.xlu0 %2359
    %2362 = vset.pattern.permute.xlu0 1
    %2363 = vperm.xlu0 %2362, %v2206
    %v2364 = vpop.permute.xlu0 %2363
    %2366 = vset.pattern.permute.xlu0 1
    %2367 = vperm.xlu0 %2366, %v2207
    %v2368 = vpop.permute.xlu0 %2367
    %2370 = vset.pattern.permute.xlu0 1
    %2371 = vperm.xlu0 %2370, %v2208
    %v2372 = vpop.permute.xlu0 %2371
    %2374 = vset.pattern.permute.xlu0 1
    %2375 = vperm.xlu0 %2374, %v2209
    %v2376 = vpop.permute.xlu0 %2375
    %v2378 = vmul.f32 %v65, %v2316
    %v2379 = vmul.f32 %v66, %v2320
    %v2380 = vmul.f32 %v67, %v2324
    %v2381 = vmul.f32 %v68, %v2328
    %v2382 = vmul.f32 %v69, %v2332
    %v2383 = vmul.f32 %v70, %v2336
    %v2384 = vmul.f32 %v71, %v2340
    %v2385 = vmul.f32 %v72, %v2344
    %v2386 = vmul.f32 %v73, %v2348
    %v2387 = vmul.f32 %v74, %v2352
    %v2388 = vmul.f32 %v75, %v2356
    %v2389 = vmul.f32 %v76, %v2360
    %v2390 = vmul.f32 %v77, %v2364
    %v2391 = vmul.f32 %v78, %v2368
    %v2392 = vmul.f32 %v79, %v2372
    %v2393 = vmul.f32 %v80, %v2376
    %v2394 = vpack.c.bf16 %v2379, %v2378
    %v2395 = vpack.c.bf16 %v2381, %v2380
    %v2396 = vpack.c.bf16 %v2383, %v2382
    %v2397 = vpack.c.bf16 %v2385, %v2384
    %v2398 = vpack.c.bf16 %v2387, %v2386
    %v2399 = vpack.c.bf16 %v2389, %v2388
    %v2400 = vpack.c.bf16 %v2391, %v2390
    %v2401 = vpack.c.bf16 %v2393, %v2392
    %2402 = vset.pattern.permute.xlu0 2
    %2403 = vperm.xlu0 %2402, %v2194
    %v2404 = vpop.permute.xlu0 %2403
    %2406 = vset.pattern.permute.xlu0 2
    %2407 = vperm.xlu0 %2406, %v2195
    %v2408 = vpop.permute.xlu0 %2407
    %2410 = vset.pattern.permute.xlu0 2
    %2411 = vperm.xlu0 %2410, %v2196
    %v2412 = vpop.permute.xlu0 %2411
    %2414 = vset.pattern.permute.xlu0 2
    %2415 = vperm.xlu0 %2414, %v2197
    %v2416 = vpop.permute.xlu0 %2415
    %2418 = vset.pattern.permute.xlu0 2
    %2419 = vperm.xlu0 %2418, %v2198
    %v2420 = vpop.permute.xlu0 %2419
    %2422 = vset.pattern.permute.xlu0 2
    %2423 = vperm.xlu0 %2422, %v2199
    %v2424 = vpop.permute.xlu0 %2423
    %2426 = vset.pattern.permute.xlu0 2
    %2427 = vperm.xlu0 %2426, %v2200
    %v2428 = vpop.permute.xlu0 %2427
    %2430 = vset.pattern.permute.xlu0 2
    %2431 = vperm.xlu0 %2430, %v2201
    %v2432 = vpop.permute.xlu0 %2431
    %2434 = vset.pattern.permute.xlu0 2
    %2435 = vperm.xlu0 %2434, %v2202
    %v2436 = vpop.permute.xlu0 %2435
    %2438 = vset.pattern.permute.xlu0 2
    %2439 = vperm.xlu0 %2438, %v2203
    %v2440 = vpop.permute.xlu0 %2439
    %2442 = vset.pattern.permute.xlu0 2
    %2443 = vperm.xlu0 %2442, %v2204
    %v2444 = vpop.permute.xlu0 %2443
    %2446 = vset.pattern.permute.xlu0 2
    %2447 = vperm.xlu0 %2446, %v2205
    %v2448 = vpop.permute.xlu0 %2447
    %2450 = vset.pattern.permute.xlu0 2
    %2451 = vperm.xlu0 %2450, %v2206
    %v2452 = vpop.permute.xlu0 %2451
    %2454 = vset.pattern.permute.xlu0 2
    %2455 = vperm.xlu0 %2454, %v2207
    %v2456 = vpop.permute.xlu0 %2455
    %2458 = vset.pattern.permute.xlu0 2
    %2459 = vperm.xlu0 %2458, %v2208
    %v2460 = vpop.permute.xlu0 %2459
    %2462 = vset.pattern.permute.xlu0 2
    %2463 = vperm.xlu0 %2462, %v2209
    %v2464 = vpop.permute.xlu0 %2463
    %v2466 = vmul.f32 %v65, %v2404
    %v2467 = vmul.f32 %v66, %v2408
    %v2468 = vmul.f32 %v67, %v2412
    %v2469 = vmul.f32 %v68, %v2416
    %v2470 = vmul.f32 %v69, %v2420
    %v2471 = vmul.f32 %v70, %v2424
    %v2472 = vmul.f32 %v71, %v2428
    %v2473 = vmul.f32 %v72, %v2432
    %v2474 = vmul.f32 %v73, %v2436
    %v2475 = vmul.f32 %v74, %v2440
    %v2476 = vmul.f32 %v75, %v2444
    %v2477 = vmul.f32 %v76, %v2448
    %v2478 = vmul.f32 %v77, %v2452
    %v2479 = vmul.f32 %v78, %v2456
    %v2480 = vmul.f32 %v79, %v2460
    %v2481 = vmul.f32 %v80, %v2464
    %v2482 = vpack.c.bf16 %v2467, %v2466
    %v2483 = vpack.c.bf16 %v2469, %v2468
    %v2484 = vpack.c.bf16 %v2471, %v2470
    %v2485 = vpack.c.bf16 %v2473, %v2472
    %v2486 = vpack.c.bf16 %v2475, %v2474
    %v2487 = vpack.c.bf16 %v2477, %v2476
    %v2488 = vpack.c.bf16 %v2479, %v2478
    %v2489 = vpack.c.bf16 %v2481, %v2480
    %2490 = vset.pattern.permute.xlu0 3
    %2491 = vperm.xlu0 %2490, %v2194
    %v2492 = vpop.permute.xlu0 %2491
    %2494 = vset.pattern.permute.xlu0 3
    %2495 = vperm.xlu0 %2494, %v2195
    %v2496 = vpop.permute.xlu0 %2495
    %2498 = vset.pattern.permute.xlu0 3
    %2499 = vperm.xlu0 %2498, %v2196
    %v2500 = vpop.permute.xlu0 %2499
    %2502 = vset.pattern.permute.xlu0 3
    %2503 = vperm.xlu0 %2502, %v2197
    %v2504 = vpop.permute.xlu0 %2503
    %2506 = vset.pattern.permute.xlu0 3
    %2507 = vperm.xlu0 %2506, %v2198
    %v2508 = vpop.permute.xlu0 %2507
    %2510 = vset.pattern.permute.xlu0 3
    %2511 = vperm.xlu0 %2510, %v2199
    %v2512 = vpop.permute.xlu0 %2511
    %2514 = vset.pattern.permute.xlu0 3
    %2515 = vperm.xlu0 %2514, %v2200
    %v2516 = vpop.permute.xlu0 %2515
    %2518 = vset.pattern.permute.xlu0 3
    %2519 = vperm.xlu0 %2518, %v2201
    %v2520 = vpop.permute.xlu0 %2519
    %2522 = vset.pattern.permute.xlu0 3
    %2523 = vperm.xlu0 %2522, %v2202
    %v2524 = vpop.permute.xlu0 %2523
    %2526 = vset.pattern.permute.xlu0 3
    %2527 = vperm.xlu0 %2526, %v2203
    %v2528 = vpop.permute.xlu0 %2527
    %2530 = vset.pattern.permute.xlu0 3
    %2531 = vperm.xlu0 %2530, %v2204
    %v2532 = vpop.permute.xlu0 %2531
    %2534 = vset.pattern.permute.xlu0 3
    %2535 = vperm.xlu0 %2534, %v2205
    %v2536 = vpop.permute.xlu0 %2535
    %2538 = vset.pattern.permute.xlu0 3
    %2539 = vperm.xlu0 %2538, %v2206
    %v2540 = vpop.permute.xlu0 %2539
    %2542 = vset.pattern.permute.xlu0 3
    %2543 = vperm.xlu0 %2542, %v2207
    %v2544 = vpop.permute.xlu0 %2543
    %2546 = vset.pattern.permute.xlu0 3
    %2547 = vperm.xlu0 %2546, %v2208
    %v2548 = vpop.permute.xlu0 %2547
    %2550 = vset.pattern.permute.xlu0 3
    %2551 = vperm.xlu0 %2550, %v2209
    %v2552 = vpop.permute.xlu0 %2551
    %v2554 = vmul.f32 %v65, %v2492
    %v2555 = vmul.f32 %v66, %v2496
    %v2556 = vmul.f32 %v67, %v2500
    %v2557 = vmul.f32 %v68, %v2504
    %v2558 = vmul.f32 %v69, %v2508
    %v2559 = vmul.f32 %v70, %v2512
    %v2560 = vmul.f32 %v71, %v2516
    %v2561 = vmul.f32 %v72, %v2520
    %v2562 = vmul.f32 %v73, %v2524
    %v2563 = vmul.f32 %v74, %v2528
    %v2564 = vmul.f32 %v75, %v2532
    %v2565 = vmul.f32 %v76, %v2536
    %v2566 = vmul.f32 %v77, %v2540
    %v2567 = vmul.f32 %v78, %v2544
    %v2568 = vmul.f32 %v79, %v2548
    %v2569 = vmul.f32 %v80, %v2552
    %v2570 = vpack.c.bf16 %v2555, %v2554
    %v2571 = vpack.c.bf16 %v2557, %v2556
    %v2572 = vpack.c.bf16 %v2559, %v2558
    %v2573 = vpack.c.bf16 %v2561, %v2560
    %v2574 = vpack.c.bf16 %v2563, %v2562
    %v2575 = vpack.c.bf16 %v2565, %v2564
    %v2576 = vpack.c.bf16 %v2567, %v2566
    %v2577 = vpack.c.bf16 %v2569, %v2568
    %2578 = vset.pattern.permute.xlu0 4
    %2579 = vperm.xlu0 %2578, %v2194
    %v2580 = vpop.permute.xlu0 %2579
    %2582 = vset.pattern.permute.xlu0 4
    %2583 = vperm.xlu0 %2582, %v2195
    %v2584 = vpop.permute.xlu0 %2583
    %2586 = vset.pattern.permute.xlu0 4
    %2587 = vperm.xlu0 %2586, %v2196
    %v2588 = vpop.permute.xlu0 %2587
    %2590 = vset.pattern.permute.xlu0 4
    %2591 = vperm.xlu0 %2590, %v2197
    %v2592 = vpop.permute.xlu0 %2591
    %2594 = vset.pattern.permute.xlu0 4
    %2595 = vperm.xlu0 %2594, %v2198
    %v2596 = vpop.permute.xlu0 %2595
    %2598 = vset.pattern.permute.xlu0 4
    %2599 = vperm.xlu0 %2598, %v2199
    %v2600 = vpop.permute.xlu0 %2599
    %2602 = vset.pattern.permute.xlu0 4
    %2603 = vperm.xlu0 %2602, %v2200
    %v2604 = vpop.permute.xlu0 %2603
    %2606 = vset.pattern.permute.xlu0 4
    %2607 = vperm.xlu0 %2606, %v2201
    %v2608 = vpop.permute.xlu0 %2607
    %2610 = vset.pattern.permute.xlu0 4
    %2611 = vperm.xlu0 %2610, %v2202
    %v2612 = vpop.permute.xlu0 %2611
    %2614 = vset.pattern.permute.xlu0 4
    %2615 = vperm.xlu0 %2614, %v2203
    %v2616 = vpop.permute.xlu0 %2615
    %2618 = vset.pattern.permute.xlu0 4
    %2619 = vperm.xlu0 %2618, %v2204
    %v2620 = vpop.permute.xlu0 %2619
    %2622 = vset.pattern.permute.xlu0 4
    %2623 = vperm.xlu0 %2622, %v2205
    %v2624 = vpop.permute.xlu0 %2623
    %2626 = vset.pattern.permute.xlu0 4
    %2627 = vperm.xlu0 %2626, %v2206
    %v2628 = vpop.permute.xlu0 %2627
    %2630 = vset.pattern.permute.xlu0 4
    %2631 = vperm.xlu0 %2630, %v2207
    %v2632 = vpop.permute.xlu0 %2631
    %2634 = vset.pattern.permute.xlu0 4
    %2635 = vperm.xlu0 %2634, %v2208
    %v2636 = vpop.permute.xlu0 %2635
    %2638 = vset.pattern.permute.xlu0 4
    %2639 = vperm.xlu0 %2638, %v2209
    %v2640 = vpop.permute.xlu0 %2639
    %v2642 = vmul.f32 %v65, %v2580
    %v2643 = vmul.f32 %v66, %v2584
    %v2644 = vmul.f32 %v67, %v2588
    %v2645 = vmul.f32 %v68, %v2592
    %v2646 = vmul.f32 %v69, %v2596
    %v2647 = vmul.f32 %v70, %v2600
    %v2648 = vmul.f32 %v71, %v2604
    %v2649 = vmul.f32 %v72, %v2608
    %v2650 = vmul.f32 %v73, %v2612
    %v2651 = vmul.f32 %v74, %v2616
    %v2652 = vmul.f32 %v75, %v2620
    %v2653 = vmul.f32 %v76, %v2624
    %v2654 = vmul.f32 %v77, %v2628
    %v2655 = vmul.f32 %v78, %v2632
    %v2656 = vmul.f32 %v79, %v2636
    %v2657 = vmul.f32 %v80, %v2640
    %v2658 = vpack.c.bf16 %v2643, %v2642
    %v2659 = vpack.c.bf16 %v2645, %v2644
    %v2660 = vpack.c.bf16 %v2647, %v2646
    %v2661 = vpack.c.bf16 %v2649, %v2648
    %v2662 = vpack.c.bf16 %v2651, %v2650
    %v2663 = vpack.c.bf16 %v2653, %v2652
    %v2664 = vpack.c.bf16 %v2655, %v2654
    %v2665 = vpack.c.bf16 %v2657, %v2656
    %2666 = vset.pattern.permute.xlu0 5
    %2667 = vperm.xlu0 %2666, %v2194
    %v2668 = vpop.permute.xlu0 %2667
    %2670 = vset.pattern.permute.xlu0 5
    %2671 = vperm.xlu0 %2670, %v2195
    %v2672 = vpop.permute.xlu0 %2671
    %2674 = vset.pattern.permute.xlu0 5
    %2675 = vperm.xlu0 %2674, %v2196
    %v2676 = vpop.permute.xlu0 %2675
    %2678 = vset.pattern.permute.xlu0 5
    %2679 = vperm.xlu0 %2678, %v2197
    %v2680 = vpop.permute.xlu0 %2679
    %2682 = vset.pattern.permute.xlu0 5
    %2683 = vperm.xlu0 %2682, %v2198
    %v2684 = vpop.permute.xlu0 %2683
    %2686 = vset.pattern.permute.xlu0 5
    %2687 = vperm.xlu0 %2686, %v2199
    %v2688 = vpop.permute.xlu0 %2687
    %2690 = vset.pattern.permute.xlu0 5
    %2691 = vperm.xlu0 %2690, %v2200
    %v2692 = vpop.permute.xlu0 %2691
    %2694 = vset.pattern.permute.xlu0 5
    %2695 = vperm.xlu0 %2694, %v2201
    %v2696 = vpop.permute.xlu0 %2695
    %2698 = vset.pattern.permute.xlu0 5
    %2699 = vperm.xlu0 %2698, %v2202
    %v2700 = vpop.permute.xlu0 %2699
    %2702 = vset.pattern.permute.xlu0 5
    %2703 = vperm.xlu0 %2702, %v2203
    %v2704 = vpop.permute.xlu0 %2703
    %2706 = vset.pattern.permute.xlu0 5
    %2707 = vperm.xlu0 %2706, %v2204
    %v2708 = vpop.permute.xlu0 %2707
    %2710 = vset.pattern.permute.xlu0 5
    %2711 = vperm.xlu0 %2710, %v2205
    %v2712 = vpop.permute.xlu0 %2711
    %2714 = vset.pattern.permute.xlu0 5
    %2715 = vperm.xlu0 %2714, %v2206
    %v2716 = vpop.permute.xlu0 %2715
    %2718 = vset.pattern.permute.xlu0 5
    %2719 = vperm.xlu0 %2718, %v2207
    %v2720 = vpop.permute.xlu0 %2719
    %2722 = vset.pattern.permute.xlu0 5
    %2723 = vperm.xlu0 %2722, %v2208
    %v2724 = vpop.permute.xlu0 %2723
    %2726 = vset.pattern.permute.xlu0 5
    %2727 = vperm.xlu0 %2726, %v2209
    %v2728 = vpop.permute.xlu0 %2727
    %v2730 = vmul.f32 %v65, %v2668
    %v2731 = vmul.f32 %v66, %v2672
    %v2732 = vmul.f32 %v67, %v2676
    %v2733 = vmul.f32 %v68, %v2680
    %v2734 = vmul.f32 %v69, %v2684
    %v2735 = vmul.f32 %v70, %v2688
    %v2736 = vmul.f32 %v71, %v2692
    %v2737 = vmul.f32 %v72, %v2696
    %v2738 = vmul.f32 %v73, %v2700
    %v2739 = vmul.f32 %v74, %v2704
    %v2740 = vmul.f32 %v75, %v2708
    %v2741 = vmul.f32 %v76, %v2712
    %v2742 = vmul.f32 %v77, %v2716
    %v2743 = vmul.f32 %v78, %v2720
    %v2744 = vmul.f32 %v79, %v2724
    %v2745 = vmul.f32 %v80, %v2728
    %v2746 = vpack.c.bf16 %v2731, %v2730
    %v2747 = vpack.c.bf16 %v2733, %v2732
    %v2748 = vpack.c.bf16 %v2735, %v2734
    %v2749 = vpack.c.bf16 %v2737, %v2736
    %v2750 = vpack.c.bf16 %v2739, %v2738
    %v2751 = vpack.c.bf16 %v2741, %v2740
    %v2752 = vpack.c.bf16 %v2743, %v2742
    %v2753 = vpack.c.bf16 %v2745, %v2744
    %2754 = vset.pattern.permute.xlu0 6
    %2755 = vperm.xlu0 %2754, %v2194
    %v2756 = vpop.permute.xlu0 %2755
    %2758 = vset.pattern.permute.xlu0 6
    %2759 = vperm.xlu0 %2758, %v2195
    %v2760 = vpop.permute.xlu0 %2759
    %2762 = vset.pattern.permute.xlu0 6
    %2763 = vperm.xlu0 %2762, %v2196
    %v2764 = vpop.permute.xlu0 %2763
    %2766 = vset.pattern.permute.xlu0 6
    %2767 = vperm.xlu0 %2766, %v2197
    %v2768 = vpop.permute.xlu0 %2767
    %2770 = vset.pattern.permute.xlu0 6
    %2771 = vperm.xlu0 %2770, %v2198
    %v2772 = vpop.permute.xlu0 %2771
    %2774 = vset.pattern.permute.xlu0 6
    %2775 = vperm.xlu0 %2774, %v2199
    %v2776 = vpop.permute.xlu0 %2775
    %2778 = vset.pattern.permute.xlu0 6
    %2779 = vperm.xlu0 %2778, %v2200
    %v2780 = vpop.permute.xlu0 %2779
    %2782 = vset.pattern.permute.xlu0 6
    %2783 = vperm.xlu0 %2782, %v2201
    %v2784 = vpop.permute.xlu0 %2783
    %2786 = vset.pattern.permute.xlu0 6
    %2787 = vperm.xlu0 %2786, %v2202
    %v2788 = vpop.permute.xlu0 %2787
    %2790 = vset.pattern.permute.xlu0 6
    %2791 = vperm.xlu0 %2790, %v2203
    %v2792 = vpop.permute.xlu0 %2791
    %2794 = vset.pattern.permute.xlu0 6
    %2795 = vperm.xlu0 %2794, %v2204
    %v2796 = vpop.permute.xlu0 %2795
    %2798 = vset.pattern.permute.xlu0 6
    %2799 = vperm.xlu0 %2798, %v2205
    %v2800 = vpop.permute.xlu0 %2799
    %2802 = vset.pattern.permute.xlu0 6
    %2803 = vperm.xlu0 %2802, %v2206
    %v2804 = vpop.permute.xlu0 %2803
    %2806 = vset.pattern.permute.xlu0 6
    %2807 = vperm.xlu0 %2806, %v2207
    %v2808 = vpop.permute.xlu0 %2807
    %2810 = vset.pattern.permute.xlu0 6
    %2811 = vperm.xlu0 %2810, %v2208
    %v2812 = vpop.permute.xlu0 %2811
    %2814 = vset.pattern.permute.xlu0 6
    %2815 = vperm.xlu0 %2814, %v2209
    %v2816 = vpop.permute.xlu0 %2815
    %v2818 = vmul.f32 %v65, %v2756
    %v2819 = vmul.f32 %v66, %v2760
    %v2820 = vmul.f32 %v67, %v2764
    %v2821 = vmul.f32 %v68, %v2768
    %v2822 = vmul.f32 %v69, %v2772
    %v2823 = vmul.f32 %v70, %v2776
    %v2824 = vmul.f32 %v71, %v2780
    %v2825 = vmul.f32 %v72, %v2784
    %v2826 = vmul.f32 %v73, %v2788
    %v2827 = vmul.f32 %v74, %v2792
    %v2828 = vmul.f32 %v75, %v2796
    %v2829 = vmul.f32 %v76, %v2800
    %v2830 = vmul.f32 %v77, %v2804
    %v2831 = vmul.f32 %v78, %v2808
    %v2832 = vmul.f32 %v79, %v2812
    %v2833 = vmul.f32 %v80, %v2816
    %v2834 = vpack.c.bf16 %v2819, %v2818
    %v2835 = vpack.c.bf16 %v2821, %v2820
    %v2836 = vpack.c.bf16 %v2823, %v2822
    %v2837 = vpack.c.bf16 %v2825, %v2824
    %v2838 = vpack.c.bf16 %v2827, %v2826
    %v2839 = vpack.c.bf16 %v2829, %v2828
    %v2840 = vpack.c.bf16 %v2831, %v2830
    %v2841 = vpack.c.bf16 %v2833, %v2832
    %2842 = vset.pattern.permute.xlu0 7
    %2843 = vperm.xlu0 %2842, %v2194
    %v2844 = vpop.permute.xlu0 %2843
    %2846 = vset.pattern.permute.xlu0 7
    %2847 = vperm.xlu0 %2846, %v2195
    %v2848 = vpop.permute.xlu0 %2847
    %2850 = vset.pattern.permute.xlu0 7
    %2851 = vperm.xlu0 %2850, %v2196
    %v2852 = vpop.permute.xlu0 %2851
    %2854 = vset.pattern.permute.xlu0 7
    %2855 = vperm.xlu0 %2854, %v2197
    %v2856 = vpop.permute.xlu0 %2855
    %2858 = vset.pattern.permute.xlu0 7
    %2859 = vperm.xlu0 %2858, %v2198
    %v2860 = vpop.permute.xlu0 %2859
    %2862 = vset.pattern.permute.xlu0 7
    %2863 = vperm.xlu0 %2862, %v2199
    %v2864 = vpop.permute.xlu0 %2863
    %2866 = vset.pattern.permute.xlu0 7
    %2867 = vperm.xlu0 %2866, %v2200
    %v2868 = vpop.permute.xlu0 %2867
    %2870 = vset.pattern.permute.xlu0 7
    %2871 = vperm.xlu0 %2870, %v2201
    %v2872 = vpop.permute.xlu0 %2871
    %2874 = vset.pattern.permute.xlu0 7
    %2875 = vperm.xlu0 %2874, %v2202
    %v2876 = vpop.permute.xlu0 %2875
    %2878 = vset.pattern.permute.xlu0 7
    %2879 = vperm.xlu0 %2878, %v2203
    %v2880 = vpop.permute.xlu0 %2879
    %2882 = vset.pattern.permute.xlu0 7
    %2883 = vperm.xlu0 %2882, %v2204
    %v2884 = vpop.permute.xlu0 %2883
    %2886 = vset.pattern.permute.xlu0 7
    %2887 = vperm.xlu0 %2886, %v2205
    %v2888 = vpop.permute.xlu0 %2887
    %2890 = vset.pattern.permute.xlu0 7
    %2891 = vperm.xlu0 %2890, %v2206
    %v2892 = vpop.permute.xlu0 %2891
    %2894 = vset.pattern.permute.xlu0 7
    %2895 = vperm.xlu0 %2894, %v2207
    %v2896 = vpop.permute.xlu0 %2895
    %2898 = vset.pattern.permute.xlu0 7
    %2899 = vperm.xlu0 %2898, %v2208
    %v2900 = vpop.permute.xlu0 %2899
    %2902 = vset.pattern.permute.xlu0 7
    %2903 = vperm.xlu0 %2902, %v2209
    %v2904 = vpop.permute.xlu0 %2903
    %v2906 = vmul.f32 %v65, %v2844
    %v2907 = vmul.f32 %v66, %v2848
    %v2908 = vmul.f32 %v67, %v2852
    %v2909 = vmul.f32 %v68, %v2856
    %v2910 = vmul.f32 %v69, %v2860
    %v2911 = vmul.f32 %v70, %v2864
    %v2912 = vmul.f32 %v71, %v2868
    %v2913 = vmul.f32 %v72, %v2872
    %v2914 = vmul.f32 %v73, %v2876
    %v2915 = vmul.f32 %v74, %v2880
    %v2916 = vmul.f32 %v75, %v2884
    %v2917 = vmul.f32 %v76, %v2888
    %v2918 = vmul.f32 %v77, %v2892
    %v2919 = vmul.f32 %v78, %v2896
    %v2920 = vmul.f32 %v79, %v2900
    %v2921 = vmul.f32 %v80, %v2904
    %v2922 = vpack.c.bf16 %v2907, %v2906
    %v2923 = vpack.c.bf16 %v2909, %v2908
    %v2924 = vpack.c.bf16 %v2911, %v2910
    %v2925 = vpack.c.bf16 %v2913, %v2912
    %v2926 = vpack.c.bf16 %v2915, %v2914
    %v2927 = vpack.c.bf16 %v2917, %v2916
    %v2928 = vpack.c.bf16 %v2919, %v2918
    %v2929 = vpack.c.bf16 %v2921, %v2920
    %2930 = vset.pattern.permute.xlu0 8
    %2931 = vperm.xlu0 %2930, %v2194
    %v2932 = vpop.permute.xlu0 %2931
    %2934 = vset.pattern.permute.xlu0 8
    %2935 = vperm.xlu0 %2934, %v2195
    %v2936 = vpop.permute.xlu0 %2935
    %2938 = vset.pattern.permute.xlu0 8
    %2939 = vperm.xlu0 %2938, %v2196
    %v2940 = vpop.permute.xlu0 %2939
    %2942 = vset.pattern.permute.xlu0 8
    %2943 = vperm.xlu0 %2942, %v2197
    %v2944 = vpop.permute.xlu0 %2943
    %2946 = vset.pattern.permute.xlu0 8
    %2947 = vperm.xlu0 %2946, %v2198
    %v2948 = vpop.permute.xlu0 %2947
    %2950 = vset.pattern.permute.xlu0 8
    %2951 = vperm.xlu0 %2950, %v2199
    %v2952 = vpop.permute.xlu0 %2951
    %2954 = vset.pattern.permute.xlu0 8
    %2955 = vperm.xlu0 %2954, %v2200
    %v2956 = vpop.permute.xlu0 %2955
    %2958 = vset.pattern.permute.xlu0 8
    %2959 = vperm.xlu0 %2958, %v2201
    %v2960 = vpop.permute.xlu0 %2959
    %2962 = vset.pattern.permute.xlu0 8
    %2963 = vperm.xlu0 %2962, %v2202
    %v2964 = vpop.permute.xlu0 %2963
    %2966 = vset.pattern.permute.xlu0 8
    %2967 = vperm.xlu0 %2966, %v2203
    %v2968 = vpop.permute.xlu0 %2967
    %2970 = vset.pattern.permute.xlu0 8
    %2971 = vperm.xlu0 %2970, %v2204
    %v2972 = vpop.permute.xlu0 %2971
    %2974 = vset.pattern.permute.xlu0 8
    %2975 = vperm.xlu0 %2974, %v2205
    %v2976 = vpop.permute.xlu0 %2975
    %2978 = vset.pattern.permute.xlu0 8
    %2979 = vperm.xlu0 %2978, %v2206
    %v2980 = vpop.permute.xlu0 %2979
    %2982 = vset.pattern.permute.xlu0 8
    %2983 = vperm.xlu0 %2982, %v2207
    %v2984 = vpop.permute.xlu0 %2983
    %2986 = vset.pattern.permute.xlu0 8
    %2987 = vperm.xlu0 %2986, %v2208
    %v2988 = vpop.permute.xlu0 %2987
    %2990 = vset.pattern.permute.xlu0 8
    %2991 = vperm.xlu0 %2990, %v2209
    %v2992 = vpop.permute.xlu0 %2991
    %v2994 = vmul.f32 %v65, %v2932
    %v2995 = vmul.f32 %v66, %v2936
    %v2996 = vmul.f32 %v67, %v2940
    %v2997 = vmul.f32 %v68, %v2944
    %v2998 = vmul.f32 %v69, %v2948
    %v2999 = vmul.f32 %v70, %v2952
    %v3000 = vmul.f32 %v71, %v2956
    %v3001 = vmul.f32 %v72, %v2960
    %v3002 = vmul.f32 %v73, %v2964
    %v3003 = vmul.f32 %v74, %v2968
    %v3004 = vmul.f32 %v75, %v2972
    %v3005 = vmul.f32 %v76, %v2976
    %v3006 = vmul.f32 %v77, %v2980
    %v3007 = vmul.f32 %v78, %v2984
    %v3008 = vmul.f32 %v79, %v2988
    %v3009 = vmul.f32 %v80, %v2992
    %v3010 = vpack.c.bf16 %v2995, %v2994
    %v3011 = vpack.c.bf16 %v2997, %v2996
    %v3012 = vpack.c.bf16 %v2999, %v2998
    %v3013 = vpack.c.bf16 %v3001, %v3000
    %v3014 = vpack.c.bf16 %v3003, %v3002
    %v3015 = vpack.c.bf16 %v3005, %v3004
    %v3016 = vpack.c.bf16 %v3007, %v3006
    %v3017 = vpack.c.bf16 %v3009, %v3008
    %3018 = vset.pattern.permute.xlu0 9
    %3019 = vperm.xlu0 %3018, %v2194
    %v3020 = vpop.permute.xlu0 %3019
    %3022 = vset.pattern.permute.xlu0 9
    %3023 = vperm.xlu0 %3022, %v2195
    %v3024 = vpop.permute.xlu0 %3023
    %3026 = vset.pattern.permute.xlu0 9
    %3027 = vperm.xlu0 %3026, %v2196
    %v3028 = vpop.permute.xlu0 %3027
    %3030 = vset.pattern.permute.xlu0 9
    %3031 = vperm.xlu0 %3030, %v2197
    %v3032 = vpop.permute.xlu0 %3031
    %3034 = vset.pattern.permute.xlu0 9
    %3035 = vperm.xlu0 %3034, %v2198
    %v3036 = vpop.permute.xlu0 %3035
    %3038 = vset.pattern.permute.xlu0 9
    %3039 = vperm.xlu0 %3038, %v2199
    %v3040 = vpop.permute.xlu0 %3039
    %3042 = vset.pattern.permute.xlu0 9
    %3043 = vperm.xlu0 %3042, %v2200
    %v3044 = vpop.permute.xlu0 %3043
    %3046 = vset.pattern.permute.xlu0 9
    %3047 = vperm.xlu0 %3046, %v2201
    %v3048 = vpop.permute.xlu0 %3047
    %3050 = vset.pattern.permute.xlu0 9
    %3051 = vperm.xlu0 %3050, %v2202
    %v3052 = vpop.permute.xlu0 %3051
    %3054 = vset.pattern.permute.xlu0 9
    %3055 = vperm.xlu0 %3054, %v2203
    %v3056 = vpop.permute.xlu0 %3055
    %3058 = vset.pattern.permute.xlu0 9
    %3059 = vperm.xlu0 %3058, %v2204
    %v3060 = vpop.permute.xlu0 %3059
    %3062 = vset.pattern.permute.xlu0 9
    %3063 = vperm.xlu0 %3062, %v2205
    %v3064 = vpop.permute.xlu0 %3063
    %3066 = vset.pattern.permute.xlu0 9
    %3067 = vperm.xlu0 %3066, %v2206
    %v3068 = vpop.permute.xlu0 %3067
    %3070 = vset.pattern.permute.xlu0 9
    %3071 = vperm.xlu0 %3070, %v2207
    %v3072 = vpop.permute.xlu0 %3071
    %3074 = vset.pattern.permute.xlu0 9
    %3075 = vperm.xlu0 %3074, %v2208
    %v3076 = vpop.permute.xlu0 %3075
    %3078 = vset.pattern.permute.xlu0 9
    %3079 = vperm.xlu0 %3078, %v2209
    %v3080 = vpop.permute.xlu0 %3079
    %v3082 = vmul.f32 %v65, %v3020
    %v3083 = vmul.f32 %v66, %v3024
    %v3084 = vmul.f32 %v67, %v3028
    %v3085 = vmul.f32 %v68, %v3032
    %v3086 = vmul.f32 %v69, %v3036
    %v3087 = vmul.f32 %v70, %v3040
    %v3088 = vmul.f32 %v71, %v3044
    %v3089 = vmul.f32 %v72, %v3048
    %v3090 = vmul.f32 %v73, %v3052
    %v3091 = vmul.f32 %v74, %v3056
    %v3092 = vmul.f32 %v75, %v3060
    %v3093 = vmul.f32 %v76, %v3064
    %v3094 = vmul.f32 %v77, %v3068
    %v3095 = vmul.f32 %v78, %v3072
    %v3096 = vmul.f32 %v79, %v3076
    %v3097 = vmul.f32 %v80, %v3080
    %v3098 = vpack.c.bf16 %v3083, %v3082
    %v3099 = vpack.c.bf16 %v3085, %v3084
    %v3100 = vpack.c.bf16 %v3087, %v3086
    %v3101 = vpack.c.bf16 %v3089, %v3088
    %v3102 = vpack.c.bf16 %v3091, %v3090
    %v3103 = vpack.c.bf16 %v3093, %v3092
    %v3104 = vpack.c.bf16 %v3095, %v3094
    %v3105 = vpack.c.bf16 %v3097, %v3096
    %3106 = vset.pattern.permute.xlu0 10
    %3107 = vperm.xlu0 %3106, %v2194
    %v3108 = vpop.permute.xlu0 %3107
    %3110 = vset.pattern.permute.xlu0 10
    %3111 = vperm.xlu0 %3110, %v2195
    %v3112 = vpop.permute.xlu0 %3111
    %3114 = vset.pattern.permute.xlu0 10
    %3115 = vperm.xlu0 %3114, %v2196
    %v3116 = vpop.permute.xlu0 %3115
    %3118 = vset.pattern.permute.xlu0 10
    %3119 = vperm.xlu0 %3118, %v2197
    %v3120 = vpop.permute.xlu0 %3119
    %3122 = vset.pattern.permute.xlu0 10
    %3123 = vperm.xlu0 %3122, %v2198
    %v3124 = vpop.permute.xlu0 %3123
    %3126 = vset.pattern.permute.xlu0 10
    %3127 = vperm.xlu0 %3126, %v2199
    %v3128 = vpop.permute.xlu0 %3127
    %3130 = vset.pattern.permute.xlu0 10
    %3131 = vperm.xlu0 %3130, %v2200
    %v3132 = vpop.permute.xlu0 %3131
    %3134 = vset.pattern.permute.xlu0 10
    %3135 = vperm.xlu0 %3134, %v2201
    %v3136 = vpop.permute.xlu0 %3135
    %3138 = vset.pattern.permute.xlu0 10
    %3139 = vperm.xlu0 %3138, %v2202
    %v3140 = vpop.permute.xlu0 %3139
    %3142 = vset.pattern.permute.xlu0 10
    %3143 = vperm.xlu0 %3142, %v2203
    %v3144 = vpop.permute.xlu0 %3143
    %3146 = vset.pattern.permute.xlu0 10
    %3147 = vperm.xlu0 %3146, %v2204
    %v3148 = vpop.permute.xlu0 %3147
    %3150 = vset.pattern.permute.xlu0 10
    %3151 = vperm.xlu0 %3150, %v2205
    %v3152 = vpop.permute.xlu0 %3151
    %3154 = vset.pattern.permute.xlu0 10
    %3155 = vperm.xlu0 %3154, %v2206
    %v3156 = vpop.permute.xlu0 %3155
    %3158 = vset.pattern.permute.xlu0 10
    %3159 = vperm.xlu0 %3158, %v2207
    %v3160 = vpop.permute.xlu0 %3159
    %3162 = vset.pattern.permute.xlu0 10
    %3163 = vperm.xlu0 %3162, %v2208
    %v3164 = vpop.permute.xlu0 %3163
    %3166 = vset.pattern.permute.xlu0 10
    %3167 = vperm.xlu0 %3166, %v2209
    %v3168 = vpop.permute.xlu0 %3167
    %v3170 = vmul.f32 %v65, %v3108
    %v3171 = vmul.f32 %v66, %v3112
    %v3172 = vmul.f32 %v67, %v3116
    %v3173 = vmul.f32 %v68, %v3120
    %v3174 = vmul.f32 %v69, %v3124
    %v3175 = vmul.f32 %v70, %v3128
    %v3176 = vmul.f32 %v71, %v3132
    %v3177 = vmul.f32 %v72, %v3136
    %v3178 = vmul.f32 %v73, %v3140
    %v3179 = vmul.f32 %v74, %v3144
    %v3180 = vmul.f32 %v75, %v3148
    %v3181 = vmul.f32 %v76, %v3152
    %v3182 = vmul.f32 %v77, %v3156
    %v3183 = vmul.f32 %v78, %v3160
    %v3184 = vmul.f32 %v79, %v3164
    %v3185 = vmul.f32 %v80, %v3168
    %v3186 = vpack.c.bf16 %v3171, %v3170
    %v3187 = vpack.c.bf16 %v3173, %v3172
    %v3188 = vpack.c.bf16 %v3175, %v3174
    %v3189 = vpack.c.bf16 %v3177, %v3176
    %v3190 = vpack.c.bf16 %v3179, %v3178
    %v3191 = vpack.c.bf16 %v3181, %v3180
    %v3192 = vpack.c.bf16 %v3183, %v3182
    %v3193 = vpack.c.bf16 %v3185, %v3184
    %3194 = vset.pattern.permute.xlu0 11
    %3195 = vperm.xlu0 %3194, %v2194
    %v3196 = vpop.permute.xlu0 %3195
    %3198 = vset.pattern.permute.xlu0 11
    %3199 = vperm.xlu0 %3198, %v2195
    %v3200 = vpop.permute.xlu0 %3199
    %3202 = vset.pattern.permute.xlu0 11
    %3203 = vperm.xlu0 %3202, %v2196
    %v3204 = vpop.permute.xlu0 %3203
    %3206 = vset.pattern.permute.xlu0 11
    %3207 = vperm.xlu0 %3206, %v2197
    %v3208 = vpop.permute.xlu0 %3207
    %3210 = vset.pattern.permute.xlu0 11
    %3211 = vperm.xlu0 %3210, %v2198
    %v3212 = vpop.permute.xlu0 %3211
    %3214 = vset.pattern.permute.xlu0 11
    %3215 = vperm.xlu0 %3214, %v2199
    %v3216 = vpop.permute.xlu0 %3215
    %3218 = vset.pattern.permute.xlu0 11
    %3219 = vperm.xlu0 %3218, %v2200
    %v3220 = vpop.permute.xlu0 %3219
    %3222 = vset.pattern.permute.xlu0 11
    %3223 = vperm.xlu0 %3222, %v2201
    %v3224 = vpop.permute.xlu0 %3223
    %3226 = vset.pattern.permute.xlu0 11
    %3227 = vperm.xlu0 %3226, %v2202
    %v3228 = vpop.permute.xlu0 %3227
    %3230 = vset.pattern.permute.xlu0 11
    %3231 = vperm.xlu0 %3230, %v2203
    %v3232 = vpop.permute.xlu0 %3231
    %3234 = vset.pattern.permute.xlu0 11
    %3235 = vperm.xlu0 %3234, %v2204
    %v3236 = vpop.permute.xlu0 %3235
    %3238 = vset.pattern.permute.xlu0 11
    %3239 = vperm.xlu0 %3238, %v2205
    %v3240 = vpop.permute.xlu0 %3239
    %3242 = vset.pattern.permute.xlu0 11
    %3243 = vperm.xlu0 %3242, %v2206
    %v3244 = vpop.permute.xlu0 %3243
    %3246 = vset.pattern.permute.xlu0 11
    %3247 = vperm.xlu0 %3246, %v2207
    %v3248 = vpop.permute.xlu0 %3247
    %3250 = vset.pattern.permute.xlu0 11
    %3251 = vperm.xlu0 %3250, %v2208
    %v3252 = vpop.permute.xlu0 %3251
    %3254 = vset.pattern.permute.xlu0 11
    %3255 = vperm.xlu0 %3254, %v2209
    %v3256 = vpop.permute.xlu0 %3255
    %v3258 = vmul.f32 %v65, %v3196
    %v3259 = vmul.f32 %v66, %v3200
    %v3260 = vmul.f32 %v67, %v3204
    %v3261 = vmul.f32 %v68, %v3208
    %v3262 = vmul.f32 %v69, %v3212
    %v3263 = vmul.f32 %v70, %v3216
    %v3264 = vmul.f32 %v71, %v3220
    %v3265 = vmul.f32 %v72, %v3224
    %v3266 = vmul.f32 %v73, %v3228
    %v3267 = vmul.f32 %v74, %v3232
    %v3268 = vmul.f32 %v75, %v3236
    %v3269 = vmul.f32 %v76, %v3240
    %v3270 = vmul.f32 %v77, %v3244
    %v3271 = vmul.f32 %v78, %v3248
    %v3272 = vmul.f32 %v79, %v3252
    %v3273 = vmul.f32 %v80, %v3256
    %v3274 = vpack.c.bf16 %v3259, %v3258
    %v3275 = vpack.c.bf16 %v3261, %v3260
    %v3276 = vpack.c.bf16 %v3263, %v3262
    %v3277 = vpack.c.bf16 %v3265, %v3264
    %v3278 = vpack.c.bf16 %v3267, %v3266
    %v3279 = vpack.c.bf16 %v3269, %v3268
    %v3280 = vpack.c.bf16 %v3271, %v3270
    %v3281 = vpack.c.bf16 %v3273, %v3272
    %3282 = vset.pattern.permute.xlu0 12
    %3283 = vperm.xlu0 %3282, %v2194
    %v3284 = vpop.permute.xlu0 %3283
    %3286 = vset.pattern.permute.xlu0 12
    %3287 = vperm.xlu0 %3286, %v2195
    %v3288 = vpop.permute.xlu0 %3287
    %3290 = vset.pattern.permute.xlu0 12
    %3291 = vperm.xlu0 %3290, %v2196
    %v3292 = vpop.permute.xlu0 %3291
    %3294 = vset.pattern.permute.xlu0 12
    %3295 = vperm.xlu0 %3294, %v2197
    %v3296 = vpop.permute.xlu0 %3295
    %3298 = vset.pattern.permute.xlu0 12
    %3299 = vperm.xlu0 %3298, %v2198
    %v3300 = vpop.permute.xlu0 %3299
    %3302 = vset.pattern.permute.xlu0 12
    %3303 = vperm.xlu0 %3302, %v2199
    %v3304 = vpop.permute.xlu0 %3303
    %3306 = vset.pattern.permute.xlu0 12
    %3307 = vperm.xlu0 %3306, %v2200
    %v3308 = vpop.permute.xlu0 %3307
    %3310 = vset.pattern.permute.xlu0 12
    %3311 = vperm.xlu0 %3310, %v2201
    %v3312 = vpop.permute.xlu0 %3311
    %3314 = vset.pattern.permute.xlu0 12
    %3315 = vperm.xlu0 %3314, %v2202
    %v3316 = vpop.permute.xlu0 %3315
    %3318 = vset.pattern.permute.xlu0 12
    %3319 = vperm.xlu0 %3318, %v2203
    %v3320 = vpop.permute.xlu0 %3319
    %3322 = vset.pattern.permute.xlu0 12
    %3323 = vperm.xlu0 %3322, %v2204
    %v3324 = vpop.permute.xlu0 %3323
    %3326 = vset.pattern.permute.xlu0 12
    %3327 = vperm.xlu0 %3326, %v2205
    %v3328 = vpop.permute.xlu0 %3327
    %3330 = vset.pattern.permute.xlu0 12
    %3331 = vperm.xlu0 %3330, %v2206
    %v3332 = vpop.permute.xlu0 %3331
    %3334 = vset.pattern.permute.xlu0 12
    %3335 = vperm.xlu0 %3334, %v2207
    %v3336 = vpop.permute.xlu0 %3335
    %3338 = vset.pattern.permute.xlu0 12
    %3339 = vperm.xlu0 %3338, %v2208
    %v3340 = vpop.permute.xlu0 %3339
    %3342 = vset.pattern.permute.xlu0 12
    %3343 = vperm.xlu0 %3342, %v2209
    %v3344 = vpop.permute.xlu0 %3343
    %v3346 = vmul.f32 %v65, %v3284
    %v3347 = vmul.f32 %v66, %v3288
    %v3348 = vmul.f32 %v67, %v3292
    %v3349 = vmul.f32 %v68, %v3296
    %v3350 = vmul.f32 %v69, %v3300
    %v3351 = vmul.f32 %v70, %v3304
    %v3352 = vmul.f32 %v71, %v3308
    %v3353 = vmul.f32 %v72, %v3312
    %v3354 = vmul.f32 %v73, %v3316
    %v3355 = vmul.f32 %v74, %v3320
    %v3356 = vmul.f32 %v75, %v3324
    %v3357 = vmul.f32 %v76, %v3328
    %v3358 = vmul.f32 %v77, %v3332
    %v3359 = vmul.f32 %v78, %v3336
    %v3360 = vmul.f32 %v79, %v3340
    %v3361 = vmul.f32 %v80, %v3344
    %v3362 = vpack.c.bf16 %v3347, %v3346
    %v3363 = vpack.c.bf16 %v3349, %v3348
    %v3364 = vpack.c.bf16 %v3351, %v3350
    %v3365 = vpack.c.bf16 %v3353, %v3352
    %v3366 = vpack.c.bf16 %v3355, %v3354
    %v3367 = vpack.c.bf16 %v3357, %v3356
    %v3368 = vpack.c.bf16 %v3359, %v3358
    %v3369 = vpack.c.bf16 %v3361, %v3360
    %3370 = vset.pattern.permute.xlu0 13
    %3371 = vperm.xlu0 %3370, %v2194
    %v3372 = vpop.permute.xlu0 %3371
    %3374 = vset.pattern.permute.xlu0 13
    %3375 = vperm.xlu0 %3374, %v2195
    %v3376 = vpop.permute.xlu0 %3375
    %3378 = vset.pattern.permute.xlu0 13
    %3379 = vperm.xlu0 %3378, %v2196
    %v3380 = vpop.permute.xlu0 %3379
    %3382 = vset.pattern.permute.xlu0 13
    %3383 = vperm.xlu0 %3382, %v2197
    %v3384 = vpop.permute.xlu0 %3383
    %3386 = vset.pattern.permute.xlu0 13
    %3387 = vperm.xlu0 %3386, %v2198
    %v3388 = vpop.permute.xlu0 %3387
    %3390 = vset.pattern.permute.xlu0 13
    %3391 = vperm.xlu0 %3390, %v2199
    %v3392 = vpop.permute.xlu0 %3391
    %3394 = vset.pattern.permute.xlu0 13
    %3395 = vperm.xlu0 %3394, %v2200
    %v3396 = vpop.permute.xlu0 %3395
    %3398 = vset.pattern.permute.xlu0 13
    %3399 = vperm.xlu0 %3398, %v2201
    %v3400 = vpop.permute.xlu0 %3399
    %3402 = vset.pattern.permute.xlu0 13
    %3403 = vperm.xlu0 %3402, %v2202
    %v3404 = vpop.permute.xlu0 %3403
    %3406 = vset.pattern.permute.xlu0 13
    %3407 = vperm.xlu0 %3406, %v2203
    %v3408 = vpop.permute.xlu0 %3407
    %3410 = vset.pattern.permute.xlu0 13
    %3411 = vperm.xlu0 %3410, %v2204
    %v3412 = vpop.permute.xlu0 %3411
    %3414 = vset.pattern.permute.xlu0 13
    %3415 = vperm.xlu0 %3414, %v2205
    %v3416 = vpop.permute.xlu0 %3415
    %3418 = vset.pattern.permute.xlu0 13
    %3419 = vperm.xlu0 %3418, %v2206
    %v3420 = vpop.permute.xlu0 %3419
    %3422 = vset.pattern.permute.xlu0 13
    %3423 = vperm.xlu0 %3422, %v2207
    %v3424 = vpop.permute.xlu0 %3423
    %3426 = vset.pattern.permute.xlu0 13
    %3427 = vperm.xlu0 %3426, %v2208
    %v3428 = vpop.permute.xlu0 %3427
    %3430 = vset.pattern.permute.xlu0 13
    %3431 = vperm.xlu0 %3430, %v2209
    %v3432 = vpop.permute.xlu0 %3431
    %v3434 = vmul.f32 %v65, %v3372
    %v3435 = vmul.f32 %v66, %v3376
    %v3436 = vmul.f32 %v67, %v3380
    %v3437 = vmul.f32 %v68, %v3384
    %v3438 = vmul.f32 %v69, %v3388
    %v3439 = vmul.f32 %v70, %v3392
    %v3440 = vmul.f32 %v71, %v3396
    %v3441 = vmul.f32 %v72, %v3400
    %v3442 = vmul.f32 %v73, %v3404
    %v3443 = vmul.f32 %v74, %v3408
    %v3444 = vmul.f32 %v75, %v3412
    %v3445 = vmul.f32 %v76, %v3416
    %v3446 = vmul.f32 %v77, %v3420
    %v3447 = vmul.f32 %v78, %v3424
    %v3448 = vmul.f32 %v79, %v3428
    %v3449 = vmul.f32 %v80, %v3432
    %v3450 = vpack.c.bf16 %v3435, %v3434
    %v3451 = vpack.c.bf16 %v3437, %v3436
    %v3452 = vpack.c.bf16 %v3439, %v3438
    %v3453 = vpack.c.bf16 %v3441, %v3440
    %v3454 = vpack.c.bf16 %v3443, %v3442
    %v3455 = vpack.c.bf16 %v3445, %v3444
    %v3456 = vpack.c.bf16 %v3447, %v3446
    %v3457 = vpack.c.bf16 %v3449, %v3448
    %3458 = vset.pattern.permute.xlu0 14
    %3459 = vperm.xlu0 %3458, %v2194
    %v3460 = vpop.permute.xlu0 %3459
    %3462 = vset.pattern.permute.xlu0 14
    %3463 = vperm.xlu0 %3462, %v2195
    %v3464 = vpop.permute.xlu0 %3463
    %3466 = vset.pattern.permute.xlu0 14
    %3467 = vperm.xlu0 %3466, %v2196
    %v3468 = vpop.permute.xlu0 %3467
    %3470 = vset.pattern.permute.xlu0 14
    %3471 = vperm.xlu0 %3470, %v2197
    %v3472 = vpop.permute.xlu0 %3471
    %3474 = vset.pattern.permute.xlu0 14
    %3475 = vperm.xlu0 %3474, %v2198
    %v3476 = vpop.permute.xlu0 %3475
    %3478 = vset.pattern.permute.xlu0 14
    %3479 = vperm.xlu0 %3478, %v2199
    %v3480 = vpop.permute.xlu0 %3479
    %3482 = vset.pattern.permute.xlu0 14
    %3483 = vperm.xlu0 %3482, %v2200
    %v3484 = vpop.permute.xlu0 %3483
    %3486 = vset.pattern.permute.xlu0 14
    %3487 = vperm.xlu0 %3486, %v2201
    %v3488 = vpop.permute.xlu0 %3487
    %3490 = vset.pattern.permute.xlu0 14
    %3491 = vperm.xlu0 %3490, %v2202
    %v3492 = vpop.permute.xlu0 %3491
    %3494 = vset.pattern.permute.xlu0 14
    %3495 = vperm.xlu0 %3494, %v2203
    %v3496 = vpop.permute.xlu0 %3495
    %3498 = vset.pattern.permute.xlu0 14
    %3499 = vperm.xlu0 %3498, %v2204
    %v3500 = vpop.permute.xlu0 %3499
    %3502 = vset.pattern.permute.xlu0 14
    %3503 = vperm.xlu0 %3502, %v2205
    %v3504 = vpop.permute.xlu0 %3503
    %3506 = vset.pattern.permute.xlu0 14
    %3507 = vperm.xlu0 %3506, %v2206
    %v3508 = vpop.permute.xlu0 %3507
    %3510 = vset.pattern.permute.xlu0 14
    %3511 = vperm.xlu0 %3510, %v2207
    %v3512 = vpop.permute.xlu0 %3511
    %3514 = vset.pattern.permute.xlu0 14
    %3515 = vperm.xlu0 %3514, %v2208
    %v3516 = vpop.permute.xlu0 %3515
    %3518 = vset.pattern.permute.xlu0 14
    %3519 = vperm.xlu0 %3518, %v2209
    %v3520 = vpop.permute.xlu0 %3519
    %v3522 = vmul.f32 %v65, %v3460
    %v3523 = vmul.f32 %v66, %v3464
    %v3524 = vmul.f32 %v67, %v3468
    %v3525 = vmul.f32 %v68, %v3472
    %v3526 = vmul.f32 %v69, %v3476
    %v3527 = vmul.f32 %v70, %v3480
    %v3528 = vmul.f32 %v71, %v3484
    %v3529 = vmul.f32 %v72, %v3488
    %v3530 = vmul.f32 %v73, %v3492
    %v3531 = vmul.f32 %v74, %v3496
    %v3532 = vmul.f32 %v75, %v3500
    %v3533 = vmul.f32 %v76, %v3504
    %v3534 = vmul.f32 %v77, %v3508
    %v3535 = vmul.f32 %v78, %v3512
    %v3536 = vmul.f32 %v79, %v3516
    %v3537 = vmul.f32 %v80, %v3520
    %v3538 = vpack.c.bf16 %v3523, %v3522
    %v3539 = vpack.c.bf16 %v3525, %v3524
    %v3540 = vpack.c.bf16 %v3527, %v3526
    %v3541 = vpack.c.bf16 %v3529, %v3528
    %v3542 = vpack.c.bf16 %v3531, %v3530
    %v3543 = vpack.c.bf16 %v3533, %v3532
    %v3544 = vpack.c.bf16 %v3535, %v3534
    %v3545 = vpack.c.bf16 %v3537, %v3536
    %3546 = vset.pattern.permute.xlu0 15
    %3547 = vperm.xlu0 %3546, %v2194
    %v3548 = vpop.permute.xlu0 %3547
    %3550 = vset.pattern.permute.xlu0 15
    %3551 = vperm.xlu0 %3550, %v2195
    %v3552 = vpop.permute.xlu0 %3551
    %3554 = vset.pattern.permute.xlu0 15
    %3555 = vperm.xlu0 %3554, %v2196
    %v3556 = vpop.permute.xlu0 %3555
    %3558 = vset.pattern.permute.xlu0 15
    %3559 = vperm.xlu0 %3558, %v2197
    %v3560 = vpop.permute.xlu0 %3559
    %3562 = vset.pattern.permute.xlu0 15
    %3563 = vperm.xlu0 %3562, %v2198
    %v3564 = vpop.permute.xlu0 %3563
    %3566 = vset.pattern.permute.xlu0 15
    %3567 = vperm.xlu0 %3566, %v2199
    %v3568 = vpop.permute.xlu0 %3567
    %3570 = vset.pattern.permute.xlu0 15
    %3571 = vperm.xlu0 %3570, %v2200
    %v3572 = vpop.permute.xlu0 %3571
    %3574 = vset.pattern.permute.xlu0 15
    %3575 = vperm.xlu0 %3574, %v2201
    %v3576 = vpop.permute.xlu0 %3575
    %3578 = vset.pattern.permute.xlu0 15
    %3579 = vperm.xlu0 %3578, %v2202
    %v3580 = vpop.permute.xlu0 %3579
    %3582 = vset.pattern.permute.xlu0 15
    %3583 = vperm.xlu0 %3582, %v2203
    %v3584 = vpop.permute.xlu0 %3583
    %3586 = vset.pattern.permute.xlu0 15
    %3587 = vperm.xlu0 %3586, %v2204
    %v3588 = vpop.permute.xlu0 %3587
    %3590 = vset.pattern.permute.xlu0 15
    %3591 = vperm.xlu0 %3590, %v2205
    %v3592 = vpop.permute.xlu0 %3591
    %3594 = vset.pattern.permute.xlu0 15
    %3595 = vperm.xlu0 %3594, %v2206
    %v3596 = vpop.permute.xlu0 %3595
    %3598 = vset.pattern.permute.xlu0 15
    %3599 = vperm.xlu0 %3598, %v2207
    %v3600 = vpop.permute.xlu0 %3599
    %3602 = vset.pattern.permute.xlu0 15
    %3603 = vperm.xlu0 %3602, %v2208
    %v3604 = vpop.permute.xlu0 %3603
    %3606 = vset.pattern.permute.xlu0 15
    %3607 = vperm.xlu0 %3606, %v2209
    %v3608 = vpop.permute.xlu0 %3607
    %v3610 = vmul.f32 %v65, %v3548
    %v3611 = vmul.f32 %v66, %v3552
    %v3612 = vmul.f32 %v67, %v3556
    %v3613 = vmul.f32 %v68, %v3560
    %v3614 = vmul.f32 %v69, %v3564
    %v3615 = vmul.f32 %v70, %v3568
    %v3616 = vmul.f32 %v71, %v3572
    %v3617 = vmul.f32 %v72, %v3576
    %v3618 = vmul.f32 %v73, %v3580
    %v3619 = vmul.f32 %v74, %v3584
    %v3620 = vmul.f32 %v75, %v3588
    %v3621 = vmul.f32 %v76, %v3592
    %v3622 = vmul.f32 %v77, %v3596
    %v3623 = vmul.f32 %v78, %v3600
    %v3624 = vmul.f32 %v79, %v3604
    %v3625 = vmul.f32 %v80, %v3608
    %v3626 = vpack.c.bf16 %v3611, %v3610
    %v3627 = vpack.c.bf16 %v3613, %v3612
    %v3628 = vpack.c.bf16 %v3615, %v3614
    %v3629 = vpack.c.bf16 %v3617, %v3616
    %v3630 = vpack.c.bf16 %v3619, %v3618
    %v3631 = vpack.c.bf16 %v3621, %v3620
    %v3632 = vpack.c.bf16 %v3623, %v3622
    %v3633 = vpack.c.bf16 %v3625, %v3624
    %3634 = vset.pattern.permute.xlu0 16
    %3635 = vperm.xlu0 %3634, %v2194
    %v3636 = vpop.permute.xlu0 %3635
    %3638 = vset.pattern.permute.xlu0 16
    %3639 = vperm.xlu0 %3638, %v2195
    %v3640 = vpop.permute.xlu0 %3639
    %3642 = vset.pattern.permute.xlu0 16
    %3643 = vperm.xlu0 %3642, %v2196
    %v3644 = vpop.permute.xlu0 %3643
    %3646 = vset.pattern.permute.xlu0 16
    %3647 = vperm.xlu0 %3646, %v2197
    %v3648 = vpop.permute.xlu0 %3647
    %3650 = vset.pattern.permute.xlu0 16
    %3651 = vperm.xlu0 %3650, %v2198
    %v3652 = vpop.permute.xlu0 %3651
    %3654 = vset.pattern.permute.xlu0 16
    %3655 = vperm.xlu0 %3654, %v2199
    %v3656 = vpop.permute.xlu0 %3655
    %3658 = vset.pattern.permute.xlu0 16
    %3659 = vperm.xlu0 %3658, %v2200
    %v3660 = vpop.permute.xlu0 %3659
    %3662 = vset.pattern.permute.xlu0 16
    %3663 = vperm.xlu0 %3662, %v2201
    %v3664 = vpop.permute.xlu0 %3663
    %3666 = vset.pattern.permute.xlu0 16
    %3667 = vperm.xlu0 %3666, %v2202
    %v3668 = vpop.permute.xlu0 %3667
    %3670 = vset.pattern.permute.xlu0 16
    %3671 = vperm.xlu0 %3670, %v2203
    %v3672 = vpop.permute.xlu0 %3671
    %3674 = vset.pattern.permute.xlu0 16
    %3675 = vperm.xlu0 %3674, %v2204
    %v3676 = vpop.permute.xlu0 %3675
    %3678 = vset.pattern.permute.xlu0 16
    %3679 = vperm.xlu0 %3678, %v2205
    %v3680 = vpop.permute.xlu0 %3679
    %3682 = vset.pattern.permute.xlu0 16
    %3683 = vperm.xlu0 %3682, %v2206
    %v3684 = vpop.permute.xlu0 %3683
    %3686 = vset.pattern.permute.xlu0 16
    %3687 = vperm.xlu0 %3686, %v2207
    %v3688 = vpop.permute.xlu0 %3687
    %3690 = vset.pattern.permute.xlu0 16
    %3691 = vperm.xlu0 %3690, %v2208
    %v3692 = vpop.permute.xlu0 %3691
    %3694 = vset.pattern.permute.xlu0 16
    %3695 = vperm.xlu0 %3694, %v2209
    %v3696 = vpop.permute.xlu0 %3695
    %v3698 = vmul.f32 %v65, %v3636
    %v3699 = vmul.f32 %v66, %v3640
    %v3700 = vmul.f32 %v67, %v3644
    %v3701 = vmul.f32 %v68, %v3648
    %v3702 = vmul.f32 %v69, %v3652
    %v3703 = vmul.f32 %v70, %v3656
    %v3704 = vmul.f32 %v71, %v3660
    %v3705 = vmul.f32 %v72, %v3664
    %v3706 = vmul.f32 %v73, %v3668
    %v3707 = vmul.f32 %v74, %v3672
    %v3708 = vmul.f32 %v75, %v3676
    %v3709 = vmul.f32 %v76, %v3680
    %v3710 = vmul.f32 %v77, %v3684
    %v3711 = vmul.f32 %v78, %v3688
    %v3712 = vmul.f32 %v79, %v3692
    %v3713 = vmul.f32 %v80, %v3696
    %v3714 = vpack.c.bf16 %v3699, %v3698
    %v3715 = vpack.c.bf16 %v3701, %v3700
    %v3716 = vpack.c.bf16 %v3703, %v3702
    %v3717 = vpack.c.bf16 %v3705, %v3704
    %v3718 = vpack.c.bf16 %v3707, %v3706
    %v3719 = vpack.c.bf16 %v3709, %v3708
    %v3720 = vpack.c.bf16 %v3711, %v3710
    %v3721 = vpack.c.bf16 %v3713, %v3712
    %3722 = vset.pattern.permute.xlu0 17
    %3723 = vperm.xlu0 %3722, %v2194
    %v3724 = vpop.permute.xlu0 %3723
    %3726 = vset.pattern.permute.xlu0 17
    %3727 = vperm.xlu0 %3726, %v2195
    %v3728 = vpop.permute.xlu0 %3727
    %3730 = vset.pattern.permute.xlu0 17
    %3731 = vperm.xlu0 %3730, %v2196
    %v3732 = vpop.permute.xlu0 %3731
    %3734 = vset.pattern.permute.xlu0 17
    %3735 = vperm.xlu0 %3734, %v2197
    %v3736 = vpop.permute.xlu0 %3735
    %3738 = vset.pattern.permute.xlu0 17
    %3739 = vperm.xlu0 %3738, %v2198
    %v3740 = vpop.permute.xlu0 %3739
    %3742 = vset.pattern.permute.xlu0 17
    %3743 = vperm.xlu0 %3742, %v2199
    %v3744 = vpop.permute.xlu0 %3743
    %3746 = vset.pattern.permute.xlu0 17
    %3747 = vperm.xlu0 %3746, %v2200
    %v3748 = vpop.permute.xlu0 %3747
    %3750 = vset.pattern.permute.xlu0 17
    %3751 = vperm.xlu0 %3750, %v2201
    %v3752 = vpop.permute.xlu0 %3751
    %3754 = vset.pattern.permute.xlu0 17
    %3755 = vperm.xlu0 %3754, %v2202
    %v3756 = vpop.permute.xlu0 %3755
    %3758 = vset.pattern.permute.xlu0 17
    %3759 = vperm.xlu0 %3758, %v2203
    %v3760 = vpop.permute.xlu0 %3759
    %3762 = vset.pattern.permute.xlu0 17
    %3763 = vperm.xlu0 %3762, %v2204
    %v3764 = vpop.permute.xlu0 %3763
    %3766 = vset.pattern.permute.xlu0 17
    %3767 = vperm.xlu0 %3766, %v2205
    %v3768 = vpop.permute.xlu0 %3767
    %3770 = vset.pattern.permute.xlu0 17
    %3771 = vperm.xlu0 %3770, %v2206
    %v3772 = vpop.permute.xlu0 %3771
    %3774 = vset.pattern.permute.xlu0 17
    %3775 = vperm.xlu0 %3774, %v2207
    %v3776 = vpop.permute.xlu0 %3775
    %3778 = vset.pattern.permute.xlu0 17
    %3779 = vperm.xlu0 %3778, %v2208
    %v3780 = vpop.permute.xlu0 %3779
    %3782 = vset.pattern.permute.xlu0 17
    %3783 = vperm.xlu0 %3782, %v2209
    %v3784 = vpop.permute.xlu0 %3783
    %v3786 = vmul.f32 %v65, %v3724
    %v3787 = vmul.f32 %v66, %v3728
    %v3788 = vmul.f32 %v67, %v3732
    %v3789 = vmul.f32 %v68, %v3736
    %v3790 = vmul.f32 %v69, %v3740
    %v3791 = vmul.f32 %v70, %v3744
    %v3792 = vmul.f32 %v71, %v3748
    %v3793 = vmul.f32 %v72, %v3752
    %v3794 = vmul.f32 %v73, %v3756
    %v3795 = vmul.f32 %v74, %v3760
    %v3796 = vmul.f32 %v75, %v3764
    %v3797 = vmul.f32 %v76, %v3768
    %v3798 = vmul.f32 %v77, %v3772
    %v3799 = vmul.f32 %v78, %v3776
    %v3800 = vmul.f32 %v79, %v3780
    %v3801 = vmul.f32 %v80, %v3784
    %v3802 = vpack.c.bf16 %v3787, %v3786
    %v3803 = vpack.c.bf16 %v3789, %v3788
    %v3804 = vpack.c.bf16 %v3791, %v3790
    %v3805 = vpack.c.bf16 %v3793, %v3792
    %v3806 = vpack.c.bf16 %v3795, %v3794
    %v3807 = vpack.c.bf16 %v3797, %v3796
    %v3808 = vpack.c.bf16 %v3799, %v3798
    %v3809 = vpack.c.bf16 %v3801, %v3800
    %3810 = vset.pattern.permute.xlu0 18
    %3811 = vperm.xlu0 %3810, %v2194
    %v3812 = vpop.permute.xlu0 %3811
    %3814 = vset.pattern.permute.xlu0 18
    %3815 = vperm.xlu0 %3814, %v2195
    %v3816 = vpop.permute.xlu0 %3815
    %3818 = vset.pattern.permute.xlu0 18
    %3819 = vperm.xlu0 %3818, %v2196
    %v3820 = vpop.permute.xlu0 %3819
    %3822 = vset.pattern.permute.xlu0 18
    %3823 = vperm.xlu0 %3822, %v2197
    %v3824 = vpop.permute.xlu0 %3823
    %3826 = vset.pattern.permute.xlu0 18
    %3827 = vperm.xlu0 %3826, %v2198
    %v3828 = vpop.permute.xlu0 %3827
    %3830 = vset.pattern.permute.xlu0 18
    %3831 = vperm.xlu0 %3830, %v2199
    %v3832 = vpop.permute.xlu0 %3831
    %3834 = vset.pattern.permute.xlu0 18
    %3835 = vperm.xlu0 %3834, %v2200
    %v3836 = vpop.permute.xlu0 %3835
    %3838 = vset.pattern.permute.xlu0 18
    %3839 = vperm.xlu0 %3838, %v2201
    %v3840 = vpop.permute.xlu0 %3839
    %3842 = vset.pattern.permute.xlu0 18
    %3843 = vperm.xlu0 %3842, %v2202
    %v3844 = vpop.permute.xlu0 %3843
    %3846 = vset.pattern.permute.xlu0 18
    %3847 = vperm.xlu0 %3846, %v2203
    %v3848 = vpop.permute.xlu0 %3847
    %3850 = vset.pattern.permute.xlu0 18
    %3851 = vperm.xlu0 %3850, %v2204
    %v3852 = vpop.permute.xlu0 %3851
    %3854 = vset.pattern.permute.xlu0 18
    %3855 = vperm.xlu0 %3854, %v2205
    %v3856 = vpop.permute.xlu0 %3855
    %3858 = vset.pattern.permute.xlu0 18
    %3859 = vperm.xlu0 %3858, %v2206
    %v3860 = vpop.permute.xlu0 %3859
    %3862 = vset.pattern.permute.xlu0 18
    %3863 = vperm.xlu0 %3862, %v2207
    %v3864 = vpop.permute.xlu0 %3863
    %3866 = vset.pattern.permute.xlu0 18
    %3867 = vperm.xlu0 %3866, %v2208
    %v3868 = vpop.permute.xlu0 %3867
    %3870 = vset.pattern.permute.xlu0 18
    %3871 = vperm.xlu0 %3870, %v2209
    %v3872 = vpop.permute.xlu0 %3871
    %v3874 = vmul.f32 %v65, %v3812
    %v3875 = vmul.f32 %v66, %v3816
    %v3876 = vmul.f32 %v67, %v3820
    %v3877 = vmul.f32 %v68, %v3824
    %v3878 = vmul.f32 %v69, %v3828
    %v3879 = vmul.f32 %v70, %v3832
    %v3880 = vmul.f32 %v71, %v3836
    %v3881 = vmul.f32 %v72, %v3840
    %v3882 = vmul.f32 %v73, %v3844
    %v3883 = vmul.f32 %v74, %v3848
    %v3884 = vmul.f32 %v75, %v3852
    %v3885 = vmul.f32 %v76, %v3856
    %v3886 = vmul.f32 %v77, %v3860
    %v3887 = vmul.f32 %v78, %v3864
    %v3888 = vmul.f32 %v79, %v3868
    %v3889 = vmul.f32 %v80, %v3872
    %v3890 = vpack.c.bf16 %v3875, %v3874
    %v3891 = vpack.c.bf16 %v3877, %v3876
    %v3892 = vpack.c.bf16 %v3879, %v3878
    %v3893 = vpack.c.bf16 %v3881, %v3880
    %v3894 = vpack.c.bf16 %v3883, %v3882
    %v3895 = vpack.c.bf16 %v3885, %v3884
    %v3896 = vpack.c.bf16 %v3887, %v3886
    %v3897 = vpack.c.bf16 %v3889, %v3888
    %3898 = vset.pattern.permute.xlu0 19
    %3899 = vperm.xlu0 %3898, %v2194
    %v3900 = vpop.permute.xlu0 %3899
    %3902 = vset.pattern.permute.xlu0 19
    %3903 = vperm.xlu0 %3902, %v2195
    %v3904 = vpop.permute.xlu0 %3903
    %3906 = vset.pattern.permute.xlu0 19
    %3907 = vperm.xlu0 %3906, %v2196
    %v3908 = vpop.permute.xlu0 %3907
    %3910 = vset.pattern.permute.xlu0 19
    %3911 = vperm.xlu0 %3910, %v2197
    %v3912 = vpop.permute.xlu0 %3911
    %3914 = vset.pattern.permute.xlu0 19
    %3915 = vperm.xlu0 %3914, %v2198
    %v3916 = vpop.permute.xlu0 %3915
    %3918 = vset.pattern.permute.xlu0 19
    %3919 = vperm.xlu0 %3918, %v2199
    %v3920 = vpop.permute.xlu0 %3919
    %3922 = vset.pattern.permute.xlu0 19
    %3923 = vperm.xlu0 %3922, %v2200
    %v3924 = vpop.permute.xlu0 %3923
    %3926 = vset.pattern.permute.xlu0 19
    %3927 = vperm.xlu0 %3926, %v2201
    %v3928 = vpop.permute.xlu0 %3927
    %3930 = vset.pattern.permute.xlu0 19
    %3931 = vperm.xlu0 %3930, %v2202
    %v3932 = vpop.permute.xlu0 %3931
    %3934 = vset.pattern.permute.xlu0 19
    %3935 = vperm.xlu0 %3934, %v2203
    %v3936 = vpop.permute.xlu0 %3935
    %3938 = vset.pattern.permute.xlu0 19
    %3939 = vperm.xlu0 %3938, %v2204
    %v3940 = vpop.permute.xlu0 %3939
    %3942 = vset.pattern.permute.xlu0 19
    %3943 = vperm.xlu0 %3942, %v2205
    %v3944 = vpop.permute.xlu0 %3943
    %3946 = vset.pattern.permute.xlu0 19
    %3947 = vperm.xlu0 %3946, %v2206
    %v3948 = vpop.permute.xlu0 %3947
    %3950 = vset.pattern.permute.xlu0 19
    %3951 = vperm.xlu0 %3950, %v2207
    %v3952 = vpop.permute.xlu0 %3951
    %3954 = vset.pattern.permute.xlu0 19
    %3955 = vperm.xlu0 %3954, %v2208
    %v3956 = vpop.permute.xlu0 %3955
    %3958 = vset.pattern.permute.xlu0 19
    %3959 = vperm.xlu0 %3958, %v2209
    %v3960 = vpop.permute.xlu0 %3959
    %v3962 = vmul.f32 %v65, %v3900
    %v3963 = vmul.f32 %v66, %v3904
    %v3964 = vmul.f32 %v67, %v3908
    %v3965 = vmul.f32 %v68, %v3912
    %v3966 = vmul.f32 %v69, %v3916
    %v3967 = vmul.f32 %v70, %v3920
    %v3968 = vmul.f32 %v71, %v3924
    %v3969 = vmul.f32 %v72, %v3928
    %v3970 = vmul.f32 %v73, %v3932
    %v3971 = vmul.f32 %v74, %v3936
    %v3972 = vmul.f32 %v75, %v3940
    %v3973 = vmul.f32 %v76, %v3944
    %v3974 = vmul.f32 %v77, %v3948
    %v3975 = vmul.f32 %v78, %v3952
    %v3976 = vmul.f32 %v79, %v3956
    %v3977 = vmul.f32 %v80, %v3960
    %v3978 = vpack.c.bf16 %v3963, %v3962
    %v3979 = vpack.c.bf16 %v3965, %v3964
    %v3980 = vpack.c.bf16 %v3967, %v3966
    %v3981 = vpack.c.bf16 %v3969, %v3968
    %v3982 = vpack.c.bf16 %v3971, %v3970
    %v3983 = vpack.c.bf16 %v3973, %v3972
    %v3984 = vpack.c.bf16 %v3975, %v3974
    %v3985 = vpack.c.bf16 %v3977, %v3976
    %3986 = vset.pattern.permute.xlu0 20
    %3987 = vperm.xlu0 %3986, %v2194
    %v3988 = vpop.permute.xlu0 %3987
    %3990 = vset.pattern.permute.xlu0 20
    %3991 = vperm.xlu0 %3990, %v2195
    %v3992 = vpop.permute.xlu0 %3991
    %3994 = vset.pattern.permute.xlu0 20
    %3995 = vperm.xlu0 %3994, %v2196
    %v3996 = vpop.permute.xlu0 %3995
    %3998 = vset.pattern.permute.xlu0 20
    %3999 = vperm.xlu0 %3998, %v2197
    %v4000 = vpop.permute.xlu0 %3999
    %4002 = vset.pattern.permute.xlu0 20
    %4003 = vperm.xlu0 %4002, %v2198
    %v4004 = vpop.permute.xlu0 %4003
    %4006 = vset.pattern.permute.xlu0 20
    %4007 = vperm.xlu0 %4006, %v2199
    %v4008 = vpop.permute.xlu0 %4007
    %4010 = vset.pattern.permute.xlu0 20
    %4011 = vperm.xlu0 %4010, %v2200
    %v4012 = vpop.permute.xlu0 %4011
    %4014 = vset.pattern.permute.xlu0 20
    %4015 = vperm.xlu0 %4014, %v2201
    %v4016 = vpop.permute.xlu0 %4015
    %4018 = vset.pattern.permute.xlu0 20
    %4019 = vperm.xlu0 %4018, %v2202
    %v4020 = vpop.permute.xlu0 %4019
    %4022 = vset.pattern.permute.xlu0 20
    %4023 = vperm.xlu0 %4022, %v2203
    %v4024 = vpop.permute.xlu0 %4023
    %4026 = vset.pattern.permute.xlu0 20
    %4027 = vperm.xlu0 %4026, %v2204
    %v4028 = vpop.permute.xlu0 %4027
    %4030 = vset.pattern.permute.xlu0 20
    %4031 = vperm.xlu0 %4030, %v2205
    %v4032 = vpop.permute.xlu0 %4031
    %4034 = vset.pattern.permute.xlu0 20
    %4035 = vperm.xlu0 %4034, %v2206
    %v4036 = vpop.permute.xlu0 %4035
    %4038 = vset.pattern.permute.xlu0 20
    %4039 = vperm.xlu0 %4038, %v2207
    %v4040 = vpop.permute.xlu0 %4039
    %4042 = vset.pattern.permute.xlu0 20
    %4043 = vperm.xlu0 %4042, %v2208
    %v4044 = vpop.permute.xlu0 %4043
    %4046 = vset.pattern.permute.xlu0 20
    %4047 = vperm.xlu0 %4046, %v2209
    %v4048 = vpop.permute.xlu0 %4047
    %v4050 = vmul.f32 %v65, %v3988
    %v4051 = vmul.f32 %v66, %v3992
    %v4052 = vmul.f32 %v67, %v3996
    %v4053 = vmul.f32 %v68, %v4000
    %v4054 = vmul.f32 %v69, %v4004
    %v4055 = vmul.f32 %v70, %v4008
    %v4056 = vmul.f32 %v71, %v4012
    %v4057 = vmul.f32 %v72, %v4016
    %v4058 = vmul.f32 %v73, %v4020
    %v4059 = vmul.f32 %v74, %v4024
    %v4060 = vmul.f32 %v75, %v4028
    %v4061 = vmul.f32 %v76, %v4032
    %v4062 = vmul.f32 %v77, %v4036
    %v4063 = vmul.f32 %v78, %v4040
    %v4064 = vmul.f32 %v79, %v4044
    %v4065 = vmul.f32 %v80, %v4048
    %v4066 = vpack.c.bf16 %v4051, %v4050
    %v4067 = vpack.c.bf16 %v4053, %v4052
    %v4068 = vpack.c.bf16 %v4055, %v4054
    %v4069 = vpack.c.bf16 %v4057, %v4056
    %v4070 = vpack.c.bf16 %v4059, %v4058
    %v4071 = vpack.c.bf16 %v4061, %v4060
    %v4072 = vpack.c.bf16 %v4063, %v4062
    %v4073 = vpack.c.bf16 %v4065, %v4064
    %4074 = vset.pattern.permute.xlu0 21
    %4075 = vperm.xlu0 %4074, %v2194
    %v4076 = vpop.permute.xlu0 %4075
    %4078 = vset.pattern.permute.xlu0 21
    %4079 = vperm.xlu0 %4078, %v2195
    %v4080 = vpop.permute.xlu0 %4079
    %4082 = vset.pattern.permute.xlu0 21
    %4083 = vperm.xlu0 %4082, %v2196
    %v4084 = vpop.permute.xlu0 %4083
    %4086 = vset.pattern.permute.xlu0 21
    %4087 = vperm.xlu0 %4086, %v2197
    %v4088 = vpop.permute.xlu0 %4087
    %4090 = vset.pattern.permute.xlu0 21
    %4091 = vperm.xlu0 %4090, %v2198
    %v4092 = vpop.permute.xlu0 %4091
    %4094 = vset.pattern.permute.xlu0 21
    %4095 = vperm.xlu0 %4094, %v2199
    %v4096 = vpop.permute.xlu0 %4095
    %4098 = vset.pattern.permute.xlu0 21
    %4099 = vperm.xlu0 %4098, %v2200
    %v4100 = vpop.permute.xlu0 %4099
    %4102 = vset.pattern.permute.xlu0 21
    %4103 = vperm.xlu0 %4102, %v2201
    %v4104 = vpop.permute.xlu0 %4103
    %4106 = vset.pattern.permute.xlu0 21
    %4107 = vperm.xlu0 %4106, %v2202
    %v4108 = vpop.permute.xlu0 %4107
    %4110 = vset.pattern.permute.xlu0 21
    %4111 = vperm.xlu0 %4110, %v2203
    %v4112 = vpop.permute.xlu0 %4111
    %4114 = vset.pattern.permute.xlu0 21
    %4115 = vperm.xlu0 %4114, %v2204
    %v4116 = vpop.permute.xlu0 %4115
    %4118 = vset.pattern.permute.xlu0 21
    %4119 = vperm.xlu0 %4118, %v2205
    %v4120 = vpop.permute.xlu0 %4119
    %4122 = vset.pattern.permute.xlu0 21
    %4123 = vperm.xlu0 %4122, %v2206
    %v4124 = vpop.permute.xlu0 %4123
    %4126 = vset.pattern.permute.xlu0 21
    %4127 = vperm.xlu0 %4126, %v2207
    %v4128 = vpop.permute.xlu0 %4127
    %4130 = vset.pattern.permute.xlu0 21
    %4131 = vperm.xlu0 %4130, %v2208
    %v4132 = vpop.permute.xlu0 %4131
    %4134 = vset.pattern.permute.xlu0 21
    %4135 = vperm.xlu0 %4134, %v2209
    %v4136 = vpop.permute.xlu0 %4135
    %v4138 = vmul.f32 %v65, %v4076
    %v4139 = vmul.f32 %v66, %v4080
    %v4140 = vmul.f32 %v67, %v4084
    %v4141 = vmul.f32 %v68, %v4088
    %v4142 = vmul.f32 %v69, %v4092
    %v4143 = vmul.f32 %v70, %v4096
    %v4144 = vmul.f32 %v71, %v4100
    %v4145 = vmul.f32 %v72, %v4104
    %v4146 = vmul.f32 %v73, %v4108
    %v4147 = vmul.f32 %v74, %v4112
    %v4148 = vmul.f32 %v75, %v4116
    %v4149 = vmul.f32 %v76, %v4120
    %v4150 = vmul.f32 %v77, %v4124
    %v4151 = vmul.f32 %v78, %v4128
    %v4152 = vmul.f32 %v79, %v4132
    %v4153 = vmul.f32 %v80, %v4136
    %v4154 = vpack.c.bf16 %v4139, %v4138
    %v4155 = vpack.c.bf16 %v4141, %v4140
    %v4156 = vpack.c.bf16 %v4143, %v4142
    %v4157 = vpack.c.bf16 %v4145, %v4144
    %v4158 = vpack.c.bf16 %v4147, %v4146
    %v4159 = vpack.c.bf16 %v4149, %v4148
    %v4160 = vpack.c.bf16 %v4151, %v4150
    %v4161 = vpack.c.bf16 %v4153, %v4152
    %4162 = vset.pattern.permute.xlu0 22
    %4163 = vperm.xlu0 %4162, %v2194
    %v4164 = vpop.permute.xlu0 %4163
    %4166 = vset.pattern.permute.xlu0 22
    %4167 = vperm.xlu0 %4166, %v2195
    %v4168 = vpop.permute.xlu0 %4167
    %4170 = vset.pattern.permute.xlu0 22
    %4171 = vperm.xlu0 %4170, %v2196
    %v4172 = vpop.permute.xlu0 %4171
    %4174 = vset.pattern.permute.xlu0 22
    %4175 = vperm.xlu0 %4174, %v2197
    %v4176 = vpop.permute.xlu0 %4175
    %4178 = vset.pattern.permute.xlu0 22
    %4179 = vperm.xlu0 %4178, %v2198
    %v4180 = vpop.permute.xlu0 %4179
    %4182 = vset.pattern.permute.xlu0 22
    %4183 = vperm.xlu0 %4182, %v2199
    %v4184 = vpop.permute.xlu0 %4183
    %4186 = vset.pattern.permute.xlu0 22
    %4187 = vperm.xlu0 %4186, %v2200
    %v4188 = vpop.permute.xlu0 %4187
    %4190 = vset.pattern.permute.xlu0 22
    %4191 = vperm.xlu0 %4190, %v2201
    %v4192 = vpop.permute.xlu0 %4191
    %4194 = vset.pattern.permute.xlu0 22
    %4195 = vperm.xlu0 %4194, %v2202
    %v4196 = vpop.permute.xlu0 %4195
    %4198 = vset.pattern.permute.xlu0 22
    %4199 = vperm.xlu0 %4198, %v2203
    %v4200 = vpop.permute.xlu0 %4199
    %4202 = vset.pattern.permute.xlu0 22
    %4203 = vperm.xlu0 %4202, %v2204
    %v4204 = vpop.permute.xlu0 %4203
    %4206 = vset.pattern.permute.xlu0 22
    %4207 = vperm.xlu0 %4206, %v2205
    %v4208 = vpop.permute.xlu0 %4207
    %4210 = vset.pattern.permute.xlu0 22
    %4211 = vperm.xlu0 %4210, %v2206
    %v4212 = vpop.permute.xlu0 %4211
    %4214 = vset.pattern.permute.xlu0 22
    %4215 = vperm.xlu0 %4214, %v2207
    %v4216 = vpop.permute.xlu0 %4215
    %4218 = vset.pattern.permute.xlu0 22
    %4219 = vperm.xlu0 %4218, %v2208
    %v4220 = vpop.permute.xlu0 %4219
    %4222 = vset.pattern.permute.xlu0 22
    %4223 = vperm.xlu0 %4222, %v2209
    %v4224 = vpop.permute.xlu0 %4223
    %v4226 = vmul.f32 %v65, %v4164
    %v4227 = vmul.f32 %v66, %v4168
    %v4228 = vmul.f32 %v67, %v4172
    %v4229 = vmul.f32 %v68, %v4176
    %v4230 = vmul.f32 %v69, %v4180
    %v4231 = vmul.f32 %v70, %v4184
    %v4232 = vmul.f32 %v71, %v4188
    %v4233 = vmul.f32 %v72, %v4192
    %v4234 = vmul.f32 %v73, %v4196
    %v4235 = vmul.f32 %v74, %v4200
    %v4236 = vmul.f32 %v75, %v4204
    %v4237 = vmul.f32 %v76, %v4208
    %v4238 = vmul.f32 %v77, %v4212
    %v4239 = vmul.f32 %v78, %v4216
    %v4240 = vmul.f32 %v79, %v4220
    %v4241 = vmul.f32 %v80, %v4224
    %v4242 = vpack.c.bf16 %v4227, %v4226
    %v4243 = vpack.c.bf16 %v4229, %v4228
    %v4244 = vpack.c.bf16 %v4231, %v4230
    %v4245 = vpack.c.bf16 %v4233, %v4232
    %v4246 = vpack.c.bf16 %v4235, %v4234
    %v4247 = vpack.c.bf16 %v4237, %v4236
    %v4248 = vpack.c.bf16 %v4239, %v4238
    %v4249 = vpack.c.bf16 %v4241, %v4240
    %4250 = vset.pattern.permute.xlu0 23
    %4251 = vperm.xlu0 %4250, %v2194
    %v4252 = vpop.permute.xlu0 %4251
    %4254 = vset.pattern.permute.xlu0 23
    %4255 = vperm.xlu0 %4254, %v2195
    %v4256 = vpop.permute.xlu0 %4255
    %4258 = vset.pattern.permute.xlu0 23
    %4259 = vperm.xlu0 %4258, %v2196
    %v4260 = vpop.permute.xlu0 %4259
    %4262 = vset.pattern.permute.xlu0 23
    %4263 = vperm.xlu0 %4262, %v2197
    %v4264 = vpop.permute.xlu0 %4263
    %4266 = vset.pattern.permute.xlu0 23
    %4267 = vperm.xlu0 %4266, %v2198
    %v4268 = vpop.permute.xlu0 %4267
    %4270 = vset.pattern.permute.xlu0 23
    %4271 = vperm.xlu0 %4270, %v2199
    %v4272 = vpop.permute.xlu0 %4271
    %4274 = vset.pattern.permute.xlu0 23
    %4275 = vperm.xlu0 %4274, %v2200
    %v4276 = vpop.permute.xlu0 %4275
    %4278 = vset.pattern.permute.xlu0 23
    %4279 = vperm.xlu0 %4278, %v2201
    %v4280 = vpop.permute.xlu0 %4279
    %4282 = vset.pattern.permute.xlu0 23
    %4283 = vperm.xlu0 %4282, %v2202
    %v4284 = vpop.permute.xlu0 %4283
    %4286 = vset.pattern.permute.xlu0 23
    %4287 = vperm.xlu0 %4286, %v2203
    %v4288 = vpop.permute.xlu0 %4287
    %4290 = vset.pattern.permute.xlu0 23
    %4291 = vperm.xlu0 %4290, %v2204
    %v4292 = vpop.permute.xlu0 %4291
    %4294 = vset.pattern.permute.xlu0 23
    %4295 = vperm.xlu0 %4294, %v2205
    %v4296 = vpop.permute.xlu0 %4295
    %4298 = vset.pattern.permute.xlu0 23
    %4299 = vperm.xlu0 %4298, %v2206
    %v4300 = vpop.permute.xlu0 %4299
    %4302 = vset.pattern.permute.xlu0 23
    %4303 = vperm.xlu0 %4302, %v2207
    %v4304 = vpop.permute.xlu0 %4303
    %4306 = vset.pattern.permute.xlu0 23
    %4307 = vperm.xlu0 %4306, %v2208
    %v4308 = vpop.permute.xlu0 %4307
    %4310 = vset.pattern.permute.xlu0 23
    %4311 = vperm.xlu0 %4310, %v2209
    %v4312 = vpop.permute.xlu0 %4311
    %v4314 = vmul.f32 %v65, %v4252
    %v4315 = vmul.f32 %v66, %v4256
    %v4316 = vmul.f32 %v67, %v4260
    %v4317 = vmul.f32 %v68, %v4264
    %v4318 = vmul.f32 %v69, %v4268
    %v4319 = vmul.f32 %v70, %v4272
    %v4320 = vmul.f32 %v71, %v4276
    %v4321 = vmul.f32 %v72, %v4280
    %v4322 = vmul.f32 %v73, %v4284
    %v4323 = vmul.f32 %v74, %v4288
    %v4324 = vmul.f32 %v75, %v4292
    %v4325 = vmul.f32 %v76, %v4296
    %v4326 = vmul.f32 %v77, %v4300
    %v4327 = vmul.f32 %v78, %v4304
    %v4328 = vmul.f32 %v79, %v4308
    %v4329 = vmul.f32 %v80, %v4312
    %v4330 = vpack.c.bf16 %v4315, %v4314
    %v4331 = vpack.c.bf16 %v4317, %v4316
    %v4332 = vpack.c.bf16 %v4319, %v4318
    %v4333 = vpack.c.bf16 %v4321, %v4320
    %v4334 = vpack.c.bf16 %v4323, %v4322
    %v4335 = vpack.c.bf16 %v4325, %v4324
    %v4336 = vpack.c.bf16 %v4327, %v4326
    %v4337 = vpack.c.bf16 %v4329, %v4328
    %4338 = vset.pattern.permute.xlu0 24
    %4339 = vperm.xlu0 %4338, %v2194
    %v4340 = vpop.permute.xlu0 %4339
    %4342 = vset.pattern.permute.xlu0 24
    %4343 = vperm.xlu0 %4342, %v2195
    %v4344 = vpop.permute.xlu0 %4343
    %4346 = vset.pattern.permute.xlu0 24
    %4347 = vperm.xlu0 %4346, %v2196
    %v4348 = vpop.permute.xlu0 %4347
    %4350 = vset.pattern.permute.xlu0 24
    %4351 = vperm.xlu0 %4350, %v2197
    %v4352 = vpop.permute.xlu0 %4351
    %4354 = vset.pattern.permute.xlu0 24
    %4355 = vperm.xlu0 %4354, %v2198
    %v4356 = vpop.permute.xlu0 %4355
    %4358 = vset.pattern.permute.xlu0 24
    %4359 = vperm.xlu0 %4358, %v2199
    %v4360 = vpop.permute.xlu0 %4359
    %4362 = vset.pattern.permute.xlu0 24
    %4363 = vperm.xlu0 %4362, %v2200
    %v4364 = vpop.permute.xlu0 %4363
    %4366 = vset.pattern.permute.xlu0 24
    %4367 = vperm.xlu0 %4366, %v2201
    %v4368 = vpop.permute.xlu0 %4367
    %4370 = vset.pattern.permute.xlu0 24
    %4371 = vperm.xlu0 %4370, %v2202
    %v4372 = vpop.permute.xlu0 %4371
    %4374 = vset.pattern.permute.xlu0 24
    %4375 = vperm.xlu0 %4374, %v2203
    %v4376 = vpop.permute.xlu0 %4375
    %4378 = vset.pattern.permute.xlu0 24
    %4379 = vperm.xlu0 %4378, %v2204
    %v4380 = vpop.permute.xlu0 %4379
    %4382 = vset.pattern.permute.xlu0 24
    %4383 = vperm.xlu0 %4382, %v2205
    %v4384 = vpop.permute.xlu0 %4383
    %4386 = vset.pattern.permute.xlu0 24
    %4387 = vperm.xlu0 %4386, %v2206
    %v4388 = vpop.permute.xlu0 %4387
    %4390 = vset.pattern.permute.xlu0 24
    %4391 = vperm.xlu0 %4390, %v2207
    %v4392 = vpop.permute.xlu0 %4391
    %4394 = vset.pattern.permute.xlu0 24
    %4395 = vperm.xlu0 %4394, %v2208
    %v4396 = vpop.permute.xlu0 %4395
    %4398 = vset.pattern.permute.xlu0 24
    %4399 = vperm.xlu0 %4398, %v2209
    %v4400 = vpop.permute.xlu0 %4399
    %v4402 = vmul.f32 %v65, %v4340
    %v4403 = vmul.f32 %v66, %v4344
    %v4404 = vmul.f32 %v67, %v4348
    %v4405 = vmul.f32 %v68, %v4352
    %v4406 = vmul.f32 %v69, %v4356
    %v4407 = vmul.f32 %v70, %v4360
    %v4408 = vmul.f32 %v71, %v4364
    %v4409 = vmul.f32 %v72, %v4368
    %v4410 = vmul.f32 %v73, %v4372
    %v4411 = vmul.f32 %v74, %v4376
    %v4412 = vmul.f32 %v75, %v4380
    %v4413 = vmul.f32 %v76, %v4384
    %v4414 = vmul.f32 %v77, %v4388
    %v4415 = vmul.f32 %v78, %v4392
    %v4416 = vmul.f32 %v79, %v4396
    %v4417 = vmul.f32 %v80, %v4400
    %v4418 = vpack.c.bf16 %v4403, %v4402
    %v4419 = vpack.c.bf16 %v4405, %v4404
    %v4420 = vpack.c.bf16 %v4407, %v4406
    %v4421 = vpack.c.bf16 %v4409, %v4408
    %v4422 = vpack.c.bf16 %v4411, %v4410
    %v4423 = vpack.c.bf16 %v4413, %v4412
    %v4424 = vpack.c.bf16 %v4415, %v4414
    %v4425 = vpack.c.bf16 %v4417, %v4416
    %4426 = vset.pattern.permute.xlu0 25
    %4427 = vperm.xlu0 %4426, %v2194
    %v4428 = vpop.permute.xlu0 %4427
    %4430 = vset.pattern.permute.xlu0 25
    %4431 = vperm.xlu0 %4430, %v2195
    %v4432 = vpop.permute.xlu0 %4431
    %4434 = vset.pattern.permute.xlu0 25
    %4435 = vperm.xlu0 %4434, %v2196
    %v4436 = vpop.permute.xlu0 %4435
    %4438 = vset.pattern.permute.xlu0 25
    %4439 = vperm.xlu0 %4438, %v2197
    %v4440 = vpop.permute.xlu0 %4439
    %4442 = vset.pattern.permute.xlu0 25
    %4443 = vperm.xlu0 %4442, %v2198
    %v4444 = vpop.permute.xlu0 %4443
    %4446 = vset.pattern.permute.xlu0 25
    %4447 = vperm.xlu0 %4446, %v2199
    %v4448 = vpop.permute.xlu0 %4447
    %4450 = vset.pattern.permute.xlu0 25
    %4451 = vperm.xlu0 %4450, %v2200
    %v4452 = vpop.permute.xlu0 %4451
    %4454 = vset.pattern.permute.xlu0 25
    %4455 = vperm.xlu0 %4454, %v2201
    %v4456 = vpop.permute.xlu0 %4455
    %4458 = vset.pattern.permute.xlu0 25
    %4459 = vperm.xlu0 %4458, %v2202
    %v4460 = vpop.permute.xlu0 %4459
    %4462 = vset.pattern.permute.xlu0 25
    %4463 = vperm.xlu0 %4462, %v2203
    %v4464 = vpop.permute.xlu0 %4463
    %4466 = vset.pattern.permute.xlu0 25
    %4467 = vperm.xlu0 %4466, %v2204
    %v4468 = vpop.permute.xlu0 %4467
    %4470 = vset.pattern.permute.xlu0 25
    %4471 = vperm.xlu0 %4470, %v2205
    %v4472 = vpop.permute.xlu0 %4471
    %4474 = vset.pattern.permute.xlu0 25
    %4475 = vperm.xlu0 %4474, %v2206
    %v4476 = vpop.permute.xlu0 %4475
    %4478 = vset.pattern.permute.xlu0 25
    %4479 = vperm.xlu0 %4478, %v2207
    %v4480 = vpop.permute.xlu0 %4479
    %4482 = vset.pattern.permute.xlu0 25
    %4483 = vperm.xlu0 %4482, %v2208
    %v4484 = vpop.permute.xlu0 %4483
    %4486 = vset.pattern.permute.xlu0 25
    %4487 = vperm.xlu0 %4486, %v2209
    %v4488 = vpop.permute.xlu0 %4487
    %v4490 = vmul.f32 %v65, %v4428
    %v4491 = vmul.f32 %v66, %v4432
    %v4492 = vmul.f32 %v67, %v4436
    %v4493 = vmul.f32 %v68, %v4440
    %v4494 = vmul.f32 %v69, %v4444
    %v4495 = vmul.f32 %v70, %v4448
    %v4496 = vmul.f32 %v71, %v4452
    %v4497 = vmul.f32 %v72, %v4456
    %v4498 = vmul.f32 %v73, %v4460
    %v4499 = vmul.f32 %v74, %v4464
    %v4500 = vmul.f32 %v75, %v4468
    %v4501 = vmul.f32 %v76, %v4472
    %v4502 = vmul.f32 %v77, %v4476
    %v4503 = vmul.f32 %v78, %v4480
    %v4504 = vmul.f32 %v79, %v4484
    %v4505 = vmul.f32 %v80, %v4488
    %v4506 = vpack.c.bf16 %v4491, %v4490
    %v4507 = vpack.c.bf16 %v4493, %v4492
    %v4508 = vpack.c.bf16 %v4495, %v4494
    %v4509 = vpack.c.bf16 %v4497, %v4496
    %v4510 = vpack.c.bf16 %v4499, %v4498
    %v4511 = vpack.c.bf16 %v4501, %v4500
    %v4512 = vpack.c.bf16 %v4503, %v4502
    %v4513 = vpack.c.bf16 %v4505, %v4504
    %4514 = vset.pattern.permute.xlu0 26
    %4515 = vperm.xlu0 %4514, %v2194
    %v4516 = vpop.permute.xlu0 %4515
    %4518 = vset.pattern.permute.xlu0 26
    %4519 = vperm.xlu0 %4518, %v2195
    %v4520 = vpop.permute.xlu0 %4519
    %4522 = vset.pattern.permute.xlu0 26
    %4523 = vperm.xlu0 %4522, %v2196
    %v4524 = vpop.permute.xlu0 %4523
    %4526 = vset.pattern.permute.xlu0 26
    %4527 = vperm.xlu0 %4526, %v2197
    %v4528 = vpop.permute.xlu0 %4527
    %4530 = vset.pattern.permute.xlu0 26
    %4531 = vperm.xlu0 %4530, %v2198
    %v4532 = vpop.permute.xlu0 %4531
    %4534 = vset.pattern.permute.xlu0 26
    %4535 = vperm.xlu0 %4534, %v2199
    %v4536 = vpop.permute.xlu0 %4535
    %4538 = vset.pattern.permute.xlu0 26
    %4539 = vperm.xlu0 %4538, %v2200
    %v4540 = vpop.permute.xlu0 %4539
    %4542 = vset.pattern.permute.xlu0 26
    %4543 = vperm.xlu0 %4542, %v2201
    %v4544 = vpop.permute.xlu0 %4543
    %4546 = vset.pattern.permute.xlu0 26
    %4547 = vperm.xlu0 %4546, %v2202
    %v4548 = vpop.permute.xlu0 %4547
    %4550 = vset.pattern.permute.xlu0 26
    %4551 = vperm.xlu0 %4550, %v2203
    %v4552 = vpop.permute.xlu0 %4551
    %4554 = vset.pattern.permute.xlu0 26
    %4555 = vperm.xlu0 %4554, %v2204
    %v4556 = vpop.permute.xlu0 %4555
    %4558 = vset.pattern.permute.xlu0 26
    %4559 = vperm.xlu0 %4558, %v2205
    %v4560 = vpop.permute.xlu0 %4559
    %4562 = vset.pattern.permute.xlu0 26
    %4563 = vperm.xlu0 %4562, %v2206
    %v4564 = vpop.permute.xlu0 %4563
    %4566 = vset.pattern.permute.xlu0 26
    %4567 = vperm.xlu0 %4566, %v2207
    %v4568 = vpop.permute.xlu0 %4567
    %4570 = vset.pattern.permute.xlu0 26
    %4571 = vperm.xlu0 %4570, %v2208
    %v4572 = vpop.permute.xlu0 %4571
    %4574 = vset.pattern.permute.xlu0 26
    %4575 = vperm.xlu0 %4574, %v2209
    %v4576 = vpop.permute.xlu0 %4575
    %v4578 = vmul.f32 %v65, %v4516
    %v4579 = vmul.f32 %v66, %v4520
    %v4580 = vmul.f32 %v67, %v4524
    %v4581 = vmul.f32 %v68, %v4528
    %v4582 = vmul.f32 %v69, %v4532
    %v4583 = vmul.f32 %v70, %v4536
    %v4584 = vmul.f32 %v71, %v4540
    %v4585 = vmul.f32 %v72, %v4544
    %v4586 = vmul.f32 %v73, %v4548
    %v4587 = vmul.f32 %v74, %v4552
    %v4588 = vmul.f32 %v75, %v4556
    %v4589 = vmul.f32 %v76, %v4560
    %v4590 = vmul.f32 %v77, %v4564
    %v4591 = vmul.f32 %v78, %v4568
    %v4592 = vmul.f32 %v79, %v4572
    %v4593 = vmul.f32 %v80, %v4576
    %v4594 = vpack.c.bf16 %v4579, %v4578
    %v4595 = vpack.c.bf16 %v4581, %v4580
    %v4596 = vpack.c.bf16 %v4583, %v4582
    %v4597 = vpack.c.bf16 %v4585, %v4584
    %v4598 = vpack.c.bf16 %v4587, %v4586
    %v4599 = vpack.c.bf16 %v4589, %v4588
    %v4600 = vpack.c.bf16 %v4591, %v4590
    %v4601 = vpack.c.bf16 %v4593, %v4592
    %4602 = vset.pattern.permute.xlu0 27
    %4603 = vperm.xlu0 %4602, %v2194
    %v4604 = vpop.permute.xlu0 %4603
    %4606 = vset.pattern.permute.xlu0 27
    %4607 = vperm.xlu0 %4606, %v2195
    %v4608 = vpop.permute.xlu0 %4607
    %4610 = vset.pattern.permute.xlu0 27
    %4611 = vperm.xlu0 %4610, %v2196
    %v4612 = vpop.permute.xlu0 %4611
    %4614 = vset.pattern.permute.xlu0 27
    %4615 = vperm.xlu0 %4614, %v2197
    %v4616 = vpop.permute.xlu0 %4615
    %4618 = vset.pattern.permute.xlu0 27
    %4619 = vperm.xlu0 %4618, %v2198
    %v4620 = vpop.permute.xlu0 %4619
    %4622 = vset.pattern.permute.xlu0 27
    %4623 = vperm.xlu0 %4622, %v2199
    %v4624 = vpop.permute.xlu0 %4623
    %4626 = vset.pattern.permute.xlu0 27
    %4627 = vperm.xlu0 %4626, %v2200
    %v4628 = vpop.permute.xlu0 %4627
    %4630 = vset.pattern.permute.xlu0 27
    %4631 = vperm.xlu0 %4630, %v2201
    %v4632 = vpop.permute.xlu0 %4631
    %4634 = vset.pattern.permute.xlu0 27
    %4635 = vperm.xlu0 %4634, %v2202
    %v4636 = vpop.permute.xlu0 %4635
    %4638 = vset.pattern.permute.xlu0 27
    %4639 = vperm.xlu0 %4638, %v2203
    %v4640 = vpop.permute.xlu0 %4639
    %4642 = vset.pattern.permute.xlu0 27
    %4643 = vperm.xlu0 %4642, %v2204
    %v4644 = vpop.permute.xlu0 %4643
    %4646 = vset.pattern.permute.xlu0 27
    %4647 = vperm.xlu0 %4646, %v2205
    %v4648 = vpop.permute.xlu0 %4647
    %4650 = vset.pattern.permute.xlu0 27
    %4651 = vperm.xlu0 %4650, %v2206
    %v4652 = vpop.permute.xlu0 %4651
    %4654 = vset.pattern.permute.xlu0 27
    %4655 = vperm.xlu0 %4654, %v2207
    %v4656 = vpop.permute.xlu0 %4655
    %4658 = vset.pattern.permute.xlu0 27
    %4659 = vperm.xlu0 %4658, %v2208
    %v4660 = vpop.permute.xlu0 %4659
    %4662 = vset.pattern.permute.xlu0 27
    %4663 = vperm.xlu0 %4662, %v2209
    %v4664 = vpop.permute.xlu0 %4663
    %v4666 = vmul.f32 %v65, %v4604
    %v4667 = vmul.f32 %v66, %v4608
    %v4668 = vmul.f32 %v67, %v4612
    %v4669 = vmul.f32 %v68, %v4616
    %v4670 = vmul.f32 %v69, %v4620
    %v4671 = vmul.f32 %v70, %v4624
    %v4672 = vmul.f32 %v71, %v4628
    %v4673 = vmul.f32 %v72, %v4632
    %v4674 = vmul.f32 %v73, %v4636
    %v4675 = vmul.f32 %v74, %v4640
    %v4676 = vmul.f32 %v75, %v4644
    %v4677 = vmul.f32 %v76, %v4648
    %v4678 = vmul.f32 %v77, %v4652
    %v4679 = vmul.f32 %v78, %v4656
    %v4680 = vmul.f32 %v79, %v4660
    %v4681 = vmul.f32 %v80, %v4664
    %v4682 = vpack.c.bf16 %v4667, %v4666
    %v4683 = vpack.c.bf16 %v4669, %v4668
    %v4684 = vpack.c.bf16 %v4671, %v4670
    %v4685 = vpack.c.bf16 %v4673, %v4672
    %v4686 = vpack.c.bf16 %v4675, %v4674
    %v4687 = vpack.c.bf16 %v4677, %v4676
    %v4688 = vpack.c.bf16 %v4679, %v4678
    %v4689 = vpack.c.bf16 %v4681, %v4680
    %4690 = vset.pattern.permute.xlu0 28
    %4691 = vperm.xlu0 %4690, %v2194
    %v4692 = vpop.permute.xlu0 %4691
    %4694 = vset.pattern.permute.xlu0 28
    %4695 = vperm.xlu0 %4694, %v2195
    %v4696 = vpop.permute.xlu0 %4695
    %4698 = vset.pattern.permute.xlu0 28
    %4699 = vperm.xlu0 %4698, %v2196
    %v4700 = vpop.permute.xlu0 %4699
    %4702 = vset.pattern.permute.xlu0 28
    %4703 = vperm.xlu0 %4702, %v2197
    %v4704 = vpop.permute.xlu0 %4703
    %4706 = vset.pattern.permute.xlu0 28
    %4707 = vperm.xlu0 %4706, %v2198
    %v4708 = vpop.permute.xlu0 %4707
    %4710 = vset.pattern.permute.xlu0 28
    %4711 = vperm.xlu0 %4710, %v2199
    %v4712 = vpop.permute.xlu0 %4711
    %4714 = vset.pattern.permute.xlu0 28
    %4715 = vperm.xlu0 %4714, %v2200
    %v4716 = vpop.permute.xlu0 %4715
    %4718 = vset.pattern.permute.xlu0 28
    %4719 = vperm.xlu0 %4718, %v2201
    %v4720 = vpop.permute.xlu0 %4719
    %4722 = vset.pattern.permute.xlu0 28
    %4723 = vperm.xlu0 %4722, %v2202
    %v4724 = vpop.permute.xlu0 %4723
    %4726 = vset.pattern.permute.xlu0 28
    %4727 = vperm.xlu0 %4726, %v2203
    %v4728 = vpop.permute.xlu0 %4727
    %4730 = vset.pattern.permute.xlu0 28
    %4731 = vperm.xlu0 %4730, %v2204
    %v4732 = vpop.permute.xlu0 %4731
    %4734 = vset.pattern.permute.xlu0 28
    %4735 = vperm.xlu0 %4734, %v2205
    %v4736 = vpop.permute.xlu0 %4735
    %4738 = vset.pattern.permute.xlu0 28
    %4739 = vperm.xlu0 %4738, %v2206
    %v4740 = vpop.permute.xlu0 %4739
    %4742 = vset.pattern.permute.xlu0 28
    %4743 = vperm.xlu0 %4742, %v2207
    %v4744 = vpop.permute.xlu0 %4743
    %4746 = vset.pattern.permute.xlu0 28
    %4747 = vperm.xlu0 %4746, %v2208
    %v4748 = vpop.permute.xlu0 %4747
    %4750 = vset.pattern.permute.xlu0 28
    %4751 = vperm.xlu0 %4750, %v2209
    %v4752 = vpop.permute.xlu0 %4751
    %v4754 = vmul.f32 %v65, %v4692
    %v4755 = vmul.f32 %v66, %v4696
    %v4756 = vmul.f32 %v67, %v4700
    %v4757 = vmul.f32 %v68, %v4704
    %v4758 = vmul.f32 %v69, %v4708
    %v4759 = vmul.f32 %v70, %v4712
    %v4760 = vmul.f32 %v71, %v4716
    %v4761 = vmul.f32 %v72, %v4720
    %v4762 = vmul.f32 %v73, %v4724
    %v4763 = vmul.f32 %v74, %v4728
    %v4764 = vmul.f32 %v75, %v4732
    %v4765 = vmul.f32 %v76, %v4736
    %v4766 = vmul.f32 %v77, %v4740
    %v4767 = vmul.f32 %v78, %v4744
    %v4768 = vmul.f32 %v79, %v4748
    %v4769 = vmul.f32 %v80, %v4752
    %v4770 = vpack.c.bf16 %v4755, %v4754
    %v4771 = vpack.c.bf16 %v4757, %v4756
    %v4772 = vpack.c.bf16 %v4759, %v4758
    %v4773 = vpack.c.bf16 %v4761, %v4760
    %v4774 = vpack.c.bf16 %v4763, %v4762
    %v4775 = vpack.c.bf16 %v4765, %v4764
    %v4776 = vpack.c.bf16 %v4767, %v4766
    %v4777 = vpack.c.bf16 %v4769, %v4768
    %4778 = vset.pattern.permute.xlu0 29
    %4779 = vperm.xlu0 %4778, %v2194
    %v4780 = vpop.permute.xlu0 %4779
    %4782 = vset.pattern.permute.xlu0 29
    %4783 = vperm.xlu0 %4782, %v2195
    %v4784 = vpop.permute.xlu0 %4783
    %4786 = vset.pattern.permute.xlu0 29
    %4787 = vperm.xlu0 %4786, %v2196
    %v4788 = vpop.permute.xlu0 %4787
    %4790 = vset.pattern.permute.xlu0 29
    %4791 = vperm.xlu0 %4790, %v2197
    %v4792 = vpop.permute.xlu0 %4791
    %4794 = vset.pattern.permute.xlu0 29
    %4795 = vperm.xlu0 %4794, %v2198
    %v4796 = vpop.permute.xlu0 %4795
    %4798 = vset.pattern.permute.xlu0 29
    %4799 = vperm.xlu0 %4798, %v2199
    %v4800 = vpop.permute.xlu0 %4799
    %4802 = vset.pattern.permute.xlu0 29
    %4803 = vperm.xlu0 %4802, %v2200
    %v4804 = vpop.permute.xlu0 %4803
    %4806 = vset.pattern.permute.xlu0 29
    %4807 = vperm.xlu0 %4806, %v2201
    %v4808 = vpop.permute.xlu0 %4807
    %4810 = vset.pattern.permute.xlu0 29
    %4811 = vperm.xlu0 %4810, %v2202
    %v4812 = vpop.permute.xlu0 %4811
    %4814 = vset.pattern.permute.xlu0 29
    %4815 = vperm.xlu0 %4814, %v2203
    %v4816 = vpop.permute.xlu0 %4815
    %4818 = vset.pattern.permute.xlu0 29
    %4819 = vperm.xlu0 %4818, %v2204
    %v4820 = vpop.permute.xlu0 %4819
    %4822 = vset.pattern.permute.xlu0 29
    %4823 = vperm.xlu0 %4822, %v2205
    %v4824 = vpop.permute.xlu0 %4823
    %4826 = vset.pattern.permute.xlu0 29
    %4827 = vperm.xlu0 %4826, %v2206
    %v4828 = vpop.permute.xlu0 %4827
    %4830 = vset.pattern.permute.xlu0 29
    %4831 = vperm.xlu0 %4830, %v2207
    %v4832 = vpop.permute.xlu0 %4831
    %4834 = vset.pattern.permute.xlu0 29
    %4835 = vperm.xlu0 %4834, %v2208
    %v4836 = vpop.permute.xlu0 %4835
    %4838 = vset.pattern.permute.xlu0 29
    %4839 = vperm.xlu0 %4838, %v2209
    %v4840 = vpop.permute.xlu0 %4839
    %v4842 = vmul.f32 %v65, %v4780
    %v4843 = vmul.f32 %v66, %v4784
    %v4844 = vmul.f32 %v67, %v4788
    %v4845 = vmul.f32 %v68, %v4792
    %v4846 = vmul.f32 %v69, %v4796
    %v4847 = vmul.f32 %v70, %v4800
    %v4848 = vmul.f32 %v71, %v4804
    %v4849 = vmul.f32 %v72, %v4808
    %v4850 = vmul.f32 %v73, %v4812
    %v4851 = vmul.f32 %v74, %v4816
    %v4852 = vmul.f32 %v75, %v4820
    %v4853 = vmul.f32 %v76, %v4824
    %v4854 = vmul.f32 %v77, %v4828
    %v4855 = vmul.f32 %v78, %v4832
    %v4856 = vmul.f32 %v79, %v4836
    %v4857 = vmul.f32 %v80, %v4840
    %v4858 = vpack.c.bf16 %v4843, %v4842
    %v4859 = vpack.c.bf16 %v4845, %v4844
    %v4860 = vpack.c.bf16 %v4847, %v4846
    %v4861 = vpack.c.bf16 %v4849, %v4848
    %v4862 = vpack.c.bf16 %v4851, %v4850
    %v4863 = vpack.c.bf16 %v4853, %v4852
    %v4864 = vpack.c.bf16 %v4855, %v4854
    %v4865 = vpack.c.bf16 %v4857, %v4856
    %4866 = vset.pattern.permute.xlu0 30
    %4867 = vperm.xlu0 %4866, %v2194
    %v4868 = vpop.permute.xlu0 %4867
    %4870 = vset.pattern.permute.xlu0 30
    %4871 = vperm.xlu0 %4870, %v2195
    %v4872 = vpop.permute.xlu0 %4871
    %4874 = vset.pattern.permute.xlu0 30
    %4875 = vperm.xlu0 %4874, %v2196
    %v4876 = vpop.permute.xlu0 %4875
    %4878 = vset.pattern.permute.xlu0 30
    %4879 = vperm.xlu0 %4878, %v2197
    %v4880 = vpop.permute.xlu0 %4879
    %4882 = vset.pattern.permute.xlu0 30
    %4883 = vperm.xlu0 %4882, %v2198
    %v4884 = vpop.permute.xlu0 %4883
    %4886 = vset.pattern.permute.xlu0 30
    %4887 = vperm.xlu0 %4886, %v2199
    %v4888 = vpop.permute.xlu0 %4887
    %4890 = vset.pattern.permute.xlu0 30
    %4891 = vperm.xlu0 %4890, %v2200
    %v4892 = vpop.permute.xlu0 %4891
    %4894 = vset.pattern.permute.xlu0 30
    %4895 = vperm.xlu0 %4894, %v2201
    %v4896 = vpop.permute.xlu0 %4895
    %4898 = vset.pattern.permute.xlu0 30
    %4899 = vperm.xlu0 %4898, %v2202
    %v4900 = vpop.permute.xlu0 %4899
    %4902 = vset.pattern.permute.xlu0 30
    %4903 = vperm.xlu0 %4902, %v2203
    %v4904 = vpop.permute.xlu0 %4903
    %4906 = vset.pattern.permute.xlu0 30
    %4907 = vperm.xlu0 %4906, %v2204
    %v4908 = vpop.permute.xlu0 %4907
    %4910 = vset.pattern.permute.xlu0 30
    %4911 = vperm.xlu0 %4910, %v2205
    %v4912 = vpop.permute.xlu0 %4911
    %4914 = vset.pattern.permute.xlu0 30
    %4915 = vperm.xlu0 %4914, %v2206
    %v4916 = vpop.permute.xlu0 %4915
    %4918 = vset.pattern.permute.xlu0 30
    %4919 = vperm.xlu0 %4918, %v2207
    %v4920 = vpop.permute.xlu0 %4919
    %4922 = vset.pattern.permute.xlu0 30
    %4923 = vperm.xlu0 %4922, %v2208
    %v4924 = vpop.permute.xlu0 %4923
    %4926 = vset.pattern.permute.xlu0 30
    %4927 = vperm.xlu0 %4926, %v2209
    %v4928 = vpop.permute.xlu0 %4927
    %v4930 = vmul.f32 %v65, %v4868
    %v4931 = vmul.f32 %v66, %v4872
    %v4932 = vmul.f32 %v67, %v4876
    %v4933 = vmul.f32 %v68, %v4880
    %v4934 = vmul.f32 %v69, %v4884
    %v4935 = vmul.f32 %v70, %v4888
    %v4936 = vmul.f32 %v71, %v4892
    %v4937 = vmul.f32 %v72, %v4896
    %v4938 = vmul.f32 %v73, %v4900
    %v4939 = vmul.f32 %v74, %v4904
    %v4940 = vmul.f32 %v75, %v4908
    %v4941 = vmul.f32 %v76, %v4912
    %v4942 = vmul.f32 %v77, %v4916
    %v4943 = vmul.f32 %v78, %v4920
    %v4944 = vmul.f32 %v79, %v4924
    %v4945 = vmul.f32 %v80, %v4928
    %v4946 = vpack.c.bf16 %v4931, %v4930
    %v4947 = vpack.c.bf16 %v4933, %v4932
    %v4948 = vpack.c.bf16 %v4935, %v4934
    %v4949 = vpack.c.bf16 %v4937, %v4936
    %v4950 = vpack.c.bf16 %v4939, %v4938
    %v4951 = vpack.c.bf16 %v4941, %v4940
    %v4952 = vpack.c.bf16 %v4943, %v4942
    %v4953 = vpack.c.bf16 %v4945, %v4944
    %4954 = vset.pattern.permute.xlu0 31
    %4955 = vperm.xlu0 %4954, %v2194
    %v4956 = vpop.permute.xlu0 %4955
    %4958 = vset.pattern.permute.xlu0 31
    %4959 = vperm.xlu0 %4958, %v2195
    %v4960 = vpop.permute.xlu0 %4959
    %4962 = vset.pattern.permute.xlu0 31
    %4963 = vperm.xlu0 %4962, %v2196
    %v4964 = vpop.permute.xlu0 %4963
    %4966 = vset.pattern.permute.xlu0 31
    %4967 = vperm.xlu0 %4966, %v2197
    %v4968 = vpop.permute.xlu0 %4967
    %4970 = vset.pattern.permute.xlu0 31
    %4971 = vperm.xlu0 %4970, %v2198
    %v4972 = vpop.permute.xlu0 %4971
    %4974 = vset.pattern.permute.xlu0 31
    %4975 = vperm.xlu0 %4974, %v2199
    %v4976 = vpop.permute.xlu0 %4975
    %4978 = vset.pattern.permute.xlu0 31
    %4979 = vperm.xlu0 %4978, %v2200
    %v4980 = vpop.permute.xlu0 %4979
    %4982 = vset.pattern.permute.xlu0 31
    %4983 = vperm.xlu0 %4982, %v2201
    %v4984 = vpop.permute.xlu0 %4983
    %4986 = vset.pattern.permute.xlu0 31
    %4987 = vperm.xlu0 %4986, %v2202
    %v4988 = vpop.permute.xlu0 %4987
    %4990 = vset.pattern.permute.xlu0 31
    %4991 = vperm.xlu0 %4990, %v2203
    %v4992 = vpop.permute.xlu0 %4991
    %4994 = vset.pattern.permute.xlu0 31
    %4995 = vperm.xlu0 %4994, %v2204
    %v4996 = vpop.permute.xlu0 %4995
    %4998 = vset.pattern.permute.xlu0 31
    %4999 = vperm.xlu0 %4998, %v2205
    %v5000 = vpop.permute.xlu0 %4999
    %5002 = vset.pattern.permute.xlu0 31
    %5003 = vperm.xlu0 %5002, %v2206
    %v5004 = vpop.permute.xlu0 %5003
    %5006 = vset.pattern.permute.xlu0 31
    %5007 = vperm.xlu0 %5006, %v2207
    %v5008 = vpop.permute.xlu0 %5007
    %5010 = vset.pattern.permute.xlu0 31
    %5011 = vperm.xlu0 %5010, %v2208
    %v5012 = vpop.permute.xlu0 %5011
    %5014 = vset.pattern.permute.xlu0 31
    %5015 = vperm.xlu0 %5014, %v2209
    %v5016 = vpop.permute.xlu0 %5015
    %v5018 = vmul.f32 %v65, %v4956
    %v5019 = vmul.f32 %v66, %v4960
    %v5020 = vmul.f32 %v67, %v4964
    %v5021 = vmul.f32 %v68, %v4968
    %v5022 = vmul.f32 %v69, %v4972
    %v5023 = vmul.f32 %v70, %v4976
    %v5024 = vmul.f32 %v71, %v4980
    %v5025 = vmul.f32 %v72, %v4984
    %v5026 = vmul.f32 %v73, %v4988
    %v5027 = vmul.f32 %v74, %v4992
    %v5028 = vmul.f32 %v75, %v4996
    %v5029 = vmul.f32 %v76, %v5000
    %v5030 = vmul.f32 %v77, %v5004
    %v5031 = vmul.f32 %v78, %v5008
    %v5032 = vmul.f32 %v79, %v5012
    %v5033 = vmul.f32 %v80, %v5016
    %v5034 = vpack.c.bf16 %v5019, %v5018
    %v5035 = vpack.c.bf16 %v5021, %v5020
    %v5036 = vpack.c.bf16 %v5023, %v5022
    %v5037 = vpack.c.bf16 %v5025, %v5024
    %v5038 = vpack.c.bf16 %v5027, %v5026
    %v5039 = vpack.c.bf16 %v5029, %v5028
    %v5040 = vpack.c.bf16 %v5031, %v5030
    %v5041 = vpack.c.bf16 %v5033, %v5032
    %v5042 = vld [vmem:[#allocation6] sm:$0xf]
    %v5043 = vld [vmem:[#allocation6 + $0x4] sm:$0xf]
    %v5044 = vld [vmem:[#allocation6 + $0x8] sm:$0xf]
    %v5045 = vld [vmem:[#allocation6 + $0xc] sm:$0xf]
    %v5046 = vld [vmem:[#allocation6 + $0x10] sm:$0xf]
    %v5047 = vld [vmem:[#allocation6 + $0x14] sm:$0xf]
    %v5048 = vld [vmem:[#allocation6 + $0x18] sm:$0xf]
    %v5049 = vld [vmem:[#allocation6 + $0x1c] sm:$0xf]
    %v5050 = vld [vmem:[#allocation6 + $0x20] sm:$0xf]
    %v5051 = vld [vmem:[#allocation6 + $0x24] sm:$0xf]
    %v5052 = vld [vmem:[#allocation6 + $0x28] sm:$0xf]
    %v5053 = vld [vmem:[#allocation6 + $0x2c] sm:$0xf]
    %v5054 = vld [vmem:[#allocation6 + $0x30] sm:$0xf]
    %v5055 = vld [vmem:[#allocation6 + $0x34] sm:$0xf]
    %v5056 = vld [vmem:[#allocation6 + $0x38] sm:$0xf]
    %v5057 = vld [vmem:[#allocation6 + $0x3c] sm:$0xf]
    %v5058 = vld [vmem:[#allocation6 + $0x40] sm:$0xf]
    %v5059 = vld [vmem:[#allocation6 + $0x44] sm:$0xf]
    %v5060 = vld [vmem:[#allocation6 + $0x48] sm:$0xf]
    %v5061 = vld [vmem:[#allocation6 + $0x4c] sm:$0xf]
    %v5062 = vld [vmem:[#allocation6 + $0x50] sm:$0xf]
    %v5063 = vld [vmem:[#allocation6 + $0x54] sm:$0xf]
    %v5064 = vld [vmem:[#allocation6 + $0x58] sm:$0xf]
    %v5065 = vld [vmem:[#allocation6 + $0x5c] sm:$0xf]
    %v5066 = vld [vmem:[#allocation6 + $0x60] sm:$0xf]
    %v5067 = vld [vmem:[#allocation6 + $0x64] sm:$0xf]
    %v5068 = vld [vmem:[#allocation6 + $0x68] sm:$0xf]
    %v5069 = vld [vmem:[#allocation6 + $0x6c] sm:$0xf]
    %v5070 = vld [vmem:[#allocation6 + $0x70] sm:$0xf]
    %v5071 = vld [vmem:[#allocation6 + $0x74] sm:$0xf]
    %v5072 = vld [vmem:[#allocation6 + $0x78] sm:$0xf]
    %v5073 = vld [vmem:[#allocation6 + $0x7c] sm:$0xf]
    %v5074 = vld [vmem:[#allocation6 + $0x80] sm:$0xf]
    %v5075 = vld [vmem:[#allocation6 + $0x84] sm:$0xf]
    %v5076 = vld [vmem:[#allocation6 + $0x88] sm:$0xf]
    %v5077 = vld [vmem:[#allocation6 + $0x8c] sm:$0xf]
    %v5078 = vld [vmem:[#allocation6 + $0x90] sm:$0xf]
    %v5079 = vld [vmem:[#allocation6 + $0x94] sm:$0xf]
    %v5080 = vld [vmem:[#allocation6 + $0x98] sm:$0xf]
    %v5081 = vld [vmem:[#allocation6 + $0x9c] sm:$0xf]
    %v5082 = vld [vmem:[#allocation6 + $0xa0] sm:$0xf]
    %v5083 = vld [vmem:[#allocation6 + $0xa4] sm:$0xf]
    %v5084 = vld [vmem:[#allocation6 + $0xa8] sm:$0xf]
    %v5085 = vld [vmem:[#allocation6 + $0xac] sm:$0xf]
    %v5086 = vld [vmem:[#allocation6 + $0xb0] sm:$0xf]
    %v5087 = vld [vmem:[#allocation6 + $0xb4] sm:$0xf]
    %v5088 = vld [vmem:[#allocation6 + $0xb8] sm:$0xf]
    %v5089 = vld [vmem:[#allocation6 + $0xbc] sm:$0xf]
    %v5090 = vld [vmem:[#allocation6 + $0xc0] sm:$0xf]
    %v5091 = vld [vmem:[#allocation6 + $0xc4] sm:$0xf]
    %v5092 = vld [vmem:[#allocation6 + $0xc8] sm:$0xf]
    %v5093 = vld [vmem:[#allocation6 + $0xcc] sm:$0xf]
    %v5094 = vld [vmem:[#allocation6 + $0xd0] sm:$0xf]
    %v5095 = vld [vmem:[#allocation6 + $0xd4] sm:$0xf]
    %v5096 = vld [vmem:[#allocation6 + $0xd8] sm:$0xf]
    %v5097 = vld [vmem:[#allocation6 + $0xdc] sm:$0xf]
    %v5098 = vld [vmem:[#allocation6 + $0xe0] sm:$0xf]
    %v5099 = vld [vmem:[#allocation6 + $0xe4] sm:$0xf]
    %v5100 = vld [vmem:[#allocation6 + $0xe8] sm:$0xf]
    %v5101 = vld [vmem:[#allocation6 + $0xec] sm:$0xf]
    %v5102 = vld [vmem:[#allocation6 + $0xf0] sm:$0xf]
    %v5103 = vld [vmem:[#allocation6 + $0xf4] sm:$0xf]
    %v5104 = vld [vmem:[#allocation6 + $0xf8] sm:$0xf]
    %v5105 = vld [vmem:[#allocation6 + $0xfc] sm:$0xf]
    %v5106 = vld [vmem:[#allocation6 + $0x100] sm:$0xf]
    %v5107 = vld [vmem:[#allocation6 + $0x104] sm:$0xf]
    %v5108 = vld [vmem:[#allocation6 + $0x108] sm:$0xf]
    %v5109 = vld [vmem:[#allocation6 + $0x10c] sm:$0xf]
    %v5110 = vld [vmem:[#allocation6 + $0x110] sm:$0xf]
    %v5111 = vld [vmem:[#allocation6 + $0x114] sm:$0xf]
    %v5112 = vld [vmem:[#allocation6 + $0x118] sm:$0xf]
    %v5113 = vld [vmem:[#allocation6 + $0x11c] sm:$0xf]
    %v5114 = vld [vmem:[#allocation6 + $0x120] sm:$0xf]
    %v5115 = vld [vmem:[#allocation6 + $0x124] sm:$0xf]
    %v5116 = vld [vmem:[#allocation6 + $0x128] sm:$0xf]
    %v5117 = vld [vmem:[#allocation6 + $0x12c] sm:$0xf]
    %v5118 = vld [vmem:[#allocation6 + $0x130] sm:$0xf]
    %v5119 = vld [vmem:[#allocation6 + $0x134] sm:$0xf]
    %v5120 = vld [vmem:[#allocation6 + $0x138] sm:$0xf]
    %v5121 = vld [vmem:[#allocation6 + $0x13c] sm:$0xf]
    %v5122 = vld [vmem:[#allocation6 + $0x140] sm:$0xf]
    %v5123 = vld [vmem:[#allocation6 + $0x144] sm:$0xf]
    %v5124 = vld [vmem:[#allocation6 + $0x148] sm:$0xf]
    %v5125 = vld [vmem:[#allocation6 + $0x14c] sm:$0xf]
    %v5126 = vld [vmem:[#allocation6 + $0x150] sm:$0xf]
    %v5127 = vld [vmem:[#allocation6 + $0x154] sm:$0xf]
    %v5128 = vld [vmem:[#allocation6 + $0x158] sm:$0xf]
    %v5129 = vld [vmem:[#allocation6 + $0x15c] sm:$0xf]
    %v5130 = vld [vmem:[#allocation6 + $0x160] sm:$0xf]
    %v5131 = vld [vmem:[#allocation6 + $0x164] sm:$0xf]
    %v5132 = vld [vmem:[#allocation6 + $0x168] sm:$0xf]
    %v5133 = vld [vmem:[#allocation6 + $0x16c] sm:$0xf]
    %v5134 = vld [vmem:[#allocation6 + $0x170] sm:$0xf]
    %v5135 = vld [vmem:[#allocation6 + $0x174] sm:$0xf]
    %v5136 = vld [vmem:[#allocation6 + $0x178] sm:$0xf]
    %v5137 = vld [vmem:[#allocation6 + $0x17c] sm:$0xf]
    %v5138 = vld [vmem:[#allocation6 + $0x180] sm:$0xf]
    %v5139 = vld [vmem:[#allocation6 + $0x184] sm:$0xf]
    %v5140 = vld [vmem:[#allocation6 + $0x188] sm:$0xf]
    %v5141 = vld [vmem:[#allocation6 + $0x18c] sm:$0xf]
    %v5142 = vld [vmem:[#allocation6 + $0x190] sm:$0xf]
    %v5143 = vld [vmem:[#allocation6 + $0x194] sm:$0xf]
    %v5144 = vld [vmem:[#allocation6 + $0x198] sm:$0xf]
    %v5145 = vld [vmem:[#allocation6 + $0x19c] sm:$0xf]
    %v5146 = vld [vmem:[#allocation6 + $0x1a0] sm:$0xf]
    %v5147 = vld [vmem:[#allocation6 + $0x1a4] sm:$0xf]
    %v5148 = vld [vmem:[#allocation6 + $0x1a8] sm:$0xf]
    %v5149 = vld [vmem:[#allocation6 + $0x1ac] sm:$0xf]
    %v5150 = vld [vmem:[#allocation6 + $0x1b0] sm:$0xf]
    %v5151 = vld [vmem:[#allocation6 + $0x1b4] sm:$0xf]
    %v5152 = vld [vmem:[#allocation6 + $0x1b8] sm:$0xf]
    %v5153 = vld [vmem:[#allocation6 + $0x1bc] sm:$0xf]
    %v5154 = vld [vmem:[#allocation6 + $0x1c0] sm:$0xf]
    %v5155 = vld [vmem:[#allocation6 + $0x1c4] sm:$0xf]
    %v5156 = vld [vmem:[#allocation6 + $0x1c8] sm:$0xf]
    %v5157 = vld [vmem:[#allocation6 + $0x1cc] sm:$0xf]
    %v5158 = vld [vmem:[#allocation6 + $0x1d0] sm:$0xf]
    %v5159 = vld [vmem:[#allocation6 + $0x1d4] sm:$0xf]
    %v5160 = vld [vmem:[#allocation6 + $0x1d8] sm:$0xf]
    %v5161 = vld [vmem:[#allocation6 + $0x1dc] sm:$0xf]
    %v5162 = vld [vmem:[#allocation6 + $0x1e0] sm:$0xf]
    %v5163 = vld [vmem:[#allocation6 + $0x1e4] sm:$0xf]
    %v5164 = vld [vmem:[#allocation6 + $0x1e8] sm:$0xf]
    %v5165 = vld [vmem:[#allocation6 + $0x1ec] sm:$0xf]
    %v5166 = vld [vmem:[#allocation6 + $0x1f0] sm:$0xf]
    %v5167 = vld [vmem:[#allocation6 + $0x1f4] sm:$0xf]
    %v5168 = vld [vmem:[#allocation6 + $0x1f8] sm:$0xf]
    %v5169 = vld [vmem:[#allocation6 + $0x1fc] sm:$0xf]
    %v5170 = vld [vmem:[#allocation6 + $0x200] sm:$0xf]
    %v5171 = vld [vmem:[#allocation6 + $0x204] sm:$0xf]
    %v5172 = vld [vmem:[#allocation6 + $0x208] sm:$0xf]
    %v5173 = vld [vmem:[#allocation6 + $0x20c] sm:$0xf]
    %v5174 = vld [vmem:[#allocation6 + $0x210] sm:$0xf]
    %v5175 = vld [vmem:[#allocation6 + $0x214] sm:$0xf]
    %v5176 = vld [vmem:[#allocation6 + $0x218] sm:$0xf]
    %v5177 = vld [vmem:[#allocation6 + $0x21c] sm:$0xf]
    %v5178 = vld [vmem:[#allocation6 + $0x220] sm:$0xf]
    %v5179 = vld [vmem:[#allocation6 + $0x224] sm:$0xf]
    %v5180 = vld [vmem:[#allocation6 + $0x228] sm:$0xf]
    %v5181 = vld [vmem:[#allocation6 + $0x22c] sm:$0xf]
    %v5182 = vld [vmem:[#allocation6 + $0x230] sm:$0xf]
    %v5183 = vld [vmem:[#allocation6 + $0x234] sm:$0xf]
    %v5184 = vld [vmem:[#allocation6 + $0x238] sm:$0xf]
    %v5185 = vld [vmem:[#allocation6 + $0x23c] sm:$0xf]
    %v5186 = vld [vmem:[#allocation6 + $0x240] sm:$0xf]
    %v5187 = vld [vmem:[#allocation6 + $0x244] sm:$0xf]
    %v5188 = vld [vmem:[#allocation6 + $0x248] sm:$0xf]
    %v5189 = vld [vmem:[#allocation6 + $0x24c] sm:$0xf]
    %v5190 = vld [vmem:[#allocation6 + $0x250] sm:$0xf]
    %v5191 = vld [vmem:[#allocation6 + $0x254] sm:$0xf]
    %v5192 = vld [vmem:[#allocation6 + $0x258] sm:$0xf]
    %v5193 = vld [vmem:[#allocation6 + $0x25c] sm:$0xf]
    %v5194 = vld [vmem:[#allocation6 + $0x260] sm:$0xf]
    %v5195 = vld [vmem:[#allocation6 + $0x264] sm:$0xf]
    %v5196 = vld [vmem:[#allocation6 + $0x268] sm:$0xf]
    %v5197 = vld [vmem:[#allocation6 + $0x26c] sm:$0xf]
    %v5198 = vld [vmem:[#allocation6 + $0x270] sm:$0xf]
    %v5199 = vld [vmem:[#allocation6 + $0x274] sm:$0xf]
    %v5200 = vld [vmem:[#allocation6 + $0x278] sm:$0xf]
    %v5201 = vld [vmem:[#allocation6 + $0x27c] sm:$0xf]
    %v5202 = vld [vmem:[#allocation6 + $0x280] sm:$0xf]
    %v5203 = vld [vmem:[#allocation6 + $0x284] sm:$0xf]
    %v5204 = vld [vmem:[#allocation6 + $0x288] sm:$0xf]
    %v5205 = vld [vmem:[#allocation6 + $0x28c] sm:$0xf]
    %v5206 = vld [vmem:[#allocation6 + $0x290] sm:$0xf]
    %v5207 = vld [vmem:[#allocation6 + $0x294] sm:$0xf]
    %v5208 = vld [vmem:[#allocation6 + $0x298] sm:$0xf]
    %v5209 = vld [vmem:[#allocation6 + $0x29c] sm:$0xf]
    %v5210 = vld [vmem:[#allocation6 + $0x2a0] sm:$0xf]
    %v5211 = vld [vmem:[#allocation6 + $0x2a4] sm:$0xf]
    %v5212 = vld [vmem:[#allocation6 + $0x2a8] sm:$0xf]
    %v5213 = vld [vmem:[#allocation6 + $0x2ac] sm:$0xf]
    %v5214 = vld [vmem:[#allocation6 + $0x2b0] sm:$0xf]
    %v5215 = vld [vmem:[#allocation6 + $0x2b4] sm:$0xf]
    %v5216 = vld [vmem:[#allocation6 + $0x2b8] sm:$0xf]
    %v5217 = vld [vmem:[#allocation6 + $0x2bc] sm:$0xf]
    %v5218 = vld [vmem:[#allocation6 + $0x2c0] sm:$0xf]
    %v5219 = vld [vmem:[#allocation6 + $0x2c4] sm:$0xf]
    %v5220 = vld [vmem:[#allocation6 + $0x2c8] sm:$0xf]
    %v5221 = vld [vmem:[#allocation6 + $0x2cc] sm:$0xf]
    %v5222 = vld [vmem:[#allocation6 + $0x2d0] sm:$0xf]
    %v5223 = vld [vmem:[#allocation6 + $0x2d4] sm:$0xf]
    %v5224 = vld [vmem:[#allocation6 + $0x2d8] sm:$0xf]
    %v5225 = vld [vmem:[#allocation6 + $0x2dc] sm:$0xf]
    %v5226 = vld [vmem:[#allocation6 + $0x2e0] sm:$0xf]
    %v5227 = vld [vmem:[#allocation6 + $0x2e4] sm:$0xf]
    %v5228 = vld [vmem:[#allocation6 + $0x2e8] sm:$0xf]
    %v5229 = vld [vmem:[#allocation6 + $0x2ec] sm:$0xf]
    %v5230 = vld [vmem:[#allocation6 + $0x2f0] sm:$0xf]
    %v5231 = vld [vmem:[#allocation6 + $0x2f4] sm:$0xf]
    %v5232 = vld [vmem:[#allocation6 + $0x2f8] sm:$0xf]
    %v5233 = vld [vmem:[#allocation6 + $0x2fc] sm:$0xf]
    %v5234 = vld [vmem:[#allocation6 + $0x300] sm:$0xf]
    %v5235 = vld [vmem:[#allocation6 + $0x304] sm:$0xf]
    %v5236 = vld [vmem:[#allocation6 + $0x308] sm:$0xf]
    %v5237 = vld [vmem:[#allocation6 + $0x30c] sm:$0xf]
    %v5238 = vld [vmem:[#allocation6 + $0x310] sm:$0xf]
    %v5239 = vld [vmem:[#allocation6 + $0x314] sm:$0xf]
    %v5240 = vld [vmem:[#allocation6 + $0x318] sm:$0xf]
    %v5241 = vld [vmem:[#allocation6 + $0x31c] sm:$0xf]
    %v5242 = vld [vmem:[#allocation6 + $0x320] sm:$0xf]
    %v5243 = vld [vmem:[#allocation6 + $0x324] sm:$0xf]
    %v5244 = vld [vmem:[#allocation6 + $0x328] sm:$0xf]
    %v5245 = vld [vmem:[#allocation6 + $0x32c] sm:$0xf]
    %v5246 = vld [vmem:[#allocation6 + $0x330] sm:$0xf]
    %v5247 = vld [vmem:[#allocation6 + $0x334] sm:$0xf]
    %v5248 = vld [vmem:[#allocation6 + $0x338] sm:$0xf]
    %v5249 = vld [vmem:[#allocation6 + $0x33c] sm:$0xf]
    %v5250 = vld [vmem:[#allocation6 + $0x340] sm:$0xf]
    %v5251 = vld [vmem:[#allocation6 + $0x344] sm:$0xf]
    %v5252 = vld [vmem:[#allocation6 + $0x348] sm:$0xf]
    %v5253 = vld [vmem:[#allocation6 + $0x34c] sm:$0xf]
    %v5254 = vld [vmem:[#allocation6 + $0x350] sm:$0xf]
    %v5255 = vld [vmem:[#allocation6 + $0x354] sm:$0xf]
    %v5256 = vld [vmem:[#allocation6 + $0x358] sm:$0xf]
    %v5257 = vld [vmem:[#allocation6 + $0x35c] sm:$0xf]
    %v5258 = vld [vmem:[#allocation6 + $0x360] sm:$0xf]
    %v5259 = vld [vmem:[#allocation6 + $0x364] sm:$0xf]
    %v5260 = vld [vmem:[#allocation6 + $0x368] sm:$0xf]
    %v5261 = vld [vmem:[#allocation6 + $0x36c] sm:$0xf]
    %v5262 = vld [vmem:[#allocation6 + $0x370] sm:$0xf]
    %v5263 = vld [vmem:[#allocation6 + $0x374] sm:$0xf]
    %v5264 = vld [vmem:[#allocation6 + $0x378] sm:$0xf]
    %v5265 = vld [vmem:[#allocation6 + $0x37c] sm:$0xf]
    %v5266 = vld [vmem:[#allocation6 + $0x380] sm:$0xf]
    %v5267 = vld [vmem:[#allocation6 + $0x384] sm:$0xf]
    %v5268 = vld [vmem:[#allocation6 + $0x388] sm:$0xf]
    %v5269 = vld [vmem:[#allocation6 + $0x38c] sm:$0xf]
    %v5270 = vld [vmem:[#allocation6 + $0x390] sm:$0xf]
    %v5271 = vld [vmem:[#allocation6 + $0x394] sm:$0xf]
    %v5272 = vld [vmem:[#allocation6 + $0x398] sm:$0xf]
    %v5273 = vld [vmem:[#allocation6 + $0x39c] sm:$0xf]
    %v5274 = vld [vmem:[#allocation6 + $0x3a0] sm:$0xf]
    %v5275 = vld [vmem:[#allocation6 + $0x3a4] sm:$0xf]
    %v5276 = vld [vmem:[#allocation6 + $0x3a8] sm:$0xf]
    %v5277 = vld [vmem:[#allocation6 + $0x3ac] sm:$0xf]
    %v5278 = vld [vmem:[#allocation6 + $0x3b0] sm:$0xf]
    %v5279 = vld [vmem:[#allocation6 + $0x3b4] sm:$0xf]
    %v5280 = vld [vmem:[#allocation6 + $0x3b8] sm:$0xf]
    %v5281 = vld [vmem:[#allocation6 + $0x3bc] sm:$0xf]
    %v5282 = vld [vmem:[#allocation6 + $0x3c0] sm:$0xf]
    %v5283 = vld [vmem:[#allocation6 + $0x3c4] sm:$0xf]
    %v5284 = vld [vmem:[#allocation6 + $0x3c8] sm:$0xf]
    %v5285 = vld [vmem:[#allocation6 + $0x3cc] sm:$0xf]
    %v5286 = vld [vmem:[#allocation6 + $0x3d0] sm:$0xf]
    %v5287 = vld [vmem:[#allocation6 + $0x3d4] sm:$0xf]
    %v5288 = vld [vmem:[#allocation6 + $0x3d8] sm:$0xf]
    %v5289 = vld [vmem:[#allocation6 + $0x3dc] sm:$0xf]
    %v5290 = vld [vmem:[#allocation6 + $0x3e0] sm:$0xf]
    %v5291 = vld [vmem:[#allocation6 + $0x3e4] sm:$0xf]
    %v5292 = vld [vmem:[#allocation6 + $0x3e8] sm:$0xf]
    %v5293 = vld [vmem:[#allocation6 + $0x3ec] sm:$0xf]
    %v5294 = vld [vmem:[#allocation6 + $0x3f0] sm:$0xf]
    %v5295 = vld [vmem:[#allocation6 + $0x3f4] sm:$0xf]
    %v5296 = vld [vmem:[#allocation6 + $0x3f8] sm:$0xf]
    %v5297 = vld [vmem:[#allocation6 + $0x3fc] sm:$0xf]
    %v5298 = vld [vmem:[#allocation6 + $0x400] sm:$0xf]
    %v5299 = vld [vmem:[#allocation6 + $0x404] sm:$0xf]
    %v5300 = vld [vmem:[#allocation6 + $0x408] sm:$0xf]
    %v5301 = vld [vmem:[#allocation6 + $0x40c] sm:$0xf]
    %v5302 = vld [vmem:[#allocation6 + $0x410] sm:$0xf]
    %v5303 = vld [vmem:[#allocation6 + $0x414] sm:$0xf]
    %v5304 = vld [vmem:[#allocation6 + $0x418] sm:$0xf]
    %v5305 = vld [vmem:[#allocation6 + $0x41c] sm:$0xf]
    %v5306 = vld [vmem:[#allocation6 + $0x420] sm:$0xf]
    %v5307 = vld [vmem:[#allocation6 + $0x424] sm:$0xf]
    %v5308 = vld [vmem:[#allocation6 + $0x428] sm:$0xf]
    %v5309 = vld [vmem:[#allocation6 + $0x42c] sm:$0xf]
    %v5310 = vld [vmem:[#allocation6 + $0x430] sm:$0xf]
    %v5311 = vld [vmem:[#allocation6 + $0x434] sm:$0xf]
    %v5312 = vld [vmem:[#allocation6 + $0x438] sm:$0xf]
    %v5313 = vld [vmem:[#allocation6 + $0x43c] sm:$0xf]
    %v5314 = vld [vmem:[#allocation6 + $0x440] sm:$0xf]
    %v5315 = vld [vmem:[#allocation6 + $0x444] sm:$0xf]
    %v5316 = vld [vmem:[#allocation6 + $0x448] sm:$0xf]
    %v5317 = vld [vmem:[#allocation6 + $0x44c] sm:$0xf]
    %v5318 = vld [vmem:[#allocation6 + $0x450] sm:$0xf]
    %v5319 = vld [vmem:[#allocation6 + $0x454] sm:$0xf]
    %v5320 = vld [vmem:[#allocation6 + $0x458] sm:$0xf]
    %v5321 = vld [vmem:[#allocation6 + $0x45c] sm:$0xf]
    %v5322 = vld [vmem:[#allocation6 + $0x460] sm:$0xf]
    %v5323 = vld [vmem:[#allocation6 + $0x464] sm:$0xf]
    %v5324 = vld [vmem:[#allocation6 + $0x468] sm:$0xf]
    %v5325 = vld [vmem:[#allocation6 + $0x46c] sm:$0xf]
    %v5326 = vld [vmem:[#allocation6 + $0x470] sm:$0xf]
    %v5327 = vld [vmem:[#allocation6 + $0x474] sm:$0xf]
    %v5328 = vld [vmem:[#allocation6 + $0x478] sm:$0xf]
    %v5329 = vld [vmem:[#allocation6 + $0x47c] sm:$0xf]
    %v5330 = vld [vmem:[#allocation6 + $0x480] sm:$0xf]
    %v5331 = vld [vmem:[#allocation6 + $0x484] sm:$0xf]
    %v5332 = vld [vmem:[#allocation6 + $0x488] sm:$0xf]
    %v5333 = vld [vmem:[#allocation6 + $0x48c] sm:$0xf]
    %v5334 = vld [vmem:[#allocation6 + $0x490] sm:$0xf]
    %v5335 = vld [vmem:[#allocation6 + $0x494] sm:$0xf]
    %v5336 = vld [vmem:[#allocation6 + $0x498] sm:$0xf]
    %v5337 = vld [vmem:[#allocation6 + $0x49c] sm:$0xf]
    %v5338 = vld [vmem:[#allocation6 + $0x4a0] sm:$0xf]
    %v5339 = vld [vmem:[#allocation6 + $0x4a4] sm:$0xf]
    %v5340 = vld [vmem:[#allocation6 + $0x4a8] sm:$0xf]
    %v5341 = vld [vmem:[#allocation6 + $0x4ac] sm:$0xf]
    %v5342 = vld [vmem:[#allocation6 + $0x4b0] sm:$0xf]
    %v5343 = vld [vmem:[#allocation6 + $0x4b4] sm:$0xf]
    %v5344 = vld [vmem:[#allocation6 + $0x4b8] sm:$0xf]
    %v5345 = vld [vmem:[#allocation6 + $0x4bc] sm:$0xf]
    %v5346 = vld [vmem:[#allocation6 + $0x4c0] sm:$0xf]
    %v5347 = vld [vmem:[#allocation6 + $0x4c4] sm:$0xf]
    %v5348 = vld [vmem:[#allocation6 + $0x4c8] sm:$0xf]
    %v5349 = vld [vmem:[#allocation6 + $0x4cc] sm:$0xf]
    %v5350 = vld [vmem:[#allocation6 + $0x4d0] sm:$0xf]
    %v5351 = vld [vmem:[#allocation6 + $0x4d4] sm:$0xf]
    %v5352 = vld [vmem:[#allocation6 + $0x4d8] sm:$0xf]
    %v5353 = vld [vmem:[#allocation6 + $0x4dc] sm:$0xf]
    %v5354 = vld [vmem:[#allocation6 + $0x4e0] sm:$0xf]
    %v5355 = vld [vmem:[#allocation6 + $0x4e4] sm:$0xf]
    %v5356 = vld [vmem:[#allocation6 + $0x4e8] sm:$0xf]
    %v5357 = vld [vmem:[#allocation6 + $0x4ec] sm:$0xf]
    %v5358 = vld [vmem:[#allocation6 + $0x4f0] sm:$0xf]
    %v5359 = vld [vmem:[#allocation6 + $0x4f4] sm:$0xf]
    %v5360 = vld [vmem:[#allocation6 + $0x4f8] sm:$0xf]
    %v5361 = vld [vmem:[#allocation6 + $0x4fc] sm:$0xf]
    %v5362 = vld [vmem:[#allocation6 + $0x500] sm:$0xf]
    %v5363 = vld [vmem:[#allocation6 + $0x504] sm:$0xf]
    %v5364 = vld [vmem:[#allocation6 + $0x508] sm:$0xf]
    %v5365 = vld [vmem:[#allocation6 + $0x50c] sm:$0xf]
    %v5366 = vld [vmem:[#allocation6 + $0x510] sm:$0xf]
    %v5367 = vld [vmem:[#allocation6 + $0x514] sm:$0xf]
    %v5368 = vld [vmem:[#allocation6 + $0x518] sm:$0xf]
    %v5369 = vld [vmem:[#allocation6 + $0x51c] sm:$0xf]
    %v5370 = vld [vmem:[#allocation6 + $0x520] sm:$0xf]
    %v5371 = vld [vmem:[#allocation6 + $0x524] sm:$0xf]
    %v5372 = vld [vmem:[#allocation6 + $0x528] sm:$0xf]
    %v5373 = vld [vmem:[#allocation6 + $0x52c] sm:$0xf]
    %v5374 = vld [vmem:[#allocation6 + $0x530] sm:$0xf]
    %v5375 = vld [vmem:[#allocation6 + $0x534] sm:$0xf]
    %v5376 = vld [vmem:[#allocation6 + $0x538] sm:$0xf]
    %v5377 = vld [vmem:[#allocation6 + $0x53c] sm:$0xf]
    %v5378 = vld [vmem:[#allocation6 + $0x540] sm:$0xf]
    %v5379 = vld [vmem:[#allocation6 + $0x544] sm:$0xf]
    %v5380 = vld [vmem:[#allocation6 + $0x548] sm:$0xf]
    %v5381 = vld [vmem:[#allocation6 + $0x54c] sm:$0xf]
    %v5382 = vld [vmem:[#allocation6 + $0x550] sm:$0xf]
    %v5383 = vld [vmem:[#allocation6 + $0x554] sm:$0xf]
    %v5384 = vld [vmem:[#allocation6 + $0x558] sm:$0xf]
    %v5385 = vld [vmem:[#allocation6 + $0x55c] sm:$0xf]
    %v5386 = vld [vmem:[#allocation6 + $0x560] sm:$0xf]
    %v5387 = vld [vmem:[#allocation6 + $0x564] sm:$0xf]
    %v5388 = vld [vmem:[#allocation6 + $0x568] sm:$0xf]
    %v5389 = vld [vmem:[#allocation6 + $0x56c] sm:$0xf]
    %v5390 = vld [vmem:[#allocation6 + $0x570] sm:$0xf]
    %v5391 = vld [vmem:[#allocation6 + $0x574] sm:$0xf]
    %v5392 = vld [vmem:[#allocation6 + $0x578] sm:$0xf]
    %v5393 = vld [vmem:[#allocation6 + $0x57c] sm:$0xf]
    %v5394 = vld [vmem:[#allocation6 + $0x580] sm:$0xf]
    %v5395 = vld [vmem:[#allocation6 + $0x584] sm:$0xf]
    %v5396 = vld [vmem:[#allocation6 + $0x588] sm:$0xf]
    %v5397 = vld [vmem:[#allocation6 + $0x58c] sm:$0xf]
    %v5398 = vld [vmem:[#allocation6 + $0x590] sm:$0xf]
    %v5399 = vld [vmem:[#allocation6 + $0x594] sm:$0xf]
    %v5400 = vld [vmem:[#allocation6 + $0x598] sm:$0xf]
    %v5401 = vld [vmem:[#allocation6 + $0x59c] sm:$0xf]
    %v5402 = vld [vmem:[#allocation6 + $0x5a0] sm:$0xf]
    %v5403 = vld [vmem:[#allocation6 + $0x5a4] sm:$0xf]
    %v5404 = vld [vmem:[#allocation6 + $0x5a8] sm:$0xf]
    %v5405 = vld [vmem:[#allocation6 + $0x5ac] sm:$0xf]
    %v5406 = vld [vmem:[#allocation6 + $0x5b0] sm:$0xf]
    %v5407 = vld [vmem:[#allocation6 + $0x5b4] sm:$0xf]
    %v5408 = vld [vmem:[#allocation6 + $0x5b8] sm:$0xf]
    %v5409 = vld [vmem:[#allocation6 + $0x5bc] sm:$0xf]
    %v5410 = vld [vmem:[#allocation6 + $0x5c0] sm:$0xf]
    %v5411 = vld [vmem:[#allocation6 + $0x5c4] sm:$0xf]
    %v5412 = vld [vmem:[#allocation6 + $0x5c8] sm:$0xf]
    %v5413 = vld [vmem:[#allocation6 + $0x5cc] sm:$0xf]
    %v5414 = vld [vmem:[#allocation6 + $0x5d0] sm:$0xf]
    %v5415 = vld [vmem:[#allocation6 + $0x5d4] sm:$0xf]
    %v5416 = vld [vmem:[#allocation6 + $0x5d8] sm:$0xf]
    %v5417 = vld [vmem:[#allocation6 + $0x5dc] sm:$0xf]
    %v5418 = vld [vmem:[#allocation6 + $0x5e0] sm:$0xf]
    %v5419 = vld [vmem:[#allocation6 + $0x5e4] sm:$0xf]
    %v5420 = vld [vmem:[#allocation6 + $0x5e8] sm:$0xf]
    %v5421 = vld [vmem:[#allocation6 + $0x5ec] sm:$0xf]
    %v5422 = vld [vmem:[#allocation6 + $0x5f0] sm:$0xf]
    %v5423 = vld [vmem:[#allocation6 + $0x5f4] sm:$0xf]
    %v5424 = vld [vmem:[#allocation6 + $0x5f8] sm:$0xf]
    %v5425 = vld [vmem:[#allocation6 + $0x5fc] sm:$0xf]
    %v5426 = vld [vmem:[#allocation6 + $0x600] sm:$0xf]
    %v5427 = vld [vmem:[#allocation6 + $0x604] sm:$0xf]
    %v5428 = vld [vmem:[#allocation6 + $0x608] sm:$0xf]
    %v5429 = vld [vmem:[#allocation6 + $0x60c] sm:$0xf]
    %v5430 = vld [vmem:[#allocation6 + $0x610] sm:$0xf]
    %v5431 = vld [vmem:[#allocation6 + $0x614] sm:$0xf]
    %v5432 = vld [vmem:[#allocation6 + $0x618] sm:$0xf]
    %v5433 = vld [vmem:[#allocation6 + $0x61c] sm:$0xf]
    %v5434 = vld [vmem:[#allocation6 + $0x620] sm:$0xf]
    %v5435 = vld [vmem:[#allocation6 + $0x624] sm:$0xf]
    %v5436 = vld [vmem:[#allocation6 + $0x628] sm:$0xf]
    %v5437 = vld [vmem:[#allocation6 + $0x62c] sm:$0xf]
    %v5438 = vld [vmem:[#allocation6 + $0x630] sm:$0xf]
    %v5439 = vld [vmem:[#allocation6 + $0x634] sm:$0xf]
    %v5440 = vld [vmem:[#allocation6 + $0x638] sm:$0xf]
    %v5441 = vld [vmem:[#allocation6 + $0x63c] sm:$0xf]
    %v5442 = vld [vmem:[#allocation6 + $0x640] sm:$0xf]
    %v5443 = vld [vmem:[#allocation6 + $0x644] sm:$0xf]
    %v5444 = vld [vmem:[#allocation6 + $0x648] sm:$0xf]
    %v5445 = vld [vmem:[#allocation6 + $0x64c] sm:$0xf]
    %v5446 = vld [vmem:[#allocation6 + $0x650] sm:$0xf]
    %v5447 = vld [vmem:[#allocation6 + $0x654] sm:$0xf]
    %v5448 = vld [vmem:[#allocation6 + $0x658] sm:$0xf]
    %v5449 = vld [vmem:[#allocation6 + $0x65c] sm:$0xf]
    %v5450 = vld [vmem:[#allocation6 + $0x660] sm:$0xf]
    %v5451 = vld [vmem:[#allocation6 + $0x664] sm:$0xf]
    %v5452 = vld [vmem:[#allocation6 + $0x668] sm:$0xf]
    %v5453 = vld [vmem:[#allocation6 + $0x66c] sm:$0xf]
    %v5454 = vld [vmem:[#allocation6 + $0x670] sm:$0xf]
    %v5455 = vld [vmem:[#allocation6 + $0x674] sm:$0xf]
    %v5456 = vld [vmem:[#allocation6 + $0x678] sm:$0xf]
    %v5457 = vld [vmem:[#allocation6 + $0x67c] sm:$0xf]
    %v5458 = vld [vmem:[#allocation6 + $0x680] sm:$0xf]
    %v5459 = vld [vmem:[#allocation6 + $0x684] sm:$0xf]
    %v5460 = vld [vmem:[#allocation6 + $0x688] sm:$0xf]
    %v5461 = vld [vmem:[#allocation6 + $0x68c] sm:$0xf]
    %v5462 = vld [vmem:[#allocation6 + $0x690] sm:$0xf]
    %v5463 = vld [vmem:[#allocation6 + $0x694] sm:$0xf]
    %v5464 = vld [vmem:[#allocation6 + $0x698] sm:$0xf]
    %v5465 = vld [vmem:[#allocation6 + $0x69c] sm:$0xf]
    %v5466 = vld [vmem:[#allocation6 + $0x6a0] sm:$0xf]
    %v5467 = vld [vmem:[#allocation6 + $0x6a4] sm:$0xf]
    %v5468 = vld [vmem:[#allocation6 + $0x6a8] sm:$0xf]
    %v5469 = vld [vmem:[#allocation6 + $0x6ac] sm:$0xf]
    %v5470 = vld [vmem:[#allocation6 + $0x6b0] sm:$0xf]
    %v5471 = vld [vmem:[#allocation6 + $0x6b4] sm:$0xf]
    %v5472 = vld [vmem:[#allocation6 + $0x6b8] sm:$0xf]
    %v5473 = vld [vmem:[#allocation6 + $0x6bc] sm:$0xf]
    %v5474 = vld [vmem:[#allocation6 + $0x6c0] sm:$0xf]
    %v5475 = vld [vmem:[#allocation6 + $0x6c4] sm:$0xf]
    %v5476 = vld [vmem:[#allocation6 + $0x6c8] sm:$0xf]
    %v5477 = vld [vmem:[#allocation6 + $0x6cc] sm:$0xf]
    %v5478 = vld [vmem:[#allocation6 + $0x6d0] sm:$0xf]
    %v5479 = vld [vmem:[#allocation6 + $0x6d4] sm:$0xf]
    %v5480 = vld [vmem:[#allocation6 + $0x6d8] sm:$0xf]
    %v5481 = vld [vmem:[#allocation6 + $0x6dc] sm:$0xf]
    %v5482 = vld [vmem:[#allocation6 + $0x6e0] sm:$0xf]
    %v5483 = vld [vmem:[#allocation6 + $0x6e4] sm:$0xf]
    %v5484 = vld [vmem:[#allocation6 + $0x6e8] sm:$0xf]
    %v5485 = vld [vmem:[#allocation6 + $0x6ec] sm:$0xf]
    %v5486 = vld [vmem:[#allocation6 + $0x6f0] sm:$0xf]
    %v5487 = vld [vmem:[#allocation6 + $0x6f4] sm:$0xf]
    %v5488 = vld [vmem:[#allocation6 + $0x6f8] sm:$0xf]
    %v5489 = vld [vmem:[#allocation6 + $0x6fc] sm:$0xf]
    %v5490 = vld [vmem:[#allocation6 + $0x700] sm:$0xf]
    %v5491 = vld [vmem:[#allocation6 + $0x704] sm:$0xf]
    %v5492 = vld [vmem:[#allocation6 + $0x708] sm:$0xf]
    %v5493 = vld [vmem:[#allocation6 + $0x70c] sm:$0xf]
    %v5494 = vld [vmem:[#allocation6 + $0x710] sm:$0xf]
    %v5495 = vld [vmem:[#allocation6 + $0x714] sm:$0xf]
    %v5496 = vld [vmem:[#allocation6 + $0x718] sm:$0xf]
    %v5497 = vld [vmem:[#allocation6 + $0x71c] sm:$0xf]
    %v5498 = vld [vmem:[#allocation6 + $0x720] sm:$0xf]
    %v5499 = vld [vmem:[#allocation6 + $0x724] sm:$0xf]
    %v5500 = vld [vmem:[#allocation6 + $0x728] sm:$0xf]
    %v5501 = vld [vmem:[#allocation6 + $0x72c] sm:$0xf]
    %v5502 = vld [vmem:[#allocation6 + $0x730] sm:$0xf]
    %v5503 = vld [vmem:[#allocation6 + $0x734] sm:$0xf]
    %v5504 = vld [vmem:[#allocation6 + $0x738] sm:$0xf]
    %v5505 = vld [vmem:[#allocation6 + $0x73c] sm:$0xf]
    %v5506 = vld [vmem:[#allocation6 + $0x740] sm:$0xf]
    %v5507 = vld [vmem:[#allocation6 + $0x744] sm:$0xf]
    %v5508 = vld [vmem:[#allocation6 + $0x748] sm:$0xf]
    %v5509 = vld [vmem:[#allocation6 + $0x74c] sm:$0xf]
    %v5510 = vld [vmem:[#allocation6 + $0x750] sm:$0xf]
    %v5511 = vld [vmem:[#allocation6 + $0x754] sm:$0xf]
    %v5512 = vld [vmem:[#allocation6 + $0x758] sm:$0xf]
    %v5513 = vld [vmem:[#allocation6 + $0x75c] sm:$0xf]
    %v5514 = vld [vmem:[#allocation6 + $0x760] sm:$0xf]
    %v5515 = vld [vmem:[#allocation6 + $0x764] sm:$0xf]
    %v5516 = vld [vmem:[#allocation6 + $0x768] sm:$0xf]
    %v5517 = vld [vmem:[#allocation6 + $0x76c] sm:$0xf]
    %v5518 = vld [vmem:[#allocation6 + $0x770] sm:$0xf]
    %v5519 = vld [vmem:[#allocation6 + $0x774] sm:$0xf]
    %v5520 = vld [vmem:[#allocation6 + $0x778] sm:$0xf]
    %v5521 = vld [vmem:[#allocation6 + $0x77c] sm:$0xf]
    %v5522 = vld [vmem:[#allocation6 + $0x780] sm:$0xf]
    %v5523 = vld [vmem:[#allocation6 + $0x784] sm:$0xf]
    %v5524 = vld [vmem:[#allocation6 + $0x788] sm:$0xf]
    %v5525 = vld [vmem:[#allocation6 + $0x78c] sm:$0xf]
    %v5526 = vld [vmem:[#allocation6 + $0x790] sm:$0xf]
    %v5527 = vld [vmem:[#allocation6 + $0x794] sm:$0xf]
    %v5528 = vld [vmem:[#allocation6 + $0x798] sm:$0xf]
    %v5529 = vld [vmem:[#allocation6 + $0x79c] sm:$0xf]
    %v5530 = vld [vmem:[#allocation6 + $0x7a0] sm:$0xf]
    %v5531 = vld [vmem:[#allocation6 + $0x7a4] sm:$0xf]
    %v5532 = vld [vmem:[#allocation6 + $0x7a8] sm:$0xf]
    %v5533 = vld [vmem:[#allocation6 + $0x7ac] sm:$0xf]
    %v5534 = vld [vmem:[#allocation6 + $0x7b0] sm:$0xf]
    %v5535 = vld [vmem:[#allocation6 + $0x7b4] sm:$0xf]
    %v5536 = vld [vmem:[#allocation6 + $0x7b8] sm:$0xf]
    %v5537 = vld [vmem:[#allocation6 + $0x7bc] sm:$0xf]
    %v5538 = vld [vmem:[#allocation6 + $0x7c0] sm:$0xf]
    %v5539 = vld [vmem:[#allocation6 + $0x7c4] sm:$0xf]
    %v5540 = vld [vmem:[#allocation6 + $0x7c8] sm:$0xf]
    %v5541 = vld [vmem:[#allocation6 + $0x7cc] sm:$0xf]
    %v5542 = vld [vmem:[#allocation6 + $0x7d0] sm:$0xf]
    %v5543 = vld [vmem:[#allocation6 + $0x7d4] sm:$0xf]
    %v5544 = vld [vmem:[#allocation6 + $0x7d8] sm:$0xf]
    %v5545 = vld [vmem:[#allocation6 + $0x7dc] sm:$0xf]
    %v5546 = vld [vmem:[#allocation6 + $0x7e0] sm:$0xf]
    %v5547 = vld [vmem:[#allocation6 + $0x7e4] sm:$0xf]
    %v5548 = vld [vmem:[#allocation6 + $0x7e8] sm:$0xf]
    %v5549 = vld [vmem:[#allocation6 + $0x7ec] sm:$0xf]
    %v5550 = vld [vmem:[#allocation6 + $0x7f0] sm:$0xf]
    %v5551 = vld [vmem:[#allocation6 + $0x7f4] sm:$0xf]
    %v5552 = vld [vmem:[#allocation6 + $0x7f8] sm:$0xf]
    %v5553 = vld [vmem:[#allocation6 + $0x7fc] sm:$0xf]
    %v6066 = vunpack.c.l.b16 %v5042
    %v6067 = vunpack.c.l.b16 %v5043
    %v6068 = vunpack.c.l.b16 %v5044
    %v6069 = vunpack.c.l.b16 %v5045
    %v6070 = vunpack.c.l.b16 %v5046
    %v6071 = vunpack.c.l.b16 %v5047
    %v6072 = vunpack.c.l.b16 %v5048
    %v6073 = vunpack.c.l.b16 %v5049
    %v6074 = vunpack.c.l.b16 %v5050
    %v6075 = vunpack.c.l.b16 %v5051
    %v6076 = vunpack.c.l.b16 %v5052
    %v6077 = vunpack.c.l.b16 %v5053
    %v6078 = vunpack.c.l.b16 %v5054
    %v6079 = vunpack.c.l.b16 %v5055
    %v6080 = vunpack.c.l.b16 %v5056
    %v6081 = vunpack.c.l.b16 %v5057
    %v6082 = vunpack.c.l.b16 %v5058
    %v6083 = vunpack.c.l.b16 %v5059
    %v6084 = vunpack.c.l.b16 %v5060
    %v6085 = vunpack.c.l.b16 %v5061
    %v6086 = vunpack.c.l.b16 %v5062
    %v6087 = vunpack.c.l.b16 %v5063
    %v6088 = vunpack.c.l.b16 %v5064
    %v6089 = vunpack.c.l.b16 %v5065
    %v6090 = vunpack.c.l.b16 %v5066
    %v6091 = vunpack.c.l.b16 %v5067
    %v6092 = vunpack.c.l.b16 %v5068
    %v6093 = vunpack.c.l.b16 %v5069
    %v6094 = vunpack.c.l.b16 %v5070
    %v6095 = vunpack.c.l.b16 %v5071
    %v6096 = vunpack.c.l.b16 %v5072
    %v6097 = vunpack.c.l.b16 %v5073
    %v6098 = vunpack.c.l.b16 %v5074
    %v6099 = vunpack.c.l.b16 %v5075
    %v6100 = vunpack.c.l.b16 %v5076
    %v6101 = vunpack.c.l.b16 %v5077
    %v6102 = vunpack.c.l.b16 %v5078
    %v6103 = vunpack.c.l.b16 %v5079
    %v6104 = vunpack.c.l.b16 %v5080
    %v6105 = vunpack.c.l.b16 %v5081
    %v6106 = vunpack.c.l.b16 %v5082
    %v6107 = vunpack.c.l.b16 %v5083
    %v6108 = vunpack.c.l.b16 %v5084
    %v6109 = vunpack.c.l.b16 %v5085
    %v6110 = vunpack.c.l.b16 %v5086
    %v6111 = vunpack.c.l.b16 %v5087
    %v6112 = vunpack.c.l.b16 %v5088
    %v6113 = vunpack.c.l.b16 %v5089
    %v6114 = vunpack.c.l.b16 %v5090
    %v6115 = vunpack.c.l.b16 %v5091
    %v6116 = vunpack.c.l.b16 %v5092
    %v6117 = vunpack.c.l.b16 %v5093
    %v6118 = vunpack.c.l.b16 %v5094
    %v6119 = vunpack.c.l.b16 %v5095
    %v6120 = vunpack.c.l.b16 %v5096
    %v6121 = vunpack.c.l.b16 %v5097
    %v6122 = vunpack.c.l.b16 %v5098
    %v6123 = vunpack.c.l.b16 %v5099
    %v6124 = vunpack.c.l.b16 %v5100
    %v6125 = vunpack.c.l.b16 %v5101
    %v6126 = vunpack.c.l.b16 %v5102
    %v6127 = vunpack.c.l.b16 %v5103
    %v6128 = vunpack.c.l.b16 %v5104
    %v6129 = vunpack.c.l.b16 %v5105
    %v6130 = vunpack.c.l.b16 %v5106
    %v6131 = vunpack.c.l.b16 %v5107
    %v6132 = vunpack.c.l.b16 %v5108
    %v6133 = vunpack.c.l.b16 %v5109
    %v6134 = vunpack.c.l.b16 %v5110
    %v6135 = vunpack.c.l.b16 %v5111
    %v6136 = vunpack.c.l.b16 %v5112
    %v6137 = vunpack.c.l.b16 %v5113
    %v6138 = vunpack.c.l.b16 %v5114
    %v6139 = vunpack.c.l.b16 %v5115
    %v6140 = vunpack.c.l.b16 %v5116
    %v6141 = vunpack.c.l.b16 %v5117
    %v6142 = vunpack.c.l.b16 %v5118
    %v6143 = vunpack.c.l.b16 %v5119
    %v6144 = vunpack.c.l.b16 %v5120
    %v6145 = vunpack.c.l.b16 %v5121
    %v6146 = vunpack.c.l.b16 %v5122
    %v6147 = vunpack.c.l.b16 %v5123
    %v6148 = vunpack.c.l.b16 %v5124
    %v6149 = vunpack.c.l.b16 %v5125
    %v6150 = vunpack.c.l.b16 %v5126
    %v6151 = vunpack.c.l.b16 %v5127
    %v6152 = vunpack.c.l.b16 %v5128
    %v6153 = vunpack.c.l.b16 %v5129
    %v6154 = vunpack.c.l.b16 %v5130
    %v6155 = vunpack.c.l.b16 %v5131
    %v6156 = vunpack.c.l.b16 %v5132
    %v6157 = vunpack.c.l.b16 %v5133
    %v6158 = vunpack.c.l.b16 %v5134
    %v6159 = vunpack.c.l.b16 %v5135
    %v6160 = vunpack.c.l.b16 %v5136
    %v6161 = vunpack.c.l.b16 %v5137
    %v6162 = vunpack.c.l.b16 %v5138
    %v6163 = vunpack.c.l.b16 %v5139
    %v6164 = vunpack.c.l.b16 %v5140
    %v6165 = vunpack.c.l.b16 %v5141
    %v6166 = vunpack.c.l.b16 %v5142
    %v6167 = vunpack.c.l.b16 %v5143
    %v6168 = vunpack.c.l.b16 %v5144
    %v6169 = vunpack.c.l.b16 %v5145
    %v6170 = vunpack.c.l.b16 %v5146
    %v6171 = vunpack.c.l.b16 %v5147
    %v6172 = vunpack.c.l.b16 %v5148
    %v6173 = vunpack.c.l.b16 %v5149
    %v6174 = vunpack.c.l.b16 %v5150
    %v6175 = vunpack.c.l.b16 %v5151
    %v6176 = vunpack.c.l.b16 %v5152
    %v6177 = vunpack.c.l.b16 %v5153
    %v6178 = vunpack.c.l.b16 %v5154
    %v6179 = vunpack.c.l.b16 %v5155
    %v6180 = vunpack.c.l.b16 %v5156
    %v6181 = vunpack.c.l.b16 %v5157
    %v6182 = vunpack.c.l.b16 %v5158
    %v6183 = vunpack.c.l.b16 %v5159
    %v6184 = vunpack.c.l.b16 %v5160
    %v6185 = vunpack.c.l.b16 %v5161
    %v6186 = vunpack.c.l.b16 %v5162
    %v6187 = vunpack.c.l.b16 %v5163
    %v6188 = vunpack.c.l.b16 %v5164
    %v6189 = vunpack.c.l.b16 %v5165
    %v6190 = vunpack.c.l.b16 %v5166
    %v6191 = vunpack.c.l.b16 %v5167
    %v6192 = vunpack.c.l.b16 %v5168
    %v6193 = vunpack.c.l.b16 %v5169
    %v6194 = vunpack.c.l.b16 %v5170
    %v6195 = vunpack.c.l.b16 %v5171
    %v6196 = vunpack.c.l.b16 %v5172
    %v6197 = vunpack.c.l.b16 %v5173
    %v6198 = vunpack.c.l.b16 %v5174
    %v6199 = vunpack.c.l.b16 %v5175
    %v6200 = vunpack.c.l.b16 %v5176
    %v6201 = vunpack.c.l.b16 %v5177
    %v6202 = vunpack.c.l.b16 %v5178
    %v6203 = vunpack.c.l.b16 %v5179
    %v6204 = vunpack.c.l.b16 %v5180
    %v6205 = vunpack.c.l.b16 %v5181
    %v6206 = vunpack.c.l.b16 %v5182
    %v6207 = vunpack.c.l.b16 %v5183
    %v6208 = vunpack.c.l.b16 %v5184
    %v6209 = vunpack.c.l.b16 %v5185
    %v6210 = vunpack.c.l.b16 %v5186
    %v6211 = vunpack.c.l.b16 %v5187
    %v6212 = vunpack.c.l.b16 %v5188
    %v6213 = vunpack.c.l.b16 %v5189
    %v6214 = vunpack.c.l.b16 %v5190
    %v6215 = vunpack.c.l.b16 %v5191
    %v6216 = vunpack.c.l.b16 %v5192
    %v6217 = vunpack.c.l.b16 %v5193
    %v6218 = vunpack.c.l.b16 %v5194
    %v6219 = vunpack.c.l.b16 %v5195
    %v6220 = vunpack.c.l.b16 %v5196
    %v6221 = vunpack.c.l.b16 %v5197
    %v6222 = vunpack.c.l.b16 %v5198
    %v6223 = vunpack.c.l.b16 %v5199
    %v6224 = vunpack.c.l.b16 %v5200
    %v6225 = vunpack.c.l.b16 %v5201
    %v6226 = vunpack.c.l.b16 %v5202
    %v6227 = vunpack.c.l.b16 %v5203
    %v6228 = vunpack.c.l.b16 %v5204
    %v6229 = vunpack.c.l.b16 %v5205
    %v6230 = vunpack.c.l.b16 %v5206
    %v6231 = vunpack.c.l.b16 %v5207
    %v6232 = vunpack.c.l.b16 %v5208
    %v6233 = vunpack.c.l.b16 %v5209
    %v6234 = vunpack.c.l.b16 %v5210
    %v6235 = vunpack.c.l.b16 %v5211
    %v6236 = vunpack.c.l.b16 %v5212
    %v6237 = vunpack.c.l.b16 %v5213
    %v6238 = vunpack.c.l.b16 %v5214
    %v6239 = vunpack.c.l.b16 %v5215
    %v6240 = vunpack.c.l.b16 %v5216
    %v6241 = vunpack.c.l.b16 %v5217
    %v6242 = vunpack.c.l.b16 %v5218
    %v6243 = vunpack.c.l.b16 %v5219
    %v6244 = vunpack.c.l.b16 %v5220
    %v6245 = vunpack.c.l.b16 %v5221
    %v6246 = vunpack.c.l.b16 %v5222
    %v6247 = vunpack.c.l.b16 %v5223
    %v6248 = vunpack.c.l.b16 %v5224
    %v6249 = vunpack.c.l.b16 %v5225
    %v6250 = vunpack.c.l.b16 %v5226
    %v6251 = vunpack.c.l.b16 %v5227
    %v6252 = vunpack.c.l.b16 %v5228
    %v6253 = vunpack.c.l.b16 %v5229
    %v6254 = vunpack.c.l.b16 %v5230
    %v6255 = vunpack.c.l.b16 %v5231
    %v6256 = vunpack.c.l.b16 %v5232
    %v6257 = vunpack.c.l.b16 %v5233
    %v6258 = vunpack.c.l.b16 %v5234
    %v6259 = vunpack.c.l.b16 %v5235
    %v6260 = vunpack.c.l.b16 %v5236
    %v6261 = vunpack.c.l.b16 %v5237
    %v6262 = vunpack.c.l.b16 %v5238
    %v6263 = vunpack.c.l.b16 %v5239
    %v6264 = vunpack.c.l.b16 %v5240
    %v6265 = vunpack.c.l.b16 %v5241
    %v6266 = vunpack.c.l.b16 %v5242
    %v6267 = vunpack.c.l.b16 %v5243
    %v6268 = vunpack.c.l.b16 %v5244
    %v6269 = vunpack.c.l.b16 %v5245
    %v6270 = vunpack.c.l.b16 %v5246
    %v6271 = vunpack.c.l.b16 %v5247
    %v6272 = vunpack.c.l.b16 %v5248
    %v6273 = vunpack.c.l.b16 %v5249
    %v6274 = vunpack.c.l.b16 %v5250
    %v6275 = vunpack.c.l.b16 %v5251
    %v6276 = vunpack.c.l.b16 %v5252
    %v6277 = vunpack.c.l.b16 %v5253
    %v6278 = vunpack.c.l.b16 %v5254
    %v6279 = vunpack.c.l.b16 %v5255
    %v6280 = vunpack.c.l.b16 %v5256
    %v6281 = vunpack.c.l.b16 %v5257
    %v6282 = vunpack.c.l.b16 %v5258
    %v6283 = vunpack.c.l.b16 %v5259
    %v6284 = vunpack.c.l.b16 %v5260
    %v6285 = vunpack.c.l.b16 %v5261
    %v6286 = vunpack.c.l.b16 %v5262
    %v6287 = vunpack.c.l.b16 %v5263
    %v6288 = vunpack.c.l.b16 %v5264
    %v6289 = vunpack.c.l.b16 %v5265
    %v6290 = vunpack.c.l.b16 %v5266
    %v6291 = vunpack.c.l.b16 %v5267
    %v6292 = vunpack.c.l.b16 %v5268
    %v6293 = vunpack.c.l.b16 %v5269
    %v6294 = vunpack.c.l.b16 %v5270
    %v6295 = vunpack.c.l.b16 %v5271
    %v6296 = vunpack.c.l.b16 %v5272
    %v6297 = vunpack.c.l.b16 %v5273
    %v6298 = vunpack.c.l.b16 %v5274
    %v6299 = vunpack.c.l.b16 %v5275
    %v6300 = vunpack.c.l.b16 %v5276
    %v6301 = vunpack.c.l.b16 %v5277
    %v6302 = vunpack.c.l.b16 %v5278
    %v6303 = vunpack.c.l.b16 %v5279
    %v6304 = vunpack.c.l.b16 %v5280
    %v6305 = vunpack.c.l.b16 %v5281
    %v6306 = vunpack.c.l.b16 %v5282
    %v6307 = vunpack.c.l.b16 %v5283
    %v6308 = vunpack.c.l.b16 %v5284
    %v6309 = vunpack.c.l.b16 %v5285
    %v6310 = vunpack.c.l.b16 %v5286
    %v6311 = vunpack.c.l.b16 %v5287
    %v6312 = vunpack.c.l.b16 %v5288
    %v6313 = vunpack.c.l.b16 %v5289
    %v6314 = vunpack.c.l.b16 %v5290
    %v6315 = vunpack.c.l.b16 %v5291
    %v6316 = vunpack.c.l.b16 %v5292
    %v6317 = vunpack.c.l.b16 %v5293
    %v6318 = vunpack.c.l.b16 %v5294
    %v6319 = vunpack.c.l.b16 %v5295
    %v6320 = vunpack.c.l.b16 %v5296
    %v6321 = vunpack.c.l.b16 %v5297
    %v6322 = vunpack.c.l.b16 %v5298
    %v6323 = vunpack.c.l.b16 %v5299
    %v6324 = vunpack.c.l.b16 %v5300
    %v6325 = vunpack.c.l.b16 %v5301
    %v6326 = vunpack.c.l.b16 %v5302
    %v6327 = vunpack.c.l.b16 %v5303
    %v6328 = vunpack.c.l.b16 %v5304
    %v6329 = vunpack.c.l.b16 %v5305
    %v6330 = vunpack.c.l.b16 %v5306
    %v6331 = vunpack.c.l.b16 %v5307
    %v6332 = vunpack.c.l.b16 %v5308
    %v6333 = vunpack.c.l.b16 %v5309
    %v6334 = vunpack.c.l.b16 %v5310
    %v6335 = vunpack.c.l.b16 %v5311
    %v6336 = vunpack.c.l.b16 %v5312
    %v6337 = vunpack.c.l.b16 %v5313
    %v6338 = vunpack.c.l.b16 %v5314
    %v6339 = vunpack.c.l.b16 %v5315
    %v6340 = vunpack.c.l.b16 %v5316
    %v6341 = vunpack.c.l.b16 %v5317
    %v6342 = vunpack.c.l.b16 %v5318
    %v6343 = vunpack.c.l.b16 %v5319
    %v6344 = vunpack.c.l.b16 %v5320
    %v6345 = vunpack.c.l.b16 %v5321
    %v6346 = vunpack.c.l.b16 %v5322
    %v6347 = vunpack.c.l.b16 %v5323
    %v6348 = vunpack.c.l.b16 %v5324
    %v6349 = vunpack.c.l.b16 %v5325
    %v6350 = vunpack.c.l.b16 %v5326
    %v6351 = vunpack.c.l.b16 %v5327
    %v6352 = vunpack.c.l.b16 %v5328
    %v6353 = vunpack.c.l.b16 %v5329
    %v6354 = vunpack.c.l.b16 %v5330
    %v6355 = vunpack.c.l.b16 %v5331
    %v6356 = vunpack.c.l.b16 %v5332
    %v6357 = vunpack.c.l.b16 %v5333
    %v6358 = vunpack.c.l.b16 %v5334
    %v6359 = vunpack.c.l.b16 %v5335
    %v6360 = vunpack.c.l.b16 %v5336
    %v6361 = vunpack.c.l.b16 %v5337
    %v6362 = vunpack.c.l.b16 %v5338
    %v6363 = vunpack.c.l.b16 %v5339
    %v6364 = vunpack.c.l.b16 %v5340
    %v6365 = vunpack.c.l.b16 %v5341
    %v6366 = vunpack.c.l.b16 %v5342
    %v6367 = vunpack.c.l.b16 %v5343
    %v6368 = vunpack.c.l.b16 %v5344
    %v6369 = vunpack.c.l.b16 %v5345
    %v6370 = vunpack.c.l.b16 %v5346
    %v6371 = vunpack.c.l.b16 %v5347
    %v6372 = vunpack.c.l.b16 %v5348
    %v6373 = vunpack.c.l.b16 %v5349
    %v6374 = vunpack.c.l.b16 %v5350
    %v6375 = vunpack.c.l.b16 %v5351
    %v6376 = vunpack.c.l.b16 %v5352
    %v6377 = vunpack.c.l.b16 %v5353
    %v6378 = vunpack.c.l.b16 %v5354
    %v6379 = vunpack.c.l.b16 %v5355
    %v6380 = vunpack.c.l.b16 %v5356
    %v6381 = vunpack.c.l.b16 %v5357
    %v6382 = vunpack.c.l.b16 %v5358
    %v6383 = vunpack.c.l.b16 %v5359
    %v6384 = vunpack.c.l.b16 %v5360
    %v6385 = vunpack.c.l.b16 %v5361
    %v6386 = vunpack.c.l.b16 %v5362
    %v6387 = vunpack.c.l.b16 %v5363
    %v6388 = vunpack.c.l.b16 %v5364
    %v6389 = vunpack.c.l.b16 %v5365
    %v6390 = vunpack.c.l.b16 %v5366
    %v6391 = vunpack.c.l.b16 %v5367
    %v6392 = vunpack.c.l.b16 %v5368
    %v6393 = vunpack.c.l.b16 %v5369
    %v6394 = vunpack.c.l.b16 %v5370
    %v6395 = vunpack.c.l.b16 %v5371
    %v6396 = vunpack.c.l.b16 %v5372
    %v6397 = vunpack.c.l.b16 %v5373
    %v6398 = vunpack.c.l.b16 %v5374
    %v6399 = vunpack.c.l.b16 %v5375
    %v6400 = vunpack.c.l.b16 %v5376
    %v6401 = vunpack.c.l.b16 %v5377
    %v6402 = vunpack.c.l.b16 %v5378
    %v6403 = vunpack.c.l.b16 %v5379
    %v6404 = vunpack.c.l.b16 %v5380
    %v6405 = vunpack.c.l.b16 %v5381
    %v6406 = vunpack.c.l.b16 %v5382
    %v6407 = vunpack.c.l.b16 %v5383
    %v6408 = vunpack.c.l.b16 %v5384
    %v6409 = vunpack.c.l.b16 %v5385
    %v6410 = vunpack.c.l.b16 %v5386
    %v6411 = vunpack.c.l.b16 %v5387
    %v6412 = vunpack.c.l.b16 %v5388
    %v6413 = vunpack.c.l.b16 %v5389
    %v6414 = vunpack.c.l.b16 %v5390
    %v6415 = vunpack.c.l.b16 %v5391
    %v6416 = vunpack.c.l.b16 %v5392
    %v6417 = vunpack.c.l.b16 %v5393
    %v6418 = vunpack.c.l.b16 %v5394
    %v6419 = vunpack.c.l.b16 %v5395
    %v6420 = vunpack.c.l.b16 %v5396
    %v6421 = vunpack.c.l.b16 %v5397
    %v6422 = vunpack.c.l.b16 %v5398
    %v6423 = vunpack.c.l.b16 %v5399
    %v6424 = vunpack.c.l.b16 %v5400
    %v6425 = vunpack.c.l.b16 %v5401
    %v6426 = vunpack.c.l.b16 %v5402
    %v6427 = vunpack.c.l.b16 %v5403
    %v6428 = vunpack.c.l.b16 %v5404
    %v6429 = vunpack.c.l.b16 %v5405
    %v6430 = vunpack.c.l.b16 %v5406
    %v6431 = vunpack.c.l.b16 %v5407
    %v6432 = vunpack.c.l.b16 %v5408
    %v6433 = vunpack.c.l.b16 %v5409
    %v6434 = vunpack.c.l.b16 %v5410
    %v6435 = vunpack.c.l.b16 %v5411
    %v6436 = vunpack.c.l.b16 %v5412
    %v6437 = vunpack.c.l.b16 %v5413
    %v6438 = vunpack.c.l.b16 %v5414
    %v6439 = vunpack.c.l.b16 %v5415
    %v6440 = vunpack.c.l.b16 %v5416
    %v6441 = vunpack.c.l.b16 %v5417
    %v6442 = vunpack.c.l.b16 %v5418
    %v6443 = vunpack.c.l.b16 %v5419
    %v6444 = vunpack.c.l.b16 %v5420
    %v6445 = vunpack.c.l.b16 %v5421
    %v6446 = vunpack.c.l.b16 %v5422
    %v6447 = vunpack.c.l.b16 %v5423
    %v6448 = vunpack.c.l.b16 %v5424
    %v6449 = vunpack.c.l.b16 %v5425
    %v6450 = vunpack.c.l.b16 %v5426
    %v6451 = vunpack.c.l.b16 %v5427
    %v6452 = vunpack.c.l.b16 %v5428
    %v6453 = vunpack.c.l.b16 %v5429
    %v6454 = vunpack.c.l.b16 %v5430
    %v6455 = vunpack.c.l.b16 %v5431
    %v6456 = vunpack.c.l.b16 %v5432
    %v6457 = vunpack.c.l.b16 %v5433
    %v6458 = vunpack.c.l.b16 %v5434
    %v6459 = vunpack.c.l.b16 %v5435
    %v6460 = vunpack.c.l.b16 %v5436
    %v6461 = vunpack.c.l.b16 %v5437
    %v6462 = vunpack.c.l.b16 %v5438
    %v6463 = vunpack.c.l.b16 %v5439
    %v6464 = vunpack.c.l.b16 %v5440
    %v6465 = vunpack.c.l.b16 %v5441
    %v6466 = vunpack.c.l.b16 %v5442
    %v6467 = vunpack.c.l.b16 %v5443
    %v6468 = vunpack.c.l.b16 %v5444
    %v6469 = vunpack.c.l.b16 %v5445
    %v6470 = vunpack.c.l.b16 %v5446
    %v6471 = vunpack.c.l.b16 %v5447
    %v6472 = vunpack.c.l.b16 %v5448
    %v6473 = vunpack.c.l.b16 %v5449
    %v6474 = vunpack.c.l.b16 %v5450
    %v6475 = vunpack.c.l.b16 %v5451
    %v6476 = vunpack.c.l.b16 %v5452
    %v6477 = vunpack.c.l.b16 %v5453
    %v6478 = vunpack.c.l.b16 %v5454
    %v6479 = vunpack.c.l.b16 %v5455
    %v6480 = vunpack.c.l.b16 %v5456
    %v6481 = vunpack.c.l.b16 %v5457
    %v6482 = vunpack.c.l.b16 %v5458
    %v6483 = vunpack.c.l.b16 %v5459
    %v6484 = vunpack.c.l.b16 %v5460
    %v6485 = vunpack.c.l.b16 %v5461
    %v6486 = vunpack.c.l.b16 %v5462
    %v6487 = vunpack.c.l.b16 %v5463
    %v6488 = vunpack.c.l.b16 %v5464
    %v6489 = vunpack.c.l.b16 %v5465
    %v6490 = vunpack.c.l.b16 %v5466
    %v6491 = vunpack.c.l.b16 %v5467
    %v6492 = vunpack.c.l.b16 %v5468
    %v6493 = vunpack.c.l.b16 %v5469
    %v6494 = vunpack.c.l.b16 %v5470
    %v6495 = vunpack.c.l.b16 %v5471
    %v6496 = vunpack.c.l.b16 %v5472
    %v6497 = vunpack.c.l.b16 %v5473
    %v6498 = vunpack.c.l.b16 %v5474
    %v6499 = vunpack.c.l.b16 %v5475
    %v6500 = vunpack.c.l.b16 %v5476
    %v6501 = vunpack.c.l.b16 %v5477
    %v6502 = vunpack.c.l.b16 %v5478
    %v6503 = vunpack.c.l.b16 %v5479
    %v6504 = vunpack.c.l.b16 %v5480
    %v6505 = vunpack.c.l.b16 %v5481
    %v6506 = vunpack.c.l.b16 %v5482
    %v6507 = vunpack.c.l.b16 %v5483
    %v6508 = vunpack.c.l.b16 %v5484
    %v6509 = vunpack.c.l.b16 %v5485
    %v6510 = vunpack.c.l.b16 %v5486
    %v6511 = vunpack.c.l.b16 %v5487
    %v6512 = vunpack.c.l.b16 %v5488
    %v6513 = vunpack.c.l.b16 %v5489
    %v6514 = vunpack.c.l.b16 %v5490
    %v6515 = vunpack.c.l.b16 %v5491
    %v6516 = vunpack.c.l.b16 %v5492
    %v6517 = vunpack.c.l.b16 %v5493
    %v6518 = vunpack.c.l.b16 %v5494
    %v6519 = vunpack.c.l.b16 %v5495
    %v6520 = vunpack.c.l.b16 %v5496
    %v6521 = vunpack.c.l.b16 %v5497
    %v6522 = vunpack.c.l.b16 %v5498
    %v6523 = vunpack.c.l.b16 %v5499
    %v6524 = vunpack.c.l.b16 %v5500
    %v6525 = vunpack.c.l.b16 %v5501
    %v6526 = vunpack.c.l.b16 %v5502
    %v6527 = vunpack.c.l.b16 %v5503
    %v6528 = vunpack.c.l.b16 %v5504
    %v6529 = vunpack.c.l.b16 %v5505
    %v6530 = vunpack.c.l.b16 %v5506
    %v6531 = vunpack.c.l.b16 %v5507
    %v6532 = vunpack.c.l.b16 %v5508
    %v6533 = vunpack.c.l.b16 %v5509
    %v6534 = vunpack.c.l.b16 %v5510
    %v6535 = vunpack.c.l.b16 %v5511
    %v6536 = vunpack.c.l.b16 %v5512
    %v6537 = vunpack.c.l.b16 %v5513
    %v6538 = vunpack.c.l.b16 %v5514
    %v6539 = vunpack.c.l.b16 %v5515
    %v6540 = vunpack.c.l.b16 %v5516
    %v6541 = vunpack.c.l.b16 %v5517
    %v6542 = vunpack.c.l.b16 %v5518
    %v6543 = vunpack.c.l.b16 %v5519
    %v6544 = vunpack.c.l.b16 %v5520
    %v6545 = vunpack.c.l.b16 %v5521
    %v6546 = vunpack.c.l.b16 %v5522
    %v6547 = vunpack.c.l.b16 %v5523
    %v6548 = vunpack.c.l.b16 %v5524
    %v6549 = vunpack.c.l.b16 %v5525
    %v6550 = vunpack.c.l.b16 %v5526
    %v6551 = vunpack.c.l.b16 %v5527
    %v6552 = vunpack.c.l.b16 %v5528
    %v6553 = vunpack.c.l.b16 %v5529
    %v6554 = vunpack.c.l.b16 %v5530
    %v6555 = vunpack.c.l.b16 %v5531
    %v6556 = vunpack.c.l.b16 %v5532
    %v6557 = vunpack.c.l.b16 %v5533
    %v6558 = vunpack.c.l.b16 %v5534
    %v6559 = vunpack.c.l.b16 %v5535
    %v6560 = vunpack.c.l.b16 %v5536
    %v6561 = vunpack.c.l.b16 %v5537
    %v6562 = vunpack.c.l.b16 %v5538
    %v6563 = vunpack.c.l.b16 %v5539
    %v6564 = vunpack.c.l.b16 %v5540
    %v6565 = vunpack.c.l.b16 %v5541
    %v6566 = vunpack.c.l.b16 %v5542
    %v6567 = vunpack.c.l.b16 %v5543
    %v6568 = vunpack.c.l.b16 %v5544
    %v6569 = vunpack.c.l.b16 %v5545
    %v6570 = vunpack.c.l.b16 %v5546
    %v6571 = vunpack.c.l.b16 %v5547
    %v6572 = vunpack.c.l.b16 %v5548
    %v6573 = vunpack.c.l.b16 %v5549
    %v6574 = vunpack.c.l.b16 %v5550
    %v6575 = vunpack.c.l.b16 %v5551
    %v6576 = vunpack.c.l.b16 %v5552
    %v6577 = vunpack.c.l.b16 %v5553
    %v6578 = vpack.c.b16 %v6067, %v6066
    %v6579 = vpack.c.b16 %v6069, %v6068
    %v6580 = vpack.c.b16 %v6071, %v6070
    %v6581 = vpack.c.b16 %v6073, %v6072
    %v6582 = vpack.c.b16 %v6075, %v6074
    %v6583 = vpack.c.b16 %v6077, %v6076
    %v6584 = vpack.c.b16 %v6079, %v6078
    %v6585 = vpack.c.b16 %v6081, %v6080
    %v6586 = vpack.c.b16 %v6083, %v6082
    %v6587 = vpack.c.b16 %v6085, %v6084
    %v6588 = vpack.c.b16 %v6087, %v6086
    %v6589 = vpack.c.b16 %v6089, %v6088
    %v6590 = vpack.c.b16 %v6091, %v6090
    %v6591 = vpack.c.b16 %v6093, %v6092
    %v6592 = vpack.c.b16 %v6095, %v6094
    %v6593 = vpack.c.b16 %v6097, %v6096
    %v6594 = vpack.c.b16 %v6099, %v6098
    %v6595 = vpack.c.b16 %v6101, %v6100
    %v6596 = vpack.c.b16 %v6103, %v6102
    %v6597 = vpack.c.b16 %v6105, %v6104
    %v6598 = vpack.c.b16 %v6107, %v6106
    %v6599 = vpack.c.b16 %v6109, %v6108
    %v6600 = vpack.c.b16 %v6111, %v6110
    %v6601 = vpack.c.b16 %v6113, %v6112
    %v6602 = vpack.c.b16 %v6115, %v6114
    %v6603 = vpack.c.b16 %v6117, %v6116
    %v6604 = vpack.c.b16 %v6119, %v6118
    %v6605 = vpack.c.b16 %v6121, %v6120
    %v6606 = vpack.c.b16 %v6123, %v6122
    %v6607 = vpack.c.b16 %v6125, %v6124
    %v6608 = vpack.c.b16 %v6127, %v6126
    %v6609 = vpack.c.b16 %v6129, %v6128
    %v6610 = vpack.c.b16 %v6131, %v6130
    %v6611 = vpack.c.b16 %v6133, %v6132
    %v6612 = vpack.c.b16 %v6135, %v6134
    %v6613 = vpack.c.b16 %v6137, %v6136
    %v6614 = vpack.c.b16 %v6139, %v6138
    %v6615 = vpack.c.b16 %v6141, %v6140
    %v6616 = vpack.c.b16 %v6143, %v6142
    %v6617 = vpack.c.b16 %v6145, %v6144
    %v6618 = vpack.c.b16 %v6147, %v6146
    %v6619 = vpack.c.b16 %v6149, %v6148
    %v6620 = vpack.c.b16 %v6151, %v6150
    %v6621 = vpack.c.b16 %v6153, %v6152
    %v6622 = vpack.c.b16 %v6155, %v6154
    %v6623 = vpack.c.b16 %v6157, %v6156
    %v6624 = vpack.c.b16 %v6159, %v6158
    %v6625 = vpack.c.b16 %v6161, %v6160
    %v6626 = vpack.c.b16 %v6163, %v6162
    %v6627 = vpack.c.b16 %v6165, %v6164
    %v6628 = vpack.c.b16 %v6167, %v6166
    %v6629 = vpack.c.b16 %v6169, %v6168
    %v6630 = vpack.c.b16 %v6171, %v6170
    %v6631 = vpack.c.b16 %v6173, %v6172
    %v6632 = vpack.c.b16 %v6175, %v6174
    %v6633 = vpack.c.b16 %v6177, %v6176
    %v6634 = vpack.c.b16 %v6179, %v6178
    %v6635 = vpack.c.b16 %v6181, %v6180
    %v6636 = vpack.c.b16 %v6183, %v6182
    %v6637 = vpack.c.b16 %v6185, %v6184
    %v6638 = vpack.c.b16 %v6187, %v6186
    %v6639 = vpack.c.b16 %v6189, %v6188
    %v6640 = vpack.c.b16 %v6191, %v6190
    %v6641 = vpack.c.b16 %v6193, %v6192
    %v6642 = vpack.c.b16 %v6195, %v6194
    %v6643 = vpack.c.b16 %v6197, %v6196
    %v6644 = vpack.c.b16 %v6199, %v6198
    %v6645 = vpack.c.b16 %v6201, %v6200
    %v6646 = vpack.c.b16 %v6203, %v6202
    %v6647 = vpack.c.b16 %v6205, %v6204
    %v6648 = vpack.c.b16 %v6207, %v6206
    %v6649 = vpack.c.b16 %v6209, %v6208
    %v6650 = vpack.c.b16 %v6211, %v6210
    %v6651 = vpack.c.b16 %v6213, %v6212
    %v6652 = vpack.c.b16 %v6215, %v6214
    %v6653 = vpack.c.b16 %v6217, %v6216
    %v6654 = vpack.c.b16 %v6219, %v6218
    %v6655 = vpack.c.b16 %v6221, %v6220
    %v6656 = vpack.c.b16 %v6223, %v6222
    %v6657 = vpack.c.b16 %v6225, %v6224
    %v6658 = vpack.c.b16 %v6227, %v6226
    %v6659 = vpack.c.b16 %v6229, %v6228
    %v6660 = vpack.c.b16 %v6231, %v6230
    %v6661 = vpack.c.b16 %v6233, %v6232
    %v6662 = vpack.c.b16 %v6235, %v6234
    %v6663 = vpack.c.b16 %v6237, %v6236
    %v6664 = vpack.c.b16 %v6239, %v6238
    %v6665 = vpack.c.b16 %v6241, %v6240
    %v6666 = vpack.c.b16 %v6243, %v6242
    %v6667 = vpack.c.b16 %v6245, %v6244
    %v6668 = vpack.c.b16 %v6247, %v6246
    %v6669 = vpack.c.b16 %v6249, %v6248
    %v6670 = vpack.c.b16 %v6251, %v6250
    %v6671 = vpack.c.b16 %v6253, %v6252
    %v6672 = vpack.c.b16 %v6255, %v6254
    %v6673 = vpack.c.b16 %v6257, %v6256
    %v6674 = vpack.c.b16 %v6259, %v6258
    %v6675 = vpack.c.b16 %v6261, %v6260
    %v6676 = vpack.c.b16 %v6263, %v6262
    %v6677 = vpack.c.b16 %v6265, %v6264
    %v6678 = vpack.c.b16 %v6267, %v6266
    %v6679 = vpack.c.b16 %v6269, %v6268
    %v6680 = vpack.c.b16 %v6271, %v6270
    %v6681 = vpack.c.b16 %v6273, %v6272
    %v6682 = vpack.c.b16 %v6275, %v6274
    %v6683 = vpack.c.b16 %v6277, %v6276
    %v6684 = vpack.c.b16 %v6279, %v6278
    %v6685 = vpack.c.b16 %v6281, %v6280
    %v6686 = vpack.c.b16 %v6283, %v6282
    %v6687 = vpack.c.b16 %v6285, %v6284
    %v6688 = vpack.c.b16 %v6287, %v6286
    %v6689 = vpack.c.b16 %v6289, %v6288
    %v6690 = vpack.c.b16 %v6291, %v6290
    %v6691 = vpack.c.b16 %v6293, %v6292
    %v6692 = vpack.c.b16 %v6295, %v6294
    %v6693 = vpack.c.b16 %v6297, %v6296
    %v6694 = vpack.c.b16 %v6299, %v6298
    %v6695 = vpack.c.b16 %v6301, %v6300
    %v6696 = vpack.c.b16 %v6303, %v6302
    %v6697 = vpack.c.b16 %v6305, %v6304
    %v6698 = vpack.c.b16 %v6307, %v6306
    %v6699 = vpack.c.b16 %v6309, %v6308
    %v6700 = vpack.c.b16 %v6311, %v6310
    %v6701 = vpack.c.b16 %v6313, %v6312
    %v6702 = vpack.c.b16 %v6315, %v6314
    %v6703 = vpack.c.b16 %v6317, %v6316
    %v6704 = vpack.c.b16 %v6319, %v6318
    %v6705 = vpack.c.b16 %v6321, %v6320
    %v6706 = vpack.c.b16 %v6323, %v6322
    %v6707 = vpack.c.b16 %v6325, %v6324
    %v6708 = vpack.c.b16 %v6327, %v6326
    %v6709 = vpack.c.b16 %v6329, %v6328
    %v6710 = vpack.c.b16 %v6331, %v6330
    %v6711 = vpack.c.b16 %v6333, %v6332
    %v6712 = vpack.c.b16 %v6335, %v6334
    %v6713 = vpack.c.b16 %v6337, %v6336
    %v6714 = vpack.c.b16 %v6339, %v6338
    %v6715 = vpack.c.b16 %v6341, %v6340
    %v6716 = vpack.c.b16 %v6343, %v6342
    %v6717 = vpack.c.b16 %v6345, %v6344
    %v6718 = vpack.c.b16 %v6347, %v6346
    %v6719 = vpack.c.b16 %v6349, %v6348
    %v6720 = vpack.c.b16 %v6351, %v6350
    %v6721 = vpack.c.b16 %v6353, %v6352
    %v6722 = vpack.c.b16 %v6355, %v6354
    %v6723 = vpack.c.b16 %v6357, %v6356
    %v6724 = vpack.c.b16 %v6359, %v6358
    %v6725 = vpack.c.b16 %v6361, %v6360
    %v6726 = vpack.c.b16 %v6363, %v6362
    %v6727 = vpack.c.b16 %v6365, %v6364
    %v6728 = vpack.c.b16 %v6367, %v6366
    %v6729 = vpack.c.b16 %v6369, %v6368
    %v6730 = vpack.c.b16 %v6371, %v6370
    %v6731 = vpack.c.b16 %v6373, %v6372
    %v6732 = vpack.c.b16 %v6375, %v6374
    %v6733 = vpack.c.b16 %v6377, %v6376
    %v6734 = vpack.c.b16 %v6379, %v6378
    %v6735 = vpack.c.b16 %v6381, %v6380
    %v6736 = vpack.c.b16 %v6383, %v6382
    %v6737 = vpack.c.b16 %v6385, %v6384
    %v6738 = vpack.c.b16 %v6387, %v6386
    %v6739 = vpack.c.b16 %v6389, %v6388
    %v6740 = vpack.c.b16 %v6391, %v6390
    %v6741 = vpack.c.b16 %v6393, %v6392
    %v6742 = vpack.c.b16 %v6395, %v6394
    %v6743 = vpack.c.b16 %v6397, %v6396
    %v6744 = vpack.c.b16 %v6399, %v6398
    %v6745 = vpack.c.b16 %v6401, %v6400
    %v6746 = vpack.c.b16 %v6403, %v6402
    %v6747 = vpack.c.b16 %v6405, %v6404
    %v6748 = vpack.c.b16 %v6407, %v6406
    %v6749 = vpack.c.b16 %v6409, %v6408
    %v6750 = vpack.c.b16 %v6411, %v6410
    %v6751 = vpack.c.b16 %v6413, %v6412
    %v6752 = vpack.c.b16 %v6415, %v6414
    %v6753 = vpack.c.b16 %v6417, %v6416
    %v6754 = vpack.c.b16 %v6419, %v6418
    %v6755 = vpack.c.b16 %v6421, %v6420
    %v6756 = vpack.c.b16 %v6423, %v6422
    %v6757 = vpack.c.b16 %v6425, %v6424
    %v6758 = vpack.c.b16 %v6427, %v6426
    %v6759 = vpack.c.b16 %v6429, %v6428
    %v6760 = vpack.c.b16 %v6431, %v6430
    %v6761 = vpack.c.b16 %v6433, %v6432
    %v6762 = vpack.c.b16 %v6435, %v6434
    %v6763 = vpack.c.b16 %v6437, %v6436
    %v6764 = vpack.c.b16 %v6439, %v6438
    %v6765 = vpack.c.b16 %v6441, %v6440
    %v6766 = vpack.c.b16 %v6443, %v6442
    %v6767 = vpack.c.b16 %v6445, %v6444
    %v6768 = vpack.c.b16 %v6447, %v6446
    %v6769 = vpack.c.b16 %v6449, %v6448
    %v6770 = vpack.c.b16 %v6451, %v6450
    %v6771 = vpack.c.b16 %v6453, %v6452
    %v6772 = vpack.c.b16 %v6455, %v6454
    %v6773 = vpack.c.b16 %v6457, %v6456
    %v6774 = vpack.c.b16 %v6459, %v6458
    %v6775 = vpack.c.b16 %v6461, %v6460
    %v6776 = vpack.c.b16 %v6463, %v6462
    %v6777 = vpack.c.b16 %v6465, %v6464
    %v6778 = vpack.c.b16 %v6467, %v6466
    %v6779 = vpack.c.b16 %v6469, %v6468
    %v6780 = vpack.c.b16 %v6471, %v6470
    %v6781 = vpack.c.b16 %v6473, %v6472
    %v6782 = vpack.c.b16 %v6475, %v6474
    %v6783 = vpack.c.b16 %v6477, %v6476
    %v6784 = vpack.c.b16 %v6479, %v6478
    %v6785 = vpack.c.b16 %v6481, %v6480
    %v6786 = vpack.c.b16 %v6483, %v6482
    %v6787 = vpack.c.b16 %v6485, %v6484
    %v6788 = vpack.c.b16 %v6487, %v6486
    %v6789 = vpack.c.b16 %v6489, %v6488
    %v6790 = vpack.c.b16 %v6491, %v6490
    %v6791 = vpack.c.b16 %v6493, %v6492
    %v6792 = vpack.c.b16 %v6495, %v6494
    %v6793 = vpack.c.b16 %v6497, %v6496
    %v6794 = vpack.c.b16 %v6499, %v6498
    %v6795 = vpack.c.b16 %v6501, %v6500
    %v6796 = vpack.c.b16 %v6503, %v6502
    %v6797 = vpack.c.b16 %v6505, %v6504
    %v6798 = vpack.c.b16 %v6507, %v6506
    %v6799 = vpack.c.b16 %v6509, %v6508
    %v6800 = vpack.c.b16 %v6511, %v6510
    %v6801 = vpack.c.b16 %v6513, %v6512
    %v6802 = vpack.c.b16 %v6515, %v6514
    %v6803 = vpack.c.b16 %v6517, %v6516
    %v6804 = vpack.c.b16 %v6519, %v6518
    %v6805 = vpack.c.b16 %v6521, %v6520
    %v6806 = vpack.c.b16 %v6523, %v6522
    %v6807 = vpack.c.b16 %v6525, %v6524
    %v6808 = vpack.c.b16 %v6527, %v6526
    %v6809 = vpack.c.b16 %v6529, %v6528
    %v6810 = vpack.c.b16 %v6531, %v6530
    %v6811 = vpack.c.b16 %v6533, %v6532
    %v6812 = vpack.c.b16 %v6535, %v6534
    %v6813 = vpack.c.b16 %v6537, %v6536
    %v6814 = vpack.c.b16 %v6539, %v6538
    %v6815 = vpack.c.b16 %v6541, %v6540
    %v6816 = vpack.c.b16 %v6543, %v6542
    %v6817 = vpack.c.b16 %v6545, %v6544
    %v6818 = vpack.c.b16 %v6547, %v6546
    %v6819 = vpack.c.b16 %v6549, %v6548
    %v6820 = vpack.c.b16 %v6551, %v6550
    %v6821 = vpack.c.b16 %v6553, %v6552
    %v6822 = vpack.c.b16 %v6555, %v6554
    %v6823 = vpack.c.b16 %v6557, %v6556
    %v6824 = vpack.c.b16 %v6559, %v6558
    %v6825 = vpack.c.b16 %v6561, %v6560
    %v6826 = vpack.c.b16 %v6563, %v6562
    %v6827 = vpack.c.b16 %v6565, %v6564
    %v6828 = vpack.c.b16 %v6567, %v6566
    %v6829 = vpack.c.b16 %v6569, %v6568
    %v6830 = vpack.c.b16 %v6571, %v6570
    %v6831 = vpack.c.b16 %v6573, %v6572
    %v6832 = vpack.c.b16 %v6575, %v6574
    %v6833 = vpack.c.b16 %v6577, %v6576
    %7090 = vmatprep.subr.bf16.mxu0 0
    %7091 = vmatpush1.bf16.msra.mxu0 %v6578
    %7092 = vmatprep.subr.bf16.mxu0 0
    %7093 = vmatpush1.bf16.msra.mxu0 %v6579
    %7094 = vmatprep.subr.bf16.mxu0 0
    %7095 = vmatpush1.bf16.msra.mxu0 %v6580
    %7096 = vmatprep.subr.bf16.mxu0 0
    %7097 = vmatpush1.bf16.msra.mxu0 %v6581
    %7098 = vmatprep.subr.bf16.mxu0 0
    %7099 = vmatpush1.bf16.msra.mxu0 %v6582
    %7100 = vmatprep.subr.bf16.mxu0 0
    %7101 = vmatpush1.bf16.msra.mxu0 %v6583
    %7102 = vmatprep.subr.bf16.mxu0 0
    %7103 = vmatpush1.bf16.msra.mxu0 %v6584
    %7104 = vmatprep.subr.bf16.mxu0 0
    %7105 = vmatpush1.bf16.msra.mxu0 %v6585
    %7106 = vmatprep.subr.bf16.mxu0 0
    %7107 = vmatpush1.bf16.msra.mxu0 %v6586
    %7108 = vmatprep.subr.bf16.mxu0 0
    %7109 = vmatpush1.bf16.msra.mxu0 %v6587
    %7110 = vmatprep.subr.bf16.mxu0 0
    %7111 = vmatpush1.bf16.msra.mxu0 %v6588
    %7112 = vmatprep.subr.bf16.mxu0 0
    %7113 = vmatpush1.bf16.msra.mxu0 %v6589
    %7114 = vmatprep.subr.bf16.mxu0 0
    %7115 = vmatpush1.bf16.msra.mxu0 %v6590
    %7116 = vmatprep.subr.bf16.mxu0 0
    %7117 = vmatpush1.bf16.msra.mxu0 %v6591
    %7118 = vmatprep.subr.bf16.mxu0 0
    %7119 = vmatpush1.bf16.msra.mxu0 %v6592
    %7120 = vmatprep.subr.bf16.mxu0 0
    %7121 = vmatpush1.bf16.msra.mxu0 %v6593
    %7122 = vmatprep.mubr.bf16.mxu0 %v2394
    %7123 = vmatmul.mubr.bf16.gmra.mrb[0].mxu0 %v2306
    %v7124 = vpop.f32.mrb[0].mxu0
    %v7125 = vadd.f32 0.0, %v7124
    %v7126 = vpop.f32.mrb[0].mxu0
    %v7127 = vpop.f32.mrb[0].mxu0
    %v7128 = vadd.f32 0.0, %v7127
    %v7129 = vpop.f32.mrb[0].mxu0
    %7130 = vmatprep.mubr.bf16.mxu0 %v2395
    %7131 = vmatmul.mubr.bf16.gmra.mrb[0].mxu0 %v2307
    %v7132 = vpop.f32.mrb[0].mxu0
    %v7133 = vadd.f32 0.0, %v7132
    %v7134 = vpop.f32.mrb[0].mxu0
    %v7135 = vpop.f32.mrb[0].mxu0
    %v7136 = vadd.f32 0.0, %v7135
    %v7137 = vpop.f32.mrb[0].mxu0
    %7138 = vmatprep.mubr.bf16.mxu0 %v2396
    %7139 = vmatmul.mubr.bf16.gmra.mrb[0].mxu0 %v2308
    %v7140 = vpop.f32.mrb[0].mxu0
    %v7141 = vadd.f32 0.0, %v7140
    %v7142 = vpop.f32.mrb[0].mxu0
    %v7143 = vpop.f32.mrb[0].mxu0
    %v7144 = vadd.f32 0.0, %v7143
    %v7145 = vpop.f32.mrb[0].mxu0
    %7146 = vmatprep.mubr.bf16.mxu0 %v2397
    %7147 = vmatmul.mubr.bf16.gmra.mrb[0].mxu0 %v2309
    %v7148 = vpop.f32.mrb[0].mxu0
    %v7149 = vadd.f32 0.0, %v7148
    %v7150 = vpop.f32.mrb[0].mxu0
    %v7151 = vpop.f32.mrb[0].mxu0
    %v7152 = vadd.f32 0.0, %v7151
    %v7153 = vpop.f32.mrb[0].mxu0
    %7154 = vmatprep.mubr.bf16.mxu0 %v2398
    %7155 = vmatmul.mubr.bf16.gmra.mrb[0].mxu0 %v2310
    %v7156 = vpop.f32.mrb[0].mxu0
    %v7157 = vadd.f32 0.0, %v7156
    %v7158 = vpop.f32.mrb[0].mxu0
    %v7159 = vpop.f32.mrb[0].mxu0
    %v7160 = vadd.f32 0.0, %v7159
    %v7161 = vpop.f32.mrb[0].mxu0
    %7162 = vmatprep.mubr.bf16.mxu0 %v2399
    %7163 = vmatmul.mubr.bf16.gmra.mrb[0].mxu0 %v2311
    %v7164 = vpop.f32.mrb[0].mxu0
    %v7165 = vadd.f32 0.0, %v7164
    %v7166 = vpop.f32.mrb[0].mxu0
    %v7167 = vpop.f32.mrb[0].mxu0
    %v7168 = vadd.f32 0.0, %v7167
    %v7169 = vpop.f32.mrb[0].mxu0
    %7170 = vmatprep.mubr.bf16.mxu0 %v2400
    %7171 = vmatmul.mubr.bf16.gmra.mrb[0].mxu0 %v2312
    %v7172 = vpop.f32.mrb[0].mxu0
    %v7173 = vadd.f32 0.0, %v7172
    %v7174 = vpop.f32.mrb[0].mxu0
    %v7175 = vpop.f32.mrb[0].mxu0
    %v7176 = vadd.f32 0.0, %v7175
    %v7177 = vpop.f32.mrb[0].mxu0
    %7178 = vmatprep.mubr.bf16.mxu0 %v2401
    %7179 = vmatmul.mubr.bf16.gmra.mrb[0].mxu0 %v2313
    %v7180 = vpop.f32.mrb[0].mxu0
    %v7181 = vadd.f32 0.0, %v7180
    %v7182 = vpop.f32.mrb[0].mxu0
    %v7183 = vpop.f32.mrb[0].mxu0
    %v7184 = vadd.f32 0.0, %v7183
    %v7185 = vpop.f32.mrb[0].mxu0
    %7186 = vdwg.mxu0
    %7187 = vmatprep.subr.bf16.mxu0 0
    %7188 = vmatpush1.bf16.msra.mxu0 %v6594
    %7189 = vmatprep.subr.bf16.mxu0 0
    %7190 = vmatpush1.bf16.msra.mxu0 %v6595
    %7191 = vmatprep.subr.bf16.mxu0 0
    %7192 = vmatpush1.bf16.msra.mxu0 %v6596
    %7193 = vmatprep.subr.bf16.mxu0 0
    %7194 = vmatpush1.bf16.msra.mxu0 %v6597
    %7195 = vmatprep.subr.bf16.mxu0 0
    %7196 = vmatpush1.bf16.msra.mxu0 %v6598
    %7197 = vmatprep.subr.bf16.mxu0 0
    %7198 = vmatpush1.bf16.msra.mxu0 %v6599
    %7199 = vmatprep.subr.bf16.mxu0 0
    %7200 = vmatpush1.bf16.msra.mxu0 %v6600
    %7201 = vmatprep.subr.bf16.mxu0 0
    %7202 = vmatpush1.bf16.msra.mxu0 %v6601
    %7203 = vmatprep.subr.bf16.mxu0 0
    %7204 = vmatpush1.bf16.msra.mxu0 %v6602
    %7205 = vmatprep.subr.bf16.mxu0 0
    %7206 = vmatpush1.bf16.msra.mxu0 %v6603
    %7207 = vmatprep.subr.bf16.mxu0 0
    %7208 = vmatpush1.bf16.msra.mxu0 %v6604
    %7209 = vmatprep.subr.bf16.mxu0 0
    %7210 = vmatpush1.bf16.msra.mxu0 %v6605
    %7211 = vmatprep.subr.bf16.mxu0 0
    %7212 = vmatpush1.bf16.msra.mxu0 %v6606
    %7213 = vmatprep.subr.bf16.mxu0 0
    %7214 = vmatpush1.bf16.msra.mxu0 %v6607
    %7215 = vmatprep.subr.bf16.mxu0 0
    %7216 = vmatpush1.bf16.msra.mxu0 %v6608
    %7217 = vmatprep.subr.bf16.mxu0 0
    %7218 = vmatpush1.bf16.msra.mxu0 %v6609
    %7219 = vmatprep.mubr.bf16.mxu0 %v2570
    %7220 = vmatmul.mubr.bf16.gmra.mrb[0].mxu0 %v2482
    %v7221 = vpop.f32.mrb[0].mxu0
    %v7222 = vadd.f32 %v7125, %v7221
    %v7223 = vpop.f32.mrb[0].mxu0
    %v7224 = vpop.f32.mrb[0].mxu0
    %v7225 = vadd.f32 %v7128, %v7224
    %v7226 = vpop.f32.mrb[0].mxu0
    %7227 = vmatprep.mubr.bf16.mxu0 %v2571
    %7228 = vmatmul.mubr.bf16.gmra.mrb[0].mxu0 %v2483
    %v7229 = vpop.f32.mrb[0].mxu0
    %v7230 = vadd.f32 %v7133, %v7229
    %v7231 = vpop.f32.mrb[0].mxu0
    %v7232 = vpop.f32.mrb[0].mxu0
    %v7233 = vadd.f32 %v7136, %v7232
    %v7234 = vpop.f32.mrb[0].mxu0
    %7235 = vmatprep.mubr.bf16.mxu0 %v2572
    %7236 = vmatmul.mubr.bf16.gmra.mrb[0].mxu0 %v2484
    %v7237 = vpop.f32.mrb[0].mxu0
    %v7238 = vadd.f32 %v7141, %v7237
    %v7239 = vpop.f32.mrb[0].mxu0
    %v7240 = vpop.f32.mrb[0].mxu0
    %v7241 = vadd.f32 %v7144, %v7240
    %v7242 = vpop.f32.mrb[0].mxu0
    %7243 = vmatprep.mubr.bf16.mxu0 %v2573
    %7244 = vmatmul.mubr.bf16.gmra.mrb[0].mxu0 %v2485
    %v7245 = vpop.f32.mrb[0].mxu0
    %v7246 = vadd.f32 %v7149, %v7245
    %v7247 = vpop.f32.mrb[0].mxu0
    %v7248 = vpop.f32.mrb[0].mxu0
    %v7249 = vadd.f32 %v7152, %v7248
    %v7250 = vpop.f32.mrb[0].mxu0
    %7251 = vmatprep.mubr.bf16.mxu0 %v2574
    %7252 = vmatmul.mubr.bf16.gmra.mrb[0].mxu0 %v2486
    %v7253 = vpop.f32.mrb[0].mxu0
    %v7254 = vadd.f32 %v7157, %v7253
    %v7255 = vpop.f32.mrb[0].mxu0
    %v7256 = vpop.f32.mrb[0].mxu0
    %v7257 = vadd.f32 %v7160, %v7256
    %v7258 = vpop.f32.mrb[0].mxu0
    %7259 = vmatprep.mubr.bf16.mxu0 %v2575
    %7260 = vmatmul.mubr.bf16.gmra.mrb[0].mxu0 %v2487
    %v7261 = vpop.f32.mrb[0].mxu0
    %v7262 = vadd.f32 %v7165, %v7261
    %v7263 = vpop.f32.mrb[0].mxu0
    %v7264 = vpop.f32.mrb[0].mxu0
    %v7265 = vadd.f32 %v7168, %v7264
    %v7266 = vpop.f32.mrb[0].mxu0
    %7267 = vmatprep.mubr.bf16.mxu0 %v2576
    %7268 = vmatmul.mubr.bf16.gmra.mrb[0].mxu0 %v2488
    %v7269 = vpop.f32.mrb[0].mxu0
    %v7270 = vadd.f32 %v7173, %v7269
    %v7271 = vpop.f32.mrb[0].mxu0
    %v7272 = vpop.f32.mrb[0].mxu0
    %v7273 = vadd.f32 %v7176, %v7272
    %v7274 = vpop.f32.mrb[0].mxu0
    %7275 = vmatprep.mubr.bf16.mxu0 %v2577
    %7276 = vmatmul.mubr.bf16.gmra.mrb[0].mxu0 %v2489
    %v7277 = vpop.f32.mrb[0].mxu0
    %v7278 = vadd.f32 %v7181, %v7277
    %v7279 = vpop.f32.mrb[0].mxu0
    %v7280 = vpop.f32.mrb[0].mxu0
    %v7281 = vadd.f32 %v7184, %v7280
    %v7282 = vpop.f32.mrb[0].mxu0
    %7283 = vdwg.mxu0
    %7284 = vmatprep.subr.bf16.mxu0 0
    %7285 = vmatpush1.bf16.msra.mxu0 %v6610
    %7286 = vmatprep.subr.bf16.mxu0 0
    %7287 = vmatpush1.bf16.msra.mxu0 %v6611
    %7288 = vmatprep.subr.bf16.mxu0 0
    %7289 = vmatpush1.bf16.msra.mxu0 %v6612
    %7290 = vmatprep.subr.bf16.mxu0 0
    %7291 = vmatpush1.bf16.msra.mxu0 %v6613
    %7292 = vmatprep.subr.bf16.mxu0 0
    %7293 = vmatpush1.bf16.msra.mxu0 %v6614
    %7294 = vmatprep.subr.bf16.mxu0 0
    %7295 = vmatpush1.bf16.msra.mxu0 %v6615
    %7296 = vmatprep.subr.bf16.mxu0 0
    %7297 = vmatpush1.bf16.msra.mxu0 %v6616
    %7298 = vmatprep.subr.bf16.mxu0 0
    %7299 = vmatpush1.bf16.msra.mxu0 %v6617
    %7300 = vmatprep.subr.bf16.mxu0 0
    %7301 = vmatpush1.bf16.msra.mxu0 %v6618
    %7302 = vmatprep.subr.bf16.mxu0 0
    %7303 = vmatpush1.bf16.msra.mxu0 %v6619
    %7304 = vmatprep.subr.bf16.mxu0 0
    %7305 = vmatpush1.bf16.msra.mxu0 %v6620
    %7306 = vmatprep.subr.bf16.mxu0 0
    %7307 = vmatpush1.bf16.msra.mxu0 %v6621
    %7308 = vmatprep.subr.bf16.mxu0 0
    %7309 = vmatpush1.bf16.msra.mxu0 %v6622
    %7310 = vmatprep.subr.bf16.mxu0 0
    %7311 = vmatpush1.bf16.msra.mxu0 %v6623
    %7312 = vmatprep.subr.bf16.mxu0 0
    %7313 = vmatpush1.bf16.msra.mxu0 %v6624
    %7314 = vmatprep.subr.bf16.mxu0 0
    %7315 = vmatpush1.bf16.msra.mxu0 %v6625
    %7316 = vmatprep.mubr.bf16.mxu0 %v2746
    %7317 = vmatmul.mubr.bf16.gmra.mrb[0].mxu0 %v2658
    %v7318 = vpop.f32.mrb[0].mxu0
    %v7319 = vadd.f32 %v7222, %v7318
    %v7320 = vpop.f32.mrb[0].mxu0
    %v7321 = vpop.f32.mrb[0].mxu0
    %v7322 = vadd.f32 %v7225, %v7321
    %v7323 = vpop.f32.mrb[0].mxu0
    %7324 = vmatprep.mubr.bf16.mxu0 %v2747
    %7325 = vmatmul.mubr.bf16.gmra.mrb[0].mxu0 %v2659
    %v7326 = vpop.f32.mrb[0].mxu0
    %v7327 = vadd.f32 %v7230, %v7326
    %v7328 = vpop.f32.mrb[0].mxu0
    %v7329 = vpop.f32.mrb[0].mxu0
    %v7330 = vadd.f32 %v7233, %v7329
    %v7331 = vpop.f32.mrb[0].mxu0
    %7332 = vmatprep.mubr.bf16.mxu0 %v2748
    %7333 = vmatmul.mubr.bf16.gmra.mrb[0].mxu0 %v2660
    %v7334 = vpop.f32.mrb[0].mxu0
    %v7335 = vadd.f32 %v7238, %v7334
    %v7336 = vpop.f32.mrb[0].mxu0
    %v7337 = vpop.f32.mrb[0].mxu0
    %v7338 = vadd.f32 %v7241, %v7337
    %v7339 = vpop.f32.mrb[0].mxu0
    %7340 = vmatprep.mubr.bf16.mxu0 %v2749
    %7341 = vmatmul.mubr.bf16.gmra.mrb[0].mxu0 %v2661
    %v7342 = vpop.f32.mrb[0].mxu0
    %v7343 = vadd.f32 %v7246, %v7342
    %v7344 = vpop.f32.mrb[0].mxu0
    %v7345 = vpop.f32.mrb[0].mxu0
    %v7346 = vadd.f32 %v7249, %v7345
    %v7347 = vpop.f32.mrb[0].mxu0
    %7348 = vmatprep.mubr.bf16.mxu0 %v2750
    %7349 = vmatmul.mubr.bf16.gmra.mrb[0].mxu0 %v2662
    %v7350 = vpop.f32.mrb[0].mxu0
    %v7351 = vadd.f32 %v7254, %v7350
    %v7352 = vpop.f32.mrb[0].mxu0
    %v7353 = vpop.f32.mrb[0].mxu0
    %v7354 = vadd.f32 %v7257, %v7353
    %v7355 = vpop.f32.mrb[0].mxu0
    %7356 = vmatprep.mubr.bf16.mxu0 %v2751
    %7357 = vmatmul.mubr.bf16.gmra.mrb[0].mxu0 %v2663
    %v7358 = vpop.f32.mrb[0].mxu0
    %v7359 = vadd.f32 %v7262, %v7358
    %v7360 = vpop.f32.mrb[0].mxu0
    %v7361 = vpop.f32.mrb[0].mxu0
    %v7362 = vadd.f32 %v7265, %v7361
    %v7363 = vpop.f32.mrb[0].mxu0
    %7364 = vmatprep.mubr.bf16.mxu0 %v2752
    %7365 = vmatmul.mubr.bf16.gmra.mrb[0].mxu0 %v2664
    %v7366 = vpop.f32.mrb[0].mxu0
    %v7367 = vadd.f32 %v7270, %v7366
    %v7368 = vpop.f32.mrb[0].mxu0
    %v7369 = vpop.f32.mrb[0].mxu0
    %v7370 = vadd.f32 %v7273, %v7369
    %v7371 = vpop.f32.mrb[0].mxu0
    %7372 = vmatprep.mubr.bf16.mxu0 %v2753
    %7373 = vmatmul.mubr.bf16.gmra.mrb[0].mxu0 %v2665
    %v7374 = vpop.f32.mrb[0].mxu0
    %v7375 = vadd.f32 %v7278, %v7374
    %v7376 = vpop.f32.mrb[0].mxu0
    %v7377 = vpop.f32.mrb[0].mxu0
    %v7378 = vadd.f32 %v7281, %v7377
    %v7379 = vpop.f32.mrb[0].mxu0
    %7380 = vdwg.mxu0
    %7381 = vmatprep.subr.bf16.mxu0 0
    %7382 = vmatpush1.bf16.msra.mxu0 %v6626
    %7383 = vmatprep.subr.bf16.mxu0 0
    %7384 = vmatpush1.bf16.msra.mxu0 %v6627
    %7385 = vmatprep.subr.bf16.mxu0 0
    %7386 = vmatpush1.bf16.msra.mxu0 %v6628
    %7387 = vmatprep.subr.bf16.mxu0 0
    %7388 = vmatpush1.bf16.msra.mxu0 %v6629
    %7389 = vmatprep.subr.bf16.mxu0 0
    %7390 = vmatpush1.bf16.msra.mxu0 %v6630
    %7391 = vmatprep.subr.bf16.mxu0 0
    %7392 = vmatpush1.bf16.msra.mxu0 %v6631
    %7393 = vmatprep.subr.bf16.mxu0 0
    %7394 = vmatpush1.bf16.msra.mxu0 %v6632
    %7395 = vmatprep.subr.bf16.mxu0 0
    %7396 = vmatpush1.bf16.msra.mxu0 %v6633
    %7397 = vmatprep.subr.bf16.mxu0 0
    %7398 = vmatpush1.bf16.msra.mxu0 %v6634
    %7399 = vmatprep.subr.bf16.mxu0 0
    %7400 = vmatpush1.bf16.msra.mxu0 %v6635
    %7401 = vmatprep.subr.bf16.mxu0 0
    %7402 = vmatpush1.bf16.msra.mxu0 %v6636
    %7403 = vmatprep.subr.bf16.mxu0 0
    %7404 = vmatpush1.bf16.msra.mxu0 %v6637
    %7405 = vmatprep.subr.bf16.mxu0 0
    %7406 = vmatpush1.bf16.msra.mxu0 %v6638
    %7407 = vmatprep.subr.bf16.mxu0 0
    %7408 = vmatpush1.bf16.msra.mxu0 %v6639
    %7409 = vmatprep.subr.bf16.mxu0 0
    %7410 = vmatpush1.bf16.msra.mxu0 %v6640
    %7411 = vmatprep.subr.bf16.mxu0 0
    %7412 = vmatpush1.bf16.msra.mxu0 %v6641
    %7413 = vmatprep.mubr.bf16.mxu0 %v2922
    %7414 = vmatmul.mubr.bf16.gmra.mrb[0].mxu0 %v2834
    %v7415 = vpop.f32.mrb[0].mxu0
    %v7416 = vadd.f32 %v7319, %v7415
    %v7417 = vpop.f32.mrb[0].mxu0
    %v7418 = vpop.f32.mrb[0].mxu0
    %v7419 = vadd.f32 %v7322, %v7418
    %v7420 = vpop.f32.mrb[0].mxu0
    %7421 = vmatprep.mubr.bf16.mxu0 %v2923
    %7422 = vmatmul.mubr.bf16.gmra.mrb[0].mxu0 %v2835
    %v7423 = vpop.f32.mrb[0].mxu0
    %v7424 = vadd.f32 %v7327, %v7423
    %v7425 = vpop.f32.mrb[0].mxu0
    %v7426 = vpop.f32.mrb[0].mxu0
    %v7427 = vadd.f32 %v7330, %v7426
    %v7428 = vpop.f32.mrb[0].mxu0
    %7429 = vmatprep.mubr.bf16.mxu0 %v2924
    %7430 = vmatmul.mubr.bf16.gmra.mrb[0].mxu0 %v2836
    %v7431 = vpop.f32.mrb[0].mxu0
    %v7432 = vadd.f32 %v7335, %v7431
    %v7433 = vpop.f32.mrb[0].mxu0
    %v7434 = vpop.f32.mrb[0].mxu0
    %v7435 = vadd.f32 %v7338, %v7434
    %v7436 = vpop.f32.mrb[0].mxu0
    %7437 = vmatprep.mubr.bf16.mxu0 %v2925
    %7438 = vmatmul.mubr.bf16.gmra.mrb[0].mxu0 %v2837
    %v7439 = vpop.f32.mrb[0].mxu0
    %v7440 = vadd.f32 %v7343, %v7439
    %v7441 = vpop.f32.mrb[0].mxu0
    %v7442 = vpop.f32.mrb[0].mxu0
    %v7443 = vadd.f32 %v7346, %v7442
    %v7444 = vpop.f32.mrb[0].mxu0
    %7445 = vmatprep.mubr.bf16.mxu0 %v2926
    %7446 = vmatmul.mubr.bf16.gmra.mrb[0].mxu0 %v2838
    %v7447 = vpop.f32.mrb[0].mxu0
    %v7448 = vadd.f32 %v7351, %v7447
    %v7449 = vpop.f32.mrb[0].mxu0
    %v7450 = vpop.f32.mrb[0].mxu0
    %v7451 = vadd.f32 %v7354, %v7450
    %v7452 = vpop.f32.mrb[0].mxu0
    %7453 = vmatprep.mubr.bf16.mxu0 %v2927
    %7454 = vmatmul.mubr.bf16.gmra.mrb[0].mxu0 %v2839
    %v7455 = vpop.f32.mrb[0].mxu0
    %v7456 = vadd.f32 %v7359, %v7455
    %v7457 = vpop.f32.mrb[0].mxu0
    %v7458 = vpop.f32.mrb[0].mxu0
    %v7459 = vadd.f32 %v7362, %v7458
    %v7460 = vpop.f32.mrb[0].mxu0
    %7461 = vmatprep.mubr.bf16.mxu0 %v2928
    %7462 = vmatmul.mubr.bf16.gmra.mrb[0].mxu0 %v2840
    %v7463 = vpop.f32.mrb[0].mxu0
    %v7464 = vadd.f32 %v7367, %v7463
    %v7465 = vpop.f32.mrb[0].mxu0
    %v7466 = vpop.f32.mrb[0].mxu0
    %v7467 = vadd.f32 %v7370, %v7466
    %v7468 = vpop.f32.mrb[0].mxu0
    %7469 = vmatprep.mubr.bf16.mxu0 %v2929
    %7470 = vmatmul.mubr.bf16.gmra.mrb[0].mxu0 %v2841
    %v7471 = vpop.f32.mrb[0].mxu0
    %v7472 = vadd.f32 %v7375, %v7471
    %v7473 = vpop.f32.mrb[0].mxu0
    %v7474 = vpop.f32.mrb[0].mxu0
    %v7475 = vadd.f32 %v7378, %v7474
    %v7476 = vpop.f32.mrb[0].mxu0
    %7477 = vdwg.mxu0
    %7478 = vmatprep.subr.bf16.mxu0 0
    %7479 = vmatpush1.bf16.msra.mxu0 %v6642
    %7480 = vmatprep.subr.bf16.mxu0 0
    %7481 = vmatpush1.bf16.msra.mxu0 %v6643
    %7482 = vmatprep.subr.bf16.mxu0 0
    %7483 = vmatpush1.bf16.msra.mxu0 %v6644
    %7484 = vmatprep.subr.bf16.mxu0 0
    %7485 = vmatpush1.bf16.msra.mxu0 %v6645
    %7486 = vmatprep.subr.bf16.mxu0 0
    %7487 = vmatpush1.bf16.msra.mxu0 %v6646
    %7488 = vmatprep.subr.bf16.mxu0 0
    %7489 = vmatpush1.bf16.msra.mxu0 %v6647
    %7490 = vmatprep.subr.bf16.mxu0 0
    %7491 = vmatpush1.bf16.msra.mxu0 %v6648
    %7492 = vmatprep.subr.bf16.mxu0 0
    %7493 = vmatpush1.bf16.msra.mxu0 %v6649
    %7494 = vmatprep.subr.bf16.mxu0 0
    %7495 = vmatpush1.bf16.msra.mxu0 %v6650
    %7496 = vmatprep.subr.bf16.mxu0 0
    %7497 = vmatpush1.bf16.msra.mxu0 %v6651
    %7498 = vmatprep.subr.bf16.mxu0 0
    %7499 = vmatpush1.bf16.msra.mxu0 %v6652
    %7500 = vmatprep.subr.bf16.mxu0 0
    %7501 = vmatpush1.bf16.msra.mxu0 %v6653
    %7502 = vmatprep.subr.bf16.mxu0 0
    %7503 = vmatpush1.bf16.msra.mxu0 %v6654
    %7504 = vmatprep.subr.bf16.mxu0 0
    %7505 = vmatpush1.bf16.msra.mxu0 %v6655
    %7506 = vmatprep.subr.bf16.mxu0 0
    %7507 = vmatpush1.bf16.msra.mxu0 %v6656
    %7508 = vmatprep.subr.bf16.mxu0 0
    %7509 = vmatpush1.bf16.msra.mxu0 %v6657
    %7510 = vmatprep.mubr.bf16.mxu0 %v3098
    %7511 = vmatmul.mubr.bf16.gmra.mrb[0].mxu0 %v3010
    %v7512 = vpop.f32.mrb[0].mxu0
    %v7513 = vadd.f32 %v7416, %v7512
    %v7514 = vpop.f32.mrb[0].mxu0
    %v7515 = vpop.f32.mrb[0].mxu0
    %v7516 = vadd.f32 %v7419, %v7515
    %v7517 = vpop.f32.mrb[0].mxu0
    %7518 = vmatprep.mubr.bf16.mxu0 %v3099
    %7519 = vmatmul.mubr.bf16.gmra.mrb[0].mxu0 %v3011
    %v7520 = vpop.f32.mrb[0].mxu0
    %v7521 = vadd.f32 %v7424, %v7520
    %v7522 = vpop.f32.mrb[0].mxu0
    %v7523 = vpop.f32.mrb[0].mxu0
    %v7524 = vadd.f32 %v7427, %v7523
    %v7525 = vpop.f32.mrb[0].mxu0
    %7526 = vmatprep.mubr.bf16.mxu0 %v3100
    %7527 = vmatmul.mubr.bf16.gmra.mrb[0].mxu0 %v3012
    %v7528 = vpop.f32.mrb[0].mxu0
    %v7529 = vadd.f32 %v7432, %v7528
    %v7530 = vpop.f32.mrb[0].mxu0
    %v7531 = vpop.f32.mrb[0].mxu0
    %v7532 = vadd.f32 %v7435, %v7531
    %v7533 = vpop.f32.mrb[0].mxu0
    %7534 = vmatprep.mubr.bf16.mxu0 %v3101
    %7535 = vmatmul.mubr.bf16.gmra.mrb[0].mxu0 %v3013
    %v7536 = vpop.f32.mrb[0].mxu0
    %v7537 = vadd.f32 %v7440, %v7536
    %v7538 = vpop.f32.mrb[0].mxu0
    %v7539 = vpop.f32.mrb[0].mxu0
    %v7540 = vadd.f32 %v7443, %v7539
    %v7541 = vpop.f32.mrb[0].mxu0
    %7542 = vmatprep.mubr.bf16.mxu0 %v3102
    %7543 = vmatmul.mubr.bf16.gmra.mrb[0].mxu0 %v3014
    %v7544 = vpop.f32.mrb[0].mxu0
    %v7545 = vadd.f32 %v7448, %v7544
    %v7546 = vpop.f32.mrb[0].mxu0
    %v7547 = vpop.f32.mrb[0].mxu0
    %v7548 = vadd.f32 %v7451, %v7547
    %v7549 = vpop.f32.mrb[0].mxu0
    %7550 = vmatprep.mubr.bf16.mxu0 %v3103
    %7551 = vmatmul.mubr.bf16.gmra.mrb[0].mxu0 %v3015
    %v7552 = vpop.f32.mrb[0].mxu0
    %v7553 = vadd.f32 %v7456, %v7552
    %v7554 = vpop.f32.mrb[0].mxu0
    %v7555 = vpop.f32.mrb[0].mxu0
    %v7556 = vadd.f32 %v7459, %v7555
    %v7557 = vpop.f32.mrb[0].mxu0
    %7558 = vmatprep.mubr.bf16.mxu0 %v3104
    %7559 = vmatmul.mubr.bf16.gmra.mrb[0].mxu0 %v3016
    %v7560 = vpop.f32.mrb[0].mxu0
    %v7561 = vadd.f32 %v7464, %v7560
    %v7562 = vpop.f32.mrb[0].mxu0
    %v7563 = vpop.f32.mrb[0].mxu0
    %v7564 = vadd.f32 %v7467, %v7563
    %v7565 = vpop.f32.mrb[0].mxu0
    %7566 = vmatprep.mubr.bf16.mxu0 %v3105
    %7567 = vmatmul.mubr.bf16.gmra.mrb[0].mxu0 %v3017
    %v7568 = vpop.f32.mrb[0].mxu0
    %v7569 = vadd.f32 %v7472, %v7568
    %v7570 = vpop.f32.mrb[0].mxu0
    %v7571 = vpop.f32.mrb[0].mxu0
    %v7572 = vadd.f32 %v7475, %v7571
    %v7573 = vpop.f32.mrb[0].mxu0
    %7574 = vdwg.mxu0
    %7575 = vmatprep.subr.bf16.mxu0 0
    %7576 = vmatpush1.bf16.msra.mxu0 %v6658
    %7577 = vmatprep.subr.bf16.mxu0 0
    %7578 = vmatpush1.bf16.msra.mxu0 %v6659
    %7579 = vmatprep.subr.bf16.mxu0 0
    %7580 = vmatpush1.bf16.msra.mxu0 %v6660
    %7581 = vmatprep.subr.bf16.mxu0 0
    %7582 = vmatpush1.bf16.msra.mxu0 %v6661
    %7583 = vmatprep.subr.bf16.mxu0 0
    %7584 = vmatpush1.bf16.msra.mxu0 %v6662
    %7585 = vmatprep.subr.bf16.mxu0 0
    %7586 = vmatpush1.bf16.msra.mxu0 %v6663
    %7587 = vmatprep.subr.bf16.mxu0 0
    %7588 = vmatpush1.bf16.msra.mxu0 %v6664
    %7589 = vmatprep.subr.bf16.mxu0 0
    %7590 = vmatpush1.bf16.msra.mxu0 %v6665
    %7591 = vmatprep.subr.bf16.mxu0 0
    %7592 = vmatpush1.bf16.msra.mxu0 %v6666
    %7593 = vmatprep.subr.bf16.mxu0 0
    %7594 = vmatpush1.bf16.msra.mxu0 %v6667
    %7595 = vmatprep.subr.bf16.mxu0 0
    %7596 = vmatpush1.bf16.msra.mxu0 %v6668
    %7597 = vmatprep.subr.bf16.mxu0 0
    %7598 = vmatpush1.bf16.msra.mxu0 %v6669
    %7599 = vmatprep.subr.bf16.mxu0 0
    %7600 = vmatpush1.bf16.msra.mxu0 %v6670
    %7601 = vmatprep.subr.bf16.mxu0 0
    %7602 = vmatpush1.bf16.msra.mxu0 %v6671
    %7603 = vmatprep.subr.bf16.mxu0 0
    %7604 = vmatpush1.bf16.msra.mxu0 %v6672
    %7605 = vmatprep.subr.bf16.mxu0 0
    %7606 = vmatpush1.bf16.msra.mxu0 %v6673
    %7607 = vmatprep.mubr.bf16.mxu0 %v3274
    %7608 = vmatmul.mubr.bf16.gmra.mrb[0].mxu0 %v3186
    %v7609 = vpop.f32.mrb[0].mxu0
    %v7610 = vadd.f32 %v7513, %v7609
    %v7611 = vpop.f32.mrb[0].mxu0
    %v7612 = vpop.f32.mrb[0].mxu0
    %v7613 = vadd.f32 %v7516, %v7612
    %v7614 = vpop.f32.mrb[0].mxu0
    %7615 = vmatprep.mubr.bf16.mxu0 %v3275
    %7616 = vmatmul.mubr.bf16.gmra.mrb[0].mxu0 %v3187
    %v7617 = vpop.f32.mrb[0].mxu0
    %v7618 = vadd.f32 %v7521, %v7617
    %v7619 = vpop.f32.mrb[0].mxu0
    %v7620 = vpop.f32.mrb[0].mxu0
    %v7621 = vadd.f32 %v7524, %v7620
    %v7622 = vpop.f32.mrb[0].mxu0
    %7623 = vmatprep.mubr.bf16.mxu0 %v3276
    %7624 = vmatmul.mubr.bf16.gmra.mrb[0].mxu0 %v3188
    %v7625 = vpop.f32.mrb[0].mxu0
    %v7626 = vadd.f32 %v7529, %v7625
    %v7627 = vpop.f32.mrb[0].mxu0
    %v7628 = vpop.f32.mrb[0].mxu0
    %v7629 = vadd.f32 %v7532, %v7628
    %v7630 = vpop.f32.mrb[0].mxu0
    %7631 = vmatprep.mubr.bf16.mxu0 %v3277
    %7632 = vmatmul.mubr.bf16.gmra.mrb[0].mxu0 %v3189
    %v7633 = vpop.f32.mrb[0].mxu0
    %v7634 = vadd.f32 %v7537, %v7633
    %v7635 = vpop.f32.mrb[0].mxu0
    %v7636 = vpop.f32.mrb[0].mxu0
    %v7637 = vadd.f32 %v7540, %v7636
    %v7638 = vpop.f32.mrb[0].mxu0
    %7639 = vmatprep.mubr.bf16.mxu0 %v3278
    %7640 = vmatmul.mubr.bf16.gmra.mrb[0].mxu0 %v3190
    %v7641 = vpop.f32.mrb[0].mxu0
    %v7642 = vadd.f32 %v7545, %v7641
    %v7643 = vpop.f32.mrb[0].mxu0
    %v7644 = vpop.f32.mrb[0].mxu0
    %v7645 = vadd.f32 %v7548, %v7644
    %v7646 = vpop.f32.mrb[0].mxu0
    %7647 = vmatprep.mubr.bf16.mxu0 %v3279
    %7648 = vmatmul.mubr.bf16.gmra.mrb[0].mxu0 %v3191
    %v7649 = vpop.f32.mrb[0].mxu0
    %v7650 = vadd.f32 %v7553, %v7649
    %v7651 = vpop.f32.mrb[0].mxu0
    %v7652 = vpop.f32.mrb[0].mxu0
    %v7653 = vadd.f32 %v7556, %v7652
    %v7654 = vpop.f32.mrb[0].mxu0
    %7655 = vmatprep.mubr.bf16.mxu0 %v3280
    %7656 = vmatmul.mubr.bf16.gmra.mrb[0].mxu0 %v3192
    %v7657 = vpop.f32.mrb[0].mxu0
    %v7658 = vadd.f32 %v7561, %v7657
    %v7659 = vpop.f32.mrb[0].mxu0
    %v7660 = vpop.f32.mrb[0].mxu0
    %v7661 = vadd.f32 %v7564, %v7660
    %v7662 = vpop.f32.mrb[0].mxu0
    %7663 = vmatprep.mubr.bf16.mxu0 %v3281
    %7664 = vmatmul.mubr.bf16.gmra.mrb[0].mxu0 %v3193
    %v7665 = vpop.f32.mrb[0].mxu0
    %v7666 = vadd.f32 %v7569, %v7665
    %v7667 = vpop.f32.mrb[0].mxu0
    %v7668 = vpop.f32.mrb[0].mxu0
    %v7669 = vadd.f32 %v7572, %v7668
    %v7670 = vpop.f32.mrb[0].mxu0
    %7671 = vdwg.mxu0
    %7672 = vmatprep.subr.bf16.mxu0 0
    %7673 = vmatpush1.bf16.msra.mxu0 %v6674
    %7674 = vmatprep.subr.bf16.mxu0 0
    %7675 = vmatpush1.bf16.msra.mxu0 %v6675
    %7676 = vmatprep.subr.bf16.mxu0 0
    %7677 = vmatpush1.bf16.msra.mxu0 %v6676
    %7678 = vmatprep.subr.bf16.mxu0 0
    %7679 = vmatpush1.bf16.msra.mxu0 %v6677
    %7680 = vmatprep.subr.bf16.mxu0 0
    %7681 = vmatpush1.bf16.msra.mxu0 %v6678
    %7682 = vmatprep.subr.bf16.mxu0 0
    %7683 = vmatpush1.bf16.msra.mxu0 %v6679
    %7684 = vmatprep.subr.bf16.mxu0 0
    %7685 = vmatpush1.bf16.msra.mxu0 %v6680
    %7686 = vmatprep.subr.bf16.mxu0 0
    %7687 = vmatpush1.bf16.msra.mxu0 %v6681
    %7688 = vmatprep.subr.bf16.mxu0 0
    %7689 = vmatpush1.bf16.msra.mxu0 %v6682
    %7690 = vmatprep.subr.bf16.mxu0 0
    %7691 = vmatpush1.bf16.msra.mxu0 %v6683
    %7692 = vmatprep.subr.bf16.mxu0 0
    %7693 = vmatpush1.bf16.msra.mxu0 %v6684
    %7694 = vmatprep.subr.bf16.mxu0 0
    %7695 = vmatpush1.bf16.msra.mxu0 %v6685
    %7696 = vmatprep.subr.bf16.mxu0 0
    %7697 = vmatpush1.bf16.msra.mxu0 %v6686
    %7698 = vmatprep.subr.bf16.mxu0 0
    %7699 = vmatpush1.bf16.msra.mxu0 %v6687
    %7700 = vmatprep.subr.bf16.mxu0 0
    %7701 = vmatpush1.bf16.msra.mxu0 %v6688
    %7702 = vmatprep.subr.bf16.mxu0 0
    %7703 = vmatpush1.bf16.msra.mxu0 %v6689
    %7704 = vmatprep.mubr.bf16.mxu0 %v3450
    %7705 = vmatmul.mubr.bf16.gmra.mrb[0].mxu0 %v3362
    %v7706 = vpop.f32.mrb[0].mxu0
    %v7707 = vadd.f32 %v7610, %v7706
    %v7708 = vpop.f32.mrb[0].mxu0
    %v7709 = vpop.f32.mrb[0].mxu0
    %v7710 = vadd.f32 %v7613, %v7709
    %v7711 = vpop.f32.mrb[0].mxu0
    %7712 = vmatprep.mubr.bf16.mxu0 %v3451
    %7713 = vmatmul.mubr.bf16.gmra.mrb[0].mxu0 %v3363
    %v7714 = vpop.f32.mrb[0].mxu0
    %v7715 = vadd.f32 %v7618, %v7714
    %v7716 = vpop.f32.mrb[0].mxu0
    %v7717 = vpop.f32.mrb[0].mxu0
    %v7718 = vadd.f32 %v7621, %v7717
    %v7719 = vpop.f32.mrb[0].mxu0
    %7720 = vmatprep.mubr.bf16.mxu0 %v3452
    %7721 = vmatmul.mubr.bf16.gmra.mrb[0].mxu0 %v3364
    %v7722 = vpop.f32.mrb[0].mxu0
    %v7723 = vadd.f32 %v7626, %v7722
    %v7724 = vpop.f32.mrb[0].mxu0
    %v7725 = vpop.f32.mrb[0].mxu0
    %v7726 = vadd.f32 %v7629, %v7725
    %v7727 = vpop.f32.mrb[0].mxu0
    %7728 = vmatprep.mubr.bf16.mxu0 %v3453
    %7729 = vmatmul.mubr.bf16.gmra.mrb[0].mxu0 %v3365
    %v7730 = vpop.f32.mrb[0].mxu0
    %v7731 = vadd.f32 %v7634, %v7730
    %v7732 = vpop.f32.mrb[0].mxu0
    %v7733 = vpop.f32.mrb[0].mxu0
    %v7734 = vadd.f32 %v7637, %v7733
    %v7735 = vpop.f32.mrb[0].mxu0
    %7736 = vmatprep.mubr.bf16.mxu0 %v3454
    %7737 = vmatmul.mubr.bf16.gmra.mrb[0].mxu0 %v3366
    %v7738 = vpop.f32.mrb[0].mxu0
    %v7739 = vadd.f32 %v7642, %v7738
    %v7740 = vpop.f32.mrb[0].mxu0
    %v7741 = vpop.f32.mrb[0].mxu0
    %v7742 = vadd.f32 %v7645, %v7741
    %v7743 = vpop.f32.mrb[0].mxu0
    %7744 = vmatprep.mubr.bf16.mxu0 %v3455
    %7745 = vmatmul.mubr.bf16.gmra.mrb[0].mxu0 %v3367
    %v7746 = vpop.f32.mrb[0].mxu0
    %v7747 = vadd.f32 %v7650, %v7746
    %v7748 = vpop.f32.mrb[0].mxu0
    %v7749 = vpop.f32.mrb[0].mxu0
    %v7750 = vadd.f32 %v7653, %v7749
    %v7751 = vpop.f32.mrb[0].mxu0
    %7752 = vmatprep.mubr.bf16.mxu0 %v3456
    %7753 = vmatmul.mubr.bf16.gmra.mrb[0].mxu0 %v3368
    %v7754 = vpop.f32.mrb[0].mxu0
    %v7755 = vadd.f32 %v7658, %v7754
    %v7756 = vpop.f32.mrb[0].mxu0
    %v7757 = vpop.f32.mrb[0].mxu0
    %v7758 = vadd.f32 %v7661, %v7757
    %v7759 = vpop.f32.mrb[0].mxu0
    %7760 = vmatprep.mubr.bf16.mxu0 %v3457
    %7761 = vmatmul.mubr.bf16.gmra.mrb[0].mxu0 %v3369
    %v7762 = vpop.f32.mrb[0].mxu0
    %v7763 = vadd.f32 %v7666, %v7762
    %v7764 = vpop.f32.mrb[0].mxu0
    %v7765 = vpop.f32.mrb[0].mxu0
    %v7766 = vadd.f32 %v7669, %v7765
    %v7767 = vpop.f32.mrb[0].mxu0
    %7768 = vdwg.mxu0
    %7769 = vmatprep.subr.bf16.mxu0 0
    %7770 = vmatpush1.bf16.msra.mxu0 %v6690
    %7771 = vmatprep.subr.bf16.mxu0 0
    %7772 = vmatpush1.bf16.msra.mxu0 %v6691
    %7773 = vmatprep.subr.bf16.mxu0 0
    %7774 = vmatpush1.bf16.msra.mxu0 %v6692
    %7775 = vmatprep.subr.bf16.mxu0 0
    %7776 = vmatpush1.bf16.msra.mxu0 %v6693
    %7777 = vmatprep.subr.bf16.mxu0 0
    %7778 = vmatpush1.bf16.msra.mxu0 %v6694
    %7779 = vmatprep.subr.bf16.mxu0 0
    %7780 = vmatpush1.bf16.msra.mxu0 %v6695
    %7781 = vmatprep.subr.bf16.mxu0 0
    %7782 = vmatpush1.bf16.msra.mxu0 %v6696
    %7783 = vmatprep.subr.bf16.mxu0 0
    %7784 = vmatpush1.bf16.msra.mxu0 %v6697
    %7785 = vmatprep.subr.bf16.mxu0 0
    %7786 = vmatpush1.bf16.msra.mxu0 %v6698
    %7787 = vmatprep.subr.bf16.mxu0 0
    %7788 = vmatpush1.bf16.msra.mxu0 %v6699
    %7789 = vmatprep.subr.bf16.mxu0 0
    %7790 = vmatpush1.bf16.msra.mxu0 %v6700
    %7791 = vmatprep.subr.bf16.mxu0 0
    %7792 = vmatpush1.bf16.msra.mxu0 %v6701
    %7793 = vmatprep.subr.bf16.mxu0 0
    %7794 = vmatpush1.bf16.msra.mxu0 %v6702
    %7795 = vmatprep.subr.bf16.mxu0 0
    %7796 = vmatpush1.bf16.msra.mxu0 %v6703
    %7797 = vmatprep.subr.bf16.mxu0 0
    %7798 = vmatpush1.bf16.msra.mxu0 %v6704
    %7799 = vmatprep.subr.bf16.mxu0 0
    %7800 = vmatpush1.bf16.msra.mxu0 %v6705
    %7801 = vmatprep.mubr.bf16.mxu0 %v3626
    %7802 = vmatmul.mubr.bf16.gmra.mrb[0].mxu0 %v3538
    %v7803 = vpop.f32.mrb[0].mxu0
    %v7804 = vadd.f32 %v7707, %v7803
    %v7805 = vpop.f32.mrb[0].mxu0
    %v7806 = vpop.f32.mrb[0].mxu0
    %v7807 = vadd.f32 %v7710, %v7806
    %v7808 = vpop.f32.mrb[0].mxu0
    %7809 = vmatprep.mubr.bf16.mxu0 %v3627
    %7810 = vmatmul.mubr.bf16.gmra.mrb[0].mxu0 %v3539
    %v7811 = vpop.f32.mrb[0].mxu0
    %v7812 = vadd.f32 %v7715, %v7811
    %v7813 = vpop.f32.mrb[0].mxu0
    %v7814 = vpop.f32.mrb[0].mxu0
    %v7815 = vadd.f32 %v7718, %v7814
    %v7816 = vpop.f32.mrb[0].mxu0
    %7817 = vmatprep.mubr.bf16.mxu0 %v3628
    %7818 = vmatmul.mubr.bf16.gmra.mrb[0].mxu0 %v3540
    %v7819 = vpop.f32.mrb[0].mxu0
    %v7820 = vadd.f32 %v7723, %v7819
    %v7821 = vpop.f32.mrb[0].mxu0
    %v7822 = vpop.f32.mrb[0].mxu0
    %v7823 = vadd.f32 %v7726, %v7822
    %v7824 = vpop.f32.mrb[0].mxu0
    %7825 = vmatprep.mubr.bf16.mxu0 %v3629
    %7826 = vmatmul.mubr.bf16.gmra.mrb[0].mxu0 %v3541
    %v7827 = vpop.f32.mrb[0].mxu0
    %v7828 = vadd.f32 %v7731, %v7827
    %v7829 = vpop.f32.mrb[0].mxu0
    %v7830 = vpop.f32.mrb[0].mxu0
    %v7831 = vadd.f32 %v7734, %v7830
    %v7832 = vpop.f32.mrb[0].mxu0
    %7833 = vmatprep.mubr.bf16.mxu0 %v3630
    %7834 = vmatmul.mubr.bf16.gmra.mrb[0].mxu0 %v3542
    %v7835 = vpop.f32.mrb[0].mxu0
    %v7836 = vadd.f32 %v7739, %v7835
    %v7837 = vpop.f32.mrb[0].mxu0
    %v7838 = vpop.f32.mrb[0].mxu0
    %v7839 = vadd.f32 %v7742, %v7838
    %v7840 = vpop.f32.mrb[0].mxu0
    %7841 = vmatprep.mubr.bf16.mxu0 %v3631
    %7842 = vmatmul.mubr.bf16.gmra.mrb[0].mxu0 %v3543
    %v7843 = vpop.f32.mrb[0].mxu0
    %v7844 = vadd.f32 %v7747, %v7843
    %v7845 = vpop.f32.mrb[0].mxu0
    %v7846 = vpop.f32.mrb[0].mxu0
    %v7847 = vadd.f32 %v7750, %v7846
    %v7848 = vpop.f32.mrb[0].mxu0
    %7849 = vmatprep.mubr.bf16.mxu0 %v3632
    %7850 = vmatmul.mubr.bf16.gmra.mrb[0].mxu0 %v3544
    %v7851 = vpop.f32.mrb[0].mxu0
    %v7852 = vadd.f32 %v7755, %v7851
    %v7853 = vpop.f32.mrb[0].mxu0
    %v7854 = vpop.f32.mrb[0].mxu0
    %v7855 = vadd.f32 %v7758, %v7854
    %v7856 = vpop.f32.mrb[0].mxu0
    %7857 = vmatprep.mubr.bf16.mxu0 %v3633
    %7858 = vmatmul.mubr.bf16.gmra.mrb[0].mxu0 %v3545
    %v7859 = vpop.f32.mrb[0].mxu0
    %v7860 = vadd.f32 %v7763, %v7859
    %v7861 = vpop.f32.mrb[0].mxu0
    %v7862 = vpop.f32.mrb[0].mxu0
    %v7863 = vadd.f32 %v7766, %v7862
    %v7864 = vpop.f32.mrb[0].mxu0
    %7865 = vdwg.mxu0
    %7866 = vmatprep.subr.bf16.mxu0 0
    %7867 = vmatpush1.bf16.msra.mxu0 %v6706
    %7868 = vmatprep.subr.bf16.mxu0 0
    %7869 = vmatpush1.bf16.msra.mxu0 %v6707
    %7870 = vmatprep.subr.bf16.mxu0 0
    %7871 = vmatpush1.bf16.msra.mxu0 %v6708
    %7872 = vmatprep.subr.bf16.mxu0 0
    %7873 = vmatpush1.bf16.msra.mxu0 %v6709
    %7874 = vmatprep.subr.bf16.mxu0 0
    %7875 = vmatpush1.bf16.msra.mxu0 %v6710
    %7876 = vmatprep.subr.bf16.mxu0 0
    %7877 = vmatpush1.bf16.msra.mxu0 %v6711
    %7878 = vmatprep.subr.bf16.mxu0 0
    %7879 = vmatpush1.bf16.msra.mxu0 %v6712
    %7880 = vmatprep.subr.bf16.mxu0 0
    %7881 = vmatpush1.bf16.msra.mxu0 %v6713
    %7882 = vmatprep.subr.bf16.mxu0 0
    %7883 = vmatpush1.bf16.msra.mxu0 %v6714
    %7884 = vmatprep.subr.bf16.mxu0 0
    %7885 = vmatpush1.bf16.msra.mxu0 %v6715
    %7886 = vmatprep.subr.bf16.mxu0 0
    %7887 = vmatpush1.bf16.msra.mxu0 %v6716
    %7888 = vmatprep.subr.bf16.mxu0 0
    %7889 = vmatpush1.bf16.msra.mxu0 %v6717
    %7890 = vmatprep.subr.bf16.mxu0 0
    %7891 = vmatpush1.bf16.msra.mxu0 %v6718
    %7892 = vmatprep.subr.bf16.mxu0 0
    %7893 = vmatpush1.bf16.msra.mxu0 %v6719
    %7894 = vmatprep.subr.bf16.mxu0 0
    %7895 = vmatpush1.bf16.msra.mxu0 %v6720
    %7896 = vmatprep.subr.bf16.mxu0 0
    %7897 = vmatpush1.bf16.msra.mxu0 %v6721
    %7898 = vmatprep.mubr.bf16.mxu0 %v3802
    %7899 = vmatmul.mubr.bf16.gmra.mrb[0].mxu0 %v3714
    %v7900 = vpop.f32.mrb[0].mxu0
    %v7901 = vadd.f32 %v7804, %v7900
    %v7902 = vpop.f32.mrb[0].mxu0
    %v7903 = vpop.f32.mrb[0].mxu0
    %v7904 = vadd.f32 %v7807, %v7903
    %v7905 = vpop.f32.mrb[0].mxu0
    %7906 = vmatprep.mubr.bf16.mxu0 %v3803
    %7907 = vmatmul.mubr.bf16.gmra.mrb[0].mxu0 %v3715
    %v7908 = vpop.f32.mrb[0].mxu0
    %v7909 = vadd.f32 %v7812, %v7908
    %v7910 = vpop.f32.mrb[0].mxu0
    %v7911 = vpop.f32.mrb[0].mxu0
    %v7912 = vadd.f32 %v7815, %v7911
    %v7913 = vpop.f32.mrb[0].mxu0
    %7914 = vmatprep.mubr.bf16.mxu0 %v3804
    %7915 = vmatmul.mubr.bf16.gmra.mrb[0].mxu0 %v3716
    %v7916 = vpop.f32.mrb[0].mxu0
    %v7917 = vadd.f32 %v7820, %v7916
    %v7918 = vpop.f32.mrb[0].mxu0
    %v7919 = vpop.f32.mrb[0].mxu0
    %v7920 = vadd.f32 %v7823, %v7919
    %v7921 = vpop.f32.mrb[0].mxu0
    %7922 = vmatprep.mubr.bf16.mxu0 %v3805
    %7923 = vmatmul.mubr.bf16.gmra.mrb[0].mxu0 %v3717
    %v7924 = vpop.f32.mrb[0].mxu0
    %v7925 = vadd.f32 %v7828, %v7924
    %v7926 = vpop.f32.mrb[0].mxu0
    %v7927 = vpop.f32.mrb[0].mxu0
    %v7928 = vadd.f32 %v7831, %v7927
    %v7929 = vpop.f32.mrb[0].mxu0
    %7930 = vmatprep.mubr.bf16.mxu0 %v3806
    %7931 = vmatmul.mubr.bf16.gmra.mrb[0].mxu0 %v3718
    %v7932 = vpop.f32.mrb[0].mxu0
    %v7933 = vadd.f32 %v7836, %v7932
    %v7934 = vpop.f32.mrb[0].mxu0
    %v7935 = vpop.f32.mrb[0].mxu0
    %v7936 = vadd.f32 %v7839, %v7935
    %v7937 = vpop.f32.mrb[0].mxu0
    %7938 = vmatprep.mubr.bf16.mxu0 %v3807
    %7939 = vmatmul.mubr.bf16.gmra.mrb[0].mxu0 %v3719
    %v7940 = vpop.f32.mrb[0].mxu0
    %v7941 = vadd.f32 %v7844, %v7940
    %v7942 = vpop.f32.mrb[0].mxu0
    %v7943 = vpop.f32.mrb[0].mxu0
    %v7944 = vadd.f32 %v7847, %v7943
    %v7945 = vpop.f32.mrb[0].mxu0
    %7946 = vmatprep.mubr.bf16.mxu0 %v3808
    %7947 = vmatmul.mubr.bf16.gmra.mrb[0].mxu0 %v3720
    %v7948 = vpop.f32.mrb[0].mxu0
    %v7949 = vadd.f32 %v7852, %v7948
    %v7950 = vpop.f32.mrb[0].mxu0
    %v7951 = vpop.f32.mrb[0].mxu0
    %v7952 = vadd.f32 %v7855, %v7951
    %v7953 = vpop.f32.mrb[0].mxu0
    %7954 = vmatprep.mubr.bf16.mxu0 %v3809
    %7955 = vmatmul.mubr.bf16.gmra.mrb[0].mxu0 %v3721
    %v7956 = vpop.f32.mrb[0].mxu0
    %v7957 = vadd.f32 %v7860, %v7956
    %v7958 = vpop.f32.mrb[0].mxu0
    %v7959 = vpop.f32.mrb[0].mxu0
    %v7960 = vadd.f32 %v7863, %v7959
    %v7961 = vpop.f32.mrb[0].mxu0
    %7962 = vdwg.mxu0
    %7963 = vmatprep.subr.bf16.mxu0 0
    %7964 = vmatpush1.bf16.msra.mxu0 %v6722
    %7965 = vmatprep.subr.bf16.mxu0 0
    %7966 = vmatpush1.bf16.msra.mxu0 %v6723
    %7967 = vmatprep.subr.bf16.mxu0 0
    %7968 = vmatpush1.bf16.msra.mxu0 %v6724
    %7969 = vmatprep.subr.bf16.mxu0 0
    %7970 = vmatpush1.bf16.msra.mxu0 %v6725
    %7971 = vmatprep.subr.bf16.mxu0 0
    %7972 = vmatpush1.bf16.msra.mxu0 %v6726
    %7973 = vmatprep.subr.bf16.mxu0 0
    %7974 = vmatpush1.bf16.msra.mxu0 %v6727
    %7975 = vmatprep.subr.bf16.mxu0 0
    %7976 = vmatpush1.bf16.msra.mxu0 %v6728
    %7977 = vmatprep.subr.bf16.mxu0 0
    %7978 = vmatpush1.bf16.msra.mxu0 %v6729
    %7979 = vmatprep.subr.bf16.mxu0 0
    %7980 = vmatpush1.bf16.msra.mxu0 %v6730
    %7981 = vmatprep.subr.bf16.mxu0 0
    %7982 = vmatpush1.bf16.msra.mxu0 %v6731
    %7983 = vmatprep.subr.bf16.mxu0 0
    %7984 = vmatpush1.bf16.msra.mxu0 %v6732
    %7985 = vmatprep.subr.bf16.mxu0 0
    %7986 = vmatpush1.bf16.msra.mxu0 %v6733
    %7987 = vmatprep.subr.bf16.mxu0 0
    %7988 = vmatpush1.bf16.msra.mxu0 %v6734
    %7989 = vmatprep.subr.bf16.mxu0 0
    %7990 = vmatpush1.bf16.msra.mxu0 %v6735
    %7991 = vmatprep.subr.bf16.mxu0 0
    %7992 = vmatpush1.bf16.msra.mxu0 %v6736
    %7993 = vmatprep.subr.bf16.mxu0 0
    %7994 = vmatpush1.bf16.msra.mxu0 %v6737
    %7995 = vmatprep.mubr.bf16.mxu0 %v3978
    %7996 = vmatmul.mubr.bf16.gmra.mrb[0].mxu0 %v3890
    %v7997 = vpop.f32.mrb[0].mxu0
    %v7998 = vadd.f32 %v7901, %v7997
    %v7999 = vpop.f32.mrb[0].mxu0
    %v8000 = vpop.f32.mrb[0].mxu0
    %v8001 = vadd.f32 %v7904, %v8000
    %v8002 = vpop.f32.mrb[0].mxu0
    %8003 = vmatprep.mubr.bf16.mxu0 %v3979
    %8004 = vmatmul.mubr.bf16.gmra.mrb[0].mxu0 %v3891
    %v8005 = vpop.f32.mrb[0].mxu0
    %v8006 = vadd.f32 %v7909, %v8005
    %v8007 = vpop.f32.mrb[0].mxu0
    %v8008 = vpop.f32.mrb[0].mxu0
    %v8009 = vadd.f32 %v7912, %v8008
    %v8010 = vpop.f32.mrb[0].mxu0
    %8011 = vmatprep.mubr.bf16.mxu0 %v3980
    %8012 = vmatmul.mubr.bf16.gmra.mrb[0].mxu0 %v3892
    %v8013 = vpop.f32.mrb[0].mxu0
    %v8014 = vadd.f32 %v7917, %v8013
    %v8015 = vpop.f32.mrb[0].mxu0
    %v8016 = vpop.f32.mrb[0].mxu0
    %v8017 = vadd.f32 %v7920, %v8016
    %v8018 = vpop.f32.mrb[0].mxu0
    %8019 = vmatprep.mubr.bf16.mxu0 %v3981
    %8020 = vmatmul.mubr.bf16.gmra.mrb[0].mxu0 %v3893
    %v8021 = vpop.f32.mrb[0].mxu0
    %v8022 = vadd.f32 %v7925, %v8021
    %v8023 = vpop.f32.mrb[0].mxu0
    %v8024 = vpop.f32.mrb[0].mxu0
    %v8025 = vadd.f32 %v7928, %v8024
    %v8026 = vpop.f32.mrb[0].mxu0
    %8027 = vmatprep.mubr.bf16.mxu0 %v3982
    %8028 = vmatmul.mubr.bf16.gmra.mrb[0].mxu0 %v3894
    %v8029 = vpop.f32.mrb[0].mxu0
    %v8030 = vadd.f32 %v7933, %v8029
    %v8031 = vpop.f32.mrb[0].mxu0
    %v8032 = vpop.f32.mrb[0].mxu0
    %v8033 = vadd.f32 %v7936, %v8032
    %v8034 = vpop.f32.mrb[0].mxu0
    %8035 = vmatprep.mubr.bf16.mxu0 %v3983
    %8036 = vmatmul.mubr.bf16.gmra.mrb[0].mxu0 %v3895
    %v8037 = vpop.f32.mrb[0].mxu0
    %v8038 = vadd.f32 %v7941, %v8037
    %v8039 = vpop.f32.mrb[0].mxu0
    %v8040 = vpop.f32.mrb[0].mxu0
    %v8041 = vadd.f32 %v7944, %v8040
    %v8042 = vpop.f32.mrb[0].mxu0
    %8043 = vmatprep.mubr.bf16.mxu0 %v3984
    %8044 = vmatmul.mubr.bf16.gmra.mrb[0].mxu0 %v3896
    %v8045 = vpop.f32.mrb[0].mxu0
    %v8046 = vadd.f32 %v7949, %v8045
    %v8047 = vpop.f32.mrb[0].mxu0
    %v8048 = vpop.f32.mrb[0].mxu0
    %v8049 = vadd.f32 %v7952, %v8048
    %v8050 = vpop.f32.mrb[0].mxu0
    %8051 = vmatprep.mubr.bf16.mxu0 %v3985
    %8052 = vmatmul.mubr.bf16.gmra.mrb[0].mxu0 %v3897
    %v8053 = vpop.f32.mrb[0].mxu0
    %v8054 = vadd.f32 %v7957, %v8053
    %v8055 = vpop.f32.mrb[0].mxu0
    %v8056 = vpop.f32.mrb[0].mxu0
    %v8057 = vadd.f32 %v7960, %v8056
    %v8058 = vpop.f32.mrb[0].mxu0
    %8059 = vdwg.mxu0
    %8060 = vmatprep.subr.bf16.mxu0 0
    %8061 = vmatpush1.bf16.msra.mxu0 %v6738
    %8062 = vmatprep.subr.bf16.mxu0 0
    %8063 = vmatpush1.bf16.msra.mxu0 %v6739
    %8064 = vmatprep.subr.bf16.mxu0 0
    %8065 = vmatpush1.bf16.msra.mxu0 %v6740
    %8066 = vmatprep.subr.bf16.mxu0 0
    %8067 = vmatpush1.bf16.msra.mxu0 %v6741
    %8068 = vmatprep.subr.bf16.mxu0 0
    %8069 = vmatpush1.bf16.msra.mxu0 %v6742
    %8070 = vmatprep.subr.bf16.mxu0 0
    %8071 = vmatpush1.bf16.msra.mxu0 %v6743
    %8072 = vmatprep.subr.bf16.mxu0 0
    %8073 = vmatpush1.bf16.msra.mxu0 %v6744
    %8074 = vmatprep.subr.bf16.mxu0 0
    %8075 = vmatpush1.bf16.msra.mxu0 %v6745
    %8076 = vmatprep.subr.bf16.mxu0 0
    %8077 = vmatpush1.bf16.msra.mxu0 %v6746
    %8078 = vmatprep.subr.bf16.mxu0 0
    %8079 = vmatpush1.bf16.msra.mxu0 %v6747
    %8080 = vmatprep.subr.bf16.mxu0 0
    %8081 = vmatpush1.bf16.msra.mxu0 %v6748
    %8082 = vmatprep.subr.bf16.mxu0 0
    %8083 = vmatpush1.bf16.msra.mxu0 %v6749
    %8084 = vmatprep.subr.bf16.mxu0 0
    %8085 = vmatpush1.bf16.msra.mxu0 %v6750
    %8086 = vmatprep.subr.bf16.mxu0 0
    %8087 = vmatpush1.bf16.msra.mxu0 %v6751
    %8088 = vmatprep.subr.bf16.mxu0 0
    %8089 = vmatpush1.bf16.msra.mxu0 %v6752
    %8090 = vmatprep.subr.bf16.mxu0 0
    %8091 = vmatpush1.bf16.msra.mxu0 %v6753
    %8092 = vmatprep.mubr.bf16.mxu0 %v4154
    %8093 = vmatmul.mubr.bf16.gmra.mrb[0].mxu0 %v4066
    %v8094 = vpop.f32.mrb[0].mxu0
    %v8095 = vadd.f32 %v7998, %v8094
    %v8096 = vpop.f32.mrb[0].mxu0
    %v8097 = vpop.f32.mrb[0].mxu0
    %v8098 = vadd.f32 %v8001, %v8097
    %v8099 = vpop.f32.mrb[0].mxu0
    %8100 = vmatprep.mubr.bf16.mxu0 %v4155
    %8101 = vmatmul.mubr.bf16.gmra.mrb[0].mxu0 %v4067
    %v8102 = vpop.f32.mrb[0].mxu0
    %v8103 = vadd.f32 %v8006, %v8102
    %v8104 = vpop.f32.mrb[0].mxu0
    %v8105 = vpop.f32.mrb[0].mxu0
    %v8106 = vadd.f32 %v8009, %v8105
    %v8107 = vpop.f32.mrb[0].mxu0
    %8108 = vmatprep.mubr.bf16.mxu0 %v4156
    %8109 = vmatmul.mubr.bf16.gmra.mrb[0].mxu0 %v4068
    %v8110 = vpop.f32.mrb[0].mxu0
    %v8111 = vadd.f32 %v8014, %v8110
    %v8112 = vpop.f32.mrb[0].mxu0
    %v8113 = vpop.f32.mrb[0].mxu0
    %v8114 = vadd.f32 %v8017, %v8113
    %v8115 = vpop.f32.mrb[0].mxu0
    %8116 = vmatprep.mubr.bf16.mxu0 %v4157
    %8117 = vmatmul.mubr.bf16.gmra.mrb[0].mxu0 %v4069
    %v8118 = vpop.f32.mrb[0].mxu0
    %v8119 = vadd.f32 %v8022, %v8118
    %v8120 = vpop.f32.mrb[0].mxu0
    %v8121 = vpop.f32.mrb[0].mxu0
    %v8122 = vadd.f32 %v8025, %v8121
    %v8123 = vpop.f32.mrb[0].mxu0
    %8124 = vmatprep.mubr.bf16.mxu0 %v4158
    %8125 = vmatmul.mubr.bf16.gmra.mrb[0].mxu0 %v4070
    %v8126 = vpop.f32.mrb[0].mxu0
    %v8127 = vadd.f32 %v8030, %v8126
    %v8128 = vpop.f32.mrb[0].mxu0
    %v8129 = vpop.f32.mrb[0].mxu0
    %v8130 = vadd.f32 %v8033, %v8129
    %v8131 = vpop.f32.mrb[0].mxu0
    %8132 = vmatprep.mubr.bf16.mxu0 %v4159
    %8133 = vmatmul.mubr.bf16.gmra.mrb[0].mxu0 %v4071
    %v8134 = vpop.f32.mrb[0].mxu0
    %v8135 = vadd.f32 %v8038, %v8134
    %v8136 = vpop.f32.mrb[0].mxu0
    %v8137 = vpop.f32.mrb[0].mxu0
    %v8138 = vadd.f32 %v8041, %v8137
    %v8139 = vpop.f32.mrb[0].mxu0
    %8140 = vmatprep.mubr.bf16.mxu0 %v4160
    %8141 = vmatmul.mubr.bf16.gmra.mrb[0].mxu0 %v4072
    %v8142 = vpop.f32.mrb[0].mxu0
    %v8143 = vadd.f32 %v8046, %v8142
    %v8144 = vpop.f32.mrb[0].mxu0
    %v8145 = vpop.f32.mrb[0].mxu0
    %v8146 = vadd.f32 %v8049, %v8145
    %v8147 = vpop.f32.mrb[0].mxu0
    %8148 = vmatprep.mubr.bf16.mxu0 %v4161
    %8149 = vmatmul.mubr.bf16.gmra.mrb[0].mxu0 %v4073
    %v8150 = vpop.f32.mrb[0].mxu0
    %v8151 = vadd.f32 %v8054, %v8150
    %v8152 = vpop.f32.mrb[0].mxu0
    %v8153 = vpop.f32.mrb[0].mxu0
    %v8154 = vadd.f32 %v8057, %v8153
    %v8155 = vpop.f32.mrb[0].mxu0
    %8156 = vdwg.mxu0
    %8157 = vmatprep.subr.bf16.mxu0 0
    %8158 = vmatpush1.bf16.msra.mxu0 %v6754
    %8159 = vmatprep.subr.bf16.mxu0 0
    %8160 = vmatpush1.bf16.msra.mxu0 %v6755
    %8161 = vmatprep.subr.bf16.mxu0 0
    %8162 = vmatpush1.bf16.msra.mxu0 %v6756
    %8163 = vmatprep.subr.bf16.mxu0 0
    %8164 = vmatpush1.bf16.msra.mxu0 %v6757
    %8165 = vmatprep.subr.bf16.mxu0 0
    %8166 = vmatpush1.bf16.msra.mxu0 %v6758
    %8167 = vmatprep.subr.bf16.mxu0 0
    %8168 = vmatpush1.bf16.msra.mxu0 %v6759
    %8169 = vmatprep.subr.bf16.mxu0 0
    %8170 = vmatpush1.bf16.msra.mxu0 %v6760
    %8171 = vmatprep.subr.bf16.mxu0 0
    %8172 = vmatpush1.bf16.msra.mxu0 %v6761
    %8173 = vmatprep.subr.bf16.mxu0 0
    %8174 = vmatpush1.bf16.msra.mxu0 %v6762
    %8175 = vmatprep.subr.bf16.mxu0 0
    %8176 = vmatpush1.bf16.msra.mxu0 %v6763
    %8177 = vmatprep.subr.bf16.mxu0 0
    %8178 = vmatpush1.bf16.msra.mxu0 %v6764
    %8179 = vmatprep.subr.bf16.mxu0 0
    %8180 = vmatpush1.bf16.msra.mxu0 %v6765
    %8181 = vmatprep.subr.bf16.mxu0 0
    %8182 = vmatpush1.bf16.msra.mxu0 %v6766
    %8183 = vmatprep.subr.bf16.mxu0 0
    %8184 = vmatpush1.bf16.msra.mxu0 %v6767
    %8185 = vmatprep.subr.bf16.mxu0 0
    %8186 = vmatpush1.bf16.msra.mxu0 %v6768
    %8187 = vmatprep.subr.bf16.mxu0 0
    %8188 = vmatpush1.bf16.msra.mxu0 %v6769
    %8189 = vmatprep.mubr.bf16.mxu0 %v4330
    %8190 = vmatmul.mubr.bf16.gmra.mrb[0].mxu0 %v4242
    %v8191 = vpop.f32.mrb[0].mxu0
    %v8192 = vadd.f32 %v8095, %v8191
    %v8193 = vpop.f32.mrb[0].mxu0
    %v8194 = vpop.f32.mrb[0].mxu0
    %v8195 = vadd.f32 %v8098, %v8194
    %v8196 = vpop.f32.mrb[0].mxu0
    %8197 = vmatprep.mubr.bf16.mxu0 %v4331
    %8198 = vmatmul.mubr.bf16.gmra.mrb[0].mxu0 %v4243
    %v8199 = vpop.f32.mrb[0].mxu0
    %v8200 = vadd.f32 %v8103, %v8199
    %v8201 = vpop.f32.mrb[0].mxu0
    %v8202 = vpop.f32.mrb[0].mxu0
    %v8203 = vadd.f32 %v8106, %v8202
    %v8204 = vpop.f32.mrb[0].mxu0
    %8205 = vmatprep.mubr.bf16.mxu0 %v4332
    %8206 = vmatmul.mubr.bf16.gmra.mrb[0].mxu0 %v4244
    %v8207 = vpop.f32.mrb[0].mxu0
    %v8208 = vadd.f32 %v8111, %v8207
    %v8209 = vpop.f32.mrb[0].mxu0
    %v8210 = vpop.f32.mrb[0].mxu0
    %v8211 = vadd.f32 %v8114, %v8210
    %v8212 = vpop.f32.mrb[0].mxu0
    %8213 = vmatprep.mubr.bf16.mxu0 %v4333
    %8214 = vmatmul.mubr.bf16.gmra.mrb[0].mxu0 %v4245
    %v8215 = vpop.f32.mrb[0].mxu0
    %v8216 = vadd.f32 %v8119, %v8215
    %v8217 = vpop.f32.mrb[0].mxu0
    %v8218 = vpop.f32.mrb[0].mxu0
    %v8219 = vadd.f32 %v8122, %v8218
    %v8220 = vpop.f32.mrb[0].mxu0
    %8221 = vmatprep.mubr.bf16.mxu0 %v4334
    %8222 = vmatmul.mubr.bf16.gmra.mrb[0].mxu0 %v4246
    %v8223 = vpop.f32.mrb[0].mxu0
    %v8224 = vadd.f32 %v8127, %v8223
    %v8225 = vpop.f32.mrb[0].mxu0
    %v8226 = vpop.f32.mrb[0].mxu0
    %v8227 = vadd.f32 %v8130, %v8226
    %v8228 = vpop.f32.mrb[0].mxu0
    %8229 = vmatprep.mubr.bf16.mxu0 %v4335
    %8230 = vmatmul.mubr.bf16.gmra.mrb[0].mxu0 %v4247
    %v8231 = vpop.f32.mrb[0].mxu0
    %v8232 = vadd.f32 %v8135, %v8231
    %v8233 = vpop.f32.mrb[0].mxu0
    %v8234 = vpop.f32.mrb[0].mxu0
    %v8235 = vadd.f32 %v8138, %v8234
    %v8236 = vpop.f32.mrb[0].mxu0
    %8237 = vmatprep.mubr.bf16.mxu0 %v4336
    %8238 = vmatmul.mubr.bf16.gmra.mrb[0].mxu0 %v4248
    %v8239 = vpop.f32.mrb[0].mxu0
    %v8240 = vadd.f32 %v8143, %v8239
    %v8241 = vpop.f32.mrb[0].mxu0
    %v8242 = vpop.f32.mrb[0].mxu0
    %v8243 = vadd.f32 %v8146, %v8242
    %v8244 = vpop.f32.mrb[0].mxu0
    %8245 = vmatprep.mubr.bf16.mxu0 %v4337
    %8246 = vmatmul.mubr.bf16.gmra.mrb[0].mxu0 %v4249
    %v8247 = vpop.f32.mrb[0].mxu0
    %v8248 = vadd.f32 %v8151, %v8247
    %v8249 = vpop.f32.mrb[0].mxu0
    %v8250 = vpop.f32.mrb[0].mxu0
    %v8251 = vadd.f32 %v8154, %v8250
    %v8252 = vpop.f32.mrb[0].mxu0
    %8253 = vdwg.mxu0
    %8254 = vmatprep.subr.bf16.mxu0 0
    %8255 = vmatpush1.bf16.msra.mxu0 %v6770
    %8256 = vmatprep.subr.bf16.mxu0 0
    %8257 = vmatpush1.bf16.msra.mxu0 %v6771
    %8258 = vmatprep.subr.bf16.mxu0 0
    %8259 = vmatpush1.bf16.msra.mxu0 %v6772
    %8260 = vmatprep.subr.bf16.mxu0 0
    %8261 = vmatpush1.bf16.msra.mxu0 %v6773
    %8262 = vmatprep.subr.bf16.mxu0 0
    %8263 = vmatpush1.bf16.msra.mxu0 %v6774
    %8264 = vmatprep.subr.bf16.mxu0 0
    %8265 = vmatpush1.bf16.msra.mxu0 %v6775
    %8266 = vmatprep.subr.bf16.mxu0 0
    %8267 = vmatpush1.bf16.msra.mxu0 %v6776
    %8268 = vmatprep.subr.bf16.mxu0 0
    %8269 = vmatpush1.bf16.msra.mxu0 %v6777
    %8270 = vmatprep.subr.bf16.mxu0 0
    %8271 = vmatpush1.bf16.msra.mxu0 %v6778
    %8272 = vmatprep.subr.bf16.mxu0 0
    %8273 = vmatpush1.bf16.msra.mxu0 %v6779
    %8274 = vmatprep.subr.bf16.mxu0 0
    %8275 = vmatpush1.bf16.msra.mxu0 %v6780
    %8276 = vmatprep.subr.bf16.mxu0 0
    %8277 = vmatpush1.bf16.msra.mxu0 %v6781
    %8278 = vmatprep.subr.bf16.mxu0 0
    %8279 = vmatpush1.bf16.msra.mxu0 %v6782
    %8280 = vmatprep.subr.bf16.mxu0 0
    %8281 = vmatpush1.bf16.msra.mxu0 %v6783
    %8282 = vmatprep.subr.bf16.mxu0 0
    %8283 = vmatpush1.bf16.msra.mxu0 %v6784
    %8284 = vmatprep.subr.bf16.mxu0 0
    %8285 = vmatpush1.bf16.msra.mxu0 %v6785
    %8286 = vmatprep.mubr.bf16.mxu0 %v4506
    %8287 = vmatmul.mubr.bf16.gmra.mrb[0].mxu0 %v4418
    %v8288 = vpop.f32.mrb[0].mxu0
    %v8289 = vadd.f32 %v8192, %v8288
    %v8290 = vpop.f32.mrb[0].mxu0
    %v8291 = vpop.f32.mrb[0].mxu0
    %v8292 = vadd.f32 %v8195, %v8291
    %v8293 = vpop.f32.mrb[0].mxu0
    %8294 = vmatprep.mubr.bf16.mxu0 %v4507
    %8295 = vmatmul.mubr.bf16.gmra.mrb[0].mxu0 %v4419
    %v8296 = vpop.f32.mrb[0].mxu0
    %v8297 = vadd.f32 %v8200, %v8296
    %v8298 = vpop.f32.mrb[0].mxu0
    %v8299 = vpop.f32.mrb[0].mxu0
    %v8300 = vadd.f32 %v8203, %v8299
    %v8301 = vpop.f32.mrb[0].mxu0
    %8302 = vmatprep.mubr.bf16.mxu0 %v4508
    %8303 = vmatmul.mubr.bf16.gmra.mrb[0].mxu0 %v4420
    %v8304 = vpop.f32.mrb[0].mxu0
    %v8305 = vadd.f32 %v8208, %v8304
    %v8306 = vpop.f32.mrb[0].mxu0
    %v8307 = vpop.f32.mrb[0].mxu0
    %v8308 = vadd.f32 %v8211, %v8307
    %v8309 = vpop.f32.mrb[0].mxu0
    %8310 = vmatprep.mubr.bf16.mxu0 %v4509
    %8311 = vmatmul.mubr.bf16.gmra.mrb[0].mxu0 %v4421
    %v8312 = vpop.f32.mrb[0].mxu0
    %v8313 = vadd.f32 %v8216, %v8312
    %v8314 = vpop.f32.mrb[0].mxu0
    %v8315 = vpop.f32.mrb[0].mxu0
    %v8316 = vadd.f32 %v8219, %v8315
    %v8317 = vpop.f32.mrb[0].mxu0
    %8318 = vmatprep.mubr.bf16.mxu0 %v4510
    %8319 = vmatmul.mubr.bf16.gmra.mrb[0].mxu0 %v4422
    %v8320 = vpop.f32.mrb[0].mxu0
    %v8321 = vadd.f32 %v8224, %v8320
    %v8322 = vpop.f32.mrb[0].mxu0
    %v8323 = vpop.f32.mrb[0].mxu0
    %v8324 = vadd.f32 %v8227, %v8323
    %v8325 = vpop.f32.mrb[0].mxu0
    %8326 = vmatprep.mubr.bf16.mxu0 %v4511
    %8327 = vmatmul.mubr.bf16.gmra.mrb[0].mxu0 %v4423
    %v8328 = vpop.f32.mrb[0].mxu0
    %v8329 = vadd.f32 %v8232, %v8328
    %v8330 = vpop.f32.mrb[0].mxu0
    %v8331 = vpop.f32.mrb[0].mxu0
    %v8332 = vadd.f32 %v8235, %v8331
    %v8333 = vpop.f32.mrb[0].mxu0
    %8334 = vmatprep.mubr.bf16.mxu0 %v4512
    %8335 = vmatmul.mubr.bf16.gmra.mrb[0].mxu0 %v4424
    %v8336 = vpop.f32.mrb[0].mxu0
    %v8337 = vadd.f32 %v8240, %v8336
    %v8338 = vpop.f32.mrb[0].mxu0
    %v8339 = vpop.f32.mrb[0].mxu0
    %v8340 = vadd.f32 %v8243, %v8339
    %v8341 = vpop.f32.mrb[0].mxu0
    %8342 = vmatprep.mubr.bf16.mxu0 %v4513
    %8343 = vmatmul.mubr.bf16.gmra.mrb[0].mxu0 %v4425
    %v8344 = vpop.f32.mrb[0].mxu0
    %v8345 = vadd.f32 %v8248, %v8344
    %v8346 = vpop.f32.mrb[0].mxu0
    %v8347 = vpop.f32.mrb[0].mxu0
    %v8348 = vadd.f32 %v8251, %v8347
    %v8349 = vpop.f32.mrb[0].mxu0
    %8350 = vdwg.mxu0
    %8351 = vmatprep.subr.bf16.mxu0 0
    %8352 = vmatpush1.bf16.msra.mxu0 %v6786
    %8353 = vmatprep.subr.bf16.mxu0 0
    %8354 = vmatpush1.bf16.msra.mxu0 %v6787
    %8355 = vmatprep.subr.bf16.mxu0 0
    %8356 = vmatpush1.bf16.msra.mxu0 %v6788
    %8357 = vmatprep.subr.bf16.mxu0 0
    %8358 = vmatpush1.bf16.msra.mxu0 %v6789
    %8359 = vmatprep.subr.bf16.mxu0 0
    %8360 = vmatpush1.bf16.msra.mxu0 %v6790
    %8361 = vmatprep.subr.bf16.mxu0 0
    %8362 = vmatpush1.bf16.msra.mxu0 %v6791
    %8363 = vmatprep.subr.bf16.mxu0 0
    %8364 = vmatpush1.bf16.msra.mxu0 %v6792
    %8365 = vmatprep.subr.bf16.mxu0 0
    %8366 = vmatpush1.bf16.msra.mxu0 %v6793
    %8367 = vmatprep.subr.bf16.mxu0 0
    %8368 = vmatpush1.bf16.msra.mxu0 %v6794
    %8369 = vmatprep.subr.bf16.mxu0 0
    %8370 = vmatpush1.bf16.msra.mxu0 %v6795
    %8371 = vmatprep.subr.bf16.mxu0 0
    %8372 = vmatpush1.bf16.msra.mxu0 %v6796
    %8373 = vmatprep.subr.bf16.mxu0 0
    %8374 = vmatpush1.bf16.msra.mxu0 %v6797
    %8375 = vmatprep.subr.bf16.mxu0 0
    %8376 = vmatpush1.bf16.msra.mxu0 %v6798
    %8377 = vmatprep.subr.bf16.mxu0 0
    %8378 = vmatpush1.bf16.msra.mxu0 %v6799
    %8379 = vmatprep.subr.bf16.mxu0 0
    %8380 = vmatpush1.bf16.msra.mxu0 %v6800
    %8381 = vmatprep.subr.bf16.mxu0 0
    %8382 = vmatpush1.bf16.msra.mxu0 %v6801
    %8383 = vmatprep.mubr.bf16.mxu0 %v4682
    %8384 = vmatmul.mubr.bf16.gmra.mrb[0].mxu0 %v4594
    %v8385 = vpop.f32.mrb[0].mxu0
    %v8386 = vadd.f32 %v8289, %v8385
    %v8387 = vpop.f32.mrb[0].mxu0
    %v8388 = vpop.f32.mrb[0].mxu0
    %v8389 = vadd.f32 %v8292, %v8388
    %v8390 = vpop.f32.mrb[0].mxu0
    %8391 = vmatprep.mubr.bf16.mxu0 %v4683
    %8392 = vmatmul.mubr.bf16.gmra.mrb[0].mxu0 %v4595
    %v8393 = vpop.f32.mrb[0].mxu0
    %v8394 = vadd.f32 %v8297, %v8393
    %v8395 = vpop.f32.mrb[0].mxu0
    %v8396 = vpop.f32.mrb[0].mxu0
    %v8397 = vadd.f32 %v8300, %v8396
    %v8398 = vpop.f32.mrb[0].mxu0
    %8399 = vmatprep.mubr.bf16.mxu0 %v4684
    %8400 = vmatmul.mubr.bf16.gmra.mrb[0].mxu0 %v4596
    %v8401 = vpop.f32.mrb[0].mxu0
    %v8402 = vadd.f32 %v8305, %v8401
    %v8403 = vpop.f32.mrb[0].mxu0
    %v8404 = vpop.f32.mrb[0].mxu0
    %v8405 = vadd.f32 %v8308, %v8404
    %v8406 = vpop.f32.mrb[0].mxu0
    %8407 = vmatprep.mubr.bf16.mxu0 %v4685
    %8408 = vmatmul.mubr.bf16.gmra.mrb[0].mxu0 %v4597
    %v8409 = vpop.f32.mrb[0].mxu0
    %v8410 = vadd.f32 %v8313, %v8409
    %v8411 = vpop.f32.mrb[0].mxu0
    %v8412 = vpop.f32.mrb[0].mxu0
    %v8413 = vadd.f32 %v8316, %v8412
    %v8414 = vpop.f32.mrb[0].mxu0
    %8415 = vmatprep.mubr.bf16.mxu0 %v4686
    %8416 = vmatmul.mubr.bf16.gmra.mrb[0].mxu0 %v4598
    %v8417 = vpop.f32.mrb[0].mxu0
    %v8418 = vadd.f32 %v8321, %v8417
    %v8419 = vpop.f32.mrb[0].mxu0
    %v8420 = vpop.f32.mrb[0].mxu0
    %v8421 = vadd.f32 %v8324, %v8420
    %v8422 = vpop.f32.mrb[0].mxu0
    %8423 = vmatprep.mubr.bf16.mxu0 %v4687
    %8424 = vmatmul.mubr.bf16.gmra.mrb[0].mxu0 %v4599
    %v8425 = vpop.f32.mrb[0].mxu0
    %v8426 = vadd.f32 %v8329, %v8425
    %v8427 = vpop.f32.mrb[0].mxu0
    %v8428 = vpop.f32.mrb[0].mxu0
    %v8429 = vadd.f32 %v8332, %v8428
    %v8430 = vpop.f32.mrb[0].mxu0
    %8431 = vmatprep.mubr.bf16.mxu0 %v4688
    %8432 = vmatmul.mubr.bf16.gmra.mrb[0].mxu0 %v4600
    %v8433 = vpop.f32.mrb[0].mxu0
    %v8434 = vadd.f32 %v8337, %v8433
    %v8435 = vpop.f32.mrb[0].mxu0
    %v8436 = vpop.f32.mrb[0].mxu0
    %v8437 = vadd.f32 %v8340, %v8436
    %v8438 = vpop.f32.mrb[0].mxu0
    %8439 = vmatprep.mubr.bf16.mxu0 %v4689
    %8440 = vmatmul.mubr.bf16.gmra.mrb[0].mxu0 %v4601
    %v8441 = vpop.f32.mrb[0].mxu0
    %v8442 = vadd.f32 %v8345, %v8441
    %v8443 = vpop.f32.mrb[0].mxu0
    %v8444 = vpop.f32.mrb[0].mxu0
    %v8445 = vadd.f32 %v8348, %v8444
    %v8446 = vpop.f32.mrb[0].mxu0
    %8447 = vdwg.mxu0
    %8448 = vmatprep.subr.bf16.mxu0 0
    %8449 = vmatpush1.bf16.msra.mxu0 %v6802
    %8450 = vmatprep.subr.bf16.mxu0 0
    %8451 = vmatpush1.bf16.msra.mxu0 %v6803
    %8452 = vmatprep.subr.bf16.mxu0 0
    %8453 = vmatpush1.bf16.msra.mxu0 %v6804
    %8454 = vmatprep.subr.bf16.mxu0 0
    %8455 = vmatpush1.bf16.msra.mxu0 %v6805
    %8456 = vmatprep.subr.bf16.mxu0 0
    %8457 = vmatpush1.bf16.msra.mxu0 %v6806
    %8458 = vmatprep.subr.bf16.mxu0 0
    %8459 = vmatpush1.bf16.msra.mxu0 %v6807
    %8460 = vmatprep.subr.bf16.mxu0 0
    %8461 = vmatpush1.bf16.msra.mxu0 %v6808
    %8462 = vmatprep.subr.bf16.mxu0 0
    %8463 = vmatpush1.bf16.msra.mxu0 %v6809
    %8464 = vmatprep.subr.bf16.mxu0 0
    %8465 = vmatpush1.bf16.msra.mxu0 %v6810
    %8466 = vmatprep.subr.bf16.mxu0 0
    %8467 = vmatpush1.bf16.msra.mxu0 %v6811
    %8468 = vmatprep.subr.bf16.mxu0 0
    %8469 = vmatpush1.bf16.msra.mxu0 %v6812
    %8470 = vmatprep.subr.bf16.mxu0 0
    %8471 = vmatpush1.bf16.msra.mxu0 %v6813
    %8472 = vmatprep.subr.bf16.mxu0 0
    %8473 = vmatpush1.bf16.msra.mxu0 %v6814
    %8474 = vmatprep.subr.bf16.mxu0 0
    %8475 = vmatpush1.bf16.msra.mxu0 %v6815
    %8476 = vmatprep.subr.bf16.mxu0 0
    %8477 = vmatpush1.bf16.msra.mxu0 %v6816
    %8478 = vmatprep.subr.bf16.mxu0 0
    %8479 = vmatpush1.bf16.msra.mxu0 %v6817
    %8480 = vmatprep.mubr.bf16.mxu0 %v4858
    %8481 = vmatmul.mubr.bf16.gmra.mrb[0].mxu0 %v4770
    %v8482 = vpop.f32.mrb[0].mxu0
    %v8483 = vadd.f32 %v8386, %v8482
    %v8484 = vpop.f32.mrb[0].mxu0
    %v8485 = vpop.f32.mrb[0].mxu0
    %v8486 = vadd.f32 %v8389, %v8485
    %v8487 = vpop.f32.mrb[0].mxu0
    %8488 = vmatprep.mubr.bf16.mxu0 %v4859
    %8489 = vmatmul.mubr.bf16.gmra.mrb[0].mxu0 %v4771
    %v8490 = vpop.f32.mrb[0].mxu0
    %v8491 = vadd.f32 %v8394, %v8490
    %v8492 = vpop.f32.mrb[0].mxu0
    %v8493 = vpop.f32.mrb[0].mxu0
    %v8494 = vadd.f32 %v8397, %v8493
    %v8495 = vpop.f32.mrb[0].mxu0
    %8496 = vmatprep.mubr.bf16.mxu0 %v4860
    %8497 = vmatmul.mubr.bf16.gmra.mrb[0].mxu0 %v4772
    %v8498 = vpop.f32.mrb[0].mxu0
    %v8499 = vadd.f32 %v8402, %v8498
    %v8500 = vpop.f32.mrb[0].mxu0
    %v8501 = vpop.f32.mrb[0].mxu0
    %v8502 = vadd.f32 %v8405, %v8501
    %v8503 = vpop.f32.mrb[0].mxu0
    %8504 = vmatprep.mubr.bf16.mxu0 %v4861
    %8505 = vmatmul.mubr.bf16.gmra.mrb[0].mxu0 %v4773
    %v8506 = vpop.f32.mrb[0].mxu0
    %v8507 = vadd.f32 %v8410, %v8506
    %v8508 = vpop.f32.mrb[0].mxu0
    %v8509 = vpop.f32.mrb[0].mxu0
    %v8510 = vadd.f32 %v8413, %v8509
    %v8511 = vpop.f32.mrb[0].mxu0
    %8512 = vmatprep.mubr.bf16.mxu0 %v4862
    %8513 = vmatmul.mubr.bf16.gmra.mrb[0].mxu0 %v4774
    %v8514 = vpop.f32.mrb[0].mxu0
    %v8515 = vadd.f32 %v8418, %v8514
    %v8516 = vpop.f32.mrb[0].mxu0
    %v8517 = vpop.f32.mrb[0].mxu0
    %v8518 = vadd.f32 %v8421, %v8517
    %v8519 = vpop.f32.mrb[0].mxu0
    %8520 = vmatprep.mubr.bf16.mxu0 %v4863
    %8521 = vmatmul.mubr.bf16.gmra.mrb[0].mxu0 %v4775
    %v8522 = vpop.f32.mrb[0].mxu0
    %v8523 = vadd.f32 %v8426, %v8522
    %v8524 = vpop.f32.mrb[0].mxu0
    %v8525 = vpop.f32.mrb[0].mxu0
    %v8526 = vadd.f32 %v8429, %v8525
    %v8527 = vpop.f32.mrb[0].mxu0
    %8528 = vmatprep.mubr.bf16.mxu0 %v4864
    %8529 = vmatmul.mubr.bf16.gmra.mrb[0].mxu0 %v4776
    %v8530 = vpop.f32.mrb[0].mxu0
    %v8531 = vadd.f32 %v8434, %v8530
    %v8532 = vpop.f32.mrb[0].mxu0
    %v8533 = vpop.f32.mrb[0].mxu0
    %v8534 = vadd.f32 %v8437, %v8533
    %v8535 = vpop.f32.mrb[0].mxu0
    %8536 = vmatprep.mubr.bf16.mxu0 %v4865
    %8537 = vmatmul.mubr.bf16.gmra.mrb[0].mxu0 %v4777
    %v8538 = vpop.f32.mrb[0].mxu0
    %v8539 = vadd.f32 %v8442, %v8538
    %v8540 = vpop.f32.mrb[0].mxu0
    %v8541 = vpop.f32.mrb[0].mxu0
    %v8542 = vadd.f32 %v8445, %v8541
    %v8543 = vpop.f32.mrb[0].mxu0
    %8544 = vdwg.mxu0
    %8545 = vmatprep.subr.bf16.mxu0 0
    %8546 = vmatpush1.bf16.msra.mxu0 %v6818
    %8547 = vmatprep.subr.bf16.mxu0 0
    %8548 = vmatpush1.bf16.msra.mxu0 %v6819
    %8549 = vmatprep.subr.bf16.mxu0 0
    %8550 = vmatpush1.bf16.msra.mxu0 %v6820
    %8551 = vmatprep.subr.bf16.mxu0 0
    %8552 = vmatpush1.bf16.msra.mxu0 %v6821
    %8553 = vmatprep.subr.bf16.mxu0 0
    %8554 = vmatpush1.bf16.msra.mxu0 %v6822
    %8555 = vmatprep.subr.bf16.mxu0 0
    %8556 = vmatpush1.bf16.msra.mxu0 %v6823
    %8557 = vmatprep.subr.bf16.mxu0 0
    %8558 = vmatpush1.bf16.msra.mxu0 %v6824
    %8559 = vmatprep.subr.bf16.mxu0 0
    %8560 = vmatpush1.bf16.msra.mxu0 %v6825
    %8561 = vmatprep.subr.bf16.mxu0 0
    %8562 = vmatpush1.bf16.msra.mxu0 %v6826
    %8563 = vmatprep.subr.bf16.mxu0 0
    %8564 = vmatpush1.bf16.msra.mxu0 %v6827
    %8565 = vmatprep.subr.bf16.mxu0 0
    %8566 = vmatpush1.bf16.msra.mxu0 %v6828
    %8567 = vmatprep.subr.bf16.mxu0 0
    %8568 = vmatpush1.bf16.msra.mxu0 %v6829
    %8569 = vmatprep.subr.bf16.mxu0 0
    %8570 = vmatpush1.bf16.msra.mxu0 %v6830
    %8571 = vmatprep.subr.bf16.mxu0 0
    %8572 = vmatpush1.bf16.msra.mxu0 %v6831
    %8573 = vmatprep.subr.bf16.mxu0 0
    %8574 = vmatpush1.bf16.msra.mxu0 %v6832
    %8575 = vmatprep.subr.bf16.mxu0 0
    %8576 = vmatpush1.bf16.msra.mxu0 %v6833
    %8577 = vmatprep.mubr.bf16.mxu0 %v5034
    %8578 = vmatmul.mubr.bf16.gmra.mrb[0].mxu0 %v4946
    %v8579 = vpop.f32.mrb[0].mxu0
    %v8580 = vadd.f32 %v8483, %v8579
    %v8581 = vpop.f32.mrb[0].mxu0
    %v8582 = vpop.f32.mrb[0].mxu0
    %v8583 = vadd.f32 %v8486, %v8582
    %v8584 = vpop.f32.mrb[0].mxu0
    %8585 = vmatprep.mubr.bf16.mxu0 %v5035
    %8586 = vmatmul.mubr.bf16.gmra.mrb[0].mxu0 %v4947
    %v8587 = vpop.f32.mrb[0].mxu0
    %v8588 = vadd.f32 %v8491, %v8587
    %v8589 = vpop.f32.mrb[0].mxu0
    %v8590 = vpop.f32.mrb[0].mxu0
    %v8591 = vadd.f32 %v8494, %v8590
    %v8592 = vpop.f32.mrb[0].mxu0
    %8593 = vmatprep.mubr.bf16.mxu0 %v5036
    %8594 = vmatmul.mubr.bf16.gmra.mrb[0].mxu0 %v4948
    %v8595 = vpop.f32.mrb[0].mxu0
    %v8596 = vadd.f32 %v8499, %v8595
    %v8597 = vpop.f32.mrb[0].mxu0
    %v8598 = vpop.f32.mrb[0].mxu0
    %v8599 = vadd.f32 %v8502, %v8598
    %v8600 = vpop.f32.mrb[0].mxu0
    %8601 = vmatprep.mubr.bf16.mxu0 %v5037
    %8602 = vmatmul.mubr.bf16.gmra.mrb[0].mxu0 %v4949
    %v8603 = vpop.f32.mrb[0].mxu0
    %v8604 = vadd.f32 %v8507, %v8603
    %v8605 = vpop.f32.mrb[0].mxu0
    %v8606 = vpop.f32.mrb[0].mxu0
    %v8607 = vadd.f32 %v8510, %v8606
    %v8608 = vpop.f32.mrb[0].mxu0
    %8609 = vmatprep.mubr.bf16.mxu0 %v5038
    %8610 = vmatmul.mubr.bf16.gmra.mrb[0].mxu0 %v4950
    %v8611 = vpop.f32.mrb[0].mxu0
    %v8612 = vadd.f32 %v8515, %v8611
    %v8613 = vpop.f32.mrb[0].mxu0
    %v8614 = vpop.f32.mrb[0].mxu0
    %v8615 = vadd.f32 %v8518, %v8614
    %v8616 = vpop.f32.mrb[0].mxu0
    %8617 = vmatprep.mubr.bf16.mxu0 %v5039
    %8618 = vmatmul.mubr.bf16.gmra.mrb[0].mxu0 %v4951
    %v8619 = vpop.f32.mrb[0].mxu0
    %v8620 = vadd.f32 %v8523, %v8619
    %v8621 = vpop.f32.mrb[0].mxu0
    %v8622 = vpop.f32.mrb[0].mxu0
    %v8623 = vadd.f32 %v8526, %v8622
    %v8624 = vpop.f32.mrb[0].mxu0
    %8625 = vmatprep.mubr.bf16.mxu0 %v5040
    %8626 = vmatmul.mubr.bf16.gmra.mrb[0].mxu0 %v4952
    %v8627 = vpop.f32.mrb[0].mxu0
    %v8628 = vadd.f32 %v8531, %v8627
    %v8629 = vpop.f32.mrb[0].mxu0
    %v8630 = vpop.f32.mrb[0].mxu0
    %v8631 = vadd.f32 %v8534, %v8630
    %v8632 = vpop.f32.mrb[0].mxu0
    %8633 = vmatprep.mubr.bf16.mxu0 %v5041
    %8634 = vmatmul.mubr.bf16.gmra.mrb[0].mxu0 %v4953
    %v8635 = vpop.f32.mrb[0].mxu0
    %v8636 = vadd.f32 %v8539, %v8635
    %v8637 = vpop.f32.mrb[0].mxu0
    %v8638 = vpop.f32.mrb[0].mxu0
    %v8639 = vadd.f32 %v8542, %v8638
    %v8640 = vpop.f32.mrb[0].mxu0
    %8641 = vdwg.mxu0
    %v8642 = vadd.f32 %v65, %v8580
    %v8643 = vadd.f32 %v66, %v8583
    %v8644 = vadd.f32 %v67, %v8588
    %v8645 = vadd.f32 %v68, %v8591
    %v8646 = vadd.f32 %v69, %v8596
    %v8647 = vadd.f32 %v70, %v8599
    %v8648 = vadd.f32 %v71, %v8604
    %v8649 = vadd.f32 %v72, %v8607
    %v8650 = vadd.f32 %v73, %v8612
    %v8651 = vadd.f32 %v74, %v8615
    %v8652 = vadd.f32 %v75, %v8620
    %v8653 = vadd.f32 %v76, %v8623
    %v8654 = vadd.f32 %v77, %v8628
    %v8655 = vadd.f32 %v78, %v8631
    %v8656 = vadd.f32 %v79, %v8636
    %v8657 = vadd.f32 %v80, %v8639
    %8658 = vst [vmem:[%s6] sm:$0xff] %v8642
    %8659 = vst [vmem:[%s6 + $0x8] sm:$0xff] %v8643
    %8660 = vst [vmem:[%s6 + $0x10] sm:$0xff] %v8644
    %8661 = vst [vmem:[%s6 + $0x18] sm:$0xff] %v8645
    %8662 = vst [vmem:[%s6 + $0x20] sm:$0xff] %v8646
    %8663 = vst [vmem:[%s6 + $0x28] sm:$0xff] %v8647
    %8664 = vst [vmem:[%s6 + $0x30] sm:$0xff] %v8648
    %8665 = vst [vmem:[%s6 + $0x38] sm:$0xff] %v8649
    %8666 = vst [vmem:[%s6 + $0x40] sm:$0xff] %v8650
    %8667 = vst [vmem:[%s6 + $0x48] sm:$0xff] %v8651
    %8668 = vst [vmem:[%s6 + $0x50] sm:$0xff] %v8652
    %8669 = vst [vmem:[%s6 + $0x58] sm:$0xff] %v8653
    %8670 = vst [vmem:[%s6 + $0x60] sm:$0xff] %v8654
    %8671 = vst [vmem:[%s6 + $0x68] sm:$0xff] %v8655
    %8672 = vst [vmem:[%s6 + $0x70] sm:$0xff] %v8656
    %8673 = vst [vmem:[%s6 + $0x78] sm:$0xff] %v8657
    // Predicated region
    $region38: #{transition_forward.1} parent=1 // pred_check
      _
    $region39: #{transition_forward.1} parent=1 // pred_check_branch
      %8675 = sbr.rel (0) target = $region41
    $region40: #{transition_forward.1} parent=1 // pred_region
      _
    $region41: #{transition_forward.1} parent=1 // pred_fallthru
      _
    // Predicated region
    $region42: #{transition_forward.1} parent=1 // pred_check
      _
    $region43: #{transition_forward.1} parent=1 // pred_check_branch
      %8677 = sbr.rel (0) target = $region45
    $region44: #{transition_forward.1} parent=1 // pred_region
      _
    $region45: #{transition_forward.1} parent=1 // pred_fallthru
      _
    %8678 = vsyncpa [#allocation3], 1
    %8679 = vsyncpa [#allocation5], 1

</llo_original>
